<compile_context>
chip_gen: v7x
topology: tpu7x:2x2x1
jax: 0.10.0
libtpu: 0.0.40
codegen_flags: <defaults>
</compile_context>

<pallas_src>
import math
from functools import partial

import jax
import jax.numpy as jnp
from jax import lax
from jax.experimental import pallas as pl
from jax.experimental.pallas import tpu as pltpu

# ----------------------------- hyper-parameters ------------------------------
DIM = 32              # `dim` (reference default 128, scaled down)
IN_FEATURES = 8       # `in_features`
N_LINEAR = 3
N_CONV = 3
POOL_HEADS = 4
HEAD_DIM = DIM // POOL_HEADS
POOL_NUM_NODES = 300  # hard-coded in the module's pool constructor
POOL_RATIO = 0.25
NEG_SLOPE = 0.2       # GATv2 LeakyReLU negative slope
VMEM_LIMIT = 32 * 1024 * 1024   # explicit scoped-VMEM limit (review item; tiny resident set)

# index layout of the stacked [DIM, DIM] node-pipeline weights (Kernel A)
IDX_LIN = 0                          # 0..2   linear_block
IDX_ADJ = N_LINEAR                   # 3..5   adj_block
N_MID_W = N_LINEAR + N_CONV          # 6

# fc_o weight slots in the stacked GMT weights (Kernel B)
O_P1, O_SAB, O_P3 = 0, 1, 2
N_O_W = 3


# ----------------------------- Kernel A: node pipeline -----------------------
def _node_pipeline_kernel(x_ref, adj_gat_ref, adj_gcn_ref, w_in_ref, b_in_ref,
                          w_mid_ref, b_mid_ref, w_gat_ref, b_gat_ref, att_ref,
                          gbias_ref, w_kvf_ref, b_kvi_ref, b_kvo_ref, kv_ref):
    f32 = jnp.float32

    # input layer + dense block (weights already [in, out], resident in VMEM)
    h = jnp.dot(x_ref[...], w_in_ref[...], preferred_element_type=f32) + b_in_ref[...]
    h = jnp.maximum(h, 0.0)
    for l in range(N_LINEAR):
        h = jnp.dot(h, w_mid_ref[IDX_LIN + l], preferred_element_type=f32) + b_mid_ref[IDX_LIN + l]
        h = jnp.maximum(h, 0.0)

    adj_gat = adj_gat_ref[...]
    for l in range(N_CONV):
        # adj_conv linear + ReLU (adj_conv=True)
        h = jnp.dot(h, w_mid_ref[IDX_ADJ + l], preferred_element_type=f32) + b_mid_ref[IDX_ADJ + l]
        h = jnp.maximum(h, 0.0)
        # GATv2Conv(dim, dim, heads=1, edge_dim=0) + ReLU, fully fused.
        # lin_l|lin_r packed into one [DIM, 2*DIM] weight -> single, lane-denser matmul.
        # TODO(synk): edge_dim=0 with data.edge_attr=None -> lin_edge is never
        # exercised in the reference forward, so it is omitted here.
        xlr = jnp.dot(h, w_gat_ref[l], preferred_element_type=f32) + b_gat_ref[l]
        xl, xr = xlr[:, :DIM], xlr[:, DIM:]
        # TODO(synk): at reference scale (dim=128, ~300-node batches) tile the src axis
        # (online softmax over 128-wide src chunks, bf16 operands) so this [tgt, src, C]
        # intermediate stays a few MiB in v7x's 64 MiB VMEM, and move the att contraction
        # onto the MXU as a [tgt*src, C] x [C, 1] matmul; at this toy size (32 KiB) the
        # VALU+XLU form below is kept since the (tgt*src,1)->(tgt,src) relayout would
        # dominate it.
        e = xr[:, None, :] + xl[None, :, :]                        # [tgt, src, C]
        e = jnp.where(e > 0, e, NEG_SLOPE * e)                     # LeakyReLU(0.2)
        scores = jnp.sum(e * att_ref[l], axis=-1)                  # [tgt, src]
        scores = jnp.where(adj_gat > 0, scores, -1e30)             # mask non-edges
        m = jnp.max(scores, axis=1, keepdims=True)
        p = jnp.exp(scores - m)
        alpha = p * pl.reciprocal(jnp.sum(p, axis=1, keepdims=True), approx=True)
        h = jnp.dot(alpha, xl, preferred_element_type=f32) + gbias_ref[l]
        h = jnp.maximum(h, 0.0)                                    # sigma = ReLU (fused)

    # GMT lin1 folded into the GMPool_G keys|values GCNConv at pack time:
    #   kv = A_norm @ (h @ (W_lin1^T @ [Wk|Wv]) + b_lin1 @ [Wk|Wv]) + [bk|bv]
    kv_inner = jnp.dot(h, w_kvf_ref[...], preferred_element_type=f32) + b_kvi_ref[...]
    kv_ref[...] = jnp.dot(adj_gcn_ref[...], kv_inner, preferred_element_type=f32) + b_kvo_ref[...]


def _full_spec(shape):
    return pl.BlockSpec(shape, lambda *_: (0,) * len(shape))


def node_pipeline(pp, x, adj_gat, adj_gcn):
    N = x.shape[0]
    # TODO(synk): at reference scale give this a target-node-tiled parallel grid axis
    # (tile a multiple of 8) so v7x's two TensorCores split the GAT/GCN target rows.
    return pl.pallas_call(
        _node_pipeline_kernel,
        grid=(1,),
        out_shape=jax.ShapeDtypeStruct((N, 2 * DIM), jnp.float32),
        in_specs=[_full_spec((N, IN_FEATURES)),
                  _full_spec((N, N)),
                  _full_spec((N, N)),
                  _full_spec((IN_FEATURES, DIM)),
                  _full_spec((1, DIM)),
                  _full_spec((N_MID_W, DIM, DIM)),
                  _full_spec((N_MID_W, 1, DIM)),
                  _full_spec((N_CONV, DIM, 2 * DIM)),
                  _full_spec((N_CONV, 1, 2 * DIM)),
                  _full_spec((N_CONV, 1, DIM)),
                  _full_spec((N_CONV, 1, DIM)),
                  _full_spec((DIM, 2 * DIM)),
                  _full_spec((1, 2 * DIM)),
                  _full_spec((1, 2 * DIM))],
        out_specs=_full_spec((N, 2 * DIM)),
        compiler_params=pltpu.CompilerParams(
            dimension_semantics=("arbitrary",),
            vmem_limit_bytes=VMEM_LIMIT),
    )(x, adj_gat, adj_gcn, pp["w_in"], pp["b_in"], pp["w_mid"], pp["b_mid"],
      pp["w_gat"], pp["b_gat"], pp["att"], pp["gbias"],
      pp["w_kvf"], pp["b_kvi"], pp["b_kvo"])


# ----------------------------- Kernel B: GMT pooling --------------------------
def _gmt_kernel(kv_ref, qp1_ref, qp3_ref, hmask_ref, wo_ref, bo_ref,
                w_sab_ref, b_sab_ref, w_p3kv_ref, b_p3kv_ref, w2_ref, b2_ref, o_ref):
    f32 = jnp.float32
    inv_scale = 1.0 / math.sqrt(DIM)

    def mab(Qp, K, V, o_idx):
        # NOTE: the reference GraphMultisetTransformer MAB softmaxes over the
        # query/seed axis (torch.softmax(..., dim=1)) — reproduced intentionally.
        # Padded K/V rows are exactly zero (bias added only to real nodes before the
        # dense-batch scatter) and the reference -1e9 key mask is a per-key constant
        # under a query-axis softmax, so it is a mathematical no-op and is dropped.
        # Heads use lane masks on full-width matmuls: no 8-lane slices, no lane concat.
        acc = jnp.zeros_like(Qp)
        for hd in range(POOL_HEADS):
            msk = hmask_ref[hd]                                              # [1, DIM]
            s = lax.dot_general(Qp * msk, K, (((1,), (1,)), ((), ())),
                                preferred_element_type=f32) * inv_scale      # [nq, nk]
            m = jnp.max(s, axis=0, keepdims=True)
            p = jnp.exp(s - m)
            a = p * pl.reciprocal(jnp.sum(p, axis=0, keepdims=True), approx=True)
            acc = acc + jnp.dot(a, V * msk, preferred_element_type=f32)      # head lanes only
        O = Qp + acc                                                         # merged heads
        fo = jnp.dot(O, wo_ref[o_idx], preferred_element_type=f32) + bo_ref[o_idx]
        return O + jnp.maximum(fo, 0.0)                                      # fc_o residual

    kv = kv_ref[0]                                    # [max_n_pad, 2*DIM] for this graph
    K1, V1 = kv[:, :DIM], kv[:, DIM:]

    # Pool 1: GMPool_G — seed query precomputed at pack time; K/V from Kernel A.
    bx = mab(qp1_ref[...], K1, V1, O_P1)
    # Pool 2: SelfAtt (SAB) — Q|K|V fused into one [DIM, 3*DIM] matmul.
    qkv = jnp.dot(bx, w_sab_ref[...], preferred_element_type=f32) + b_sab_ref[...]
    bx = mab(qkv[:, :DIM], qkv[:, DIM:2 * DIM], qkv[:, 2 * DIM:], O_SAB)
    # Pool 3: GMPool_I — single precomputed seed query; K|V fused.
    kv3 = jnp.dot(bx, w_p3kv_ref[...], preferred_element_type=f32) + b_p3kv_ref[...]
    bx = mab(qp3_ref[...], kv3[:, :DIM], kv3[:, DIM:], O_P3)

    # lin2 -> one scalar per graph
    o_ref[0] = jnp.dot(bx, w2_ref[...], preferred_element_type=f32) + b2_ref[...]


def gmt_pool(pp, kv_dense):
    B, max_n_pad, _ = kv_dense.shape
    k1 = pp["qp1"].shape[0]
    # TODO(synk): on 1-TC chips (v5e/v6e) all B graphs could be merged into a single
    # grid step with batched einsums; grid=(B,)+"parallel" kept for v7x's 2 TensorCores.
    return pl.pallas_call(
        _gmt_kernel,
        grid=(B,),
        out_shape=jax.ShapeDtypeStruct((B, 1, 1), jnp.float32),
        in_specs=[pl.BlockSpec((1, max_n_pad, 2 * DIM), lambda b: (b, 0, 0)),
                  _full_spec((k1, DIM)),
                  _full_spec((1, DIM)),
                  _full_spec((POOL_HEADS, 1, DIM)),
                  _full_spec((N_O_W, DIM, DIM)),
                  _full_spec((N_O_W, 1, DIM)),
                  _full_spec((DIM, 3 * DIM)),
                  _full_spec((1, 3 * DIM)),
                  _full_spec((DIM, 2 * DIM)),
                  _full_spec((1, 2 * DIM)),
                  _full_spec((DIM, 1)),
                  _full_spec((1, 1))],
        out_specs=pl.BlockSpec((1, 1, 1), lambda b: (b, 0, 0)),
        compiler_params=pltpu.CompilerParams(
            dimension_semantics=("parallel",),
            vmem_limit_bytes=VMEM_LIMIT),
    )(kv_dense, pp["qp1"], pp["qp3"], pp["hmask"], pp["wo"], pp["bo"],
      pp["w_sab_qkv"], pp["b_sab_qkv"], pp["w_p3_kv"], pp["b_p3_kv"],
      pp["w_lin2"], pp["b_lin2"])


# ------------------------------ XLA glue --------------------------------------
def to_dense_batch(x, batch, num_graphs, max_n):
    # TODO(synk): fusable into Kernel B via PrefetchScalarGridSpec (per-graph start
    # offsets/lengths as scalar-prefetch args + in-kernel masking), dropping this
    # scatter and the padded HBM copy entirely.
    N, d = x.shape
    counts = jnp.zeros(num_graphs, jnp.int32).at[batch].add(1)
    starts = jnp.concatenate([jnp.zeros(1, jnp.int32), jnp.cumsum(counts)[:-1]])
    pos = jnp.arange(N, dtype=jnp.int32) - starts[batch]
    return jnp.zeros((num_graphs, max_n, d), x.dtype).at[batch, pos].set(x)


def build_adjs(edge_index, num_nodes):
    src, dst = edge_index[0], edge_index[1]
    A = jnp.zeros((num_nodes, num_nodes), jnp.float32).at[dst, src].set(1.0)  # A[i,j]=1 iff j->i
    eye = jnp.eye(num_nodes, dtype=jnp.float32)
    adj_gat = jnp.maximum(A, eye)               # GATv2: remove + re-add self loops
    A_sl = jnp.maximum(A, eye)                  # GCN: add self loops
    deg = jnp.sum(A_sl, axis=1)
    dinv = 1.0 / jnp.sqrt(deg)
    adj_gcn = A_sl * dinv[:, None] * dinv[None, :]
    return adj_gat, adj_gcn


@partial(jax.jit, static_argnames=("num_graphs", "max_n"))
def flexible_net_forward(pp, x, adj_gat, adj_gcn, batch, num_graphs, max_n):
    max_n_pad = -(-max_n // 8) * 8                                  # sublane-aligned pads
    kv_flat = node_pipeline(pp, x, adj_gat, adj_gcn)                # 1 pallas_call
    kv_dense = to_dense_batch(kv_flat, batch, num_graphs, max_n_pad)  # single XLA scatter
    return gmt_pool(pp, kv_dense).reshape(-1)                       # 1 pallas_call, .view(-1)


# --------------------------- parameters ----------------------------------------
def init_params(key):
    """Parameters in torch layout (Linear weight = [out, in])."""
    keys = iter(jax.random.split(key, 128))

    def p(shape, scale=0.1):
        return scale * jax.random.normal(next(keys), shape, dtype=jnp.float32)

    def mab_p(seed_shape=None):
        d = dict(q_w=p((DIM, DIM)), q_b=p((DIM,)),
                 k_w=p((DIM, DIM)), k_b=p((DIM,)),
                 v_w=p((DIM, DIM)), v_b=p((DIM,)),
                 o_w=p((DIM, DIM)), o_b=p((DIM,)))
        if seed_shape is not None:
            d["S"] = p(seed_shape)
        return d

    k1 = math.ceil(POOL_NUM_NODES * POOL_RATIO)   # 75 seeds for the first GMPool
    return dict(
        input_w=p((DIM, IN_FEATURES)), input_b=p((DIM,)),
        lin_w=[p((DIM, DIM)) for _ in range(N_LINEAR)],
        lin_b=[p((DIM,)) for _ in range(N_LINEAR)],
        adj_w=[p((DIM, DIM)) for _ in range(N_CONV)],
        adj_b=[p((DIM,)) for _ in range(N_CONV)],
        gat=[dict(wl=p((DIM, DIM)), bl=p((DIM,)),
                  wr=p((DIM, DIM)), br=p((DIM,)),
                  att=p((DIM,)), bias=p((DIM,))) for _ in range(N_CONV)],
        gmt=dict(lin1_w=p((DIM, DIM)), lin1_b=p((DIM,)),
                 lin2_w=p((1, DIM)), lin2_b=p((1,)),
                 pma1=mab_p((1, k1, DIM)),
                 sab=mab_p(),
                 pma3=mab_p((1, 1, DIM))),
    )


def pack_params(p):
    """Fold / pre-transpose / stack torch-layout params ONCE (reused every forward)."""
    T = lambda w: w.T
    g = p["gmt"]

    w_mid = jnp.stack([T(w) for w in p["lin_w"]] + [T(w) for w in p["adj_w"]])
    b_mid = jnp.stack(list(p["lin_b"]) + list(p["adj_b"]))[:, None, :]

    # GATv2 lin_l|lin_r fused into one [DIM, 2*DIM] projection per conv layer.
    w_gat = jnp.stack([jnp.concatenate([T(q["wl"]), T(q["wr"])], axis=1) for q in p["gat"]])
    b_gat = jnp.stack([jnp.concatenate([q["bl"], q["br"]]) for q in p["gat"]])[:, None, :]
    att = jnp.stack([q["att"] for q in p["gat"]])[:, None, :]
    gbias = jnp.stack([q["bias"] for q in p["gat"]])[:, None, :]

    # GMT lin1 folded into the GMPool_G keys|values GCNConv (no nonlinearity between).
    w_kv_cat = jnp.concatenate([T(g["pma1"]["k_w"]), T(g["pma1"]["v_w"])], axis=1)
    b_kv_cat = jnp.concatenate([g["pma1"]["k_b"], g["pma1"]["v_b"]])
    w_kvf = T(g["lin1_w"]) @ w_kv_cat                                  # [DIM, 2*DIM]
    b_kvi = g["lin1_b"][None, :] @ w_kv_cat                            # [1, 2*DIM]
    b_kvo = b_kv_cat.reshape(1, 2 * DIM)

    # Seed-query projections are constants (seeds are parameters): precompute.
    qp1 = g["pma1"]["S"][0] @ T(g["pma1"]["q_w"]) + g["pma1"]["q_b"]   # [75, DIM]
    qp3 = g["pma3"]["S"][0] @ T(g["pma3"]["q_w"]) + g["pma3"]["q_b"]   # [1, DIM]

    # SAB Q|K|V fused; GMPool_I K|V fused.
    w_sab_qkv = jnp.concatenate([T(g["sab"]["q_w"]), T(g["sab"]["k_w"]), T(g["sab"]["v_w"])], axis=1)
    b_sab_qkv = jnp.concatenate([g["sab"]["q_b"], g["sab"]["k_b"], g["sab"]["v_b"]]).reshape(1, 3 * DIM)
    w_p3_kv = jnp.concatenate([T(g["pma3"]["k_w"]), T(g["pma3"]["v_w"])], axis=1)
    b_p3_kv = jnp.concatenate([g["pma3"]["k_b"], g["pma3"]["v_b"]]).reshape(1, 2 * DIM)

    wo = jnp.stack([T(g["pma1"]["o_w"]), T(g["sab"]["o_w"]), T(g["pma3"]["o_w"])])
    bo = jnp.stack([g["pma1"]["o_b"], g["sab"]["o_b"], g["pma3"]["o_b"]])[:, None, :]

    # Per-head lane masks (heads occupy contiguous HEAD_DIM-lane groups of DIM).
    lane = jnp.arange(DIM)
    hmask = jnp.stack([((lane >= h * HEAD_DIM) & (lane < (h + 1) * HEAD_DIM)).astype(jnp.float32)
                       for h in range(POOL_HEADS)])[:, None, :]

    return dict(
        w_in=T(p["input_w"]), b_in=p["input_b"].reshape(1, DIM),
        w_mid=w_mid, b_mid=b_mid, w_gat=w_gat, b_gat=b_gat, att=att, gbias=gbias,
        w_kvf=w_kvf, b_kvi=b_kvi, b_kvo=b_kvo,
        qp1=qp1, qp3=qp3, hmask=hmask, wo=wo, bo=bo,
        w_sab_qkv=w_sab_qkv, b_sab_qkv=b_sab_qkv,
        w_p3_kv=w_p3_kv, b_p3_kv=b_p3_kv,
        w_lin2=T(g["lin2_w"]), b_lin2=g["lin2_b"].reshape(1, 1),
    )


# ----------------------------------- main ---------------------------------------
if __name__ == "__main__":
    key = jax.random.PRNGKey(0)
    k_x, k_p = jax.random.split(key)

    # Two small graphs (ring topologies), 10 + 6 nodes, bidirectional edges.
    sizes = [10, 6]
    edges = []
    off = 0
    for n in sizes:
        for i in range(n):
            j = (i + 1) % n
            edges.append((off + i, off + j))
            edges.append((off + j, off + i))
        off += n
    edge_index = jnp.asarray(edges, dtype=jnp.int32).T            # [2, E] (row0=src, row1=dst)
    batch = jnp.asarray(sum(([g] * n for g, n in enumerate(sizes)), []), dtype=jnp.int32)
    num_nodes = sum(sizes)
    num_graphs = len(sizes)
    max_n = max(sizes)

    x = jax.random.normal(k_x, (num_nodes, IN_FEATURES), dtype=jnp.float32)
    adj_gat, adj_gcn = build_adjs(edge_index, num_nodes)
    params = init_params(k_p)
    packed = pack_params(params)      # fold/transpose/stack once, reused every forward

    out = flexible_net_forward(packed, x, adj_gat, adj_gcn, batch,
                               num_graphs=num_graphs, max_n=max_n)
    out = jax.block_until_ready(out)

    assert out.shape == (num_graphs,), out.shape
    assert bool(jnp.all(jnp.isfinite(out)))
    print("KERNEL_OK")
</pallas_src>

<mosaic_0001>
module attributes {stable_mosaic.version = 11 : i64} {
  func.func private @main(%arg0: i32) attributes {dimension_semantics = [#tpu.dimension_semantics<core_parallel>], iteration_bounds = array<i64: 2>, tpu.core_type = #tpu.core_type<sc_scalar_subcore>, window_params = []} {
    return
  }
}

module attributes {stable_mosaic.version = 11 : i64} {
  func.func private @main(%arg0: i32) attributes {dimension_semantics = [#tpu.dimension_semantics<core_parallel>], iteration_bounds = array<i64: 2>, tpu.core_type = #tpu.core_type<sc_scalar_subcore>, window_params = []} {
    return
  }
}

module attributes {stable_mosaic.version = 11 : i64} {
  func.func @_node_pipeline_kernel(%arg0: i32, %arg1: memref<16x8xf32, #tpu.memory_space<vmem>>, %arg2: memref<16x16xf32, #tpu.memory_space<vmem>>, %arg3: memref<16x16xf32, #tpu.memory_space<vmem>>, %arg4: memref<8x32xf32, #tpu.memory_space<vmem>>, %arg5: memref<1x32xf32, #tpu.memory_space<vmem>>, %arg6: memref<6x32x32xf32, #tpu.memory_space<vmem>>, %arg7: memref<6x1x32xf32, #tpu.memory_space<vmem>>, %arg8: memref<3x32x64xf32, #tpu.memory_space<vmem>>, %arg9: memref<3x1x64xf32, #tpu.memory_space<vmem>>, %arg10: memref<3x1x32xf32, #tpu.memory_space<vmem>>, %arg11: memref<3x1x32xf32, #tpu.memory_space<vmem>>, %arg12: memref<32x64xf32, #tpu.memory_space<vmem>>, %arg13: memref<1x64xf32, #tpu.memory_space<vmem>>, %arg14: memref<1x64xf32, #tpu.memory_space<vmem>>, %arg15: memref<16x64xf32, #tpu.memory_space<vmem>>) attributes {dimension_semantics = [#tpu.dimension_semantics<arbitrary>], iteration_bounds = array<i64: 1>, scalar_prefetch = 0 : i64, scratch_operands = 0 : i64, tpu.core_type = #tpu.core_type<tc>, window_params = [{pipeline_mode = #tpu.pipeline_mode<synchronous>, transform_indices = @transform_0, window_bounds = array<i64: 16, 8>}, {pipeline_mode = #tpu.pipeline_mode<synchronous>, transform_indices = @transform_1, window_bounds = array<i64: 16, 16>}, {pipeline_mode = #tpu.pipeline_mode<synchronous>, transform_indices = @transform_2, window_bounds = array<i64: 16, 16>}, {pipeline_mode = #tpu.pipeline_mode<synchronous>, transform_indices = @transform_3, window_bounds = array<i64: 8, 32>}, {pipeline_mode = #tpu.pipeline_mode<synchronous>, transform_indices = @transform_4, window_bounds = array<i64: 1, 32>}, {pipeline_mode = #tpu.pipeline_mode<synchronous>, transform_indices = @transform_5, window_bounds = array<i64: 6, 32, 32>}, {pipeline_mode = #tpu.pipeline_mode<synchronous>, transform_indices = @transform_6, window_bounds = array<i64: 6, 1, 32>}, {pipeline_mode = #tpu.pipeline_mode<synchronous>, transform_indices = @transform_7, window_bounds = array<i64: 3, 32, 64>}, {pipeline_mode = #tpu.pipeline_mode<synchronous>, transform_indices = @transform_8, window_bounds = array<i64: 3, 1, 64>}, {pipeline_mode = #tpu.pipeline_mode<synchronous>, transform_indices = @transform_9, window_bounds = array<i64: 3, 1, 32>}, {pipeline_mode = #tpu.pipeline_mode<synchronous>, transform_indices = @transform_10, window_bounds = array<i64: 3, 1, 32>}, {pipeline_mode = #tpu.pipeline_mode<synchronous>, transform_indices = @transform_11, window_bounds = array<i64: 32, 64>}, {pipeline_mode = #tpu.pipeline_mode<synchronous>, transform_indices = @transform_12, window_bounds = array<i64: 1, 64>}, {pipeline_mode = #tpu.pipeline_mode<synchronous>, transform_indices = @transform_13, window_bounds = array<i64: 1, 64>}, {pipeline_mode = #tpu.pipeline_mode<synchronous>, transform_indices = @transform_14, window_bounds = array<i64: 16, 64>}]} {
    %c0 = arith.constant 0 : index
    %c0_0 = arith.constant 0 : index
    %0 = vector.load %arg1[%c0, %c0_0] : memref<16x8xf32, #tpu.memory_space<vmem>>, vector<16x8xf32>
    %c0_1 = arith.constant 0 : index
    %c0_2 = arith.constant 0 : index
    %1 = vector.load %arg4[%c0_1, %c0_2] : memref<8x32xf32, #tpu.memory_space<vmem>>, vector<8x32xf32>
    %cst = arith.constant dense<0.000000e+00> : vector<16x32xf32>
    %2 = tpu.matmul %0, %1, %cst {dimension_numbers = #tpu.dot_dimension_numbers<[1], [0], [0], [1], [0, 0, 1, 1], [], []>} : vector<16x8xf32>, vector<8x32xf32>, vector<16x32xf32> -> vector<16x32xf32>
    %c0_3 = arith.constant 0 : index
    %c0_4 = arith.constant 0 : index
    %3 = vector.load %arg5[%c0_3, %c0_4] : memref<1x32xf32, #tpu.memory_space<vmem>>, vector<1x32xf32>
    %4 = vector.broadcast %3 : vector<1x32xf32> to vector<16x32xf32>
    %5 = arith.addf %2, %4 : vector<16x32xf32>
    %cst_5 = arith.constant 0.000000e+00 : f32
    %6 = vector.broadcast %cst_5 : f32 to vector<16x32xf32>
    %7 = arith.maximumf %5, %6 : vector<16x32xf32>
    %c0_6 = arith.constant 0 : index
    %c0_7 = arith.constant 0 : index
    %c0_8 = arith.constant 0 : index
    %8 = vector.load %arg6[%c0_6, %c0_7, %c0_8] : memref<6x32x32xf32, #tpu.memory_space<vmem>>, vector<1x32x32xf32>
    %9 = vector.shape_cast %8 : vector<1x32x32xf32> to vector<32x32xf32>
    %cst_9 = arith.constant dense<0.000000e+00> : vector<16x32xf32>
    %10 = tpu.matmul %7, %9, %cst_9 {dimension_numbers = #tpu.dot_dimension_numbers<[1], [0], [0], [1], [0, 0, 1, 1], [], []>} : vector<16x32xf32>, vector<32x32xf32>, vector<16x32xf32> -> vector<16x32xf32>
    %c0_10 = arith.constant 0 : index
    %c0_11 = arith.constant 0 : index
    %c0_12 = arith.constant 0 : index
    %11 = vector.load %arg7[%c0_10, %c0_11, %c0_12] : memref<6x1x32xf32, #tpu.memory_space<vmem>>, vector<1x1x32xf32>
    %12 = vector.shape_cast %11 : vector<1x1x32xf32> to vector<1x32xf32>
    %13 = vector.broadcast %12 : vector<1x32xf32> to vector<16x32xf32>
    %14 = arith.addf %10, %13 : vector<16x32xf32>
    %cst_13 = arith.constant 0.000000e+00 : f32
    %15 = vector.broadcast %cst_13 : f32 to vector<16x32xf32>
    %16 = arith.maximumf %14, %15 : vector<16x32xf32>
    %c1 = arith.constant 1 : index
    %c0_14 = arith.constant 0 : index
    %c0_15 = arith.constant 0 : index
    %17 = vector.load %arg6[%c1, %c0_14, %c0_15] : memref<6x32x32xf32, #tpu.memory_space<vmem>>, vector<1x32x32xf32>
    %18 = vector.shape_cast %17 : vector<1x32x32xf32> to vector<32x32xf32>
    %cst_16 = arith.constant dense<0.000000e+00> : vector<16x32xf32>
    %19 = tpu.matmul %16, %18, %cst_16 {dimension_numbers = #tpu.dot_dimension_numbers<[1], [0], [0], [1], [0, 0, 1, 1], [], []>} : vector<16x32xf32>, vector<32x32xf32>, vector<16x32xf32> -> vector<16x32xf32>
    %c1_17 = arith.constant 1 : index
    %c0_18 = arith.constant 0 : index
    %c0_19 = arith.constant 0 : index
    %20 = vector.load %arg7[%c1_17, %c0_18, %c0_19] : memref<6x1x32xf32, #tpu.memory_space<vmem>>, vector<1x1x32xf32>
    %21 = vector.shape_cast %20 : vector<1x1x32xf32> to vector<1x32xf32>
    %22 = vector.broadcast %21 : vector<1x32xf32> to vector<16x32xf32>
    %23 = arith.addf %19, %22 : vector<16x32xf32>
    %cst_20 = arith.constant 0.000000e+00 : f32
    %24 = vector.broadcast %cst_20 : f32 to vector<16x32xf32>
    %25 = arith.maximumf %23, %24 : vector<16x32xf32>
    %c2 = arith.constant 2 : index
    %c0_21 = arith.constant 0 : index
    %c0_22 = arith.constant 0 : index
    %26 = vector.load %arg6[%c2, %c0_21, %c0_22] : memref<6x32x32xf32, #tpu.memory_space<vmem>>, vector<1x32x32xf32>
    %27 = vector.shape_cast %26 : vector<1x32x32xf32> to vector<32x32xf32>
    %cst_23 = arith.constant dense<0.000000e+00> : vector<16x32xf32>
    %28 = tpu.matmul %25, %27, %cst_23 {dimension_numbers = #tpu.dot_dimension_numbers<[1], [0], [0], [1], [0, 0, 1, 1], [], []>} : vector<16x32xf32>, vector<32x32xf32>, vector<16x32xf32> -> vector<16x32xf32>
    %c2_24 = arith.constant 2 : index
    %c0_25 = arith.constant 0 : index
    %c0_26 = arith.constant 0 : index
    %29 = vector.load %arg7[%c2_24, %c0_25, %c0_26] : memref<6x1x32xf32, #tpu.memory_space<vmem>>, vector<1x1x32xf32>
    %30 = vector.shape_cast %29 : vector<1x1x32xf32> to vector<1x32xf32>
    %31 = vector.broadcast %30 : vector<1x32xf32> to vector<16x32xf32>
    %32 = arith.addf %28, %31 : vector<16x32xf32>
    %cst_27 = arith.constant 0.000000e+00 : f32
    %33 = vector.broadcast %cst_27 : f32 to vector<16x32xf32>
    %34 = arith.maximumf %32, %33 : vector<16x32xf32>
    %c0_28 = arith.constant 0 : index
    %c0_29 = arith.constant 0 : index
    %35 = vector.load %arg2[%c0_28, %c0_29] : memref<16x16xf32, #tpu.memory_space<vmem>>, vector<16x16xf32>
    %c3 = arith.constant 3 : index
    %c0_30 = arith.constant 0 : index
    %c0_31 = arith.constant 0 : index
    %36 = vector.load %arg6[%c3, %c0_30, %c0_31] : memref<6x32x32xf32, #tpu.memory_space<vmem>>, vector<1x32x32xf32>
    %37 = vector.shape_cast %36 : vector<1x32x32xf32> to vector<32x32xf32>
    %cst_32 = arith.constant dense<0.000000e+00> : vector<16x32xf32>
    %38 = tpu.matmul %34, %37, %cst_32 {dimension_numbers = #tpu.dot_dimension_numbers<[1], [0], [0], [1], [0, 0, 1, 1], [], []>} : vector<16x32xf32>, vector<32x32xf32>, vector<16x32xf32> -> vector<16x32xf32>
    %c3_33 = arith.constant 3 : index
    %c0_34 = arith.constant 0 : index
    %c0_35 = arith.constant 0 : index
    %39 = vector.load %arg7[%c3_33, %c0_34, %c0_35] : memref<6x1x32xf32, #tpu.memory_space<vmem>>, vector<1x1x32xf32>
    %40 = vector.shape_cast %39 : vector<1x1x32xf32> to vector<1x32xf32>
    %41 = vector.broadcast %40 : vector<1x32xf32> to vector<16x32xf32>
    %42 = arith.addf %38, %41 : vector<16x32xf32>
    %cst_36 = arith.constant 0.000000e+00 : f32
    %43 = vector.broadcast %cst_36 : f32 to vector<16x32xf32>
    %44 = arith.maximumf %42, %43 : vector<16x32xf32>
    %c0_37 = arith.constant 0 : index
    %c0_38 = arith.constant 0 : index
    %c0_39 = arith.constant 0 : index
    %45 = vector.load %arg8[%c0_37, %c0_38, %c0_39] : memref<3x32x64xf32, #tpu.memory_space<vmem>>, vector<1x32x64xf32>
    %46 = vector.shape_cast %45 : vector<1x32x64xf32> to vector<32x64xf32>
    %cst_40 = arith.constant dense<0.000000e+00> : vector<16x64xf32>
    %47 = tpu.matmul %44, %46, %cst_40 {dimension_numbers = #tpu.dot_dimension_numbers<[1], [0], [0], [1], [0, 0, 1, 1], [], []>} : vector<16x32xf32>, vector<32x64xf32>, vector<16x64xf32> -> vector<16x64xf32>
    %c0_41 = arith.constant 0 : index
    %c0_42 = arith.constant 0 : index
    %c0_43 = arith.constant 0 : index
    %48 = vector.load %arg9[%c0_41, %c0_42, %c0_43] : memref<3x1x64xf32, #tpu.memory_space<vmem>>, vector<1x1x64xf32>
    %49 = vector.shape_cast %48 : vector<1x1x64xf32> to vector<1x64xf32>
    %50 = vector.broadcast %49 : vector<1x64xf32> to vector<16x64xf32>
    %51 = arith.addf %47, %50 : vector<16x64xf32>
    %52 = vector.extract_strided_slice %51 {offsets = [0, 0], sizes = [16, 32], strides = [1, 1]} : vector<16x64xf32> to vector<16x32xf32>
    %53 = vector.extract_strided_slice %51 {offsets = [0, 32], sizes = [16, 32], strides = [1, 1]} : vector<16x64xf32> to vector<16x32xf32>
    %54 = vector.shape_cast %53 : vector<16x32xf32> to vector<16x1x32xf32>
    %55 = vector.shape_cast %52 : vector<16x32xf32> to vector<1x16x32xf32>
    %56 = vector.broadcast %54 : vector<16x1x32xf32> to vector<16x16x32xf32>
    %57 = vector.broadcast %55 : vector<1x16x32xf32> to vector<16x16x32xf32>
    %58 = arith.addf %56, %57 : vector<16x16x32xf32>
    %cst_44 = arith.constant 0.000000e+00 : f32
    %59 = vector.broadcast %cst_44 : f32 to vector<16x16x32xf32>
    %60 = arith.cmpf ogt, %58, %59 : vector<16x16x32xf32>
    %cst_45 = arith.constant 2.000000e-01 : f32
    %61 = vector.broadcast %cst_45 : f32 to vector<16x16x32xf32>
    %62 = arith.mulf %61, %58 : vector<16x16x32xf32>
    %63 = arith.select %60, %58, %62 : vector<16x16x32xi1>, vector<16x16x32xf32>
    %c0_46 = arith.constant 0 : index
    %c0_47 = arith.constant 0 : index
    %c0_48 = arith.constant 0 : index
    %64 = vector.load %arg10[%c0_46, %c0_47, %c0_48] : memref<3x1x32xf32, #tpu.memory_space<vmem>>, vector<1x1x32xf32>
    %65 = vector.shape_cast %64 : vector<1x1x32xf32> to vector<1x32xf32>
    %66 = vector.shape_cast %65 : vector<1x32xf32> to vector<1x1x32xf32>
    %67 = vector.broadcast %66 : vector<1x1x32xf32> to vector<16x16x32xf32>
    %68 = arith.mulf %63, %67 : vector<16x16x32xf32>
    %cst_49 = arith.constant dense<0.000000e+00> : vector<16x16xf32>
    %69 = vector.multi_reduction <add>, %68, %cst_49 [2] : vector<16x16x32xf32> to vector<16x16xf32>
    %cst_50 = arith.constant 0.000000e+00 : f32
    %70 = vector.broadcast %cst_50 : f32 to vector<16x16xf32>
    %71 = arith.cmpf ogt, %35, %70 : vector<16x16xf32>
    %cst_51 = arith.constant -1.000000e+30 : f32
    %72 = vector.broadcast %cst_51 : f32 to vector<16x16xf32>
    %73 = arith.select %71, %69, %72 : vector<16x16xi1>, vector<16x16xf32>
    %cst_52 = arith.constant dense<0xFF800000> : vector<16xf32>
    %74 = vector.multi_reduction <maximumf>, %73, %cst_52 [1] : vector<16x16xf32> to vector<16xf32>
    %75 = vector.shape_cast %74 : vector<16xf32> to vector<16x1xf32>
    %76 = vector.broadcast %75 : vector<16x1xf32> to vector<16x16xf32>
    %77 = arith.subf %73, %76 : vector<16x16xf32>
    %78 = math.exp %77 : vector<16x16xf32>
    %cst_53 = arith.constant dense<0.000000e+00> : vector<16xf32>
    %79 = vector.multi_reduction <add>, %78, %cst_53 [1] : vector<16x16xf32> to vector<16xf32>
    %80 = vector.shape_cast %79 : vector<16xf32> to vector<16x1xf32>
    %81 = tpu.reciprocal %80 {approx = true} : vector<16x1xf32> -> vector<16x1xf32>
    %82 = vector.broadcast %81 : vector<16x1xf32> to vector<16x16xf32>
    %83 = arith.mulf %78, %82 : vector<16x16xf32>
    %cst_54 = arith.constant dense<0.000000e+00> : vector<16x32xf32>
    %84 = tpu.matmul %83, %52, %cst_54 {dimension_numbers = #tpu.dot_dimension_numbers<[1], [0], [0], [1], [0, 0, 1, 1], [], []>} : vector<16x16xf32>, vector<16x32xf32>, vector<16x32xf32> -> vector<16x32xf32>
    %c0_55 = arith.constant 0 : index
    %c0_56 = arith.constant 0 : index
    %c0_57 = arith.constant 0 : index
    %85 = vector.load %arg11[%c0_55, %c0_56, %c0_57] : memref<3x1x32xf32, #tpu.memory_space<vmem>>, vector<1x1x32xf32>
    %86 = vector.shape_cast %85 : vector<1x1x32xf32> to vector<1x32xf32>
    %87 = vector.broadcast %86 : vector<1x32xf32> to vector<16x32xf32>
    %88 = arith.addf %84, %87 : vector<16x32xf32>
    %cst_58 = arith.constant 0.000000e+00 : f32
    %89 = vector.broadcast %cst_58 : f32 to vector<16x32xf32>
    %90 = arith.maximumf %88, %89 : vector<16x32xf32>
    %c4 = arith.constant 4 : index
    %c0_59 = arith.constant 0 : index
    %c0_60 = arith.constant 0 : index
    %91 = vector.load %arg6[%c4, %c0_59, %c0_60] : memref<6x32x32xf32, #tpu.memory_space<vmem>>, vector<1x32x32xf32>
    %92 = vector.shape_cast %91 : vector<1x32x32xf32> to vector<32x32xf32>
    %cst_61 = arith.constant dense<0.000000e+00> : vector<16x32xf32>
    %93 = tpu.matmul %90, %92, %cst_61 {dimension_numbers = #tpu.dot_dimension_numbers<[1], [0], [0], [1], [0, 0, 1, 1], [], []>} : vector<16x32xf32>, vector<32x32xf32>, vector<16x32xf32> -> vector<16x32xf32>
    %c4_62 = arith.constant 4 : index
    %c0_63 = arith.constant 0 : index
    %c0_64 = arith.constant 0 : index
    %94 = vector.load %arg7[%c4_62, %c0_63, %c0_64] : memref<6x1x32xf32, #tpu.memory_space<vmem>>, vector<1x1x32xf32>
    %95 = vector.shape_cast %94 : vector<1x1x32xf32> to vector<1x32xf32>
    %96 = vector.broadcast %95 : vector<1x32xf32> to vector<16x32xf32>
    %97 = arith.addf %93, %96 : vector<16x32xf32>
    %cst_65 = arith.constant 0.000000e+00 : f32
    %98 = vector.broadcast %cst_65 : f32 to vector<16x32xf32>
    %99 = arith.maximumf %97, %98 : vector<16x32xf32>
    %c1_66 = arith.constant 1 : index
    %c0_67 = arith.constant 0 : index
    %c0_68 = arith.constant 0 : index
    %100 = vector.load %arg8[%c1_66, %c0_67, %c0_68] : memref<3x32x64xf32, #tpu.memory_space<vmem>>, vector<1x32x64xf32>
    %101 = vector.shape_cast %100 : vector<1x32x64xf32> to vector<32x64xf32>
    %cst_69 = arith.constant dense<0.000000e+00> : vector<16x64xf32>
    %102 = tpu.matmul %99, %101, %cst_69 {dimension_numbers = #tpu.dot_dimension_numbers<[1], [0], [0], [1], [0, 0, 1, 1], [], []>} : vector<16x32xf32>, vector<32x64xf32>, vector<16x64xf32> -> vector<16x64xf32>
    %c1_70 = arith.constant 1 : index
    %c0_71 = arith.constant 0 : index
    %c0_72 = arith.constant 0 : index
    %103 = vector.load %arg9[%c1_70, %c0_71, %c0_72] : memref<3x1x64xf32, #tpu.memory_space<vmem>>, vector<1x1x64xf32>
    %104 = vector.shape_cast %103 : vector<1x1x64xf32> to vector<1x64xf32>
    %105 = vector.broadcast %104 : vector<1x64xf32> to vector<16x64xf32>
    %106 = arith.addf %102, %105 : vector<16x64xf32>
    %107 = vector.extract_strided_slice %106 {offsets = [0, 0], sizes = [16, 32], strides = [1, 1]} : vector<16x64xf32> to vector<16x32xf32>
    %108 = vector.extract_strided_slice %106 {offsets = [0, 32], sizes = [16, 32], strides = [1, 1]} : vector<16x64xf32> to vector<16x32xf32>
    %109 = vector.shape_cast %108 : vector<16x32xf32> to vector<16x1x32xf32>
    %110 = vector.shape_cast %107 : vector<16x32xf32> to vector<1x16x32xf32>
    %111 = vector.broadcast %109 : vector<16x1x32xf32> to vector<16x16x32xf32>
    %112 = vector.broadcast %110 : vector<1x16x32xf32> to vector<16x16x32xf32>
    %113 = arith.addf %111, %112 : vector<16x16x32xf32>
    %cst_73 = arith.constant 0.000000e+00 : f32
    %114 = vector.broadcast %cst_73 : f32 to vector<16x16x32xf32>
    %115 = arith.cmpf ogt, %113, %114 : vector<16x16x32xf32>
    %cst_74 = arith.constant 2.000000e-01 : f32
    %116 = vector.broadcast %cst_74 : f32 to vector<16x16x32xf32>
    %117 = arith.mulf %116, %113 : vector<16x16x32xf32>
    %118 = arith.select %115, %113, %117 : vector<16x16x32xi1>, vector<16x16x32xf32>
    %c1_75 = arith.constant 1 : index
    %c0_76 = arith.constant 0 : index
    %c0_77 = arith.constant 0 : index
    %119 = vector.load %arg10[%c1_75, %c0_76, %c0_77] : memref<3x1x32xf32, #tpu.memory_space<vmem>>, vector<1x1x32xf32>
    %120 = vector.shape_cast %119 : vector<1x1x32xf32> to vector<1x32xf32>
    %121 = vector.shape_cast %120 : vector<1x32xf32> to vector<1x1x32xf32>
    %122 = vector.broadcast %121 : vector<1x1x32xf32> to vector<16x16x32xf32>
    %123 = arith.mulf %118, %122 : vector<16x16x32xf32>
    %cst_78 = arith.constant dense<0.000000e+00> : vector<16x16xf32>
    %124 = vector.multi_reduction <add>, %123, %cst_78 [2] : vector<16x16x32xf32> to vector<16x16xf32>
    %cst_79 = arith.constant 0.000000e+00 : f32
    %125 = vector.broadcast %cst_79 : f32 to vector<16x16xf32>
    %126 = arith.cmpf ogt, %35, %125 : vector<16x16xf32>
    %cst_80 = arith.constant -1.000000e+30 : f32
    %127 = vector.broadcast %cst_80 : f32 to vector<16x16xf32>
    %128 = arith.select %126, %124, %127 : vector<16x16xi1>, vector<16x16xf32>
    %cst_81 = arith.constant dense<0xFF800000> : vector<16xf32>
    %129 = vector.multi_reduction <maximumf>, %128, %cst_81 [1] : vector<16x16xf32> to vector<16xf32>
    %130 = vector.shape_cast %129 : vector<16xf32> to vector<16x1xf32>
    %131 = vector.broadcast %130 : vector<16x1xf32> to vector<16x16xf32>
    %132 = arith.subf %128, %131 : vector<16x16xf32>
    %133 = math.exp %132 : vector<16x16xf32>
    %cst_82 = arith.constant dense<0.000000e+00> : vector<16xf32>
    %134 = vector.multi_reduction <add>, %133, %cst_82 [1] : vector<16x16xf32> to vector<16xf32>
    %135 = vector.shape_cast %134 : vector<16xf32> to vector<16x1xf32>
    %136 = tpu.reciprocal %135 {approx = true} : vector<16x1xf32> -> vector<16x1xf32>
    %137 = vector.broadcast %136 : vector<16x1xf32> to vector<16x16xf32>
    %138 = arith.mulf %133, %137 : vector<16x16xf32>
    %cst_83 = arith.constant dense<0.000000e+00> : vector<16x32xf32>
    %139 = tpu.matmul %138, %107, %cst_83 {dimension_numbers = #tpu.dot_dimension_numbers<[1], [0], [0], [1], [0, 0, 1, 1], [], []>} : vector<16x16xf32>, vector<16x32xf32>, vector<16x32xf32> -> vector<16x32xf32>
    %c1_84 = arith.constant 1 : index
    %c0_85 = arith.constant 0 : index
    %c0_86 = arith.constant 0 : index
    %140 = vector.load %arg11[%c1_84, %c0_85, %c0_86] : memref<3x1x32xf32, #tpu.memory_space<vmem>>, vector<1x1x32xf32>
    %141 = vector.shape_cast %140 : vector<1x1x32xf32> to vector<1x32xf32>
    %142 = vector.broadcast %141 : vector<1x32xf32> to vector<16x32xf32>
    %143 = arith.addf %139, %142 : vector<16x32xf32>
    %cst_87 = arith.constant 0.000000e+00 : f32
    %144 = vector.broadcast %cst_87 : f32 to vector<16x32xf32>
    %145 = arith.maximumf %143, %144 : vector<16x32xf32>
    %c5 = arith.constant 5 : index
    %c0_88 = arith.constant 0 : index
    %c0_89 = arith.constant 0 : index
    %146 = vector.load %arg6[%c5, %c0_88, %c0_89] : memref<6x32x32xf32, #tpu.memory_space<vmem>>, vector<1x32x32xf32>
    %147 = vector.shape_cast %146 : vector<1x32x32xf32> to vector<32x32xf32>
    %cst_90 = arith.constant dense<0.000000e+00> : vector<16x32xf32>
    %148 = tpu.matmul %145, %147, %cst_90 {dimension_numbers = #tpu.dot_dimension_numbers<[1], [0], [0], [1], [0, 0, 1, 1], [], []>} : vector<16x32xf32>, vector<32x32xf32>, vector<16x32xf32> -> vector<16x32xf32>
    %c5_91 = arith.constant 5 : index
    %c0_92 = arith.constant 0 : index
    %c0_93 = arith.constant 0 : index
    %149 = vector.load %arg7[%c5_91, %c0_92, %c0_93] : memref<6x1x32xf32, #tpu.memory_space<vmem>>, vector<1x1x32xf32>
    %150 = vector.shape_cast %149 : vector<1x1x32xf32> to vector<1x32xf32>
    %151 = vector.broadcast %150 : vector<1x32xf32> to vector<16x32xf32>
    %152 = arith.addf %148, %151 : vector<16x32xf32>
    %cst_94 = arith.constant 0.000000e+00 : f32
    %153 = vector.broadcast %cst_94 : f32 to vector<16x32xf32>
    %154 = arith.maximumf %152, %153 : vector<16x32xf32>
    %c2_95 = arith.constant 2 : index
    %c0_96 = arith.constant 0 : index
    %c0_97 = arith.constant 0 : index
    %155 = vector.load %arg8[%c2_95, %c0_96, %c0_97] : memref<3x32x64xf32, #tpu.memory_space<vmem>>, vector<1x32x64xf32>
    %156 = vector.shape_cast %155 : vector<1x32x64xf32> to vector<32x64xf32>
    %cst_98 = arith.constant dense<0.000000e+00> : vector<16x64xf32>
    %157 = tpu.matmul %154, %156, %cst_98 {dimension_numbers = #tpu.dot_dimension_numbers<[1], [0], [0], [1], [0, 0, 1, 1], [], []>} : vector<16x32xf32>, vector<32x64xf32>, vector<16x64xf32> -> vector<16x64xf32>
    %c2_99 = arith.constant 2 : index
    %c0_100 = arith.constant 0 : index
    %c0_101 = arith.constant 0 : index
    %158 = vector.load %arg9[%c2_99, %c0_100, %c0_101] : memref<3x1x64xf32, #tpu.memory_space<vmem>>, vector<1x1x64xf32>
    %159 = vector.shape_cast %158 : vector<1x1x64xf32> to vector<1x64xf32>
    %160 = vector.broadcast %159 : vector<1x64xf32> to vector<16x64xf32>
    %161 = arith.addf %157, %160 : vector<16x64xf32>
    %162 = vector.extract_strided_slice %161 {offsets = [0, 0], sizes = [16, 32], strides = [1, 1]} : vector<16x64xf32> to vector<16x32xf32>
    %163 = vector.extract_strided_slice %161 {offsets = [0, 32], sizes = [16, 32], strides = [1, 1]} : vector<16x64xf32> to vector<16x32xf32>
    %164 = vector.shape_cast %163 : vector<16x32xf32> to vector<16x1x32xf32>
    %165 = vector.shape_cast %162 : vector<16x32xf32> to vector<1x16x32xf32>
    %166 = vector.broadcast %164 : vector<16x1x32xf32> to vector<16x16x32xf32>
    %167 = vector.broadcast %165 : vector<1x16x32xf32> to vector<16x16x32xf32>
    %168 = arith.addf %166, %167 : vector<16x16x32xf32>
    %cst_102 = arith.constant 0.000000e+00 : f32
    %169 = vector.broadcast %cst_102 : f32 to vector<16x16x32xf32>
    %170 = arith.cmpf ogt, %168, %169 : vector<16x16x32xf32>
    %cst_103 = arith.constant 2.000000e-01 : f32
    %171 = vector.broadcast %cst_103 : f32 to vector<16x16x32xf32>
    %172 = arith.mulf %171, %168 : vector<16x16x32xf32>
    %173 = arith.select %170, %168, %172 : vector<16x16x32xi1>, vector<16x16x32xf32>
    %c2_104 = arith.constant 2 : index
    %c0_105 = arith.constant 0 : index
    %c0_106 = arith.constant 0 : index
    %174 = vector.load %arg10[%c2_104, %c0_105, %c0_106] : memref<3x1x32xf32, #tpu.memory_space<vmem>>, vector<1x1x32xf32>
    %175 = vector.shape_cast %174 : vector<1x1x32xf32> to vector<1x32xf32>
    %176 = vector.shape_cast %175 : vector<1x32xf32> to vector<1x1x32xf32>
    %177 = vector.broadcast %176 : vector<1x1x32xf32> to vector<16x16x32xf32>
    %178 = arith.mulf %173, %177 : vector<16x16x32xf32>
    %cst_107 = arith.constant dense<0.000000e+00> : vector<16x16xf32>
    %179 = vector.multi_reduction <add>, %178, %cst_107 [2] : vector<16x16x32xf32> to vector<16x16xf32>
    %cst_108 = arith.constant 0.000000e+00 : f32
    %180 = vector.broadcast %cst_108 : f32 to vector<16x16xf32>
    %181 = arith.cmpf ogt, %35, %180 : vector<16x16xf32>
    %cst_109 = arith.constant -1.000000e+30 : f32
    %182 = vector.broadcast %cst_109 : f32 to vector<16x16xf32>
    %183 = arith.select %181, %179, %182 : vector<16x16xi1>, vector<16x16xf32>
    %cst_110 = arith.constant dense<0xFF800000> : vector<16xf32>
    %184 = vector.multi_reduction <maximumf>, %183, %cst_110 [1] : vector<16x16xf32> to vector<16xf32>
    %185 = vector.shape_cast %184 : vector<16xf32> to vector<16x1xf32>
    %186 = vector.broadcast %185 : vector<16x1xf32> to vector<16x16xf32>
    %187 = arith.subf %183, %186 : vector<16x16xf32>
    %188 = math.exp %187 : vector<16x16xf32>
    %cst_111 = arith.constant dense<0.000000e+00> : vector<16xf32>
    %189 = vector.multi_reduction <add>, %188, %cst_111 [1] : vector<16x16xf32> to vector<16xf32>
    %190 = vector.shape_cast %189 : vector<16xf32> to vector<16x1xf32>
    %191 = tpu.reciprocal %190 {approx = true} : vector<16x1xf32> -> vector<16x1xf32>
    %192 = vector.broadcast %191 : vector<16x1xf32> to vector<16x16xf32>
    %193 = arith.mulf %188, %192 : vector<16x16xf32>
    %cst_112 = arith.constant dense<0.000000e+00> : vector<16x32xf32>
    %194 = tpu.matmul %193, %162, %cst_112 {dimension_numbers = #tpu.dot_dimension_numbers<[1], [0], [0], [1], [0, 0, 1, 1], [], []>} : vector<16x16xf32>, vector<16x32xf32>, vector<16x32xf32> -> vector<16x32xf32>
    %c2_113 = arith.constant 2 : index
    %c0_114 = arith.constant 0 : index
    %c0_115 = arith.constant 0 : index
    %195 = vector.load %arg11[%c2_113, %c0_114, %c0_115] : memref<3x1x32xf32, #tpu.memory_space<vmem>>, vector<1x1x32xf32>
    %196 = vector.shape_cast %195 : vector<1x1x32xf32> to vector<1x32xf32>
    %197 = vector.broadcast %196 : vector<1x32xf32> to vector<16x32xf32>
    %198 = arith.addf %194, %197 : vector<16x32xf32>
    %cst_116 = arith.constant 0.000000e+00 : f32
    %199 = vector.broadcast %cst_116 : f32 to vector<16x32xf32>
    %200 = arith.maximumf %198, %199 : vector<16x32xf32>
    %c0_117 = arith.constant 0 : index
    %c0_118 = arith.constant 0 : index
    %201 = vector.load %arg12[%c0_117, %c0_118] : memref<32x64xf32, #tpu.memory_space<vmem>>, vector<32x64xf32>
    %cst_119 = arith.constant dense<0.000000e+00> : vector<16x64xf32>
    %202 = tpu.matmul %200, %201, %cst_119 {dimension_numbers = #tpu.dot_dimension_numbers<[1], [0], [0], [1], [0, 0, 1, 1], [], []>} : vector<16x32xf32>, vector<32x64xf32>, vector<16x64xf32> -> vector<16x64xf32>
    %c0_120 = arith.constant 0 : index
    %c0_121 = arith.constant 0 : index
    %203 = vector.load %arg13[%c0_120, %c0_121] : memref<1x64xf32, #tpu.memory_space<vmem>>, vector<1x64xf32>
    %204 = vector.broadcast %203 : vector<1x64xf32> to vector<16x64xf32>
    %205 = arith.addf %202, %204 : vector<16x64xf32>
    %c0_122 = arith.constant 0 : index
    %c0_123 = arith.constant 0 : index
    %206 = vector.load %arg3[%c0_122, %c0_123] : memref<16x16xf32, #tpu.memory_space<vmem>>, vector<16x16xf32>
    %cst_124 = arith.constant dense<0.000000e+00> : vector<16x64xf32>
    %207 = tpu.matmul %206, %205, %cst_124 {dimension_numbers = #tpu.dot_dimension_numbers<[1], [0], [0], [1], [0, 0, 1, 1], [], []>} : vector<16x16xf32>, vector<16x64xf32>, vector<16x64xf32> -> vector<16x64xf32>
    %c0_125 = arith.constant 0 : index
    %c0_126 = arith.constant 0 : index
    %208 = vector.load %arg14[%c0_125, %c0_126] : memref<1x64xf32, #tpu.memory_space<vmem>>, vector<1x64xf32>
    %209 = vector.broadcast %208 : vector<1x64xf32> to vector<16x64xf32>
    %210 = arith.addf %207, %209 : vector<16x64xf32>
    %c0_127 = arith.constant 0 : index
    %c0_128 = arith.constant 0 : index
    %211 = vector.load %arg15[%c0_127, %c0_128] : memref<16x64xf32, #tpu.memory_space<vmem>>, vector<16x64xf32>
    tpu.vector_store %arg15[%c0_127, %c0_128], %210 {strides = array<i32>} : memref<16x64xf32, #tpu.memory_space<vmem>>, vector<16x64xf32>,
    return
  }
  func.func @transform_0(%arg0: i32) -> (i32, i32) {
    %c0_i32 = arith.constant 0 : i32
    %c0_i32_0 = arith.constant 0 : i32
    %c0_i32_1 = arith.constant 0 : i32
    return %c0_i32, %c0_i32_0 : i32, i32
  }
  func.func @transform_1(%arg0: i32) -> (i32, i32) {
    %c0_i32 = arith.constant 0 : i32
    %c0_i32_0 = arith.constant 0 : i32
    %c0_i32_1 = arith.constant 0 : i32
    return %c0_i32, %c0_i32_0 : i32, i32
  }
  func.func @transform_2(%arg0: i32) -> (i32, i32) {
    %c0_i32 = arith.constant 0 : i32
    %c0_i32_0 = arith.constant 0 : i32
    %c0_i32_1 = arith.constant 0 : i32
    return %c0_i32, %c0_i32_0 : i32, i32
  }
  func.func @transform_3(%arg0: i32) -> (i32, i32) {
    %c0_i32 = arith.constant 0 : i32
    %c0_i32_0 = arith.constant 0 : i32
    %c0_i32_1 = arith.constant 0 : i32
    return %c0_i32, %c0_i32_0 : i32, i32
  }
  func.func @transform_4(%arg0: i32) -> (i32, i32) {
    %c0_i32 = arith.constant 0 : i32
    %c0_i32_0 = arith.constant 0 : i32
    %c0_i32_1 = arith.constant 0 : i32
    return %c0_i32, %c0_i32_0 : i32, i32
  }
  func.func @transform_5(%arg0: i32) -> (i32, i32, i32) {
    %c0_i32 = arith.constant 0 : i32
    %c0_i32_0 = arith.constant 0 : i32
    %c0_i32_1 = arith.constant 0 : i32
    %c0_i32_2 = arith.constant 0 : i32
    return %c0_i32, %c0_i32_0, %c0_i32_1 : i32, i32, i32
  }
  func.func @transform_6(%arg0: i32) -> (i32, i32, i32) {
    %c0_i32 = arith.constant 0 : i32
    %c0_i32_0 = arith.constant 0 : i32
    %c0_i32_1 = arith.constant 0 : i32
    %c0_i32_2 = arith.constant 0 : i32
    return %c0_i32, %c0_i32_0, %c0_i32_1 : i32, i32, i32
  }
  func.func @transform_7(%arg0: i32) -> (i32, i32, i32) {
    %c0_i32 = arith.constant 0 : i32
    %c0_i32_0 = arith.constant 0 : i32
    %c0_i32_1 = arith.constant 0 : i32
    %c0_i32_2 = arith.constant 0 : i32
    return %c0_i32, %c0_i32_0, %c0_i32_1 : i32, i32, i32
  }
  func.func @transform_8(%arg0: i32) -> (i32, i32, i32) {
    %c0_i32 = arith.constant 0 : i32
    %c0_i32_0 = arith.constant 0 : i32
    %c0_i32_1 = arith.constant 0 : i32
    %c0_i32_2 = arith.constant 0 : i32
    return %c0_i32, %c0_i32_0, %c0_i32_1 : i32, i32, i32
  }
  func.func @transform_9(%arg0: i32) -> (i32, i32, i32) {
    %c0_i32 = arith.constant 0 : i32
    %c0_i32_0 = arith.constant 0 : i32
    %c0_i32_1 = arith.constant 0 : i32
    %c0_i32_2 = arith.constant 0 : i32
    return %c0_i32, %c0_i32_0, %c0_i32_1 : i32, i32, i32
  }
  func.func @transform_10(%arg0: i32) -> (i32, i32, i32) {
    %c0_i32 = arith.constant 0 : i32
    %c0_i32_0 = arith.constant 0 : i32
    %c0_i32_1 = arith.constant 0 : i32
    %c0_i32_2 = arith.constant 0 : i32
    return %c0_i32, %c0_i32_0, %c0_i32_1 : i32, i32, i32
  }
  func.func @transform_11(%arg0: i32) -> (i32, i32) {
    %c0_i32 = arith.constant 0 : i32
    %c0_i32_0 = arith.constant 0 : i32
    %c0_i32_1 = arith.constant 0 : i32
    return %c0_i32, %c0_i32_0 : i32, i32
  }
  func.func @transform_12(%arg0: i32) -> (i32, i32) {
    %c0_i32 = arith.constant 0 : i32
    %c0_i32_0 = arith.constant 0 : i32
    %c0_i32_1 = arith.constant 0 : i32
    return %c0_i32, %c0_i32_0 : i32, i32
  }
  func.func @transform_13(%arg0: i32) -> (i32, i32) {
    %c0_i32 = arith.constant 0 : i32
    %c0_i32_0 = arith.constant 0 : i32
    %c0_i32_1 = arith.constant 0 : i32
    return %c0_i32, %c0_i32_0 : i32, i32
  }
  func.func @transform_14(%arg0: i32) -> (i32, i32) {
    %c0_i32 = arith.constant 0 : i32
    %c0_i32_0 = arith.constant 0 : i32
    %c0_i32_1 = arith.constant 0 : i32
    return %c0_i32, %c0_i32_0 : i32, i32
  }
}

module attributes {stable_mosaic.version = 11 : i64} {
  func.func @_gmt_kernel(%arg0: i32, %arg1: memref<1x16x64xf32, #tpu.memory_space<vmem>>, %arg2: memref<75x32xf32, #tpu.memory_space<vmem>>, %arg3: memref<1x32xf32, #tpu.memory_space<vmem>>, %arg4: memref<4x1x32xf32, #tpu.memory_space<vmem>>, %arg5: memref<3x32x32xf32, #tpu.memory_space<vmem>>, %arg6: memref<3x1x32xf32, #tpu.memory_space<vmem>>, %arg7: memref<32x96xf32, #tpu.memory_space<vmem>>, %arg8: memref<1x96xf32, #tpu.memory_space<vmem>>, %arg9: memref<32x64xf32, #tpu.memory_space<vmem>>, %arg10: memref<1x64xf32, #tpu.memory_space<vmem>>, %arg11: memref<32x1xf32, #tpu.memory_space<vmem>>, %arg12: memref<1x1xf32, #tpu.memory_space<vmem>>, %arg13: memref<1x1x1xf32, #tpu.memory_space<vmem>>) attributes {dimension_semantics = [#tpu.dimension_semantics<parallel>], iteration_bounds = array<i64: 2>, scalar_prefetch = 0 : i64, scratch_operands = 0 : i64, tpu.core_type = #tpu.core_type<tc>, window_params = [{transform_indices = @transform_0, window_bounds = array<i64: 1, 16, 64>}, {pipeline_mode = #tpu.pipeline_mode<synchronous>, transform_indices = @transform_1, window_bounds = array<i64: 75, 32>}, {pipeline_mode = #tpu.pipeline_mode<synchronous>, transform_indices = @transform_2, window_bounds = array<i64: 1, 32>}, {pipeline_mode = #tpu.pipeline_mode<synchronous>, transform_indices = @transform_3, window_bounds = array<i64: 4, 1, 32>}, {pipeline_mode = #tpu.pipeline_mode<synchronous>, transform_indices = @transform_4, window_bounds = array<i64: 3, 32, 32>}, {pipeline_mode = #tpu.pipeline_mode<synchronous>, transform_indices = @transform_5, window_bounds = array<i64: 3, 1, 32>}, {pipeline_mode = #tpu.pipeline_mode<synchronous>, transform_indices = @transform_6, window_bounds = array<i64: 32, 96>}, {pipeline_mode = #tpu.pipeline_mode<synchronous>, transform_indices = @transform_7, window_bounds = array<i64: 1, 96>}, {pipeline_mode = #tpu.pipeline_mode<synchronous>, transform_indices = @transform_8, window_bounds = array<i64: 32, 64>}, {pipeline_mode = #tpu.pipeline_mode<synchronous>, transform_indices = @transform_9, window_bounds = array<i64: 1, 64>}, {pipeline_mode = #tpu.pipeline_mode<synchronous>, transform_indices = @transform_10, window_bounds = array<i64: 32, 1>}, {pipeline_mode = #tpu.pipeline_mode<synchronous>, transform_indices = @transform_11, window_bounds = array<i64: 1, 1>}, {transform_indices = @transform_12, window_bounds = array<i64: 1, 1, 1>}]} {
    %c0 = arith.constant 0 : index
    %c0_0 = arith.constant 0 : index
    %c0_1 = arith.constant 0 : index
    %0 = vector.load %arg1[%c0, %c0_0, %c0_1] : memref<1x16x64xf32, #tpu.memory_space<vmem>>, vector<1x16x64xf32>
    %1 = vector.shape_cast %0 : vector<1x16x64xf32> to vector<16x64xf32>
    %2 = vector.extract_strided_slice %1 {offsets = [0, 0], sizes = [16, 32], strides = [1, 1]} : vector<16x64xf32> to vector<16x32xf32>
    %3 = vector.extract_strided_slice %1 {offsets = [0, 32], sizes = [16, 32], strides = [1, 1]} : vector<16x64xf32> to vector<16x32xf32>
    %c0_2 = arith.constant 0 : index
    %c0_3 = arith.constant 0 : index
    %4 = vector.load %arg2[%c0_2, %c0_3] : memref<75x32xf32, #tpu.memory_space<vmem>>, vector<75x32xf32>
    %cst = arith.constant 0.000000e+00 : f32
    %5 = vector.broadcast %cst : f32 to vector<75x32xf32>
    %c0_4 = arith.constant 0 : index
    %c0_5 = arith.constant 0 : index
    %c0_6 = arith.constant 0 : index
    %6 = vector.load %arg4[%c0_4, %c0_5, %c0_6] : memref<4x1x32xf32, #tpu.memory_space<vmem>>, vector<1x1x32xf32>
    %7 = vector.shape_cast %6 : vector<1x1x32xf32> to vector<1x32xf32>
    %8 = vector.broadcast %7 : vector<1x32xf32> to vector<75x32xf32>
    %9 = arith.mulf %4, %8 : vector<75x32xf32>
    %cst_7 = arith.constant dense<0.000000e+00> : vector<75x16xf32>
    %10 = tpu.matmul %9, %2, %cst_7 {dimension_numbers = #tpu.dot_dimension_numbers<[1], [1], [0], [0], [0, 0, 1, 0], [], []>} : vector<75x32xf32>, vector<16x32xf32>, vector<75x16xf32> -> vector<75x16xf32>
    %cst_8 = arith.constant 0.176776692 : f32
    %11 = vector.broadcast %cst_8 : f32 to vector<75x16xf32>
    %12 = arith.mulf %10, %11 : vector<75x16xf32>
    %cst_9 = arith.constant dense<0xFF800000> : vector<16xf32>
    %13 = vector.multi_reduction <maximumf>, %12, %cst_9 [0] : vector<75x16xf32> to vector<16xf32>
    %14 = vector.shape_cast %13 : vector<16xf32> to vector<1x16xf32>
    %15 = vector.broadcast %14 : vector<1x16xf32> to vector<75x16xf32>
    %16 = arith.subf %12, %15 : vector<75x16xf32>
    %17 = math.exp %16 : vector<75x16xf32>
    %cst_10 = arith.constant dense<0.000000e+00> : vector<16xf32>
    %18 = vector.multi_reduction <add>, %17, %cst_10 [0] : vector<75x16xf32> to vector<16xf32>
    %19 = vector.shape_cast %18 : vector<16xf32> to vector<1x16xf32>
    %20 = tpu.reciprocal %19 {approx = true} : vector<1x16xf32> -> vector<1x16xf32>
    %21 = vector.broadcast %20 : vector<1x16xf32> to vector<75x16xf32>
    %22 = arith.mulf %17, %21 : vector<75x16xf32>
    %23 = vector.broadcast %7 : vector<1x32xf32> to vector<16x32xf32>
    %24 = arith.mulf %3, %23 : vector<16x32xf32>
    %cst_11 = arith.constant dense<0.000000e+00> : vector<75x32xf32>
    %25 = tpu.matmul %22, %24, %cst_11 {dimension_numbers = #tpu.dot_dimension_numbers<[1], [0], [0], [1], [0, 0, 1, 1], [], []>} : vector<75x16xf32>, vector<16x32xf32>, vector<75x32xf32> -> vector<75x32xf32>
    %26 = arith.addf %5, %25 : vector<75x32xf32>
    %c1 = arith.constant 1 : index
    %c0_12 = arith.constant 0 : index
    %c0_13 = arith.constant 0 : index
    %27 = vector.load %arg4[%c1, %c0_12, %c0_13] : memref<4x1x32xf32, #tpu.memory_space<vmem>>, vector<1x1x32xf32>
    %28 = vector.shape_cast %27 : vector<1x1x32xf32> to vector<1x32xf32>
    %29 = vector.broadcast %28 : vector<1x32xf32> to vector<75x32xf32>
    %30 = arith.mulf %4, %29 : vector<75x32xf32>
    %cst_14 = arith.constant dense<0.000000e+00> : vector<75x16xf32>
    %31 = tpu.matmul %30, %2, %cst_14 {dimension_numbers = #tpu.dot_dimension_numbers<[1], [1], [0], [0], [0, 0, 1, 0], [], []>} : vector<75x32xf32>, vector<16x32xf32>, vector<75x16xf32> -> vector<75x16xf32>
    %cst_15 = arith.constant 0.176776692 : f32
    %32 = vector.broadcast %cst_15 : f32 to vector<75x16xf32>
    %33 = arith.mulf %31, %32 : vector<75x16xf32>
    %cst_16 = arith.constant dense<0xFF800000> : vector<16xf32>
    %34 = vector.multi_reduction <maximumf>, %33, %cst_16 [0] : vector<75x16xf32> to vector<16xf32>
    %35 = vector.shape_cast %34 : vector<16xf32> to vector<1x16xf32>
    %36 = vector.broadcast %35 : vector<1x16xf32> to vector<75x16xf32>
    %37 = arith.subf %33, %36 : vector<75x16xf32>
    %38 = math.exp %37 : vector<75x16xf32>
    %cst_17 = arith.constant dense<0.000000e+00> : vector<16xf32>
    %39 = vector.multi_reduction <add>, %38, %cst_17 [0] : vector<75x16xf32> to vector<16xf32>
    %40 = vector.shape_cast %39 : vector<16xf32> to vector<1x16xf32>
    %41 = tpu.reciprocal %40 {approx = true} : vector<1x16xf32> -> vector<1x16xf32>
    %42 = vector.broadcast %41 : vector<1x16xf32> to vector<75x16xf32>
    %43 = arith.mulf %38, %42 : vector<75x16xf32>
    %44 = vector.broadcast %28 : vector<1x32xf32> to vector<16x32xf32>
    %45 = arith.mulf %3, %44 : vector<16x32xf32>
    %cst_18 = arith.constant dense<0.000000e+00> : vector<75x32xf32>
    %46 = tpu.matmul %43, %45, %cst_18 {dimension_numbers = #tpu.dot_dimension_numbers<[1], [0], [0], [1], [0, 0, 1, 1], [], []>} : vector<75x16xf32>, vector<16x32xf32>, vector<75x32xf32> -> vector<75x32xf32>
    %47 = arith.addf %26, %46 : vector<75x32xf32>
    %c2 = arith.constant 2 : index
    %c0_19 = arith.constant 0 : index
    %c0_20 = arith.constant 0 : index
    %48 = vector.load %arg4[%c2, %c0_19, %c0_20] : memref<4x1x32xf32, #tpu.memory_space<vmem>>, vector<1x1x32xf32>
    %49 = vector.shape_cast %48 : vector<1x1x32xf32> to vector<1x32xf32>
    %50 = vector.broadcast %49 : vector<1x32xf32> to vector<75x32xf32>
    %51 = arith.mulf %4, %50 : vector<75x32xf32>
    %cst_21 = arith.constant dense<0.000000e+00> : vector<75x16xf32>
    %52 = tpu.matmul %51, %2, %cst_21 {dimension_numbers = #tpu.dot_dimension_numbers<[1], [1], [0], [0], [0, 0, 1, 0], [], []>} : vector<75x32xf32>, vector<16x32xf32>, vector<75x16xf32> -> vector<75x16xf32>
    %cst_22 = arith.constant 0.176776692 : f32
    %53 = vector.broadcast %cst_22 : f32 to vector<75x16xf32>
    %54 = arith.mulf %52, %53 : vector<75x16xf32>
    %cst_23 = arith.constant dense<0xFF800000> : vector<16xf32>
    %55 = vector.multi_reduction <maximumf>, %54, %cst_23 [0] : vector<75x16xf32> to vector<16xf32>
    %56 = vector.shape_cast %55 : vector<16xf32> to vector<1x16xf32>
    %57 = vector.broadcast %56 : vector<1x16xf32> to vector<75x16xf32>
    %58 = arith.subf %54, %57 : vector<75x16xf32>
    %59 = math.exp %58 : vector<75x16xf32>
    %cst_24 = arith.constant dense<0.000000e+00> : vector<16xf32>
    %60 = vector.multi_reduction <add>, %59, %cst_24 [0] : vector<75x16xf32> to vector<16xf32>
    %61 = vector.shape_cast %60 : vector<16xf32> to vector<1x16xf32>
    %62 = tpu.reciprocal %61 {approx = true} : vector<1x16xf32> -> vector<1x16xf32>
    %63 = vector.broadcast %62 : vector<1x16xf32> to vector<75x16xf32>
    %64 = arith.mulf %59, %63 : vector<75x16xf32>
    %65 = vector.broadcast %49 : vector<1x32xf32> to vector<16x32xf32>
    %66 = arith.mulf %3, %65 : vector<16x32xf32>
    %cst_25 = arith.constant dense<0.000000e+00> : vector<75x32xf32>
    %67 = tpu.matmul %64, %66, %cst_25 {dimension_numbers = #tpu.dot_dimension_numbers<[1], [0], [0], [1], [0, 0, 1, 1], [], []>} : vector<75x16xf32>, vector<16x32xf32>, vector<75x32xf32> -> vector<75x32xf32>
    %68 = arith.addf %47, %67 : vector<75x32xf32>
    %c3 = arith.constant 3 : index
    %c0_26 = arith.constant 0 : index
    %c0_27 = arith.constant 0 : index
    %69 = vector.load %arg4[%c3, %c0_26, %c0_27] : memref<4x1x32xf32, #tpu.memory_space<vmem>>, vector<1x1x32xf32>
    %70 = vector.shape_cast %69 : vector<1x1x32xf32> to vector<1x32xf32>
    %71 = vector.broadcast %70 : vector<1x32xf32> to vector<75x32xf32>
    %72 = arith.mulf %4, %71 : vector<75x32xf32>
    %cst_28 = arith.constant dense<0.000000e+00> : vector<75x16xf32>
    %73 = tpu.matmul %72, %2, %cst_28 {dimension_numbers = #tpu.dot_dimension_numbers<[1], [1], [0], [0], [0, 0, 1, 0], [], []>} : vector<75x32xf32>, vector<16x32xf32>, vector<75x16xf32> -> vector<75x16xf32>
    %cst_29 = arith.constant 0.176776692 : f32
    %74 = vector.broadcast %cst_29 : f32 to vector<75x16xf32>
    %75 = arith.mulf %73, %74 : vector<75x16xf32>
    %cst_30 = arith.constant dense<0xFF800000> : vector<16xf32>
    %76 = vector.multi_reduction <maximumf>, %75, %cst_30 [0] : vector<75x16xf32> to vector<16xf32>
    %77 = vector.shape_cast %76 : vector<16xf32> to vector<1x16xf32>
    %78 = vector.broadcast %77 : vector<1x16xf32> to vector<75x16xf32>
    %79 = arith.subf %75, %78 : vector<75x16xf32>
    %80 = math.exp %79 : vector<75x16xf32>
    %cst_31 = arith.constant dense<0.000000e+00> : vector<16xf32>
    %81 = vector.multi_reduction <add>, %80, %cst_31 [0] : vector<75x16xf32> to vector<16xf32>
    %82 = vector.shape_cast %81 : vector<16xf32> to vector<1x16xf32>
    %83 = tpu.reciprocal %82 {approx = true} : vector<1x16xf32> -> vector<1x16xf32>
    %84 = vector.broadcast %83 : vector<1x16xf32> to vector<75x16xf32>
    %85 = arith.mulf %80, %84 : vector<75x16xf32>
    %86 = vector.broadcast %70 : vector<1x32xf32> to vector<16x32xf32>
    %87 = arith.mulf %3, %86 : vector<16x32xf32>
    %cst_32 = arith.constant dense<0.000000e+00> : vector<75x32xf32>
    %88 = tpu.matmul %85, %87, %cst_32 {dimension_numbers = #tpu.dot_dimension_numbers<[1], [0], [0], [1], [0, 0, 1, 1], [], []>} : vector<75x16xf32>, vector<16x32xf32>, vector<75x32xf32> -> vector<75x32xf32>
    %89 = arith.addf %68, %88 : vector<75x32xf32>
    %90 = arith.addf %4, %89 : vector<75x32xf32>
    %c0_33 = arith.constant 0 : index
    %c0_34 = arith.constant 0 : index
    %c0_35 = arith.constant 0 : index
    %91 = vector.load %arg5[%c0_33, %c0_34, %c0_35] : memref<3x32x32xf32, #tpu.memory_space<vmem>>, vector<1x32x32xf32>
    %92 = vector.shape_cast %91 : vector<1x32x32xf32> to vector<32x32xf32>
    %cst_36 = arith.constant dense<0.000000e+00> : vector<75x32xf32>
    %93 = tpu.matmul %90, %92, %cst_36 {dimension_numbers = #tpu.dot_dimension_numbers<[1], [0], [0], [1], [0, 0, 1, 1], [], []>} : vector<75x32xf32>, vector<32x32xf32>, vector<75x32xf32> -> vector<75x32xf32>
    %c0_37 = arith.constant 0 : index
    %c0_38 = arith.constant 0 : index
    %c0_39 = arith.constant 0 : index
    %94 = vector.load %arg6[%c0_37, %c0_38, %c0_39] : memref<3x1x32xf32, #tpu.memory_space<vmem>>, vector<1x1x32xf32>
    %95 = vector.shape_cast %94 : vector<1x1x32xf32> to vector<1x32xf32>
    %96 = vector.broadcast %95 : vector<1x32xf32> to vector<75x32xf32>
    %97 = arith.addf %93, %96 : vector<75x32xf32>
    %cst_40 = arith.constant 0.000000e+00 : f32
    %98 = vector.broadcast %cst_40 : f32 to vector<75x32xf32>
    %99 = arith.maximumf %97, %98 : vector<75x32xf32>
    %100 = arith.addf %90, %99 : vector<75x32xf32>
    %c0_41 = arith.constant 0 : index
    %c0_42 = arith.constant 0 : index
    %101 = vector.load %arg7[%c0_41, %c0_42] : memref<32x96xf32, #tpu.memory_space<vmem>>, vector<32x96xf32>
    %cst_43 = arith.constant dense<0.000000e+00> : vector<75x96xf32>
    %102 = tpu.matmul %100, %101, %cst_43 {dimension_numbers = #tpu.dot_dimension_numbers<[1], [0], [0], [1], [0, 0, 1, 1], [], []>} : vector<75x32xf32>, vector<32x96xf32>, vector<75x96xf32> -> vector<75x96xf32>
    %c0_44 = arith.constant 0 : index
    %c0_45 = arith.constant 0 : index
    %103 = vector.load %arg8[%c0_44, %c0_45] : memref<1x96xf32, #tpu.memory_space<vmem>>, vector<1x96xf32>
    %104 = vector.broadcast %103 : vector<1x96xf32> to vector<75x96xf32>
    %105 = arith.addf %102, %104 : vector<75x96xf32>
    %106 = vector.extract_strided_slice %105 {offsets = [0, 0], sizes = [75, 32], strides = [1, 1]} : vector<75x96xf32> to vector<75x32xf32>
    %107 = vector.extract_strided_slice %105 {offsets = [0, 32], sizes = [75, 32], strides = [1, 1]} : vector<75x96xf32> to vector<75x32xf32>
    %108 = vector.extract_strided_slice %105 {offsets = [0, 64], sizes = [75, 32], strides = [1, 1]} : vector<75x96xf32> to vector<75x32xf32>
    %cst_46 = arith.constant 0.000000e+00 : f32
    %109 = vector.broadcast %cst_46 : f32 to vector<75x32xf32>
    %c0_47 = arith.constant 0 : index
    %c0_48 = arith.constant 0 : index
    %c0_49 = arith.constant 0 : index
    %110 = vector.load %arg4[%c0_47, %c0_48, %c0_49] : memref<4x1x32xf32, #tpu.memory_space<vmem>>, vector<1x1x32xf32>
    %111 = vector.shape_cast %110 : vector<1x1x32xf32> to vector<1x32xf32>
    %112 = vector.broadcast %111 : vector<1x32xf32> to vector<75x32xf32>
    %113 = arith.mulf %106, %112 : vector<75x32xf32>
    %cst_50 = arith.constant dense<0.000000e+00> : vector<75x75xf32>
    %114 = tpu.matmul %113, %107, %cst_50 {dimension_numbers = #tpu.dot_dimension_numbers<[1], [1], [0], [0], [0, 0, 1, 0], [], []>} : vector<75x32xf32>, vector<75x32xf32>, vector<75x75xf32> -> vector<75x75xf32>
    %cst_51 = arith.constant 0.176776692 : f32
    %115 = vector.broadcast %cst_51 : f32 to vector<75x75xf32>
    %116 = arith.mulf %114, %115 : vector<75x75xf32>
    %cst_52 = arith.constant dense<0xFF800000> : vector<75xf32>
    %117 = vector.multi_reduction <maximumf>, %116, %cst_52 [0] : vector<75x75xf32> to vector<75xf32>
    %118 = vector.shape_cast %117 : vector<75xf32> to vector<1x75xf32>
    %119 = vector.broadcast %118 : vector<1x75xf32> to vector<75x75xf32>
    %120 = arith.subf %116, %119 : vector<75x75xf32>
    %121 = math.exp %120 : vector<75x75xf32>
    %cst_53 = arith.constant dense<0.000000e+00> : vector<75xf32>
    %122 = vector.multi_reduction <add>, %121, %cst_53 [0] : vector<75x75xf32> to vector<75xf32>
    %123 = vector.shape_cast %122 : vector<75xf32> to vector<1x75xf32>
    %124 = tpu.reciprocal %123 {approx = true} : vector<1x75xf32> -> vector<1x75xf32>
    %125 = vector.broadcast %124 : vector<1x75xf32> to vector<75x75xf32>
    %126 = arith.mulf %121, %125 : vector<75x75xf32>
    %127 = vector.broadcast %111 : vector<1x32xf32> to vector<75x32xf32>
    %128 = arith.mulf %108, %127 : vector<75x32xf32>
    %cst_54 = arith.constant dense<0.000000e+00> : vector<75x32xf32>
    %129 = tpu.matmul %126, %128, %cst_54 {dimension_numbers = #tpu.dot_dimension_numbers<[1], [0], [0], [1], [0, 0, 1, 1], [], []>} : vector<75x75xf32>, vector<75x32xf32>, vector<75x32xf32> -> vector<75x32xf32>
    %130 = arith.addf %109, %129 : vector<75x32xf32>
    %c1_55 = arith.constant 1 : index
    %c0_56 = arith.constant 0 : index
    %c0_57 = arith.constant 0 : index
    %131 = vector.load %arg4[%c1_55, %c0_56, %c0_57] : memref<4x1x32xf32, #tpu.memory_space<vmem>>, vector<1x1x32xf32>
    %132 = vector.shape_cast %131 : vector<1x1x32xf32> to vector<1x32xf32>
    %133 = vector.broadcast %132 : vector<1x32xf32> to vector<75x32xf32>
    %134 = arith.mulf %106, %133 : vector<75x32xf32>
    %cst_58 = arith.constant dense<0.000000e+00> : vector<75x75xf32>
    %135 = tpu.matmul %134, %107, %cst_58 {dimension_numbers = #tpu.dot_dimension_numbers<[1], [1], [0], [0], [0, 0, 1, 0], [], []>} : vector<75x32xf32>, vector<75x32xf32>, vector<75x75xf32> -> vector<75x75xf32>
    %cst_59 = arith.constant 0.176776692 : f32
    %136 = vector.broadcast %cst_59 : f32 to vector<75x75xf32>
    %137 = arith.mulf %135, %136 : vector<75x75xf32>
    %cst_60 = arith.constant dense<0xFF800000> : vector<75xf32>
    %138 = vector.multi_reduction <maximumf>, %137, %cst_60 [0] : vector<75x75xf32> to vector<75xf32>
    %139 = vector.shape_cast %138 : vector<75xf32> to vector<1x75xf32>
    %140 = vector.broadcast %139 : vector<1x75xf32> to vector<75x75xf32>
    %141 = arith.subf %137, %140 : vector<75x75xf32>
    %142 = math.exp %141 : vector<75x75xf32>
    %cst_61 = arith.constant dense<0.000000e+00> : vector<75xf32>
    %143 = vector.multi_reduction <add>, %142, %cst_61 [0] : vector<75x75xf32> to vector<75xf32>
    %144 = vector.shape_cast %143 : vector<75xf32> to vector<1x75xf32>
    %145 = tpu.reciprocal %144 {approx = true} : vector<1x75xf32> -> vector<1x75xf32>
    %146 = vector.broadcast %145 : vector<1x75xf32> to vector<75x75xf32>
    %147 = arith.mulf %142, %146 : vector<75x75xf32>
    %148 = vector.broadcast %132 : vector<1x32xf32> to vector<75x32xf32>
    %149 = arith.mulf %108, %148 : vector<75x32xf32>
    %cst_62 = arith.constant dense<0.000000e+00> : vector<75x32xf32>
    %150 = tpu.matmul %147, %149, %cst_62 {dimension_numbers = #tpu.dot_dimension_numbers<[1], [0], [0], [1], [0, 0, 1, 1], [], []>} : vector<75x75xf32>, vector<75x32xf32>, vector<75x32xf32> -> vector<75x32xf32>
    %151 = arith.addf %130, %150 : vector<75x32xf32>
    %c2_63 = arith.constant 2 : index
    %c0_64 = arith.constant 0 : index
    %c0_65 = arith.constant 0 : index
    %152 = vector.load %arg4[%c2_63, %c0_64, %c0_65] : memref<4x1x32xf32, #tpu.memory_space<vmem>>, vector<1x1x32xf32>
    %153 = vector.shape_cast %152 : vector<1x1x32xf32> to vector<1x32xf32>
    %154 = vector.broadcast %153 : vector<1x32xf32> to vector<75x32xf32>
    %155 = arith.mulf %106, %154 : vector<75x32xf32>
    %cst_66 = arith.constant dense<0.000000e+00> : vector<75x75xf32>
    %156 = tpu.matmul %155, %107, %cst_66 {dimension_numbers = #tpu.dot_dimension_numbers<[1], [1], [0], [0], [0, 0, 1, 0], [], []>} : vector<75x32xf32>, vector<75x32xf32>, vector<75x75xf32> -> vector<75x75xf32>
    %cst_67 = arith.constant 0.176776692 : f32
    %157 = vector.broadcast %cst_67 : f32 to vector<75x75xf32>
    %158 = arith.mulf %156, %157 : vector<75x75xf32>
    %cst_68 = arith.constant dense<0xFF800000> : vector<75xf32>
    %159 = vector.multi_reduction <maximumf>, %158, %cst_68 [0] : vector<75x75xf32> to vector<75xf32>
    %160 = vector.shape_cast %159 : vector<75xf32> to vector<1x75xf32>
    %161 = vector.broadcast %160 : vector<1x75xf32> to vector<75x75xf32>
    %162 = arith.subf %158, %161 : vector<75x75xf32>
    %163 = math.exp %162 : vector<75x75xf32>
    %cst_69 = arith.constant dense<0.000000e+00> : vector<75xf32>
    %164 = vector.multi_reduction <add>, %163, %cst_69 [0] : vector<75x75xf32> to vector<75xf32>
    %165 = vector.shape_cast %164 : vector<75xf32> to vector<1x75xf32>
    %166 = tpu.reciprocal %165 {approx = true} : vector<1x75xf32> -> vector<1x75xf32>
    %167 = vector.broadcast %166 : vector<1x75xf32> to vector<75x75xf32>
    %168 = arith.mulf %163, %167 : vector<75x75xf32>
    %169 = vector.broadcast %153 : vector<1x32xf32> to vector<75x32xf32>
    %170 = arith.mulf %108, %169 : vector<75x32xf32>
    %cst_70 = arith.constant dense<0.000000e+00> : vector<75x32xf32>
    %171 = tpu.matmul %168, %170, %cst_70 {dimension_numbers = #tpu.dot_dimension_numbers<[1], [0], [0], [1], [0, 0, 1, 1], [], []>} : vector<75x75xf32>, vector<75x32xf32>, vector<75x32xf32> -> vector<75x32xf32>
    %172 = arith.addf %151, %171 : vector<75x32xf32>
    %c3_71 = arith.constant 3 : index
    %c0_72 = arith.constant 0 : index
    %c0_73 = arith.constant 0 : index
    %173 = vector.load %arg4[%c3_71, %c0_72, %c0_73] : memref<4x1x32xf32, #tpu.memory_space<vmem>>, vector<1x1x32xf32>
    %174 = vector.shape_cast %173 : vector<1x1x32xf32> to vector<1x32xf32>
    %175 = vector.broadcast %174 : vector<1x32xf32> to vector<75x32xf32>
    %176 = arith.mulf %106, %175 : vector<75x32xf32>
    %cst_74 = arith.constant dense<0.000000e+00> : vector<75x75xf32>
    %177 = tpu.matmul %176, %107, %cst_74 {dimension_numbers = #tpu.dot_dimension_numbers<[1], [1], [0], [0], [0, 0, 1, 0], [], []>} : vector<75x32xf32>, vector<75x32xf32>, vector<75x75xf32> -> vector<75x75xf32>
    %cst_75 = arith.constant 0.176776692 : f32
    %178 = vector.broadcast %cst_75 : f32 to vector<75x75xf32>
    %179 = arith.mulf %177, %178 : vector<75x75xf32>
    %cst_76 = arith.constant dense<0xFF800000> : vector<75xf32>
    %180 = vector.multi_reduction <maximumf>, %179, %cst_76 [0] : vector<75x75xf32> to vector<75xf32>
    %181 = vector.shape_cast %180 : vector<75xf32> to vector<1x75xf32>
    %182 = vector.broadcast %181 : vector<1x75xf32> to vector<75x75xf32>
    %183 = arith.subf %179, %182 : vector<75x75xf32>
    %184 = math.exp %183 : vector<75x75xf32>
    %cst_77 = arith.constant dense<0.000000e+00> : vector<75xf32>
    %185 = vector.multi_reduction <add>, %184, %cst_77 [0] : vector<75x75xf32> to vector<75xf32>
    %186 = vector.shape_cast %185 : vector<75xf32> to vector<1x75xf32>
    %187 = tpu.reciprocal %186 {approx = true} : vector<1x75xf32> -> vector<1x75xf32>
    %188 = vector.broadcast %187 : vector<1x75xf32> to vector<75x75xf32>
    %189 = arith.mulf %184, %188 : vector<75x75xf32>
    %190 = vector.broadcast %174 : vector<1x32xf32> to vector<75x32xf32>
    %191 = arith.mulf %108, %190 : vector<75x32xf32>
    %cst_78 = arith.constant dense<0.000000e+00> : vector<75x32xf32>
    %192 = tpu.matmul %189, %191, %cst_78 {dimension_numbers = #tpu.dot_dimension_numbers<[1], [0], [0], [1], [0, 0, 1, 1], [], []>} : vector<75x75xf32>, vector<75x32xf32>, vector<75x32xf32> -> vector<75x32xf32>
    %193 = arith.addf %172, %192 : vector<75x32xf32>
    %194 = arith.addf %106, %193 : vector<75x32xf32>
    %c1_79 = arith.constant 1 : index
    %c0_80 = arith.constant 0 : index
    %c0_81 = arith.constant 0 : index
    %195 = vector.load %arg5[%c1_79, %c0_80, %c0_81] : memref<3x32x32xf32, #tpu.memory_space<vmem>>, vector<1x32x32xf32>
    %196 = vector.shape_cast %195 : vector<1x32x32xf32> to vector<32x32xf32>
    %cst_82 = arith.constant dense<0.000000e+00> : vector<75x32xf32>
    %197 = tpu.matmul %194, %196, %cst_82 {dimension_numbers = #tpu.dot_dimension_numbers<[1], [0], [0], [1], [0, 0, 1, 1], [], []>} : vector<75x32xf32>, vector<32x32xf32>, vector<75x32xf32> -> vector<75x32xf32>
    %c1_83 = arith.constant 1 : index
    %c0_84 = arith.constant 0 : index
    %c0_85 = arith.constant 0 : index
    %198 = vector.load %arg6[%c1_83, %c0_84, %c0_85] : memref<3x1x32xf32, #tpu.memory_space<vmem>>, vector<1x1x32xf32>
    %199 = vector.shape_cast %198 : vector<1x1x32xf32> to vector<1x32xf32>
    %200 = vector.broadcast %199 : vector<1x32xf32> to vector<75x32xf32>
    %201 = arith.addf %197, %200 : vector<75x32xf32>
    %cst_86 = arith.constant 0.000000e+00 : f32
    %202 = vector.broadcast %cst_86 : f32 to vector<75x32xf32>
    %203 = arith.maximumf %201, %202 : vector<75x32xf32>
    %204 = arith.addf %194, %203 : vector<75x32xf32>
    %c0_87 = arith.constant 0 : index
    %c0_88 = arith.constant 0 : index
    %205 = vector.load %arg9[%c0_87, %c0_88] : memref<32x64xf32, #tpu.memory_space<vmem>>, vector<32x64xf32>
    %cst_89 = arith.constant dense<0.000000e+00> : vector<75x64xf32>
    %206 = tpu.matmul %204, %205, %cst_89 {dimension_numbers = #tpu.dot_dimension_numbers<[1], [0], [0], [1], [0, 0, 1, 1], [], []>} : vector<75x32xf32>, vector<32x64xf32>, vector<75x64xf32> -> vector<75x64xf32>
    %c0_90 = arith.constant 0 : index
    %c0_91 = arith.constant 0 : index
    %207 = vector.load %arg10[%c0_90, %c0_91] : memref<1x64xf32, #tpu.memory_space<vmem>>, vector<1x64xf32>
    %208 = vector.broadcast %207 : vector<1x64xf32> to vector<75x64xf32>
    %209 = arith.addf %206, %208 : vector<75x64xf32>
    %c0_92 = arith.constant 0 : index
    %c0_93 = arith.constant 0 : index
    %210 = vector.load %arg3[%c0_92, %c0_93] : memref<1x32xf32, #tpu.memory_space<vmem>>, vector<1x32xf32>
    %211 = vector.extract_strided_slice %209 {offsets = [0, 0], sizes = [75, 32], strides = [1, 1]} : vector<75x64xf32> to vector<75x32xf32>
    %212 = vector.extract_strided_slice %209 {offsets = [0, 32], sizes = [75, 32], strides = [1, 1]} : vector<75x64xf32> to vector<75x32xf32>
    %cst_94 = arith.constant 0.000000e+00 : f32
    %213 = vector.broadcast %cst_94 : f32 to vector<1x32xf32>
    %c0_95 = arith.constant 0 : index
    %c0_96 = arith.constant 0 : index
    %c0_97 = arith.constant 0 : index
    %214 = vector.load %arg4[%c0_95, %c0_96, %c0_97] : memref<4x1x32xf32, #tpu.memory_space<vmem>>, vector<1x1x32xf32>
    %215 = vector.shape_cast %214 : vector<1x1x32xf32> to vector<1x32xf32>
    %216 = arith.mulf %210, %215 : vector<1x32xf32>
    %cst_98 = arith.constant dense<0.000000e+00> : vector<1x75xf32>
    %217 = tpu.matmul %216, %211, %cst_98 {dimension_numbers = #tpu.dot_dimension_numbers<[1], [1], [0], [0], [0, 0, 1, 0], [], []>} : vector<1x32xf32>, vector<75x32xf32>, vector<1x75xf32> -> vector<1x75xf32>
    %cst_99 = arith.constant 0.176776692 : f32
    %218 = vector.broadcast %cst_99 : f32 to vector<1x75xf32>
    %219 = arith.mulf %217, %218 : vector<1x75xf32>
    %cst_100 = arith.constant dense<0xFF800000> : vector<75xf32>
    %220 = vector.multi_reduction <maximumf>, %219, %cst_100 [0] : vector<1x75xf32> to vector<75xf32>
    %221 = vector.shape_cast %220 : vector<75xf32> to vector<1x75xf32>
    %222 = arith.subf %219, %221 : vector<1x75xf32>
    %223 = math.exp %222 : vector<1x75xf32>
    %cst_101 = arith.constant dense<0.000000e+00> : vector<75xf32>
    %224 = vector.multi_reduction <add>, %223, %cst_101 [0] : vector<1x75xf32> to vector<75xf32>
    %225 = vector.shape_cast %224 : vector<75xf32> to vector<1x75xf32>
    %226 = tpu.reciprocal %225 {approx = true} : vector<1x75xf32> -> vector<1x75xf32>
    %227 = arith.mulf %223, %226 : vector<1x75xf32>
    %228 = vector.broadcast %215 : vector<1x32xf32> to vector<75x32xf32>
    %229 = arith.mulf %212, %228 : vector<75x32xf32>
    %cst_102 = arith.constant dense<0.000000e+00> : vector<1x32xf32>
    %230 = tpu.matmul %227, %229, %cst_102 {dimension_numbers = #tpu.dot_dimension_numbers<[1], [0], [0], [1], [0, 0, 1, 1], [], []>} : vector<1x75xf32>, vector<75x32xf32>, vector<1x32xf32> -> vector<1x32xf32>
    %231 = arith.addf %213, %230 : vector<1x32xf32>
    %c1_103 = arith.constant 1 : index
    %c0_104 = arith.constant 0 : index
    %c0_105 = arith.constant 0 : index
    %232 = vector.load %arg4[%c1_103, %c0_104, %c0_105] : memref<4x1x32xf32, #tpu.memory_space<vmem>>, vector<1x1x32xf32>
    %233 = vector.shape_cast %232 : vector<1x1x32xf32> to vector<1x32xf32>
    %234 = arith.mulf %210, %233 : vector<1x32xf32>
    %cst_106 = arith.constant dense<0.000000e+00> : vector<1x75xf32>
    %235 = tpu.matmul %234, %211, %cst_106 {dimension_numbers = #tpu.dot_dimension_numbers<[1], [1], [0], [0], [0, 0, 1, 0], [], []>} : vector<1x32xf32>, vector<75x32xf32>, vector<1x75xf32> -> vector<1x75xf32>
    %cst_107 = arith.constant 0.176776692 : f32
    %236 = vector.broadcast %cst_107 : f32 to vector<1x75xf32>
    %237 = arith.mulf %235, %236 : vector<1x75xf32>
    %cst_108 = arith.constant dense<0xFF800000> : vector<75xf32>
    %238 = vector.multi_reduction <maximumf>, %237, %cst_108 [0] : vector<1x75xf32> to vector<75xf32>
    %239 = vector.shape_cast %238 : vector<75xf32> to vector<1x75xf32>
    %240 = arith.subf %237, %239 : vector<1x75xf32>
    %241 = math.exp %240 : vector<1x75xf32>
    %cst_109 = arith.constant dense<0.000000e+00> : vector<75xf32>
    %242 = vector.multi_reduction <add>, %241, %cst_109 [0] : vector<1x75xf32> to vector<75xf32>
    %243 = vector.shape_cast %242 : vector<75xf32> to vector<1x75xf32>
    %244 = tpu.reciprocal %243 {approx = true} : vector<1x75xf32> -> vector<1x75xf32>
    %245 = arith.mulf %241, %244 : vector<1x75xf32>
    %246 = vector.broadcast %233 : vector<1x32xf32> to vector<75x32xf32>
    %247 = arith.mulf %212, %246 : vector<75x32xf32>
    %cst_110 = arith.constant dense<0.000000e+00> : vector<1x32xf32>
    %248 = tpu.matmul %245, %247, %cst_110 {dimension_numbers = #tpu.dot_dimension_numbers<[1], [0], [0], [1], [0, 0, 1, 1], [], []>} : vector<1x75xf32>, vector<75x32xf32>, vector<1x32xf32> -> vector<1x32xf32>
    %249 = arith.addf %231, %248 : vector<1x32xf32>
    %c2_111 = arith.constant 2 : index
    %c0_112 = arith.constant 0 : index
    %c0_113 = arith.constant 0 : index
    %250 = vector.load %arg4[%c2_111, %c0_112, %c0_113] : memref<4x1x32xf32, #tpu.memory_space<vmem>>, vector<1x1x32xf32>
    %251 = vector.shape_cast %250 : vector<1x1x32xf32> to vector<1x32xf32>
    %252 = arith.mulf %210, %251 : vector<1x32xf32>
    %cst_114 = arith.constant dense<0.000000e+00> : vector<1x75xf32>
    %253 = tpu.matmul %252, %211, %cst_114 {dimension_numbers = #tpu.dot_dimension_numbers<[1], [1], [0], [0], [0, 0, 1, 0], [], []>} : vector<1x32xf32>, vector<75x32xf32>, vector<1x75xf32> -> vector<1x75xf32>
    %cst_115 = arith.constant 0.176776692 : f32
    %254 = vector.broadcast %cst_115 : f32 to vector<1x75xf32>
    %255 = arith.mulf %253, %254 : vector<1x75xf32>
    %cst_116 = arith.constant dense<0xFF800000> : vector<75xf32>
    %256 = vector.multi_reduction <maximumf>, %255, %cst_116 [0] : vector<1x75xf32> to vector<75xf32>
    %257 = vector.shape_cast %256 : vector<75xf32> to vector<1x75xf32>
    %258 = arith.subf %255, %257 : vector<1x75xf32>
    %259 = math.exp %258 : vector<1x75xf32>
    %cst_117 = arith.constant dense<0.000000e+00> : vector<75xf32>
    %260 = vector.multi_reduction <add>, %259, %cst_117 [0] : vector<1x75xf32> to vector<75xf32>
    %261 = vector.shape_cast %260 : vector<75xf32> to vector<1x75xf32>
    %262 = tpu.reciprocal %261 {approx = true} : vector<1x75xf32> -> vector<1x75xf32>
    %263 = arith.mulf %259, %262 : vector<1x75xf32>
    %264 = vector.broadcast %251 : vector<1x32xf32> to vector<75x32xf32>
    %265 = arith.mulf %212, %264 : vector<75x32xf32>
    %cst_118 = arith.constant dense<0.000000e+00> : vector<1x32xf32>
    %266 = tpu.matmul %263, %265, %cst_118 {dimension_numbers = #tpu.dot_dimension_numbers<[1], [0], [0], [1], [0, 0, 1, 1], [], []>} : vector<1x75xf32>, vector<75x32xf32>, vector<1x32xf32> -> vector<1x32xf32>
    %267 = arith.addf %249, %266 : vector<1x32xf32>
    %c3_119 = arith.constant 3 : index
    %c0_120 = arith.constant 0 : index
    %c0_121 = arith.constant 0 : index
    %268 = vector.load %arg4[%c3_119, %c0_120, %c0_121] : memref<4x1x32xf32, #tpu.memory_space<vmem>>, vector<1x1x32xf32>
    %269 = vector.shape_cast %268 : vector<1x1x32xf32> to vector<1x32xf32>
    %270 = arith.mulf %210, %269 : vector<1x32xf32>
    %cst_122 = arith.constant dense<0.000000e+00> : vector<1x75xf32>
    %271 = tpu.matmul %270, %211, %cst_122 {dimension_numbers = #tpu.dot_dimension_numbers<[1], [1], [0], [0], [0, 0, 1, 0], [], []>} : vector<1x32xf32>, vector<75x32xf32>, vector<1x75xf32> -> vector<1x75xf32>
    %cst_123 = arith.constant 0.176776692 : f32
    %272 = vector.broadcast %cst_123 : f32 to vector<1x75xf32>
    %273 = arith.mulf %271, %272 : vector<1x75xf32>
    %cst_124 = arith.constant dense<0xFF800000> : vector<75xf32>
    %274 = vector.multi_reduction <maximumf>, %273, %cst_124 [0] : vector<1x75xf32> to vector<75xf32>
    %275 = vector.shape_cast %274 : vector<75xf32> to vector<1x75xf32>
    %276 = arith.subf %273, %275 : vector<1x75xf32>
    %277 = math.exp %276 : vector<1x75xf32>
    %cst_125 = arith.constant dense<0.000000e+00> : vector<75xf32>
    %278 = vector.multi_reduction <add>, %277, %cst_125 [0] : vector<1x75xf32> to vector<75xf32>
    %279 = vector.shape_cast %278 : vector<75xf32> to vector<1x75xf32>
    %280 = tpu.reciprocal %279 {approx = true} : vector<1x75xf32> -> vector<1x75xf32>
    %281 = arith.mulf %277, %280 : vector<1x75xf32>
    %282 = vector.broadcast %269 : vector<1x32xf32> to vector<75x32xf32>
    %283 = arith.mulf %212, %282 : vector<75x32xf32>
    %cst_126 = arith.constant dense<0.000000e+00> : vector<1x32xf32>
    %284 = tpu.matmul %281, %283, %cst_126 {dimension_numbers = #tpu.dot_dimension_numbers<[1], [0], [0], [1], [0, 0, 1, 1], [], []>} : vector<1x75xf32>, vector<75x32xf32>, vector<1x32xf32> -> vector<1x32xf32>
    %285 = arith.addf %267, %284 : vector<1x32xf32>
    %286 = arith.addf %210, %285 : vector<1x32xf32>
    %c2_127 = arith.constant 2 : index
    %c0_128 = arith.constant 0 : index
    %c0_129 = arith.constant 0 : index
    %287 = vector.load %arg5[%c2_127, %c0_128, %c0_129] : memref<3x32x32xf32, #tpu.memory_space<vmem>>, vector<1x32x32xf32>
    %288 = vector.shape_cast %287 : vector<1x32x32xf32> to vector<32x32xf32>
    %cst_130 = arith.constant dense<0.000000e+00> : vector<1x32xf32>
    %289 = tpu.matmul %286, %288, %cst_130 {dimension_numbers = #tpu.dot_dimension_numbers<[1], [0], [0], [1], [0, 0, 1, 1], [], []>} : vector<1x32xf32>, vector<32x32xf32>, vector<1x32xf32> -> vector<1x32xf32>
    %c2_131 = arith.constant 2 : index
    %c0_132 = arith.constant 0 : index
    %c0_133 = arith.constant 0 : index
    %290 = vector.load %arg6[%c2_131, %c0_132, %c0_133] : memref<3x1x32xf32, #tpu.memory_space<vmem>>, vector<1x1x32xf32>
    %291 = vector.shape_cast %290 : vector<1x1x32xf32> to vector<1x32xf32>
    %292 = arith.addf %289, %291 : vector<1x32xf32>
    %cst_134 = arith.constant 0.000000e+00 : f32
    %293 = vector.broadcast %cst_134 : f32 to vector<1x32xf32>
    %294 = arith.maximumf %292, %293 : vector<1x32xf32>
    %295 = arith.addf %286, %294 : vector<1x32xf32>
    %c0_135 = arith.constant 0 : index
    %c0_136 = arith.constant 0 : index
    %296 = vector.load %arg11[%c0_135, %c0_136] : memref<32x1xf32, #tpu.memory_space<vmem>>, vector<32x1xf32>
    %cst_137 = arith.constant dense<0.000000e+00> : vector<1x1xf32>
    %297 = tpu.matmul %295, %296, %cst_137 {dimension_numbers = #tpu.dot_dimension_numbers<[1], [0], [0], [1], [0, 0, 1, 1], [], []>} : vector<1x32xf32>, vector<32x1xf32>, vector<1x1xf32> -> vector<1x1xf32>
    %c0_138 = arith.constant 0 : index
    %c0_139 = arith.constant 0 : index
    %298 = vector.load %arg12[%c0_138, %c0_139] : memref<1x1xf32, #tpu.memory_space<vmem>>, vector<1x1xf32>
    %299 = arith.addf %297, %298 : vector<1x1xf32>
    %c0_140 = arith.constant 0 : index
    %c0_141 = arith.constant 0 : index
    %c0_142 = arith.constant 0 : index
    %300 = vector.load %arg13[%c0_140, %c0_141, %c0_142] : memref<1x1x1xf32, #tpu.memory_space<vmem>>, vector<1x1x1xf32>
    %301 = vector.shape_cast %300 : vector<1x1x1xf32> to vector<1x1xf32>
    %302 = vector.shape_cast %299 : vector<1x1xf32> to vector<1x1x1xf32>
    tpu.vector_store %arg13[%c0_140, %c0_141, %c0_142], %302 {strides = array<i32>} : memref<1x1x1xf32, #tpu.memory_space<vmem>>, vector<1x1x1xf32>,
    return
  }
  func.func @transform_0(%arg0: i32) -> (i32, i32, i32) {
    %c0_i32 = arith.constant 0 : i32
    %c0_i32_0 = arith.constant 0 : i32
    %c0_i32_1 = arith.constant 0 : i32
    return %arg0, %c0_i32, %c0_i32_0 : i32, i32, i32
  }
  func.func @transform_1(%arg0: i32) -> (i32, i32) {
    %c0_i32 = arith.constant 0 : i32
    %c0_i32_0 = arith.constant 0 : i32
    %c0_i32_1 = arith.constant 0 : i32
    return %c0_i32, %c0_i32_0 : i32, i32
  }
  func.func @transform_2(%arg0: i32) -> (i32, i32) {
    %c0_i32 = arith.constant 0 : i32
    %c0_i32_0 = arith.constant 0 : i32
    %c0_i32_1 = arith.constant 0 : i32
    return %c0_i32, %c0_i32_0 : i32, i32
  }
  func.func @transform_3(%arg0: i32) -> (i32, i32, i32) {
    %c0_i32 = arith.constant 0 : i32
    %c0_i32_0 = arith.constant 0 : i32
    %c0_i32_1 = arith.constant 0 : i32
    %c0_i32_2 = arith.constant 0 : i32
    return %c0_i32, %c0_i32_0, %c0_i32_1 : i32, i32, i32
  }
  func.func @transform_4(%arg0: i32) -> (i32, i32, i32) {
    %c0_i32 = arith.constant 0 : i32
    %c0_i32_0 = arith.constant 0 : i32
    %c0_i32_1 = arith.constant 0 : i32
    %c0_i32_2 = arith.constant 0 : i32
    return %c0_i32, %c0_i32_0, %c0_i32_1 : i32, i32, i32
  }
  func.func @transform_5(%arg0: i32) -> (i32, i32, i32) {
    %c0_i32 = arith.constant 0 : i32
    %c0_i32_0 = arith.constant 0 : i32
    %c0_i32_1 = arith.constant 0 : i32
    %c0_i32_2 = arith.constant 0 : i32
    return %c0_i32, %c0_i32_0, %c0_i32_1 : i32, i32, i32
  }
  func.func @transform_6(%arg0: i32) -> (i32, i32) {
    %c0_i32 = arith.constant 0 : i32
    %c0_i32_0 = arith.constant 0 : i32
    %c0_i32_1 = arith.constant 0 : i32
    return %c0_i32, %c0_i32_0 : i32, i32
  }
  func.func @transform_7(%arg0: i32) -> (i32, i32) {
    %c0_i32 = arith.constant 0 : i32
    %c0_i32_0 = arith.constant 0 : i32
    %c0_i32_1 = arith.constant 0 : i32
    return %c0_i32, %c0_i32_0 : i32, i32
  }
  func.func @transform_8(%arg0: i32) -> (i32, i32) {
    %c0_i32 = arith.constant 0 : i32
    %c0_i32_0 = arith.constant 0 : i32
    %c0_i32_1 = arith.constant 0 : i32
    return %c0_i32, %c0_i32_0 : i32, i32
  }
  func.func @transform_9(%arg0: i32) -> (i32, i32) {
    %c0_i32 = arith.constant 0 : i32
    %c0_i32_0 = arith.constant 0 : i32
    %c0_i32_1 = arith.constant 0 : i32
    return %c0_i32, %c0_i32_0 : i32, i32
  }
  func.func @transform_10(%arg0: i32) -> (i32, i32) {
    %c0_i32 = arith.constant 0 : i32
    %c0_i32_0 = arith.constant 0 : i32
    %c0_i32_1 = arith.constant 0 : i32
    return %c0_i32, %c0_i32_0 : i32, i32
  }
  func.func @transform_11(%arg0: i32) -> (i32, i32) {
    %c0_i32 = arith.constant 0 : i32
    %c0_i32_0 = arith.constant 0 : i32
    %c0_i32_1 = arith.constant 0 : i32
    return %c0_i32, %c0_i32_0 : i32, i32
  }
  func.func @transform_12(%arg0: i32) -> (i32, i32, i32) {
    %c0_i32 = arith.constant 0 : i32
    %c0_i32_0 = arith.constant 0 : i32
    %c0_i32_1 = arith.constant 0 : i32
    return %arg0, %c0_i32, %c0_i32_0 : i32, i32, i32
  }
}

</mosaic_0001>

<llo_original>
// kernel: flexible_net_forward.2
$region0: #{flexible_net_forward.2}
  #allocation0 [shape = 'u32[]', space=smem, size = 0x4, offset = 0x4, fixed_abs, tag = 'smem constant byte address 0x4 - core index']
  #allocation1 [shape = 'u32[144,128]{1,0:T(1,128)}', space=vmem, size = 0x12000, scoped, tag = 'internal scratch']
  %s0 = inlined_call_operand.vmem [shape: f32[16,8], index: 0, kind: input, shape index: {}]
  %s1 = inlined_call_operand.vmem [shape: f32[16,16], index: 1, kind: input, shape index: {}]
  %s2 = inlined_call_operand.vmem [shape: f32[16,16], index: 2, kind: input, shape index: {}]
  %s3 = inlined_call_operand.vmem [shape: f32[8,32], index: 3, kind: input, shape index: {}]
  %s4 = inlined_call_operand.vmem [shape: f32[1,32], index: 4, kind: input, shape index: {}]
  %s5 = inlined_call_operand.vmem [shape: f32[6,32,32], index: 5, kind: input, shape index: {}]
  %s6 = inlined_call_operand.vmem [shape: f32[6,1,32], index: 6, kind: input, shape index: {}]
  %s7 = inlined_call_operand.vmem [shape: f32[3,32,64], index: 7, kind: input, shape index: {}]
  %s8 = inlined_call_operand.vmem [shape: f32[3,1,64], index: 8, kind: input, shape index: {}]
  %s9 = inlined_call_operand.vmem [shape: f32[3,1,32], index: 9, kind: input, shape index: {}]
  %s10 = inlined_call_operand.vmem [shape: f32[3,1,32], index: 10, kind: input, shape index: {}]
  %s11 = inlined_call_operand.vmem [shape: f32[32,64], index: 11, kind: input, shape index: {}]
  %s12 = inlined_call_operand.vmem [shape: f32[1,64], index: 12, kind: input, shape index: {}]
  %s13 = inlined_call_operand.vmem [shape: f32[1,64], index: 13, kind: input, shape index: {}]
  %s14 = inlined_call_operand.vmem [shape: f32[16,64], index: 14, kind: output, shape index: {}]
  %s15 = sld [smem:[#allocation0]]
  $region66: #{flexible_net_forward.2} parent=0
    _
  %s17 = ssub.s32 1, %s15
  %s18 = scalar_select 0, %s17, %s15
  // Predicated region
  $region2: #{flexible_net_forward.2} parent=0 // pred_check
    _
  $region3: #{flexible_net_forward.2} parent=0 // pred_check_branch
    %20 = sbr.rel (0) target = $region5
  $region4: #{flexible_net_forward.2} parent=0 // pred_region
    _
  $region5: #{flexible_net_forward.2} parent=0 // pred_fallthru
    _
  // Predicated region
  $region6: #{flexible_net_forward.2} parent=0 // pred_check
    _
  $region7: #{flexible_net_forward.2} parent=0 // pred_check_branch
    %22 = sbr.rel (0) target = $region9
  $region8: #{flexible_net_forward.2} parent=0 // pred_region
    _
  $region9: #{flexible_net_forward.2} parent=0 // pred_fallthru
    _
  // Predicated region
  $region10: #{flexible_net_forward.2} parent=0 // pred_check
    _
  $region11: #{flexible_net_forward.2} parent=0 // pred_check_branch
    %24 = sbr.rel (0) target = $region13
  $region12: #{flexible_net_forward.2} parent=0 // pred_region
    _
  $region13: #{flexible_net_forward.2} parent=0 // pred_fallthru
    _
  // Predicated region
  $region14: #{flexible_net_forward.2} parent=0 // pred_check
    _
  $region15: #{flexible_net_forward.2} parent=0 // pred_check_branch
    %26 = sbr.rel (0) target = $region17
  $region16: #{flexible_net_forward.2} parent=0 // pred_region
    _
  $region17: #{flexible_net_forward.2} parent=0 // pred_fallthru
    _
  // Predicated region
  $region18: #{flexible_net_forward.2} parent=0 // pred_check
    _
  $region19: #{flexible_net_forward.2} parent=0 // pred_check_branch
    %28 = sbr.rel (0) target = $region21
  $region20: #{flexible_net_forward.2} parent=0 // pred_region
    _
  $region21: #{flexible_net_forward.2} parent=0 // pred_fallthru
    _
  // Predicated region
  $region22: #{flexible_net_forward.2} parent=0 // pred_check
    _
  $region23: #{flexible_net_forward.2} parent=0 // pred_check_branch
    %30 = sbr.rel (0) target = $region25
  $region24: #{flexible_net_forward.2} parent=0 // pred_region
    _
  $region25: #{flexible_net_forward.2} parent=0 // pred_fallthru
    _
  // Predicated region
  $region26: #{flexible_net_forward.2} parent=0 // pred_check
    _
  $region27: #{flexible_net_forward.2} parent=0 // pred_check_branch
    %32 = sbr.rel (0) target = $region29
  $region28: #{flexible_net_forward.2} parent=0 // pred_region
    _
  $region29: #{flexible_net_forward.2} parent=0 // pred_fallthru
    _
  // Predicated region
  $region30: #{flexible_net_forward.2} parent=0 // pred_check
    _
  $region31: #{flexible_net_forward.2} parent=0 // pred_check_branch
    %34 = sbr.rel (0) target = $region33
  $region32: #{flexible_net_forward.2} parent=0 // pred_region
    _
  $region33: #{flexible_net_forward.2} parent=0 // pred_fallthru
    _
  // Predicated region
  $region34: #{flexible_net_forward.2} parent=0 // pred_check
    _
  $region35: #{flexible_net_forward.2} parent=0 // pred_check_branch
    %36 = sbr.rel (0) target = $region37
  $region36: #{flexible_net_forward.2} parent=0 // pred_region
    _
  $region37: #{flexible_net_forward.2} parent=0 // pred_fallthru
    _
  // Predicated region
  $region38: #{flexible_net_forward.2} parent=0 // pred_check
    _
  $region39: #{flexible_net_forward.2} parent=0 // pred_check_branch
    %38 = sbr.rel (0) target = $region41
  $region40: #{flexible_net_forward.2} parent=0 // pred_region
    _
  $region41: #{flexible_net_forward.2} parent=0 // pred_fallthru
    _
  // Predicated region
  $region42: #{flexible_net_forward.2} parent=0 // pred_check
    _
  $region43: #{flexible_net_forward.2} parent=0 // pred_check_branch
    %40 = sbr.rel (0) target = $region45
  $region44: #{flexible_net_forward.2} parent=0 // pred_region
    _
  $region45: #{flexible_net_forward.2} parent=0 // pred_fallthru
    _
  // Predicated region
  $region46: #{flexible_net_forward.2} parent=0 // pred_check
    _
  $region47: #{flexible_net_forward.2} parent=0 // pred_check_branch
    %42 = sbr.rel (0) target = $region49
  $region48: #{flexible_net_forward.2} parent=0 // pred_region
    _
  $region49: #{flexible_net_forward.2} parent=0 // pred_fallthru
    _
  // Predicated region
  $region50: #{flexible_net_forward.2} parent=0 // pred_check
    _
  $region51: #{flexible_net_forward.2} parent=0 // pred_check_branch
    %44 = sbr.rel (0) target = $region53
  $region52: #{flexible_net_forward.2} parent=0 // pred_region
    _
  $region53: #{flexible_net_forward.2} parent=0 // pred_fallthru
    _
  // Predicated region
  $region54: #{flexible_net_forward.2} parent=0 // pred_check
    _
  $region55: #{flexible_net_forward.2} parent=0 // pred_check_branch
    %46 = sbr.rel (0) target = $region57
  $region56: #{flexible_net_forward.2} parent=0 // pred_region
    _
  $region57: #{flexible_net_forward.2} parent=0 // pred_fallthru
    _
  %v47 = vld [vmem:[%s0] sm:$0xff]
  %v48 = vld [vmem:[%s0 + $0x8] sm:$0xff]
  %v49 = vld [vmem:[%s3] sm:$0xff]
  %v50 = vld [vmem:[%s4] sm:$0x1]
  %v52 = vlaneseq
  %v53 = vshrl.u32 %v52, 7
  %v54 = vsub.s32 0, %v53
  %v55 = vrot.slane %v50, %v54
  %vm57 = vcmask 64512
  %v59 = vsel %vm57, %v47, 0
  %v62 = vsel %vm57, %v48, 0
  %64 = vmatprep.subr.mxu0 0.0
  %65 = vmatpush1.msra.mxu0 %v49
  %66 = vmatprep.subr.mxu0 0.0
  %67 = vmatpush1.msra.mxu0 0.0
  %68 = vmatprep.subr.mxu0 0.0
  %69 = vmatpush1.msra.mxu0 0.0
  %70 = vmatprep.subr.mxu0 0.0
  %71 = vmatpush1.msra.mxu0 0.0
  %72 = vmatprep.subr.mxu0 0.0
  %73 = vmatpush1.msra.mxu0 0.0
  %74 = vmatprep.subr.mxu0 0.0
  %75 = vmatpush1.msra.mxu0 0.0
  %76 = vmatprep.subr.mxu0 0.0
  %77 = vmatpush1.msra.mxu0 0.0
  %78 = vmatprep.subr.mxu0 0.0
  %79 = vmatpush1.msra.mxu0 0.0
  %80 = vmatprep.subr.mxu0 0.0
  %81 = vmatpush1.msra.mxu0 0.0
  %82 = vmatprep.subr.mxu0 0.0
  %83 = vmatpush1.msra.mxu0 0.0
  %84 = vmatprep.subr.mxu0 0.0
  %85 = vmatpush1.msra.mxu0 0.0
  %86 = vmatprep.subr.mxu0 0.0
  %87 = vmatpush1.msra.mxu0 0.0
  %88 = vmatprep.subr.mxu0 0.0
  %89 = vmatpush1.msra.mxu0 0.0
  %90 = vmatprep.subr.mxu0 0.0
  %91 = vmatpush1.msra.mxu0 0.0
  %92 = vmatprep.subr.mxu0 0.0
  %93 = vmatpush1.msra.mxu0 0.0
  %94 = vmatprep.subr.mxu0 0.0
  %95 = vmatpush1.msra.mxu0 0.0
  %96 = vmatprep.subr.mxu0 0.0
  %97 = vmatpush1.msra.mxu0 0.0
  %98 = vmatprep.subr.mxu0 0.0
  %99 = vmatpush1.msra.mxu0 0.0
  %100 = vmatprep.subr.mxu0 0.0
  %101 = vmatpush1.msra.mxu0 0.0
  %102 = vmatprep.subr.mxu0 0.0
  %103 = vmatpush1.msra.mxu0 0.0
  %104 = vmatprep.subr.mxu0 0.0
  %105 = vmatpush1.msra.mxu0 0.0
  %106 = vmatprep.subr.mxu0 0.0
  %107 = vmatpush1.msra.mxu0 0.0
  %108 = vmatprep.subr.mxu0 0.0
  %109 = vmatpush1.msra.mxu0 0.0
  %110 = vmatprep.subr.mxu0 0.0
  %111 = vmatpush1.msra.mxu0 0.0
  %112 = vmatprep.subr.mxu0 0.0
  %113 = vmatpush1.msra.mxu0 0.0
  %114 = vmatprep.subr.mxu0 0.0
  %115 = vmatpush1.msra.mxu0 0.0
  %116 = vmatprep.subr.mxu0 0.0
  %117 = vmatpush1.msra.mxu0 0.0
  %118 = vmatprep.subr.mxu0 0.0
  %119 = vmatpush1.msra.mxu0 0.0
  %120 = vmatprep.subr.mxu0 0.0
  %121 = vmatpush1.msra.mxu0 0.0
  %122 = vmatprep.subr.mxu0 0.0
  %123 = vmatpush1.msra.mxu0 0.0
  %124 = vmatprep.subr.mxu0 0.0
  %125 = vmatpush1.msra.mxu0 0.0
  %126 = vmatprep.subr.mxu0 0.0
  %127 = vmatpush1.msra.mxu0 0.0
  %128 = vmatprep.mubr.f32.mxu0 0.0
  %129 = vmatmul.mubr.f32.gmra.mrb[0].mxu0 %v59
  %v130 = vpop.f32.mrb[0].mxu0
  %v131 = vadd.f32 %v55, %v130
  %v132 = vpop.f32.mrb[0].mxu0
  %133 = vmatprep.mubr.f32.mxu0 0.0
  %134 = vmatmul.mubr.f32.gmra.mrb[0].mxu0 %v62
  %v135 = vpop.f32.mrb[0].mxu0
  %v136 = vadd.f32 %v55, %v135
  %v137 = vpop.f32.mrb[0].mxu0
  %138 = vdwg.mxu0
  %v139 = vmax.f32 %v131, 0.0
  %v140 = vmax.f32 %v136, 0.0
  %v141 = vld [vmem:[%s5] sm:$0xff]
  %v142 = vld [vmem:[%s5 + $0x8] sm:$0xff]
  %v143 = vld [vmem:[%s5 + $0x10] sm:$0xff]
  %v144 = vld [vmem:[%s5 + $0x18] sm:$0xff]
  %v145 = vld [vmem:[%s6] sm:$0x1]
  %v147 = vlaneseq
  %v148 = vshrl.u32 %v147, 7
  %v149 = vsub.s32 0, %v148
  %v150 = vrot.slane %v145, %v149
  %vm152 = vcmask 261120
  %v154 = vsel %vm152, %v139, 0
  %v157 = vsel %vm152, %v140, 0
  %159 = vmatprep.subr.mxu0 0.0
  %160 = vmatpush1.msra.mxu0 %v141
  %161 = vmatprep.subr.mxu0 0.0
  %162 = vmatpush1.msra.mxu0 %v142
  %163 = vmatprep.subr.mxu0 0.0
  %164 = vmatpush1.msra.mxu0 %v143
  %165 = vmatprep.subr.mxu0 0.0
  %166 = vmatpush1.msra.mxu0 %v144
  %167 = vmatprep.subr.mxu0 0.0
  %168 = vmatpush1.msra.mxu0 0.0
  %169 = vmatprep.subr.mxu0 0.0
  %170 = vmatpush1.msra.mxu0 0.0
  %171 = vmatprep.subr.mxu0 0.0
  %172 = vmatpush1.msra.mxu0 0.0
  %173 = vmatprep.subr.mxu0 0.0
  %174 = vmatpush1.msra.mxu0 0.0
  %175 = vmatprep.subr.mxu0 0.0
  %176 = vmatpush1.msra.mxu0 0.0
  %177 = vmatprep.subr.mxu0 0.0
  %178 = vmatpush1.msra.mxu0 0.0
  %179 = vmatprep.subr.mxu0 0.0
  %180 = vmatpush1.msra.mxu0 0.0
  %181 = vmatprep.subr.mxu0 0.0
  %182 = vmatpush1.msra.mxu0 0.0
  %183 = vmatprep.subr.mxu0 0.0
  %184 = vmatpush1.msra.mxu0 0.0
  %185 = vmatprep.subr.mxu0 0.0
  %186 = vmatpush1.msra.mxu0 0.0
  %187 = vmatprep.subr.mxu0 0.0
  %188 = vmatpush1.msra.mxu0 0.0
  %189 = vmatprep.subr.mxu0 0.0
  %190 = vmatpush1.msra.mxu0 0.0
  %191 = vmatprep.subr.mxu0 0.0
  %192 = vmatpush1.msra.mxu0 0.0
  %193 = vmatprep.subr.mxu0 0.0
  %194 = vmatpush1.msra.mxu0 0.0
  %195 = vmatprep.subr.mxu0 0.0
  %196 = vmatpush1.msra.mxu0 0.0
  %197 = vmatprep.subr.mxu0 0.0
  %198 = vmatpush1.msra.mxu0 0.0
  %199 = vmatprep.subr.mxu0 0.0
  %200 = vmatpush1.msra.mxu0 0.0
  %201 = vmatprep.subr.mxu0 0.0
  %202 = vmatpush1.msra.mxu0 0.0
  %203 = vmatprep.subr.mxu0 0.0
  %204 = vmatpush1.msra.mxu0 0.0
  %205 = vmatprep.subr.mxu0 0.0
  %206 = vmatpush1.msra.mxu0 0.0
  %207 = vmatprep.subr.mxu0 0.0
  %208 = vmatpush1.msra.mxu0 0.0
  %209 = vmatprep.subr.mxu0 0.0
  %210 = vmatpush1.msra.mxu0 0.0
  %211 = vmatprep.subr.mxu0 0.0
  %212 = vmatpush1.msra.mxu0 0.0
  %213 = vmatprep.subr.mxu0 0.0
  %214 = vmatpush1.msra.mxu0 0.0
  %215 = vmatprep.subr.mxu0 0.0
  %216 = vmatpush1.msra.mxu0 0.0
  %217 = vmatprep.subr.mxu0 0.0
  %218 = vmatpush1.msra.mxu0 0.0
  %219 = vmatprep.subr.mxu0 0.0
  %220 = vmatpush1.msra.mxu0 0.0
  %221 = vmatprep.subr.mxu0 0.0
  %222 = vmatpush1.msra.mxu0 0.0
  %223 = vmatprep.mubr.f32.mxu0 0.0
  %224 = vmatmul.mubr.f32.gmra.mrb[0].mxu0 %v154
  %v225 = vpop.f32.mrb[0].mxu0
  %v226 = vadd.f32 %v150, %v225
  %v227 = vpop.f32.mrb[0].mxu0
  %228 = vmatprep.mubr.f32.mxu0 0.0
  %229 = vmatmul.mubr.f32.gmra.mrb[0].mxu0 %v157
  %v230 = vpop.f32.mrb[0].mxu0
  %v231 = vadd.f32 %v150, %v230
  %v232 = vpop.f32.mrb[0].mxu0
  %233 = vdwg.mxu0
  %v234 = vmax.f32 %v226, 0.0
  %v235 = vmax.f32 %v231, 0.0
  %s236 = scalar_lea.vmem %s5, 32
  %v237 = vld [vmem:[%s236] sm:$0xff]
  %v238 = vld [vmem:[%s236 + $0x8] sm:$0xff]
  %v239 = vld [vmem:[%s236 + $0x10] sm:$0xff]
  %v240 = vld [vmem:[%s236 + $0x18] sm:$0xff]
  %s241 = scalar_lea.vmem %s6, 1
  %v242 = vld [vmem:[%s241] sm:$0x1]
  %v244 = vlaneseq
  %v245 = vshrl.u32 %v244, 7
  %v246 = vsub.s32 0, %v245
  %v247 = vrot.slane %v242, %v246
  %v250 = vsel %vm152, %v234, 0
  %v253 = vsel %vm152, %v235, 0
  %255 = vmatprep.subr.mxu0 0.0
  %256 = vmatpush1.msra.mxu0 %v237
  %257 = vmatprep.subr.mxu0 0.0
  %258 = vmatpush1.msra.mxu0 %v238
  %259 = vmatprep.subr.mxu0 0.0
  %260 = vmatpush1.msra.mxu0 %v239
  %261 = vmatprep.subr.mxu0 0.0
  %262 = vmatpush1.msra.mxu0 %v240
  %263 = vmatprep.subr.mxu0 0.0
  %264 = vmatpush1.msra.mxu0 0.0
  %265 = vmatprep.subr.mxu0 0.0
  %266 = vmatpush1.msra.mxu0 0.0
  %267 = vmatprep.subr.mxu0 0.0
  %268 = vmatpush1.msra.mxu0 0.0
  %269 = vmatprep.subr.mxu0 0.0
  %270 = vmatpush1.msra.mxu0 0.0
  %271 = vmatprep.subr.mxu0 0.0
  %272 = vmatpush1.msra.mxu0 0.0
  %273 = vmatprep.subr.mxu0 0.0
  %274 = vmatpush1.msra.mxu0 0.0
  %275 = vmatprep.subr.mxu0 0.0
  %276 = vmatpush1.msra.mxu0 0.0
  %277 = vmatprep.subr.mxu0 0.0
  %278 = vmatpush1.msra.mxu0 0.0
  %279 = vmatprep.subr.mxu0 0.0
  %280 = vmatpush1.msra.mxu0 0.0
  %281 = vmatprep.subr.mxu0 0.0
  %282 = vmatpush1.msra.mxu0 0.0
  %283 = vmatprep.subr.mxu0 0.0
  %284 = vmatpush1.msra.mxu0 0.0
  %285 = vmatprep.subr.mxu0 0.0
  %286 = vmatpush1.msra.mxu0 0.0
  %287 = vmatprep.subr.mxu0 0.0
  %288 = vmatpush1.msra.mxu0 0.0
  %289 = vmatprep.subr.mxu0 0.0
  %290 = vmatpush1.msra.mxu0 0.0
  %291 = vmatprep.subr.mxu0 0.0
  %292 = vmatpush1.msra.mxu0 0.0
  %293 = vmatprep.subr.mxu0 0.0
  %294 = vmatpush1.msra.mxu0 0.0
  %295 = vmatprep.subr.mxu0 0.0
  %296 = vmatpush1.msra.mxu0 0.0
  %297 = vmatprep.subr.mxu0 0.0
  %298 = vmatpush1.msra.mxu0 0.0
  %299 = vmatprep.subr.mxu0 0.0
  %300 = vmatpush1.msra.mxu0 0.0
  %301 = vmatprep.subr.mxu0 0.0
  %302 = vmatpush1.msra.mxu0 0.0
  %303 = vmatprep.subr.mxu0 0.0
  %304 = vmatpush1.msra.mxu0 0.0
  %305 = vmatprep.subr.mxu0 0.0
  %306 = vmatpush1.msra.mxu0 0.0
  %307 = vmatprep.subr.mxu0 0.0
  %308 = vmatpush1.msra.mxu0 0.0
  %309 = vmatprep.subr.mxu0 0.0
  %310 = vmatpush1.msra.mxu0 0.0
  %311 = vmatprep.subr.mxu0 0.0
  %312 = vmatpush1.msra.mxu0 0.0
  %313 = vmatprep.subr.mxu0 0.0
  %314 = vmatpush1.msra.mxu0 0.0
  %315 = vmatprep.subr.mxu0 0.0
  %316 = vmatpush1.msra.mxu0 0.0
  %317 = vmatprep.subr.mxu0 0.0
  %318 = vmatpush1.msra.mxu0 0.0
  %319 = vmatprep.mubr.f32.mxu0 0.0
  %320 = vmatmul.mubr.f32.gmra.mrb[0].mxu0 %v250
  %v321 = vpop.f32.mrb[0].mxu0
  %v322 = vadd.f32 %v247, %v321
  %v323 = vpop.f32.mrb[0].mxu0
  %324 = vmatprep.mubr.f32.mxu0 0.0
  %325 = vmatmul.mubr.f32.gmra.mrb[0].mxu0 %v253
  %v326 = vpop.f32.mrb[0].mxu0
  %v327 = vadd.f32 %v247, %v326
  %v328 = vpop.f32.mrb[0].mxu0
  %329 = vdwg.mxu0
  %v330 = vmax.f32 %v322, 0.0
  %v331 = vmax.f32 %v327, 0.0
  %s332 = scalar_lea.vmem %s5, 64
  %v333 = vld [vmem:[%s332] sm:$0xff]
  %v334 = vld [vmem:[%s332 + $0x8] sm:$0xff]
  %v335 = vld [vmem:[%s332 + $0x10] sm:$0xff]
  %v336 = vld [vmem:[%s332 + $0x18] sm:$0xff]
  %s337 = scalar_lea.vmem %s6, 2
  %v338 = vld [vmem:[%s337] sm:$0x1]
  %v340 = vlaneseq
  %v341 = vshrl.u32 %v340, 7
  %v342 = vsub.s32 0, %v341
  %v343 = vrot.slane %v338, %v342
  %v346 = vsel %vm152, %v330, 0
  %v349 = vsel %vm152, %v331, 0
  %351 = vmatprep.subr.mxu0 0.0
  %352 = vmatpush1.msra.mxu0 %v333
  %353 = vmatprep.subr.mxu0 0.0
  %354 = vmatpush1.msra.mxu0 %v334
  %355 = vmatprep.subr.mxu0 0.0
  %356 = vmatpush1.msra.mxu0 %v335
  %357 = vmatprep.subr.mxu0 0.0
  %358 = vmatpush1.msra.mxu0 %v336
  %359 = vmatprep.subr.mxu0 0.0
  %360 = vmatpush1.msra.mxu0 0.0
  %361 = vmatprep.subr.mxu0 0.0
  %362 = vmatpush1.msra.mxu0 0.0
  %363 = vmatprep.subr.mxu0 0.0
  %364 = vmatpush1.msra.mxu0 0.0
  %365 = vmatprep.subr.mxu0 0.0
  %366 = vmatpush1.msra.mxu0 0.0
  %367 = vmatprep.subr.mxu0 0.0
  %368 = vmatpush1.msra.mxu0 0.0
  %369 = vmatprep.subr.mxu0 0.0
  %370 = vmatpush1.msra.mxu0 0.0
  %371 = vmatprep.subr.mxu0 0.0
  %372 = vmatpush1.msra.mxu0 0.0
  %373 = vmatprep.subr.mxu0 0.0
  %374 = vmatpush1.msra.mxu0 0.0
  %375 = vmatprep.subr.mxu0 0.0
  %376 = vmatpush1.msra.mxu0 0.0
  %377 = vmatprep.subr.mxu0 0.0
  %378 = vmatpush1.msra.mxu0 0.0
  %379 = vmatprep.subr.mxu0 0.0
  %380 = vmatpush1.msra.mxu0 0.0
  %381 = vmatprep.subr.mxu0 0.0
  %382 = vmatpush1.msra.mxu0 0.0
  %383 = vmatprep.subr.mxu0 0.0
  %384 = vmatpush1.msra.mxu0 0.0
  %385 = vmatprep.subr.mxu0 0.0
  %386 = vmatpush1.msra.mxu0 0.0
  %387 = vmatprep.subr.mxu0 0.0
  %388 = vmatpush1.msra.mxu0 0.0
  %389 = vmatprep.subr.mxu0 0.0
  %390 = vmatpush1.msra.mxu0 0.0
  %391 = vmatprep.subr.mxu0 0.0
  %392 = vmatpush1.msra.mxu0 0.0
  %393 = vmatprep.subr.mxu0 0.0
  %394 = vmatpush1.msra.mxu0 0.0
  %395 = vmatprep.subr.mxu0 0.0
  %396 = vmatpush1.msra.mxu0 0.0
  %397 = vmatprep.subr.mxu0 0.0
  %398 = vmatpush1.msra.mxu0 0.0
  %399 = vmatprep.subr.mxu0 0.0
  %400 = vmatpush1.msra.mxu0 0.0
  %401 = vmatprep.subr.mxu0 0.0
  %402 = vmatpush1.msra.mxu0 0.0
  %403 = vmatprep.subr.mxu0 0.0
  %404 = vmatpush1.msra.mxu0 0.0
  %405 = vmatprep.subr.mxu0 0.0
  %406 = vmatpush1.msra.mxu0 0.0
  %407 = vmatprep.subr.mxu0 0.0
  %408 = vmatpush1.msra.mxu0 0.0
  %409 = vmatprep.subr.mxu0 0.0
  %410 = vmatpush1.msra.mxu0 0.0
  %411 = vmatprep.subr.mxu0 0.0
  %412 = vmatpush1.msra.mxu0 0.0
  %413 = vmatprep.subr.mxu0 0.0
  %414 = vmatpush1.msra.mxu0 0.0
  %415 = vmatprep.mubr.f32.mxu0 0.0
  %416 = vmatmul.mubr.f32.gmra.mrb[0].mxu0 %v346
  %v417 = vpop.f32.mrb[0].mxu0
  %v418 = vadd.f32 %v343, %v417
  %v419 = vpop.f32.mrb[0].mxu0
  %420 = vmatprep.mubr.f32.mxu0 0.0
  %421 = vmatmul.mubr.f32.gmra.mrb[0].mxu0 %v349
  %v422 = vpop.f32.mrb[0].mxu0
  %v423 = vadd.f32 %v343, %v422
  %v424 = vpop.f32.mrb[0].mxu0
  %425 = vdwg.mxu0
  %v426 = vmax.f32 %v418, 0.0
  %v427 = vmax.f32 %v423, 0.0
  %v428 = vld [vmem:[%s1] sm:$0xff]
  %v429 = vld [vmem:[%s1 + $0x8] sm:$0xff]
  %s430 = scalar_lea.vmem %s5, 96
  %v431 = vld [vmem:[%s430] sm:$0xff]
  %v432 = vld [vmem:[%s430 + $0x8] sm:$0xff]
  %v433 = vld [vmem:[%s430 + $0x10] sm:$0xff]
  %v434 = vld [vmem:[%s430 + $0x18] sm:$0xff]
  %s435 = scalar_lea.vmem %s6, 3
  %v436 = vld [vmem:[%s435] sm:$0x1]
  %v438 = vlaneseq
  %v439 = vshrl.u32 %v438, 7
  %v440 = vsub.s32 0, %v439
  %v441 = vrot.slane %v436, %v440
  %v444 = vsel %vm152, %v426, 0
  %v447 = vsel %vm152, %v427, 0
  %449 = vmatprep.subr.mxu0 0.0
  %450 = vmatpush1.msra.mxu0 %v431
  %451 = vmatprep.subr.mxu0 0.0
  %452 = vmatpush1.msra.mxu0 %v432
  %453 = vmatprep.subr.mxu0 0.0
  %454 = vmatpush1.msra.mxu0 %v433
  %455 = vmatprep.subr.mxu0 0.0
  %456 = vmatpush1.msra.mxu0 %v434
  %457 = vmatprep.subr.mxu0 0.0
  %458 = vmatpush1.msra.mxu0 0.0
  %459 = vmatprep.subr.mxu0 0.0
  %460 = vmatpush1.msra.mxu0 0.0
  %461 = vmatprep.subr.mxu0 0.0
  %462 = vmatpush1.msra.mxu0 0.0
  %463 = vmatprep.subr.mxu0 0.0
  %464 = vmatpush1.msra.mxu0 0.0
  %465 = vmatprep.subr.mxu0 0.0
  %466 = vmatpush1.msra.mxu0 0.0
  %467 = vmatprep.subr.mxu0 0.0
  %468 = vmatpush1.msra.mxu0 0.0
  %469 = vmatprep.subr.mxu0 0.0
  %470 = vmatpush1.msra.mxu0 0.0
  %471 = vmatprep.subr.mxu0 0.0
  %472 = vmatpush1.msra.mxu0 0.0
  %473 = vmatprep.subr.mxu0 0.0
  %474 = vmatpush1.msra.mxu0 0.0
  %475 = vmatprep.subr.mxu0 0.0
  %476 = vmatpush1.msra.mxu0 0.0
  %477 = vmatprep.subr.mxu0 0.0
  %478 = vmatpush1.msra.mxu0 0.0
  %479 = vmatprep.subr.mxu0 0.0
  %480 = vmatpush1.msra.mxu0 0.0
  %481 = vmatprep.subr.mxu0 0.0
  %482 = vmatpush1.msra.mxu0 0.0
  %483 = vmatprep.subr.mxu0 0.0
  %484 = vmatpush1.msra.mxu0 0.0
  %485 = vmatprep.subr.mxu0 0.0
  %486 = vmatpush1.msra.mxu0 0.0
  %487 = vmatprep.subr.mxu0 0.0
  %488 = vmatpush1.msra.mxu0 0.0
  %489 = vmatprep.subr.mxu0 0.0
  %490 = vmatpush1.msra.mxu0 0.0
  %491 = vmatprep.subr.mxu0 0.0
  %492 = vmatpush1.msra.mxu0 0.0
  %493 = vmatprep.subr.mxu0 0.0
  %494 = vmatpush1.msra.mxu0 0.0
  %495 = vmatprep.subr.mxu0 0.0
  %496 = vmatpush1.msra.mxu0 0.0
  %497 = vmatprep.subr.mxu0 0.0
  %498 = vmatpush1.msra.mxu0 0.0
  %499 = vmatprep.subr.mxu0 0.0
  %500 = vmatpush1.msra.mxu0 0.0
  %501 = vmatprep.subr.mxu0 0.0
  %502 = vmatpush1.msra.mxu0 0.0
  %503 = vmatprep.subr.mxu0 0.0
  %504 = vmatpush1.msra.mxu0 0.0
  %505 = vmatprep.subr.mxu0 0.0
  %506 = vmatpush1.msra.mxu0 0.0
  %507 = vmatprep.subr.mxu0 0.0
  %508 = vmatpush1.msra.mxu0 0.0
  %509 = vmatprep.subr.mxu0 0.0
  %510 = vmatpush1.msra.mxu0 0.0
  %511 = vmatprep.subr.mxu0 0.0
  %512 = vmatpush1.msra.mxu0 0.0
  %513 = vmatprep.mubr.f32.mxu0 0.0
  %514 = vmatmul.mubr.f32.gmra.mrb[0].mxu0 %v444
  %v515 = vpop.f32.mrb[0].mxu0
  %v516 = vadd.f32 %v441, %v515
  %v517 = vpop.f32.mrb[0].mxu0
  %518 = vmatprep.mubr.f32.mxu0 0.0
  %519 = vmatmul.mubr.f32.gmra.mrb[0].mxu0 %v447
  %v520 = vpop.f32.mrb[0].mxu0
  %v521 = vadd.f32 %v441, %v520
  %v522 = vpop.f32.mrb[0].mxu0
  %523 = vdwg.mxu0
  %v524 = vmax.f32 %v516, 0.0
  %v525 = vmax.f32 %v521, 0.0
  %v526 = vld [vmem:[%s7] sm:$0xff]
  %v527 = vld [vmem:[%s7 + $0x8] sm:$0xff]
  %v528 = vld [vmem:[%s7 + $0x10] sm:$0xff]
  %v529 = vld [vmem:[%s7 + $0x18] sm:$0xff]
  %v530 = vld [vmem:[%s8] sm:$0x1]
  %v532 = vlaneseq
  %v533 = vshrl.u32 %v532, 7
  %v534 = vsub.s32 0, %v533
  %v535 = vrot.slane %v530, %v534
  %v538 = vsel %vm152, %v524, 0
  %v541 = vsel %vm152, %v525, 0
  %543 = vmatprep.subr.mxu0 0.0
  %544 = vmatpush1.msra.mxu0 %v526
  %545 = vmatprep.subr.mxu0 0.0
  %546 = vmatpush1.msra.mxu0 %v527
  %547 = vmatprep.subr.mxu0 0.0
  %548 = vmatpush1.msra.mxu0 %v528
  %549 = vmatprep.subr.mxu0 0.0
  %550 = vmatpush1.msra.mxu0 %v529
  %551 = vmatprep.subr.mxu0 0.0
  %552 = vmatpush1.msra.mxu0 0.0
  %553 = vmatprep.subr.mxu0 0.0
  %554 = vmatpush1.msra.mxu0 0.0
  %555 = vmatprep.subr.mxu0 0.0
  %556 = vmatpush1.msra.mxu0 0.0
  %557 = vmatprep.subr.mxu0 0.0
  %558 = vmatpush1.msra.mxu0 0.0
  %559 = vmatprep.subr.mxu0 0.0
  %560 = vmatpush1.msra.mxu0 0.0
  %561 = vmatprep.subr.mxu0 0.0
  %562 = vmatpush1.msra.mxu0 0.0
  %563 = vmatprep.subr.mxu0 0.0
  %564 = vmatpush1.msra.mxu0 0.0
  %565 = vmatprep.subr.mxu0 0.0
  %566 = vmatpush1.msra.mxu0 0.0
  %567 = vmatprep.subr.mxu0 0.0
  %568 = vmatpush1.msra.mxu0 0.0
  %569 = vmatprep.subr.mxu0 0.0
  %570 = vmatpush1.msra.mxu0 0.0
  %571 = vmatprep.subr.mxu0 0.0
  %572 = vmatpush1.msra.mxu0 0.0
  %573 = vmatprep.subr.mxu0 0.0
  %574 = vmatpush1.msra.mxu0 0.0
  %575 = vmatprep.subr.mxu0 0.0
  %576 = vmatpush1.msra.mxu0 0.0
  %577 = vmatprep.subr.mxu0 0.0
  %578 = vmatpush1.msra.mxu0 0.0
  %579 = vmatprep.subr.mxu0 0.0
  %580 = vmatpush1.msra.mxu0 0.0
  %581 = vmatprep.subr.mxu0 0.0
  %582 = vmatpush1.msra.mxu0 0.0
  %583 = vmatprep.subr.mxu0 0.0
  %584 = vmatpush1.msra.mxu0 0.0
  %585 = vmatprep.subr.mxu0 0.0
  %586 = vmatpush1.msra.mxu0 0.0
  %587 = vmatprep.subr.mxu0 0.0
  %588 = vmatpush1.msra.mxu0 0.0
  %589 = vmatprep.subr.mxu0 0.0
  %590 = vmatpush1.msra.mxu0 0.0
  %591 = vmatprep.subr.mxu0 0.0
  %592 = vmatpush1.msra.mxu0 0.0
  %593 = vmatprep.subr.mxu0 0.0
  %594 = vmatpush1.msra.mxu0 0.0
  %595 = vmatprep.subr.mxu0 0.0
  %596 = vmatpush1.msra.mxu0 0.0
  %597 = vmatprep.subr.mxu0 0.0
  %598 = vmatpush1.msra.mxu0 0.0
  %599 = vmatprep.subr.mxu0 0.0
  %600 = vmatpush1.msra.mxu0 0.0
  %601 = vmatprep.subr.mxu0 0.0
  %602 = vmatpush1.msra.mxu0 0.0
  %603 = vmatprep.subr.mxu0 0.0
  %604 = vmatpush1.msra.mxu0 0.0
  %605 = vmatprep.subr.mxu0 0.0
  %606 = vmatpush1.msra.mxu0 0.0
  %607 = vmatprep.mubr.f32.mxu0 0.0
  %608 = vmatmul.mubr.f32.gmra.mrb[0].mxu0 %v538
  %v609 = vpop.f32.mrb[0].mxu0
  %v610 = vadd.f32 %v535, %v609
  %v611 = vpop.f32.mrb[0].mxu0
  %612 = vmatprep.mubr.f32.mxu0 0.0
  %613 = vmatmul.mubr.f32.gmra.mrb[0].mxu0 %v541
  %v614 = vpop.f32.mrb[0].mxu0
  %v615 = vadd.f32 %v535, %v614
  %v616 = vpop.f32.mrb[0].mxu0
  %617 = vdwg.mxu0
  %v620 = vcombine.high %v610, %v610
  %v622 = vunpack.c.l.s4 1966171168
  %v623 = vunpack.c.0.s8 %v622
  %v624 = vlaneseq
  %v625 = vshrl.u32 %v624, 7
  %v626 = vsub.s32 %v623, %v625
  %v627 = vrot.slane %v610, %v626
  %v629 = vunpack.c.l.s4 1966171168
  %v630 = vunpack.c.0.s8 %v629
  %v631 = vlaneseq
  %v632 = vshrl.u32 %v631, 7
  %v633 = vsub.s32 %v630, %v632
  %v634 = vrot.slane %v620, %v633
  %v635 = vcombine.high %v627, %v627
  %v636 = vcombine.high %v634, %v634
  %v638 = vunpack.c.l.s4 1966171168
  %v639 = vunpack.c.0.s8 %v638
  %v640 = vlaneseq
  %v641 = vshrl.u32 %v640, 7
  %v642 = vsub.s32 %v639, %v641
  %v643 = vrot.slane %v627, %v642
  %v645 = vunpack.c.l.s4 1966171168
  %v646 = vunpack.c.0.s8 %v645
  %v647 = vlaneseq
  %v648 = vshrl.u32 %v647, 7
  %v649 = vsub.s32 %v646, %v648
  %v650 = vrot.slane %v634, %v649
  %v652 = vunpack.c.l.s4 1966171168
  %v653 = vunpack.c.0.s8 %v652
  %v654 = vlaneseq
  %v655 = vshrl.u32 %v654, 7
  %v656 = vsub.s32 %v653, %v655
  %v657 = vrot.slane %v635, %v656
  %v659 = vunpack.c.l.s4 1966171168
  %v660 = vunpack.c.0.s8 %v659
  %v661 = vlaneseq
  %v662 = vshrl.u32 %v661, 7
  %v663 = vsub.s32 %v660, %v662
  %v664 = vrot.slane %v636, %v663
  %v665 = vcombine.high %v643, %v643
  %v666 = vcombine.high %v650, %v650
  %v667 = vcombine.high %v657, %v657
  %v668 = vcombine.high %v664, %v664
  %v669 = vcombine.high %v615, %v615
  %v671 = vunpack.c.l.s4 1966171168
  %v672 = vunpack.c.0.s8 %v671
  %v673 = vlaneseq
  %v674 = vshrl.u32 %v673, 7
  %v675 = vsub.s32 %v672, %v674
  %v676 = vrot.slane %v615, %v675
  %v678 = vunpack.c.l.s4 1966171168
  %v679 = vunpack.c.0.s8 %v678
  %v680 = vlaneseq
  %v681 = vshrl.u32 %v680, 7
  %v682 = vsub.s32 %v679, %v681
  %v683 = vrot.slane %v669, %v682
  %v684 = vcombine.high %v676, %v676
  %v685 = vcombine.high %v683, %v683
  %v687 = vunpack.c.l.s4 1966171168
  %v688 = vunpack.c.0.s8 %v687
  %v689 = vlaneseq
  %v690 = vshrl.u32 %v689, 7
  %v691 = vsub.s32 %v688, %v690
  %v692 = vrot.slane %v676, %v691
  %v694 = vunpack.c.l.s4 1966171168
  %v695 = vunpack.c.0.s8 %v694
  %v696 = vlaneseq
  %v697 = vshrl.u32 %v696, 7
  %v698 = vsub.s32 %v695, %v697
  %v699 = vrot.slane %v683, %v698
  %v701 = vunpack.c.l.s4 1966171168
  %v702 = vunpack.c.0.s8 %v701
  %v703 = vlaneseq
  %v704 = vshrl.u32 %v703, 7
  %v705 = vsub.s32 %v702, %v704
  %v706 = vrot.slane %v684, %v705
  %v708 = vunpack.c.l.s4 1966171168
  %v709 = vunpack.c.0.s8 %v708
  %v710 = vlaneseq
  %v711 = vshrl.u32 %v710, 7
  %v712 = vsub.s32 %v709, %v711
  %v713 = vrot.slane %v685, %v712
  %v714 = vcombine.high %v692, %v692
  %v715 = vcombine.high %v699, %v699
  %v716 = vcombine.high %v706, %v706
  %v717 = vcombine.high %v713, %v713
  %v718 = vlaneseq
  %v719 = vshrl.u32 %v718, 7
  %v720 = vsub.s32 0, %v719
  %v721 = vrot.slane %v643, %v720
  %v722 = vlaneseq
  %v723 = vshrl.u32 %v722, 7
  %v724 = vsub.s32 0, %v723
  %v725 = vrot.slane %v657, %v724
  %v726 = vlaneseq
  %v727 = vshrl.u32 %v726, 7
  %v728 = vsub.s32 0, %v727
  %v729 = vrot.slane %v665, %v728
  %v730 = vlaneseq
  %v731 = vshrl.u32 %v730, 7
  %v732 = vsub.s32 0, %v731
  %v733 = vrot.slane %v667, %v732
  %v734 = vlaneseq
  %v735 = vshrl.u32 %v734, 7
  %v736 = vsub.s32 0, %v735
  %v737 = vrot.slane %v650, %v736
  %v738 = vlaneseq
  %v739 = vshrl.u32 %v738, 7
  %v740 = vsub.s32 0, %v739
  %v741 = vrot.slane %v664, %v740
  %v742 = vlaneseq
  %v743 = vshrl.u32 %v742, 7
  %v744 = vsub.s32 0, %v743
  %v745 = vrot.slane %v666, %v744
  %v746 = vlaneseq
  %v747 = vshrl.u32 %v746, 7
  %v748 = vsub.s32 0, %v747
  %v749 = vrot.slane %v668, %v748
  %v750 = vlaneseq
  %v751 = vshrl.u32 %v750, 7
  %v752 = vsub.s32 0, %v751
  %v753 = vrot.slane %v692, %v752
  %v754 = vlaneseq
  %v755 = vshrl.u32 %v754, 7
  %v756 = vsub.s32 0, %v755
  %v757 = vrot.slane %v706, %v756
  %v758 = vlaneseq
  %v759 = vshrl.u32 %v758, 7
  %v760 = vsub.s32 0, %v759
  %v761 = vrot.slane %v714, %v760
  %v762 = vlaneseq
  %v763 = vshrl.u32 %v762, 7
  %v764 = vsub.s32 0, %v763
  %v765 = vrot.slane %v716, %v764
  %v766 = vlaneseq
  %v767 = vshrl.u32 %v766, 7
  %v768 = vsub.s32 0, %v767
  %v769 = vrot.slane %v699, %v768
  %v770 = vlaneseq
  %v771 = vshrl.u32 %v770, 7
  %v772 = vsub.s32 0, %v771
  %v773 = vrot.slane %v713, %v772
  %v774 = vlaneseq
  %v775 = vshrl.u32 %v774, 7
  %v776 = vsub.s32 0, %v775
  %v777 = vrot.slane %v715, %v776
  %v778 = vlaneseq
  %v779 = vshrl.u32 %v778, 7
  %v780 = vsub.s32 0, %v779
  %v781 = vrot.slane %v717, %v780
  %798 = vrot.lane.b32.xlu0 %v610, 32
  %v799 = vpop.permute.xlu0 %798
  %800 = vrot.lane.b32.xlu0 %v615, 32
  %v801 = vpop.permute.xlu0 %800
  %v804 = vadd.f32 %v721, %v799
  %v805 = vadd.f32 %v721, %v801
  %v806 = vadd.f32 %v725, %v799
  %v807 = vadd.f32 %v725, %v801
  %v808 = vadd.f32 %v729, %v799
  %v809 = vadd.f32 %v729, %v801
  %v810 = vadd.f32 %v733, %v799
  %v811 = vadd.f32 %v733, %v801
  %v812 = vadd.f32 %v737, %v799
  %v813 = vadd.f32 %v737, %v801
  %v814 = vadd.f32 %v741, %v799
  %v815 = vadd.f32 %v741, %v801
  %v816 = vadd.f32 %v745, %v799
  %v817 = vadd.f32 %v745, %v801
  %v818 = vadd.f32 %v749, %v799
  %v819 = vadd.f32 %v749, %v801
  %v820 = vadd.f32 %v753, %v799
  %v821 = vadd.f32 %v753, %v801
  %v822 = vadd.f32 %v757, %v799
  %v823 = vadd.f32 %v757, %v801
  %v824 = vadd.f32 %v761, %v799
  %v825 = vadd.f32 %v761, %v801
  %v826 = vadd.f32 %v765, %v799
  %v827 = vadd.f32 %v765, %v801
  %v828 = vadd.f32 %v769, %v799
  %v829 = vadd.f32 %v769, %v801
  %v830 = vadd.f32 %v773, %v799
  %v831 = vadd.f32 %v773, %v801
  %v832 = vadd.f32 %v777, %v799
  %v833 = vadd.f32 %v777, %v801
  %v834 = vadd.f32 %v781, %v799
  %v835 = vadd.f32 %v781, %v801
  %vm836 = vcmp.gt.f32.partialorder %v804, 0.0
  %vm837 = vcmp.gt.f32.partialorder %v805, 0.0
  %vm838 = vcmp.gt.f32.partialorder %v806, 0.0
  %vm839 = vcmp.gt.f32.partialorder %v807, 0.0
  %vm840 = vcmp.gt.f32.partialorder %v808, 0.0
  %vm841 = vcmp.gt.f32.partialorder %v809, 0.0
  %vm842 = vcmp.gt.f32.partialorder %v810, 0.0
  %vm843 = vcmp.gt.f32.partialorder %v811, 0.0
  %vm844 = vcmp.gt.f32.partialorder %v812, 0.0
  %vm845 = vcmp.gt.f32.partialorder %v813, 0.0
  %vm846 = vcmp.gt.f32.partialorder %v814, 0.0
  %vm847 = vcmp.gt.f32.partialorder %v815, 0.0
  %vm848 = vcmp.gt.f32.partialorder %v816, 0.0
  %vm849 = vcmp.gt.f32.partialorder %v817, 0.0
  %vm850 = vcmp.gt.f32.partialorder %v818, 0.0
  %vm851 = vcmp.gt.f32.partialorder %v819, 0.0
  %vm852 = vcmp.gt.f32.partialorder %v820, 0.0
  %vm853 = vcmp.gt.f32.partialorder %v821, 0.0
  %vm854 = vcmp.gt.f32.partialorder %v822, 0.0
  %vm855 = vcmp.gt.f32.partialorder %v823, 0.0
  %vm856 = vcmp.gt.f32.partialorder %v824, 0.0
  %vm857 = vcmp.gt.f32.partialorder %v825, 0.0
  %vm858 = vcmp.gt.f32.partialorder %v826, 0.0
  %vm859 = vcmp.gt.f32.partialorder %v827, 0.0
  %vm860 = vcmp.gt.f32.partialorder %v828, 0.0
  %vm861 = vcmp.gt.f32.partialorder %v829, 0.0
  %vm862 = vcmp.gt.f32.partialorder %v830, 0.0
  %vm863 = vcmp.gt.f32.partialorder %v831, 0.0
  %vm864 = vcmp.gt.f32.partialorder %v832, 0.0
  %vm865 = vcmp.gt.f32.partialorder %v833, 0.0
  %vm866 = vcmp.gt.f32.partialorder %v834, 0.0
  %vm867 = vcmp.gt.f32.partialorder %v835, 0.0
  %v868 = vmul.f32 %v804, 0.2
  %v869 = vmul.f32 %v805, 0.2
  %v870 = vmul.f32 %v806, 0.2
  %v871 = vmul.f32 %v807, 0.2
  %v872 = vmul.f32 %v808, 0.2
  %v873 = vmul.f32 %v809, 0.2
  %v874 = vmul.f32 %v810, 0.2
  %v875 = vmul.f32 %v811, 0.2
  %v876 = vmul.f32 %v812, 0.2
  %v877 = vmul.f32 %v813, 0.2
  %v878 = vmul.f32 %v814, 0.2
  %v879 = vmul.f32 %v815, 0.2
  %v880 = vmul.f32 %v816, 0.2
  %v881 = vmul.f32 %v817, 0.2
  %v882 = vmul.f32 %v818, 0.2
  %v883 = vmul.f32 %v819, 0.2
  %v884 = vmul.f32 %v820, 0.2
  %v885 = vmul.f32 %v821, 0.2
  %v886 = vmul.f32 %v822, 0.2
  %v887 = vmul.f32 %v823, 0.2
  %v888 = vmul.f32 %v824, 0.2
  %v889 = vmul.f32 %v825, 0.2
  %v890 = vmul.f32 %v826, 0.2
  %v891 = vmul.f32 %v827, 0.2
  %v892 = vmul.f32 %v828, 0.2
  %v893 = vmul.f32 %v829, 0.2
  %v894 = vmul.f32 %v830, 0.2
  %v895 = vmul.f32 %v831, 0.2
  %v896 = vmul.f32 %v832, 0.2
  %v897 = vmul.f32 %v833, 0.2
  %v898 = vmul.f32 %v834, 0.2
  %v899 = vmul.f32 %v835, 0.2
  %v900 = vsel %vm836, %v804, %v868
  %v901 = vsel %vm837, %v805, %v869
  %v902 = vsel %vm838, %v806, %v870
  %v903 = vsel %vm839, %v807, %v871
  %v904 = vsel %vm840, %v808, %v872
  %v905 = vsel %vm841, %v809, %v873
  %v906 = vsel %vm842, %v810, %v874
  %v907 = vsel %vm843, %v811, %v875
  %v908 = vsel %vm844, %v812, %v876
  %v909 = vsel %vm845, %v813, %v877
  %v910 = vsel %vm846, %v814, %v878
  %v911 = vsel %vm847, %v815, %v879
  %v912 = vsel %vm848, %v816, %v880
  %v913 = vsel %vm849, %v817, %v881
  %v914 = vsel %vm850, %v818, %v882
  %v915 = vsel %vm851, %v819, %v883
  %v916 = vsel %vm852, %v820, %v884
  %v917 = vsel %vm853, %v821, %v885
  %v918 = vsel %vm854, %v822, %v886
  %v919 = vsel %vm855, %v823, %v887
  %v920 = vsel %vm856, %v824, %v888
  %v921 = vsel %vm857, %v825, %v889
  %v922 = vsel %vm858, %v826, %v890
  %v923 = vsel %vm859, %v827, %v891
  %v924 = vsel %vm860, %v828, %v892
  %v925 = vsel %vm861, %v829, %v893
  %v926 = vsel %vm862, %v830, %v894
  %v927 = vsel %vm863, %v831, %v895
  %v928 = vsel %vm864, %v832, %v896
  %v929 = vsel %vm865, %v833, %v897
  %v930 = vsel %vm866, %v834, %v898
  %v931 = vsel %vm867, %v835, %v899
  %v932 = vld [vmem:[%s9] sm:$0x1]
  %v934 = vlaneseq
  %v935 = vshrl.u32 %v934, 7
  %v936 = vsub.s32 0, %v935
  %v937 = vrot.slane %v932, %v936
  %938 = vrot.lane.b32.xlu0 %v937, 32
  %v939 = vpop.permute.xlu0 %938
  %v941 = vmul.f32 %v900, %v939
  %v942 = vmul.f32 %v901, %v939
  %v943 = vmul.f32 %v902, %v939
  %v944 = vmul.f32 %v903, %v939
  %v945 = vmul.f32 %v904, %v939
  %v946 = vmul.f32 %v905, %v939
  %v947 = vmul.f32 %v906, %v939
  %v948 = vmul.f32 %v907, %v939
  %v949 = vmul.f32 %v908, %v939
  %v950 = vmul.f32 %v909, %v939
  %v951 = vmul.f32 %v910, %v939
  %v952 = vmul.f32 %v911, %v939
  %v953 = vmul.f32 %v912, %v939
  %v954 = vmul.f32 %v913, %v939
  %v955 = vmul.f32 %v914, %v939
  %v956 = vmul.f32 %v915, %v939
  %v957 = vmul.f32 %v916, %v939
  %v958 = vmul.f32 %v917, %v939
  %v959 = vmul.f32 %v918, %v939
  %v960 = vmul.f32 %v919, %v939
  %v961 = vmul.f32 %v920, %v939
  %v962 = vmul.f32 %v921, %v939
  %v963 = vmul.f32 %v922, %v939
  %v964 = vmul.f32 %v923, %v939
  %v965 = vmul.f32 %v924, %v939
  %v966 = vmul.f32 %v925, %v939
  %v967 = vmul.f32 %v926, %v939
  %v968 = vmul.f32 %v927, %v939
  %v969 = vmul.f32 %v928, %v939
  %v970 = vmul.f32 %v929, %v939
  %v971 = vmul.f32 %v930, %v939
  %v972 = vmul.f32 %v931, %v939
  %1005 = vrot.lane.b32.xlu0 %v941, 96
  %v1006 = vpop.permute.xlu0 %1005
  %1007 = vrot.lane.b32.xlu0 %v942, 96
  %v1008 = vpop.permute.xlu0 %1007
  %1009 = vrot.lane.b32.xlu0 %v943, 96
  %v1010 = vpop.permute.xlu0 %1009
  %1011 = vrot.lane.b32.xlu0 %v944, 96
  %v1012 = vpop.permute.xlu0 %1011
  %1013 = vrot.lane.b32.xlu0 %v945, 96
  %v1014 = vpop.permute.xlu0 %1013
  %1015 = vrot.lane.b32.xlu0 %v946, 96
  %v1016 = vpop.permute.xlu0 %1015
  %1017 = vrot.lane.b32.xlu0 %v947, 96
  %v1018 = vpop.permute.xlu0 %1017
  %1019 = vrot.lane.b32.xlu0 %v948, 96
  %v1020 = vpop.permute.xlu0 %1019
  %1021 = vrot.lane.b32.xlu0 %v949, 96
  %v1022 = vpop.permute.xlu0 %1021
  %1023 = vrot.lane.b32.xlu0 %v950, 96
  %v1024 = vpop.permute.xlu0 %1023
  %1025 = vrot.lane.b32.xlu0 %v951, 96
  %v1026 = vpop.permute.xlu0 %1025
  %1027 = vrot.lane.b32.xlu0 %v952, 96
  %v1028 = vpop.permute.xlu0 %1027
  %1029 = vrot.lane.b32.xlu0 %v953, 96
  %v1030 = vpop.permute.xlu0 %1029
  %1031 = vrot.lane.b32.xlu0 %v954, 96
  %v1032 = vpop.permute.xlu0 %1031
  %1033 = vrot.lane.b32.xlu0 %v955, 96
  %v1034 = vpop.permute.xlu0 %1033
  %1035 = vrot.lane.b32.xlu0 %v956, 96
  %v1036 = vpop.permute.xlu0 %1035
  %1037 = vrot.lane.b32.xlu0 %v957, 96
  %v1038 = vpop.permute.xlu0 %1037
  %1039 = vrot.lane.b32.xlu0 %v958, 96
  %v1040 = vpop.permute.xlu0 %1039
  %1041 = vrot.lane.b32.xlu0 %v959, 96
  %v1042 = vpop.permute.xlu0 %1041
  %1043 = vrot.lane.b32.xlu0 %v960, 96
  %v1044 = vpop.permute.xlu0 %1043
  %1045 = vrot.lane.b32.xlu0 %v961, 96
  %v1046 = vpop.permute.xlu0 %1045
  %1047 = vrot.lane.b32.xlu0 %v962, 96
  %v1048 = vpop.permute.xlu0 %1047
  %1049 = vrot.lane.b32.xlu0 %v963, 96
  %v1050 = vpop.permute.xlu0 %1049
  %1051 = vrot.lane.b32.xlu0 %v964, 96
  %v1052 = vpop.permute.xlu0 %1051
  %1053 = vrot.lane.b32.xlu0 %v965, 96
  %v1054 = vpop.permute.xlu0 %1053
  %1055 = vrot.lane.b32.xlu0 %v966, 96
  %v1056 = vpop.permute.xlu0 %1055
  %1057 = vrot.lane.b32.xlu0 %v967, 96
  %v1058 = vpop.permute.xlu0 %1057
  %1059 = vrot.lane.b32.xlu0 %v968, 96
  %v1060 = vpop.permute.xlu0 %1059
  %1061 = vrot.lane.b32.xlu0 %v969, 96
  %v1062 = vpop.permute.xlu0 %1061
  %1063 = vrot.lane.b32.xlu0 %v970, 96
  %v1064 = vpop.permute.xlu0 %1063
  %1065 = vrot.lane.b32.xlu0 %v971, 96
  %v1066 = vpop.permute.xlu0 %1065
  %1067 = vrot.lane.b32.xlu0 %v972, 96
  %v1068 = vpop.permute.xlu0 %1067
  %v1101 = vsel %vm152, %v1006, 0.0
  %1102 = vadd.xlane.f32.xlu0 %v1101
  %v1103 = vpop.xlane.xlu0 %1102
  %v1104 = vsel %vm152, %v1008, 0.0
  %1105 = vadd.xlane.f32.xlu0 %v1104
  %v1106 = vpop.xlane.xlu0 %1105
  %v1107 = vsel %vm152, %v1010, 0.0
  %1108 = vadd.xlane.f32.xlu0 %v1107
  %v1109 = vpop.xlane.xlu0 %1108
  %v1110 = vsel %vm152, %v1012, 0.0
  %1111 = vadd.xlane.f32.xlu0 %v1110
  %v1112 = vpop.xlane.xlu0 %1111
  %v1113 = vsel %vm152, %v1014, 0.0
  %1114 = vadd.xlane.f32.xlu0 %v1113
  %v1115 = vpop.xlane.xlu0 %1114
  %v1116 = vsel %vm152, %v1016, 0.0
  %1117 = vadd.xlane.f32.xlu0 %v1116
  %v1118 = vpop.xlane.xlu0 %1117
  %v1119 = vsel %vm152, %v1018, 0.0
  %1120 = vadd.xlane.f32.xlu0 %v1119
  %v1121 = vpop.xlane.xlu0 %1120
  %v1122 = vsel %vm152, %v1020, 0.0
  %1123 = vadd.xlane.f32.xlu0 %v1122
  %v1124 = vpop.xlane.xlu0 %1123
  %v1125 = vsel %vm152, %v1022, 0.0
  %1126 = vadd.xlane.f32.xlu0 %v1125
  %v1127 = vpop.xlane.xlu0 %1126
  %v1128 = vsel %vm152, %v1024, 0.0
  %1129 = vadd.xlane.f32.xlu0 %v1128
  %v1130 = vpop.xlane.xlu0 %1129
  %v1131 = vsel %vm152, %v1026, 0.0
  %1132 = vadd.xlane.f32.xlu0 %v1131
  %v1133 = vpop.xlane.xlu0 %1132
  %v1134 = vsel %vm152, %v1028, 0.0
  %1135 = vadd.xlane.f32.xlu0 %v1134
  %v1136 = vpop.xlane.xlu0 %1135
  %v1137 = vsel %vm152, %v1030, 0.0
  %1138 = vadd.xlane.f32.xlu0 %v1137
  %v1139 = vpop.xlane.xlu0 %1138
  %v1140 = vsel %vm152, %v1032, 0.0
  %1141 = vadd.xlane.f32.xlu0 %v1140
  %v1142 = vpop.xlane.xlu0 %1141
  %v1143 = vsel %vm152, %v1034, 0.0
  %1144 = vadd.xlane.f32.xlu0 %v1143
  %v1145 = vpop.xlane.xlu0 %1144
  %v1146 = vsel %vm152, %v1036, 0.0
  %1147 = vadd.xlane.f32.xlu0 %v1146
  %v1148 = vpop.xlane.xlu0 %1147
  %v1149 = vsel %vm152, %v1038, 0.0
  %1150 = vadd.xlane.f32.xlu0 %v1149
  %v1151 = vpop.xlane.xlu0 %1150
  %v1152 = vsel %vm152, %v1040, 0.0
  %1153 = vadd.xlane.f32.xlu0 %v1152
  %v1154 = vpop.xlane.xlu0 %1153
  %v1155 = vsel %vm152, %v1042, 0.0
  %1156 = vadd.xlane.f32.xlu0 %v1155
  %v1157 = vpop.xlane.xlu0 %1156
  %v1158 = vsel %vm152, %v1044, 0.0
  %1159 = vadd.xlane.f32.xlu0 %v1158
  %v1160 = vpop.xlane.xlu0 %1159
  %v1161 = vsel %vm152, %v1046, 0.0
  %1162 = vadd.xlane.f32.xlu0 %v1161
  %v1163 = vpop.xlane.xlu0 %1162
  %v1164 = vsel %vm152, %v1048, 0.0
  %1165 = vadd.xlane.f32.xlu0 %v1164
  %v1166 = vpop.xlane.xlu0 %1165
  %v1167 = vsel %vm152, %v1050, 0.0
  %1168 = vadd.xlane.f32.xlu0 %v1167
  %v1169 = vpop.xlane.xlu0 %1168
  %v1170 = vsel %vm152, %v1052, 0.0
  %1171 = vadd.xlane.f32.xlu0 %v1170
  %v1172 = vpop.xlane.xlu0 %1171
  %v1173 = vsel %vm152, %v1054, 0.0
  %1174 = vadd.xlane.f32.xlu0 %v1173
  %v1175 = vpop.xlane.xlu0 %1174
  %v1176 = vsel %vm152, %v1056, 0.0
  %1177 = vadd.xlane.f32.xlu0 %v1176
  %v1178 = vpop.xlane.xlu0 %1177
  %v1179 = vsel %vm152, %v1058, 0.0
  %1180 = vadd.xlane.f32.xlu0 %v1179
  %v1181 = vpop.xlane.xlu0 %1180
  %v1182 = vsel %vm152, %v1060, 0.0
  %1183 = vadd.xlane.f32.xlu0 %v1182
  %v1184 = vpop.xlane.xlu0 %1183
  %v1185 = vsel %vm152, %v1062, 0.0
  %1186 = vadd.xlane.f32.xlu0 %v1185
  %v1187 = vpop.xlane.xlu0 %1186
  %v1188 = vsel %vm152, %v1064, 0.0
  %1189 = vadd.xlane.f32.xlu0 %v1188
  %v1190 = vpop.xlane.xlu0 %1189
  %v1191 = vsel %vm152, %v1066, 0.0
  %1192 = vadd.xlane.f32.xlu0 %v1191
  %v1193 = vpop.xlane.xlu0 %1192
  %v1194 = vsel %vm152, %v1068, 0.0
  %1195 = vadd.xlane.f32.xlu0 %v1194
  %v1196 = vpop.xlane.xlu0 %1195
  %vm1197 = vcmp.gt.f32.partialorder %v428, 0.0
  %vm1198 = vcmp.gt.f32.partialorder %v429, 0.0
  %v1231 = vlaneseq
  %v1232 = vand.u32 %v1231, 127
  %v1233 = vlaneseq
  %v1234 = vshrl.u32 %v1233, 7
  %v1235 = vsub.s32 %v1232, %v1234
  %v1236 = vrot.slane %v1103, %v1235
  %v1237 = vadd.s32 %v1232, 4294967288
  %v1238 = vlaneseq
  %v1239 = vshrl.u32 %v1238, 7
  %v1240 = vsub.s32 %v1237, %v1239
  %v1241 = vrot.slane %v1106, %v1240
  %vm1242 = vcmask 130112
  %v1243 = vsel %vm1242, %v1241, %v1236
  %v1244 = vlaneseq
  %v1245 = vshrl.u32 %v1244, 7
  %v1246 = vsub.s32 %v1232, %v1245
  %v1247 = vrot.slane %v1109, %v1246
  %v1248 = vlaneseq
  %v1249 = vshrl.u32 %v1248, 7
  %v1250 = vsub.s32 %v1237, %v1249
  %v1251 = vrot.slane %v1112, %v1250
  %v1252 = vsel %vm1242, %v1251, %v1247
  %v1253 = vlaneseq
  %v1254 = vshrl.u32 %v1253, 7
  %v1255 = vsub.s32 %v1232, %v1254
  %v1256 = vrot.slane %v1115, %v1255
  %v1257 = vlaneseq
  %v1258 = vshrl.u32 %v1257, 7
  %v1259 = vsub.s32 %v1237, %v1258
  %v1260 = vrot.slane %v1118, %v1259
  %v1261 = vsel %vm1242, %v1260, %v1256
  %v1262 = vlaneseq
  %v1263 = vshrl.u32 %v1262, 7
  %v1264 = vsub.s32 %v1232, %v1263
  %v1265 = vrot.slane %v1121, %v1264
  %v1266 = vlaneseq
  %v1267 = vshrl.u32 %v1266, 7
  %v1268 = vsub.s32 %v1237, %v1267
  %v1269 = vrot.slane %v1124, %v1268
  %v1270 = vsel %vm1242, %v1269, %v1265
  %v1271 = vlaneseq
  %v1272 = vshrl.u32 %v1271, 7
  %v1273 = vsub.s32 %v1232, %v1272
  %v1274 = vrot.slane %v1127, %v1273
  %v1275 = vlaneseq
  %v1276 = vshrl.u32 %v1275, 7
  %v1277 = vsub.s32 %v1237, %v1276
  %v1278 = vrot.slane %v1130, %v1277
  %v1279 = vsel %vm1242, %v1278, %v1274
  %v1280 = vlaneseq
  %v1281 = vshrl.u32 %v1280, 7
  %v1282 = vsub.s32 %v1232, %v1281
  %v1283 = vrot.slane %v1133, %v1282
  %v1284 = vlaneseq
  %v1285 = vshrl.u32 %v1284, 7
  %v1286 = vsub.s32 %v1237, %v1285
  %v1287 = vrot.slane %v1136, %v1286
  %v1288 = vsel %vm1242, %v1287, %v1283
  %v1289 = vlaneseq
  %v1290 = vshrl.u32 %v1289, 7
  %v1291 = vsub.s32 %v1232, %v1290
  %v1292 = vrot.slane %v1139, %v1291
  %v1293 = vlaneseq
  %v1294 = vshrl.u32 %v1293, 7
  %v1295 = vsub.s32 %v1237, %v1294
  %v1296 = vrot.slane %v1142, %v1295
  %v1297 = vsel %vm1242, %v1296, %v1292
  %v1298 = vlaneseq
  %v1299 = vshrl.u32 %v1298, 7
  %v1300 = vsub.s32 %v1232, %v1299
  %v1301 = vrot.slane %v1145, %v1300
  %v1302 = vlaneseq
  %v1303 = vshrl.u32 %v1302, 7
  %v1304 = vsub.s32 %v1237, %v1303
  %v1305 = vrot.slane %v1148, %v1304
  %v1306 = vsel %vm1242, %v1305, %v1301
  %v1307 = vlaneseq
  %v1308 = vshrl.u32 %v1307, 7
  %v1309 = vsub.s32 %v1232, %v1308
  %v1310 = vrot.slane %v1151, %v1309
  %v1311 = vlaneseq
  %v1312 = vshrl.u32 %v1311, 7
  %v1313 = vsub.s32 %v1237, %v1312
  %v1314 = vrot.slane %v1154, %v1313
  %v1315 = vsel %vm1242, %v1314, %v1310
  %v1316 = vlaneseq
  %v1317 = vshrl.u32 %v1316, 7
  %v1318 = vsub.s32 %v1232, %v1317
  %v1319 = vrot.slane %v1157, %v1318
  %v1320 = vlaneseq
  %v1321 = vshrl.u32 %v1320, 7
  %v1322 = vsub.s32 %v1237, %v1321
  %v1323 = vrot.slane %v1160, %v1322
  %v1324 = vsel %vm1242, %v1323, %v1319
  %v1325 = vlaneseq
  %v1326 = vshrl.u32 %v1325, 7
  %v1327 = vsub.s32 %v1232, %v1326
  %v1328 = vrot.slane %v1163, %v1327
  %v1329 = vlaneseq
  %v1330 = vshrl.u32 %v1329, 7
  %v1331 = vsub.s32 %v1237, %v1330
  %v1332 = vrot.slane %v1166, %v1331
  %v1333 = vsel %vm1242, %v1332, %v1328
  %v1334 = vlaneseq
  %v1335 = vshrl.u32 %v1334, 7
  %v1336 = vsub.s32 %v1232, %v1335
  %v1337 = vrot.slane %v1169, %v1336
  %v1338 = vlaneseq
  %v1339 = vshrl.u32 %v1338, 7
  %v1340 = vsub.s32 %v1237, %v1339
  %v1341 = vrot.slane %v1172, %v1340
  %v1342 = vsel %vm1242, %v1341, %v1337
  %v1343 = vlaneseq
  %v1344 = vshrl.u32 %v1343, 7
  %v1345 = vsub.s32 %v1232, %v1344
  %v1346 = vrot.slane %v1175, %v1345
  %v1347 = vlaneseq
  %v1348 = vshrl.u32 %v1347, 7
  %v1349 = vsub.s32 %v1237, %v1348
  %v1350 = vrot.slane %v1178, %v1349
  %v1351 = vsel %vm1242, %v1350, %v1346
  %v1352 = vlaneseq
  %v1353 = vshrl.u32 %v1352, 7
  %v1354 = vsub.s32 %v1232, %v1353
  %v1355 = vrot.slane %v1181, %v1354
  %v1356 = vlaneseq
  %v1357 = vshrl.u32 %v1356, 7
  %v1358 = vsub.s32 %v1237, %v1357
  %v1359 = vrot.slane %v1184, %v1358
  %v1360 = vsel %vm1242, %v1359, %v1355
  %v1361 = vlaneseq
  %v1362 = vshrl.u32 %v1361, 7
  %v1363 = vsub.s32 %v1232, %v1362
  %v1364 = vrot.slane %v1187, %v1363
  %v1365 = vlaneseq
  %v1366 = vshrl.u32 %v1365, 7
  %v1367 = vsub.s32 %v1237, %v1366
  %v1368 = vrot.slane %v1190, %v1367
  %v1369 = vsel %vm1242, %v1368, %v1364
  %v1370 = vlaneseq
  %v1371 = vshrl.u32 %v1370, 7
  %v1372 = vsub.s32 %v1232, %v1371
  %v1373 = vrot.slane %v1193, %v1372
  %v1374 = vlaneseq
  %v1375 = vshrl.u32 %v1374, 7
  %v1376 = vsub.s32 %v1237, %v1375
  %v1377 = vrot.slane %v1196, %v1376
  %v1378 = vsel %vm1242, %v1377, %v1373
  %vm1379 = vcmask 1041409
  %v1380 = vsel %vm1379, %v1252, %v1243
  %vm1381 = vcmask 1042434
  %v1382 = vsel %vm1381, %v1261, %v1380
  %vm1383 = vcmask 1043459
  %v1384 = vsel %vm1383, %v1270, %v1382
  %vm1385 = vcmask 1044484
  %v1386 = vsel %vm1385, %v1279, %v1384
  %vm1387 = vcmask 1045509
  %v1388 = vsel %vm1387, %v1288, %v1386
  %vm1389 = vcmask 1046534
  %v1390 = vsel %vm1389, %v1297, %v1388
  %vm1391 = vcmask 1047559
  %v1392 = vsel %vm1391, %v1306, %v1390
  %v1393 = vsel %vm1379, %v1324, %v1315
  %v1394 = vsel %vm1381, %v1333, %v1393
  %v1395 = vsel %vm1383, %v1342, %v1394
  %v1396 = vsel %vm1385, %v1351, %v1395
  %v1397 = vsel %vm1387, %v1360, %v1396
  %v1398 = vsel %vm1389, %v1369, %v1397
  %v1399 = vsel %vm1391, %v1378, %v1398
  %v1402 = vsel %vm1197, %v1392, -1e+30
  %v1403 = vsel %vm1198, %v1399, -1e+30
  %vm1404 = vcmask 130048
  %v1405 = vsel %vm1404, %v1402, -inf
  %1406 = vmax.xlane.f32.xlu0 %v1405
  %v1407 = vpop.xlane.xlu0 %1406
  %v1408 = vsel %vm1404, %v1403, -inf
  %1409 = vmax.xlane.f32.xlu0 %v1408
  %v1410 = vpop.xlane.xlu0 %1409
  %v1411 = vsub.f32 %v1402, %v1407
  %v1412 = vsub.f32 %v1403, %v1410
  %v1413 = vmul.f32 %v1411, 1.442695
  %v1414 = vpow.pop %v1413
  %v1415 = vmul.f32 %v1412, 1.442695
  %v1416 = vpow.pop %v1415
  %v1417 = vsel %vm1404, %v1414, 0.0
  %1418 = vadd.xlane.f32.xlu0 %v1417
  %v1419 = vpop.xlane.xlu0 %1418
  %v1420 = vsel %vm1404, %v1416, 0.0
  %1421 = vadd.xlane.f32.xlu0 %v1420
  %v1422 = vpop.xlane.xlu0 %1421
  %v1423 = vrcp.pop %v1419
  %v1424 = vrcp.pop %v1422
  %v1425 = vmul.f32 %v1414, %v1423
  %v1426 = vmul.f32 %v1416, %v1424
  %v1427 = vld [vmem:[%s10] sm:$0x1]
  %v1429 = vlaneseq
  %v1430 = vshrl.u32 %v1429, 7
  %v1431 = vsub.s32 0, %v1430
  %v1432 = vrot.slane %v1427, %v1431
  %v1435 = vsel %vm1404, %v1425, 0
  %v1438 = vsel %vm1404, %v1426, 0
  %1440 = vmatprep.subr.mxu0 0.0
  %1441 = vmatpush1.msra.mxu0 %v610
  %1442 = vmatprep.subr.mxu0 0.0
  %1443 = vmatpush1.msra.mxu0 %v615
  %1444 = vmatprep.subr.mxu0 0.0
  %1445 = vmatpush1.msra.mxu0 0.0
  %1446 = vmatprep.subr.mxu0 0.0
  %1447 = vmatpush1.msra.mxu0 0.0
  %1448 = vmatprep.subr.mxu0 0.0
  %1449 = vmatpush1.msra.mxu0 0.0
  %1450 = vmatprep.subr.mxu0 0.0
  %1451 = vmatpush1.msra.mxu0 0.0
  %1452 = vmatprep.subr.mxu0 0.0
  %1453 = vmatpush1.msra.mxu0 0.0
  %1454 = vmatprep.subr.mxu0 0.0
  %1455 = vmatpush1.msra.mxu0 0.0
  %1456 = vmatprep.subr.mxu0 0.0
  %1457 = vmatpush1.msra.mxu0 0.0
  %1458 = vmatprep.subr.mxu0 0.0
  %1459 = vmatpush1.msra.mxu0 0.0
  %1460 = vmatprep.subr.mxu0 0.0
  %1461 = vmatpush1.msra.mxu0 0.0
  %1462 = vmatprep.subr.mxu0 0.0
  %1463 = vmatpush1.msra.mxu0 0.0
  %1464 = vmatprep.subr.mxu0 0.0
  %1465 = vmatpush1.msra.mxu0 0.0
  %1466 = vmatprep.subr.mxu0 0.0
  %1467 = vmatpush1.msra.mxu0 0.0
  %1468 = vmatprep.subr.mxu0 0.0
  %1469 = vmatpush1.msra.mxu0 0.0
  %1470 = vmatprep.subr.mxu0 0.0
  %1471 = vmatpush1.msra.mxu0 0.0
  %1472 = vmatprep.subr.mxu0 0.0
  %1473 = vmatpush1.msra.mxu0 0.0
  %1474 = vmatprep.subr.mxu0 0.0
  %1475 = vmatpush1.msra.mxu0 0.0
  %1476 = vmatprep.subr.mxu0 0.0
  %1477 = vmatpush1.msra.mxu0 0.0
  %1478 = vmatprep.subr.mxu0 0.0
  %1479 = vmatpush1.msra.mxu0 0.0
  %1480 = vmatprep.subr.mxu0 0.0
  %1481 = vmatpush1.msra.mxu0 0.0
  %1482 = vmatprep.subr.mxu0 0.0
  %1483 = vmatpush1.msra.mxu0 0.0
  %1484 = vmatprep.subr.mxu0 0.0
  %1485 = vmatpush1.msra.mxu0 0.0
  %1486 = vmatprep.subr.mxu0 0.0
  %1487 = vmatpush1.msra.mxu0 0.0
  %1488 = vmatprep.subr.mxu0 0.0
  %1489 = vmatpush1.msra.mxu0 0.0
  %1490 = vmatprep.subr.mxu0 0.0
  %1491 = vmatpush1.msra.mxu0 0.0
  %1492 = vmatprep.subr.mxu0 0.0
  %1493 = vmatpush1.msra.mxu0 0.0
  %1494 = vmatprep.subr.mxu0 0.0
  %1495 = vmatpush1.msra.mxu0 0.0
  %1496 = vmatprep.subr.mxu0 0.0
  %1497 = vmatpush1.msra.mxu0 0.0
  %1498 = vmatprep.subr.mxu0 0.0
  %1499 = vmatpush1.msra.mxu0 0.0
  %1500 = vmatprep.subr.mxu0 0.0
  %1501 = vmatpush1.msra.mxu0 0.0
  %1502 = vmatprep.subr.mxu0 0.0
  %1503 = vmatpush1.msra.mxu0 0.0
  %1504 = vmatprep.mubr.f32.mxu0 0.0
  %1505 = vmatmul.mubr.f32.gmra.mrb[0].mxu0 %v1435
  %v1506 = vpop.f32.mrb[0].mxu0
  %v1507 = vadd.f32 %v1432, %v1506
  %v1508 = vpop.f32.mrb[0].mxu0
  %1509 = vmatprep.mubr.f32.mxu0 0.0
  %1510 = vmatmul.mubr.f32.gmra.mrb[0].mxu0 %v1438
  %v1511 = vpop.f32.mrb[0].mxu0
  %v1512 = vadd.f32 %v1432, %v1511
  %v1513 = vpop.f32.mrb[0].mxu0
  %1514 = vdwg.mxu0
  %v1515 = vmax.f32 %v1507, 0.0
  %v1516 = vmax.f32 %v1512, 0.0
  %s1517 = scalar_lea.vmem %s5, 128
  %v1518 = vld [vmem:[%s1517] sm:$0xff]
  %v1519 = vld [vmem:[%s1517 + $0x8] sm:$0xff]
  %v1520 = vld [vmem:[%s1517 + $0x10] sm:$0xff]
  %v1521 = vld [vmem:[%s1517 + $0x18] sm:$0xff]
  %s1522 = scalar_lea.vmem %s6, 4
  %v1523 = vld [vmem:[%s1522] sm:$0x1]
  %v1525 = vlaneseq
  %v1526 = vshrl.u32 %v1525, 7
  %v1527 = vsub.s32 0, %v1526
  %v1528 = vrot.slane %v1523, %v1527
  %v1531 = vsel %vm152, %v1515, 0
  %v1534 = vsel %vm152, %v1516, 0
  %1536 = vmatprep.subr.mxu0 0.0
  %1537 = vmatpush1.msra.mxu0 %v1518
  %1538 = vmatprep.subr.mxu0 0.0
  %1539 = vmatpush1.msra.mxu0 %v1519
  %1540 = vmatprep.subr.mxu0 0.0
  %1541 = vmatpush1.msra.mxu0 %v1520
  %1542 = vmatprep.subr.mxu0 0.0
  %1543 = vmatpush1.msra.mxu0 %v1521
  %1544 = vmatprep.subr.mxu0 0.0
  %1545 = vmatpush1.msra.mxu0 0.0
  %1546 = vmatprep.subr.mxu0 0.0
  %1547 = vmatpush1.msra.mxu0 0.0
  %1548 = vmatprep.subr.mxu0 0.0
  %1549 = vmatpush1.msra.mxu0 0.0
  %1550 = vmatprep.subr.mxu0 0.0
  %1551 = vmatpush1.msra.mxu0 0.0
  %1552 = vmatprep.subr.mxu0 0.0
  %1553 = vmatpush1.msra.mxu0 0.0
  %1554 = vmatprep.subr.mxu0 0.0
  %1555 = vmatpush1.msra.mxu0 0.0
  %1556 = vmatprep.subr.mxu0 0.0
  %1557 = vmatpush1.msra.mxu0 0.0
  %1558 = vmatprep.subr.mxu0 0.0
  %1559 = vmatpush1.msra.mxu0 0.0
  %1560 = vmatprep.subr.mxu0 0.0
  %1561 = vmatpush1.msra.mxu0 0.0
  %1562 = vmatprep.subr.mxu0 0.0
  %1563 = vmatpush1.msra.mxu0 0.0
  %1564 = vmatprep.subr.mxu0 0.0
  %1565 = vmatpush1.msra.mxu0 0.0
  %1566 = vmatprep.subr.mxu0 0.0
  %1567 = vmatpush1.msra.mxu0 0.0
  %1568 = vmatprep.subr.mxu0 0.0
  %1569 = vmatpush1.msra.mxu0 0.0
  %1570 = vmatprep.subr.mxu0 0.0
  %1571 = vmatpush1.msra.mxu0 0.0
  %1572 = vmatprep.subr.mxu0 0.0
  %1573 = vmatpush1.msra.mxu0 0.0
  %1574 = vmatprep.subr.mxu0 0.0
  %1575 = vmatpush1.msra.mxu0 0.0
  %1576 = vmatprep.subr.mxu0 0.0
  %1577 = vmatpush1.msra.mxu0 0.0
  %1578 = vmatprep.subr.mxu0 0.0
  %1579 = vmatpush1.msra.mxu0 0.0
  %1580 = vmatprep.subr.mxu0 0.0
  %1581 = vmatpush1.msra.mxu0 0.0
  %1582 = vmatprep.subr.mxu0 0.0
  %1583 = vmatpush1.msra.mxu0 0.0
  %1584 = vmatprep.subr.mxu0 0.0
  %1585 = vmatpush1.msra.mxu0 0.0
  %1586 = vmatprep.subr.mxu0 0.0
  %1587 = vmatpush1.msra.mxu0 0.0
  %1588 = vmatprep.subr.mxu0 0.0
  %1589 = vmatpush1.msra.mxu0 0.0
  %1590 = vmatprep.subr.mxu0 0.0
  %1591 = vmatpush1.msra.mxu0 0.0
  %1592 = vmatprep.subr.mxu0 0.0
  %1593 = vmatpush1.msra.mxu0 0.0
  %1594 = vmatprep.subr.mxu0 0.0
  %1595 = vmatpush1.msra.mxu0 0.0
  %1596 = vmatprep.subr.mxu0 0.0
  %1597 = vmatpush1.msra.mxu0 0.0
  %1598 = vmatprep.subr.mxu0 0.0
  %1599 = vmatpush1.msra.mxu0 0.0
  %1600 = vmatprep.mubr.f32.mxu0 0.0
  %1601 = vmatmul.mubr.f32.gmra.mrb[0].mxu0 %v1531
  %v1602 = vpop.f32.mrb[0].mxu0
  %v1603 = vadd.f32 %v1528, %v1602
  %v1604 = vpop.f32.mrb[0].mxu0
  %1605 = vmatprep.mubr.f32.mxu0 0.0
  %1606 = vmatmul.mubr.f32.gmra.mrb[0].mxu0 %v1534
  %v1607 = vpop.f32.mrb[0].mxu0
  %v1608 = vadd.f32 %v1528, %v1607
  %v1609 = vpop.f32.mrb[0].mxu0
  %1610 = vdwg.mxu0
  %v1611 = vmax.f32 %v1603, 0.0
  %v1612 = vmax.f32 %v1608, 0.0
  %s1613 = scalar_lea.vmem %s7, 32
  %v1614 = vld [vmem:[%s1613] sm:$0xff]
  %v1615 = vld [vmem:[%s1613 + $0x8] sm:$0xff]
  %v1616 = vld [vmem:[%s1613 + $0x10] sm:$0xff]
  %v1617 = vld [vmem:[%s1613 + $0x18] sm:$0xff]
  %s1618 = scalar_lea.vmem %s8, 1
  %v1619 = vld [vmem:[%s1618] sm:$0x1]
  %v1621 = vlaneseq
  %v1622 = vshrl.u32 %v1621, 7
  %v1623 = vsub.s32 0, %v1622
  %v1624 = vrot.slane %v1619, %v1623
  %v1627 = vsel %vm152, %v1611, 0
  %v1630 = vsel %vm152, %v1612, 0
  %1632 = vmatprep.subr.mxu0 0.0
  %1633 = vmatpush1.msra.mxu0 %v1614
  %1634 = vmatprep.subr.mxu0 0.0
  %1635 = vmatpush1.msra.mxu0 %v1615
  %1636 = vmatprep.subr.mxu0 0.0
  %1637 = vmatpush1.msra.mxu0 %v1616
  %1638 = vmatprep.subr.mxu0 0.0
  %1639 = vmatpush1.msra.mxu0 %v1617
  %1640 = vmatprep.subr.mxu0 0.0
  %1641 = vmatpush1.msra.mxu0 0.0
  %1642 = vmatprep.subr.mxu0 0.0
  %1643 = vmatpush1.msra.mxu0 0.0
  %1644 = vmatprep.subr.mxu0 0.0
  %1645 = vmatpush1.msra.mxu0 0.0
  %1646 = vmatprep.subr.mxu0 0.0
  %1647 = vmatpush1.msra.mxu0 0.0
  %1648 = vmatprep.subr.mxu0 0.0
  %1649 = vmatpush1.msra.mxu0 0.0
  %1650 = vmatprep.subr.mxu0 0.0
  %1651 = vmatpush1.msra.mxu0 0.0
  %1652 = vmatprep.subr.mxu0 0.0
  %1653 = vmatpush1.msra.mxu0 0.0
  %1654 = vmatprep.subr.mxu0 0.0
  %1655 = vmatpush1.msra.mxu0 0.0
  %1656 = vmatprep.subr.mxu0 0.0
  %1657 = vmatpush1.msra.mxu0 0.0
  %1658 = vmatprep.subr.mxu0 0.0
  %1659 = vmatpush1.msra.mxu0 0.0
  %1660 = vmatprep.subr.mxu0 0.0
  %1661 = vmatpush1.msra.mxu0 0.0
  %1662 = vmatprep.subr.mxu0 0.0
  %1663 = vmatpush1.msra.mxu0 0.0
  %1664 = vmatprep.subr.mxu0 0.0
  %1665 = vmatpush1.msra.mxu0 0.0
  %1666 = vmatprep.subr.mxu0 0.0
  %1667 = vmatpush1.msra.mxu0 0.0
  %1668 = vmatprep.subr.mxu0 0.0
  %1669 = vmatpush1.msra.mxu0 0.0
  %1670 = vmatprep.subr.mxu0 0.0
  %1671 = vmatpush1.msra.mxu0 0.0
  %1672 = vmatprep.subr.mxu0 0.0
  %1673 = vmatpush1.msra.mxu0 0.0
  %1674 = vmatprep.subr.mxu0 0.0
  %1675 = vmatpush1.msra.mxu0 0.0
  %1676 = vmatprep.subr.mxu0 0.0
  %1677 = vmatpush1.msra.mxu0 0.0
  %1678 = vmatprep.subr.mxu0 0.0
  %1679 = vmatpush1.msra.mxu0 0.0
  %1680 = vmatprep.subr.mxu0 0.0
  %1681 = vmatpush1.msra.mxu0 0.0
  %1682 = vmatprep.subr.mxu0 0.0
  %1683 = vmatpush1.msra.mxu0 0.0
  %1684 = vmatprep.subr.mxu0 0.0
  %1685 = vmatpush1.msra.mxu0 0.0
  %1686 = vmatprep.subr.mxu0 0.0
  %1687 = vmatpush1.msra.mxu0 0.0
  %1688 = vmatprep.subr.mxu0 0.0
  %1689 = vmatpush1.msra.mxu0 0.0
  %1690 = vmatprep.subr.mxu0 0.0
  %1691 = vmatpush1.msra.mxu0 0.0
  %1692 = vmatprep.subr.mxu0 0.0
  %1693 = vmatpush1.msra.mxu0 0.0
  %1694 = vmatprep.subr.mxu0 0.0
  %1695 = vmatpush1.msra.mxu0 0.0
  %1696 = vmatprep.mubr.f32.mxu0 0.0
  %1697 = vmatmul.mubr.f32.gmra.mrb[0].mxu0 %v1627
  %v1698 = vpop.f32.mrb[0].mxu0
  %v1699 = vadd.f32 %v1624, %v1698
  %v1700 = vpop.f32.mrb[0].mxu0
  %1701 = vmatprep.mubr.f32.mxu0 0.0
  %1702 = vmatmul.mubr.f32.gmra.mrb[0].mxu0 %v1630
  %v1703 = vpop.f32.mrb[0].mxu0
  %v1704 = vadd.f32 %v1624, %v1703
  %v1705 = vpop.f32.mrb[0].mxu0
  %1706 = vdwg.mxu0
  %v1709 = vcombine.high %v1699, %v1699
  %v1711 = vunpack.c.l.s4 1966171168
  %v1712 = vunpack.c.0.s8 %v1711
  %v1713 = vlaneseq
  %v1714 = vshrl.u32 %v1713, 7
  %v1715 = vsub.s32 %v1712, %v1714
  %v1716 = vrot.slane %v1699, %v1715
  %v1718 = vunpack.c.l.s4 1966171168
  %v1719 = vunpack.c.0.s8 %v1718
  %v1720 = vlaneseq
  %v1721 = vshrl.u32 %v1720, 7
  %v1722 = vsub.s32 %v1719, %v1721
  %v1723 = vrot.slane %v1709, %v1722
  %v1724 = vcombine.high %v1716, %v1716
  %v1725 = vcombine.high %v1723, %v1723
  %v1727 = vunpack.c.l.s4 1966171168
  %v1728 = vunpack.c.0.s8 %v1727
  %v1729 = vlaneseq
  %v1730 = vshrl.u32 %v1729, 7
  %v1731 = vsub.s32 %v1728, %v1730
  %v1732 = vrot.slane %v1716, %v1731
  %v1734 = vunpack.c.l.s4 1966171168
  %v1735 = vunpack.c.0.s8 %v1734
  %v1736 = vlaneseq
  %v1737 = vshrl.u32 %v1736, 7
  %v1738 = vsub.s32 %v1735, %v1737
  %v1739 = vrot.slane %v1723, %v1738
  %v1741 = vunpack.c.l.s4 1966171168
  %v1742 = vunpack.c.0.s8 %v1741
  %v1743 = vlaneseq
  %v1744 = vshrl.u32 %v1743, 7
  %v1745 = vsub.s32 %v1742, %v1744
  %v1746 = vrot.slane %v1724, %v1745
  %v1748 = vunpack.c.l.s4 1966171168
  %v1749 = vunpack.c.0.s8 %v1748
  %v1750 = vlaneseq
  %v1751 = vshrl.u32 %v1750, 7
  %v1752 = vsub.s32 %v1749, %v1751
  %v1753 = vrot.slane %v1725, %v1752
  %v1754 = vcombine.high %v1732, %v1732
  %v1755 = vcombine.high %v1739, %v1739
  %v1756 = vcombine.high %v1746, %v1746
  %v1757 = vcombine.high %v1753, %v1753
  %v1758 = vcombine.high %v1704, %v1704
  %v1760 = vunpack.c.l.s4 1966171168
  %v1761 = vunpack.c.0.s8 %v1760
  %v1762 = vlaneseq
  %v1763 = vshrl.u32 %v1762, 7
  %v1764 = vsub.s32 %v1761, %v1763
  %v1765 = vrot.slane %v1704, %v1764
  %v1767 = vunpack.c.l.s4 1966171168
  %v1768 = vunpack.c.0.s8 %v1767
  %v1769 = vlaneseq
  %v1770 = vshrl.u32 %v1769, 7
  %v1771 = vsub.s32 %v1768, %v1770
  %v1772 = vrot.slane %v1758, %v1771
  %v1773 = vcombine.high %v1765, %v1765
  %v1774 = vcombine.high %v1772, %v1772
  %v1776 = vunpack.c.l.s4 1966171168
  %v1777 = vunpack.c.0.s8 %v1776
  %v1778 = vlaneseq
  %v1779 = vshrl.u32 %v1778, 7
  %v1780 = vsub.s32 %v1777, %v1779
  %v1781 = vrot.slane %v1765, %v1780
  %v1783 = vunpack.c.l.s4 1966171168
  %v1784 = vunpack.c.0.s8 %v1783
  %v1785 = vlaneseq
  %v1786 = vshrl.u32 %v1785, 7
  %v1787 = vsub.s32 %v1784, %v1786
  %v1788 = vrot.slane %v1772, %v1787
  %v1790 = vunpack.c.l.s4 1966171168
  %v1791 = vunpack.c.0.s8 %v1790
  %v1792 = vlaneseq
  %v1793 = vshrl.u32 %v1792, 7
  %v1794 = vsub.s32 %v1791, %v1793
  %v1795 = vrot.slane %v1773, %v1794
  %v1797 = vunpack.c.l.s4 1966171168
  %v1798 = vunpack.c.0.s8 %v1797
  %v1799 = vlaneseq
  %v1800 = vshrl.u32 %v1799, 7
  %v1801 = vsub.s32 %v1798, %v1800
  %v1802 = vrot.slane %v1774, %v1801
  %v1803 = vcombine.high %v1781, %v1781
  %v1804 = vcombine.high %v1788, %v1788
  %v1805 = vcombine.high %v1795, %v1795
  %v1806 = vcombine.high %v1802, %v1802
  %v1807 = vlaneseq
  %v1808 = vshrl.u32 %v1807, 7
  %v1809 = vsub.s32 0, %v1808
  %v1810 = vrot.slane %v1732, %v1809
  %v1811 = vlaneseq
  %v1812 = vshrl.u32 %v1811, 7
  %v1813 = vsub.s32 0, %v1812
  %v1814 = vrot.slane %v1746, %v1813
  %v1815 = vlaneseq
  %v1816 = vshrl.u32 %v1815, 7
  %v1817 = vsub.s32 0, %v1816
  %v1818 = vrot.slane %v1754, %v1817
  %v1819 = vlaneseq
  %v1820 = vshrl.u32 %v1819, 7
  %v1821 = vsub.s32 0, %v1820
  %v1822 = vrot.slane %v1756, %v1821
  %v1823 = vlaneseq
  %v1824 = vshrl.u32 %v1823, 7
  %v1825 = vsub.s32 0, %v1824
  %v1826 = vrot.slane %v1739, %v1825
  %v1827 = vlaneseq
  %v1828 = vshrl.u32 %v1827, 7
  %v1829 = vsub.s32 0, %v1828
  %v1830 = vrot.slane %v1753, %v1829
  %v1831 = vlaneseq
  %v1832 = vshrl.u32 %v1831, 7
  %v1833 = vsub.s32 0, %v1832
  %v1834 = vrot.slane %v1755, %v1833
  %v1835 = vlaneseq
  %v1836 = vshrl.u32 %v1835, 7
  %v1837 = vsub.s32 0, %v1836
  %v1838 = vrot.slane %v1757, %v1837
  %v1839 = vlaneseq
  %v1840 = vshrl.u32 %v1839, 7
  %v1841 = vsub.s32 0, %v1840
  %v1842 = vrot.slane %v1781, %v1841
  %v1843 = vlaneseq
  %v1844 = vshrl.u32 %v1843, 7
  %v1845 = vsub.s32 0, %v1844
  %v1846 = vrot.slane %v1795, %v1845
  %v1847 = vlaneseq
  %v1848 = vshrl.u32 %v1847, 7
  %v1849 = vsub.s32 0, %v1848
  %v1850 = vrot.slane %v1803, %v1849
  %v1851 = vlaneseq
  %v1852 = vshrl.u32 %v1851, 7
  %v1853 = vsub.s32 0, %v1852
  %v1854 = vrot.slane %v1805, %v1853
  %v1855 = vlaneseq
  %v1856 = vshrl.u32 %v1855, 7
  %v1857 = vsub.s32 0, %v1856
  %v1858 = vrot.slane %v1788, %v1857
  %v1859 = vlaneseq
  %v1860 = vshrl.u32 %v1859, 7
  %v1861 = vsub.s32 0, %v1860
  %v1862 = vrot.slane %v1802, %v1861
  %v1863 = vlaneseq
  %v1864 = vshrl.u32 %v1863, 7
  %v1865 = vsub.s32 0, %v1864
  %v1866 = vrot.slane %v1804, %v1865
  %v1867 = vlaneseq
  %v1868 = vshrl.u32 %v1867, 7
  %v1869 = vsub.s32 0, %v1868
  %v1870 = vrot.slane %v1806, %v1869
  %1887 = vrot.lane.b32.xlu0 %v1699, 32
  %v1888 = vpop.permute.xlu0 %1887
  %1889 = vrot.lane.b32.xlu0 %v1704, 32
  %v1890 = vpop.permute.xlu0 %1889
  %v1893 = vadd.f32 %v1810, %v1888
  %v1894 = vadd.f32 %v1810, %v1890
  %v1895 = vadd.f32 %v1814, %v1888
  %v1896 = vadd.f32 %v1814, %v1890
  %v1897 = vadd.f32 %v1818, %v1888
  %v1898 = vadd.f32 %v1818, %v1890
  %v1899 = vadd.f32 %v1822, %v1888
  %v1900 = vadd.f32 %v1822, %v1890
  %v1901 = vadd.f32 %v1826, %v1888
  %v1902 = vadd.f32 %v1826, %v1890
  %v1903 = vadd.f32 %v1830, %v1888
  %v1904 = vadd.f32 %v1830, %v1890
  %v1905 = vadd.f32 %v1834, %v1888
  %v1906 = vadd.f32 %v1834, %v1890
  %v1907 = vadd.f32 %v1838, %v1888
  %v1908 = vadd.f32 %v1838, %v1890
  %v1909 = vadd.f32 %v1842, %v1888
  %v1910 = vadd.f32 %v1842, %v1890
  %v1911 = vadd.f32 %v1846, %v1888
  %v1912 = vadd.f32 %v1846, %v1890
  %v1913 = vadd.f32 %v1850, %v1888
  %v1914 = vadd.f32 %v1850, %v1890
  %v1915 = vadd.f32 %v1854, %v1888
  %v1916 = vadd.f32 %v1854, %v1890
  %v1917 = vadd.f32 %v1858, %v1888
  %v1918 = vadd.f32 %v1858, %v1890
  %v1919 = vadd.f32 %v1862, %v1888
  %v1920 = vadd.f32 %v1862, %v1890
  %v1921 = vadd.f32 %v1866, %v1888
  %v1922 = vadd.f32 %v1866, %v1890
  %v1923 = vadd.f32 %v1870, %v1888
  %v1924 = vadd.f32 %v1870, %v1890
  %vm1925 = vcmp.gt.f32.partialorder %v1893, 0.0
  %vm1926 = vcmp.gt.f32.partialorder %v1894, 0.0
  %vm1927 = vcmp.gt.f32.partialorder %v1895, 0.0
  %vm1928 = vcmp.gt.f32.partialorder %v1896, 0.0
  %vm1929 = vcmp.gt.f32.partialorder %v1897, 0.0
  %vm1930 = vcmp.gt.f32.partialorder %v1898, 0.0
  %vm1931 = vcmp.gt.f32.partialorder %v1899, 0.0
  %vm1932 = vcmp.gt.f32.partialorder %v1900, 0.0
  %vm1933 = vcmp.gt.f32.partialorder %v1901, 0.0
  %vm1934 = vcmp.gt.f32.partialorder %v1902, 0.0
  %vm1935 = vcmp.gt.f32.partialorder %v1903, 0.0
  %vm1936 = vcmp.gt.f32.partialorder %v1904, 0.0
  %vm1937 = vcmp.gt.f32.partialorder %v1905, 0.0
  %vm1938 = vcmp.gt.f32.partialorder %v1906, 0.0
  %vm1939 = vcmp.gt.f32.partialorder %v1907, 0.0
  %vm1940 = vcmp.gt.f32.partialorder %v1908, 0.0
  %vm1941 = vcmp.gt.f32.partialorder %v1909, 0.0
  %vm1942 = vcmp.gt.f32.partialorder %v1910, 0.0
  %vm1943 = vcmp.gt.f32.partialorder %v1911, 0.0
  %vm1944 = vcmp.gt.f32.partialorder %v1912, 0.0
  %vm1945 = vcmp.gt.f32.partialorder %v1913, 0.0
  %vm1946 = vcmp.gt.f32.partialorder %v1914, 0.0
  %vm1947 = vcmp.gt.f32.partialorder %v1915, 0.0
  %vm1948 = vcmp.gt.f32.partialorder %v1916, 0.0
  %vm1949 = vcmp.gt.f32.partialorder %v1917, 0.0
  %vm1950 = vcmp.gt.f32.partialorder %v1918, 0.0
  %vm1951 = vcmp.gt.f32.partialorder %v1919, 0.0
  %vm1952 = vcmp.gt.f32.partialorder %v1920, 0.0
  %vm1953 = vcmp.gt.f32.partialorder %v1921, 0.0
  %vm1954 = vcmp.gt.f32.partialorder %v1922, 0.0
  %vm1955 = vcmp.gt.f32.partialorder %v1923, 0.0
  %vm1956 = vcmp.gt.f32.partialorder %v1924, 0.0
  %v1957 = vmul.f32 %v1893, 0.2
  %v1958 = vmul.f32 %v1894, 0.2
  %v1959 = vmul.f32 %v1895, 0.2
  %v1960 = vmul.f32 %v1896, 0.2
  %v1961 = vmul.f32 %v1897, 0.2
  %v1962 = vmul.f32 %v1898, 0.2
  %v1963 = vmul.f32 %v1899, 0.2
  %v1964 = vmul.f32 %v1900, 0.2
  %v1965 = vmul.f32 %v1901, 0.2
  %v1966 = vmul.f32 %v1902, 0.2
  %v1967 = vmul.f32 %v1903, 0.2
  %v1968 = vmul.f32 %v1904, 0.2
  %v1969 = vmul.f32 %v1905, 0.2
  %v1970 = vmul.f32 %v1906, 0.2
  %v1971 = vmul.f32 %v1907, 0.2
  %v1972 = vmul.f32 %v1908, 0.2
  %v1973 = vmul.f32 %v1909, 0.2
  %v1974 = vmul.f32 %v1910, 0.2
  %v1975 = vmul.f32 %v1911, 0.2
  %v1976 = vmul.f32 %v1912, 0.2
  %v1977 = vmul.f32 %v1913, 0.2
  %v1978 = vmul.f32 %v1914, 0.2
  %v1979 = vmul.f32 %v1915, 0.2
  %v1980 = vmul.f32 %v1916, 0.2
  %v1981 = vmul.f32 %v1917, 0.2
  %v1982 = vmul.f32 %v1918, 0.2
  %v1983 = vmul.f32 %v1919, 0.2
  %v1984 = vmul.f32 %v1920, 0.2
  %v1985 = vmul.f32 %v1921, 0.2
  %v1986 = vmul.f32 %v1922, 0.2
  %v1987 = vmul.f32 %v1923, 0.2
  %v1988 = vmul.f32 %v1924, 0.2
  %v1989 = vsel %vm1925, %v1893, %v1957
  %v1990 = vsel %vm1926, %v1894, %v1958
  %v1991 = vsel %vm1927, %v1895, %v1959
  %v1992 = vsel %vm1928, %v1896, %v1960
  %v1993 = vsel %vm1929, %v1897, %v1961
  %v1994 = vsel %vm1930, %v1898, %v1962
  %v1995 = vsel %vm1931, %v1899, %v1963
  %v1996 = vsel %vm1932, %v1900, %v1964
  %v1997 = vsel %vm1933, %v1901, %v1965
  %v1998 = vsel %vm1934, %v1902, %v1966
  %v1999 = vsel %vm1935, %v1903, %v1967
  %v2000 = vsel %vm1936, %v1904, %v1968
  %v2001 = vsel %vm1937, %v1905, %v1969
  %v2002 = vsel %vm1938, %v1906, %v1970
  %v2003 = vsel %vm1939, %v1907, %v1971
  %v2004 = vsel %vm1940, %v1908, %v1972
  %v2005 = vsel %vm1941, %v1909, %v1973
  %v2006 = vsel %vm1942, %v1910, %v1974
  %v2007 = vsel %vm1943, %v1911, %v1975
  %v2008 = vsel %vm1944, %v1912, %v1976
  %v2009 = vsel %vm1945, %v1913, %v1977
  %v2010 = vsel %vm1946, %v1914, %v1978
  %v2011 = vsel %vm1947, %v1915, %v1979
  %v2012 = vsel %vm1948, %v1916, %v1980
  %v2013 = vsel %vm1949, %v1917, %v1981
  %v2014 = vsel %vm1950, %v1918, %v1982
  %v2015 = vsel %vm1951, %v1919, %v1983
  %v2016 = vsel %vm1952, %v1920, %v1984
  %v2017 = vsel %vm1953, %v1921, %v1985
  %v2018 = vsel %vm1954, %v1922, %v1986
  %v2019 = vsel %vm1955, %v1923, %v1987
  %v2020 = vsel %vm1956, %v1924, %v1988
  %s2021 = scalar_lea.vmem %s9, 1
  %v2022 = vld [vmem:[%s2021] sm:$0x1]
  %v2024 = vlaneseq
  %v2025 = vshrl.u32 %v2024, 7
  %v2026 = vsub.s32 0, %v2025
  %v2027 = vrot.slane %v2022, %v2026
  %2028 = vrot.lane.b32.xlu0 %v2027, 32
  %v2029 = vpop.permute.xlu0 %2028
  %v2031 = vmul.f32 %v1989, %v2029
  %v2032 = vmul.f32 %v1990, %v2029
  %v2033 = vmul.f32 %v1991, %v2029
  %v2034 = vmul.f32 %v1992, %v2029
  %v2035 = vmul.f32 %v1993, %v2029
  %v2036 = vmul.f32 %v1994, %v2029
  %v2037 = vmul.f32 %v1995, %v2029
  %v2038 = vmul.f32 %v1996, %v2029
  %v2039 = vmul.f32 %v1997, %v2029
  %v2040 = vmul.f32 %v1998, %v2029
  %v2041 = vmul.f32 %v1999, %v2029
  %v2042 = vmul.f32 %v2000, %v2029
  %v2043 = vmul.f32 %v2001, %v2029
  %v2044 = vmul.f32 %v2002, %v2029
  %v2045 = vmul.f32 %v2003, %v2029
  %v2046 = vmul.f32 %v2004, %v2029
  %v2047 = vmul.f32 %v2005, %v2029
  %v2048 = vmul.f32 %v2006, %v2029
  %v2049 = vmul.f32 %v2007, %v2029
  %v2050 = vmul.f32 %v2008, %v2029
  %v2051 = vmul.f32 %v2009, %v2029
  %v2052 = vmul.f32 %v2010, %v2029
  %v2053 = vmul.f32 %v2011, %v2029
  %v2054 = vmul.f32 %v2012, %v2029
  %v2055 = vmul.f32 %v2013, %v2029
  %v2056 = vmul.f32 %v2014, %v2029
  %v2057 = vmul.f32 %v2015, %v2029
  %v2058 = vmul.f32 %v2016, %v2029
  %v2059 = vmul.f32 %v2017, %v2029
  %v2060 = vmul.f32 %v2018, %v2029
  %v2061 = vmul.f32 %v2019, %v2029
  %v2062 = vmul.f32 %v2020, %v2029
  %2095 = vrot.lane.b32.xlu0 %v2031, 96
  %v2096 = vpop.permute.xlu0 %2095
  %2097 = vrot.lane.b32.xlu0 %v2032, 96
  %v2098 = vpop.permute.xlu0 %2097
  %2099 = vrot.lane.b32.xlu0 %v2033, 96
  %v2100 = vpop.permute.xlu0 %2099
  %2101 = vrot.lane.b32.xlu0 %v2034, 96
  %v2102 = vpop.permute.xlu0 %2101
  %2103 = vrot.lane.b32.xlu0 %v2035, 96
  %v2104 = vpop.permute.xlu0 %2103
  %2105 = vrot.lane.b32.xlu0 %v2036, 96
  %v2106 = vpop.permute.xlu0 %2105
  %2107 = vrot.lane.b32.xlu0 %v2037, 96
  %v2108 = vpop.permute.xlu0 %2107
  %2109 = vrot.lane.b32.xlu0 %v2038, 96
  %v2110 = vpop.permute.xlu0 %2109
  %2111 = vrot.lane.b32.xlu0 %v2039, 96
  %v2112 = vpop.permute.xlu0 %2111
  %2113 = vrot.lane.b32.xlu0 %v2040, 96
  %v2114 = vpop.permute.xlu0 %2113
  %2115 = vrot.lane.b32.xlu0 %v2041, 96
  %v2116 = vpop.permute.xlu0 %2115
  %2117 = vrot.lane.b32.xlu0 %v2042, 96
  %v2118 = vpop.permute.xlu0 %2117
  %2119 = vrot.lane.b32.xlu0 %v2043, 96
  %v2120 = vpop.permute.xlu0 %2119
  %2121 = vrot.lane.b32.xlu0 %v2044, 96
  %v2122 = vpop.permute.xlu0 %2121
  %2123 = vrot.lane.b32.xlu0 %v2045, 96
  %v2124 = vpop.permute.xlu0 %2123
  %2125 = vrot.lane.b32.xlu0 %v2046, 96
  %v2126 = vpop.permute.xlu0 %2125
  %2127 = vrot.lane.b32.xlu0 %v2047, 96
  %v2128 = vpop.permute.xlu0 %2127
  %2129 = vrot.lane.b32.xlu0 %v2048, 96
  %v2130 = vpop.permute.xlu0 %2129
  %2131 = vrot.lane.b32.xlu0 %v2049, 96
  %v2132 = vpop.permute.xlu0 %2131
  %2133 = vrot.lane.b32.xlu0 %v2050, 96
  %v2134 = vpop.permute.xlu0 %2133
  %2135 = vrot.lane.b32.xlu0 %v2051, 96
  %v2136 = vpop.permute.xlu0 %2135
  %2137 = vrot.lane.b32.xlu0 %v2052, 96
  %v2138 = vpop.permute.xlu0 %2137
  %2139 = vrot.lane.b32.xlu0 %v2053, 96
  %v2140 = vpop.permute.xlu0 %2139
  %2141 = vrot.lane.b32.xlu0 %v2054, 96
  %v2142 = vpop.permute.xlu0 %2141
  %2143 = vrot.lane.b32.xlu0 %v2055, 96
  %v2144 = vpop.permute.xlu0 %2143
  %2145 = vrot.lane.b32.xlu0 %v2056, 96
  %v2146 = vpop.permute.xlu0 %2145
  %2147 = vrot.lane.b32.xlu0 %v2057, 96
  %v2148 = vpop.permute.xlu0 %2147
  %2149 = vrot.lane.b32.xlu0 %v2058, 96
  %v2150 = vpop.permute.xlu0 %2149
  %2151 = vrot.lane.b32.xlu0 %v2059, 96
  %v2152 = vpop.permute.xlu0 %2151
  %2153 = vrot.lane.b32.xlu0 %v2060, 96
  %v2154 = vpop.permute.xlu0 %2153
  %2155 = vrot.lane.b32.xlu0 %v2061, 96
  %v2156 = vpop.permute.xlu0 %2155
  %2157 = vrot.lane.b32.xlu0 %v2062, 96
  %v2158 = vpop.permute.xlu0 %2157
  %v2191 = vsel %vm152, %v2096, 0.0
  %2192 = vadd.xlane.f32.xlu0 %v2191
  %v2193 = vpop.xlane.xlu0 %2192
  %v2194 = vsel %vm152, %v2098, 0.0
  %2195 = vadd.xlane.f32.xlu0 %v2194
  %v2196 = vpop.xlane.xlu0 %2195
  %v2197 = vsel %vm152, %v2100, 0.0
  %2198 = vadd.xlane.f32.xlu0 %v2197
  %v2199 = vpop.xlane.xlu0 %2198
  %v2200 = vsel %vm152, %v2102, 0.0
  %2201 = vadd.xlane.f32.xlu0 %v2200
  %v2202 = vpop.xlane.xlu0 %2201
  %v2203 = vsel %vm152, %v2104, 0.0
  %2204 = vadd.xlane.f32.xlu0 %v2203
  %v2205 = vpop.xlane.xlu0 %2204
  %v2206 = vsel %vm152, %v2106, 0.0
  %2207 = vadd.xlane.f32.xlu0 %v2206
  %v2208 = vpop.xlane.xlu0 %2207
  %v2209 = vsel %vm152, %v2108, 0.0
  %2210 = vadd.xlane.f32.xlu0 %v2209
  %v2211 = vpop.xlane.xlu0 %2210
  %v2212 = vsel %vm152, %v2110, 0.0
  %2213 = vadd.xlane.f32.xlu0 %v2212
  %v2214 = vpop.xlane.xlu0 %2213
  %v2215 = vsel %vm152, %v2112, 0.0
  %2216 = vadd.xlane.f32.xlu0 %v2215
  %v2217 = vpop.xlane.xlu0 %2216
  %v2218 = vsel %vm152, %v2114, 0.0
  %2219 = vadd.xlane.f32.xlu0 %v2218
  %v2220 = vpop.xlane.xlu0 %2219
  %v2221 = vsel %vm152, %v2116, 0.0
  %2222 = vadd.xlane.f32.xlu0 %v2221
  %v2223 = vpop.xlane.xlu0 %2222
  %v2224 = vsel %vm152, %v2118, 0.0
  %2225 = vadd.xlane.f32.xlu0 %v2224
  %v2226 = vpop.xlane.xlu0 %2225
  %v2227 = vsel %vm152, %v2120, 0.0
  %2228 = vadd.xlane.f32.xlu0 %v2227
  %v2229 = vpop.xlane.xlu0 %2228
  %v2230 = vsel %vm152, %v2122, 0.0
  %2231 = vadd.xlane.f32.xlu0 %v2230
  %v2232 = vpop.xlane.xlu0 %2231
  %v2233 = vsel %vm152, %v2124, 0.0
  %2234 = vadd.xlane.f32.xlu0 %v2233
  %v2235 = vpop.xlane.xlu0 %2234
  %v2236 = vsel %vm152, %v2126, 0.0
  %2237 = vadd.xlane.f32.xlu0 %v2236
  %v2238 = vpop.xlane.xlu0 %2237
  %v2239 = vsel %vm152, %v2128, 0.0
  %2240 = vadd.xlane.f32.xlu0 %v2239
  %v2241 = vpop.xlane.xlu0 %2240
  %v2242 = vsel %vm152, %v2130, 0.0
  %2243 = vadd.xlane.f32.xlu0 %v2242
  %v2244 = vpop.xlane.xlu0 %2243
  %v2245 = vsel %vm152, %v2132, 0.0
  %2246 = vadd.xlane.f32.xlu0 %v2245
  %v2247 = vpop.xlane.xlu0 %2246
  %v2248 = vsel %vm152, %v2134, 0.0
  %2249 = vadd.xlane.f32.xlu0 %v2248
  %v2250 = vpop.xlane.xlu0 %2249
  %v2251 = vsel %vm152, %v2136, 0.0
  %2252 = vadd.xlane.f32.xlu0 %v2251
  %v2253 = vpop.xlane.xlu0 %2252
  %v2254 = vsel %vm152, %v2138, 0.0
  %2255 = vadd.xlane.f32.xlu0 %v2254
  %v2256 = vpop.xlane.xlu0 %2255
  %v2257 = vsel %vm152, %v2140, 0.0
  %2258 = vadd.xlane.f32.xlu0 %v2257
  %v2259 = vpop.xlane.xlu0 %2258
  %v2260 = vsel %vm152, %v2142, 0.0
  %2261 = vadd.xlane.f32.xlu0 %v2260
  %v2262 = vpop.xlane.xlu0 %2261
  %v2263 = vsel %vm152, %v2144, 0.0
  %2264 = vadd.xlane.f32.xlu0 %v2263
  %v2265 = vpop.xlane.xlu0 %2264
  %v2266 = vsel %vm152, %v2146, 0.0
  %2267 = vadd.xlane.f32.xlu0 %v2266
  %v2268 = vpop.xlane.xlu0 %2267
  %v2269 = vsel %vm152, %v2148, 0.0
  %2270 = vadd.xlane.f32.xlu0 %v2269
  %v2271 = vpop.xlane.xlu0 %2270
  %v2272 = vsel %vm152, %v2150, 0.0
  %2273 = vadd.xlane.f32.xlu0 %v2272
  %v2274 = vpop.xlane.xlu0 %2273
  %v2275 = vsel %vm152, %v2152, 0.0
  %2276 = vadd.xlane.f32.xlu0 %v2275
  %v2277 = vpop.xlane.xlu0 %2276
  %v2278 = vsel %vm152, %v2154, 0.0
  %2279 = vadd.xlane.f32.xlu0 %v2278
  %v2280 = vpop.xlane.xlu0 %2279
  %v2281 = vsel %vm152, %v2156, 0.0
  %2282 = vadd.xlane.f32.xlu0 %v2281
  %v2283 = vpop.xlane.xlu0 %2282
  %v2284 = vsel %vm152, %v2158, 0.0
  %2285 = vadd.xlane.f32.xlu0 %v2284
  %v2286 = vpop.xlane.xlu0 %2285
  %v2319 = vlaneseq
  %v2320 = vshrl.u32 %v2319, 7
  %v2321 = vsub.s32 %v1232, %v2320
  %v2322 = vrot.slane %v2193, %v2321
  %v2323 = vlaneseq
  %v2324 = vshrl.u32 %v2323, 7
  %v2325 = vsub.s32 %v1237, %v2324
  %v2326 = vrot.slane %v2196, %v2325
  %v2327 = vsel %vm1242, %v2326, %v2322
  %v2328 = vlaneseq
  %v2329 = vshrl.u32 %v2328, 7
  %v2330 = vsub.s32 %v1232, %v2329
  %v2331 = vrot.slane %v2199, %v2330
  %v2332 = vlaneseq
  %v2333 = vshrl.u32 %v2332, 7
  %v2334 = vsub.s32 %v1237, %v2333
  %v2335 = vrot.slane %v2202, %v2334
  %v2336 = vsel %vm1242, %v2335, %v2331
  %v2337 = vlaneseq
  %v2338 = vshrl.u32 %v2337, 7
  %v2339 = vsub.s32 %v1232, %v2338
  %v2340 = vrot.slane %v2205, %v2339
  %v2341 = vlaneseq
  %v2342 = vshrl.u32 %v2341, 7
  %v2343 = vsub.s32 %v1237, %v2342
  %v2344 = vrot.slane %v2208, %v2343
  %v2345 = vsel %vm1242, %v2344, %v2340
  %v2346 = vlaneseq
  %v2347 = vshrl.u32 %v2346, 7
  %v2348 = vsub.s32 %v1232, %v2347
  %v2349 = vrot.slane %v2211, %v2348
  %v2350 = vlaneseq
  %v2351 = vshrl.u32 %v2350, 7
  %v2352 = vsub.s32 %v1237, %v2351
  %v2353 = vrot.slane %v2214, %v2352
  %v2354 = vsel %vm1242, %v2353, %v2349
  %v2355 = vlaneseq
  %v2356 = vshrl.u32 %v2355, 7
  %v2357 = vsub.s32 %v1232, %v2356
  %v2358 = vrot.slane %v2217, %v2357
  %v2359 = vlaneseq
  %v2360 = vshrl.u32 %v2359, 7
  %v2361 = vsub.s32 %v1237, %v2360
  %v2362 = vrot.slane %v2220, %v2361
  %v2363 = vsel %vm1242, %v2362, %v2358
  %v2364 = vlaneseq
  %v2365 = vshrl.u32 %v2364, 7
  %v2366 = vsub.s32 %v1232, %v2365
  %v2367 = vrot.slane %v2223, %v2366
  %v2368 = vlaneseq
  %v2369 = vshrl.u32 %v2368, 7
  %v2370 = vsub.s32 %v1237, %v2369
  %v2371 = vrot.slane %v2226, %v2370
  %v2372 = vsel %vm1242, %v2371, %v2367
  %v2373 = vlaneseq
  %v2374 = vshrl.u32 %v2373, 7
  %v2375 = vsub.s32 %v1232, %v2374
  %v2376 = vrot.slane %v2229, %v2375
  %v2377 = vlaneseq
  %v2378 = vshrl.u32 %v2377, 7
  %v2379 = vsub.s32 %v1237, %v2378
  %v2380 = vrot.slane %v2232, %v2379
  %v2381 = vsel %vm1242, %v2380, %v2376
  %v2382 = vlaneseq
  %v2383 = vshrl.u32 %v2382, 7
  %v2384 = vsub.s32 %v1232, %v2383
  %v2385 = vrot.slane %v2235, %v2384
  %v2386 = vlaneseq
  %v2387 = vshrl.u32 %v2386, 7
  %v2388 = vsub.s32 %v1237, %v2387
  %v2389 = vrot.slane %v2238, %v2388
  %v2390 = vsel %vm1242, %v2389, %v2385
  %v2391 = vlaneseq
  %v2392 = vshrl.u32 %v2391, 7
  %v2393 = vsub.s32 %v1232, %v2392
  %v2394 = vrot.slane %v2241, %v2393
  %v2395 = vlaneseq
  %v2396 = vshrl.u32 %v2395, 7
  %v2397 = vsub.s32 %v1237, %v2396
  %v2398 = vrot.slane %v2244, %v2397
  %v2399 = vsel %vm1242, %v2398, %v2394
  %v2400 = vlaneseq
  %v2401 = vshrl.u32 %v2400, 7
  %v2402 = vsub.s32 %v1232, %v2401
  %v2403 = vrot.slane %v2247, %v2402
  %v2404 = vlaneseq
  %v2405 = vshrl.u32 %v2404, 7
  %v2406 = vsub.s32 %v1237, %v2405
  %v2407 = vrot.slane %v2250, %v2406
  %v2408 = vsel %vm1242, %v2407, %v2403
  %v2409 = vlaneseq
  %v2410 = vshrl.u32 %v2409, 7
  %v2411 = vsub.s32 %v1232, %v2410
  %v2412 = vrot.slane %v2253, %v2411
  %v2413 = vlaneseq
  %v2414 = vshrl.u32 %v2413, 7
  %v2415 = vsub.s32 %v1237, %v2414
  %v2416 = vrot.slane %v2256, %v2415
  %v2417 = vsel %vm1242, %v2416, %v2412
  %v2418 = vlaneseq
  %v2419 = vshrl.u32 %v2418, 7
  %v2420 = vsub.s32 %v1232, %v2419
  %v2421 = vrot.slane %v2259, %v2420
  %v2422 = vlaneseq
  %v2423 = vshrl.u32 %v2422, 7
  %v2424 = vsub.s32 %v1237, %v2423
  %v2425 = vrot.slane %v2262, %v2424
  %v2426 = vsel %vm1242, %v2425, %v2421
  %v2427 = vlaneseq
  %v2428 = vshrl.u32 %v2427, 7
  %v2429 = vsub.s32 %v1232, %v2428
  %v2430 = vrot.slane %v2265, %v2429
  %v2431 = vlaneseq
  %v2432 = vshrl.u32 %v2431, 7
  %v2433 = vsub.s32 %v1237, %v2432
  %v2434 = vrot.slane %v2268, %v2433
  %v2435 = vsel %vm1242, %v2434, %v2430
  %v2436 = vlaneseq
  %v2437 = vshrl.u32 %v2436, 7
  %v2438 = vsub.s32 %v1232, %v2437
  %v2439 = vrot.slane %v2271, %v2438
  %v2440 = vlaneseq
  %v2441 = vshrl.u32 %v2440, 7
  %v2442 = vsub.s32 %v1237, %v2441
  %v2443 = vrot.slane %v2274, %v2442
  %v2444 = vsel %vm1242, %v2443, %v2439
  %v2445 = vlaneseq
  %v2446 = vshrl.u32 %v2445, 7
  %v2447 = vsub.s32 %v1232, %v2446
  %v2448 = vrot.slane %v2277, %v2447
  %v2449 = vlaneseq
  %v2450 = vshrl.u32 %v2449, 7
  %v2451 = vsub.s32 %v1237, %v2450
  %v2452 = vrot.slane %v2280, %v2451
  %v2453 = vsel %vm1242, %v2452, %v2448
  %v2454 = vlaneseq
  %v2455 = vshrl.u32 %v2454, 7
  %v2456 = vsub.s32 %v1232, %v2455
  %v2457 = vrot.slane %v2283, %v2456
  %v2458 = vlaneseq
  %v2459 = vshrl.u32 %v2458, 7
  %v2460 = vsub.s32 %v1237, %v2459
  %v2461 = vrot.slane %v2286, %v2460
  %v2462 = vsel %vm1242, %v2461, %v2457
  %v2463 = vsel %vm1379, %v2336, %v2327
  %v2464 = vsel %vm1381, %v2345, %v2463
  %v2465 = vsel %vm1383, %v2354, %v2464
  %v2466 = vsel %vm1385, %v2363, %v2465
  %v2467 = vsel %vm1387, %v2372, %v2466
  %v2468 = vsel %vm1389, %v2381, %v2467
  %v2469 = vsel %vm1391, %v2390, %v2468
  %v2470 = vsel %vm1379, %v2408, %v2399
  %v2471 = vsel %vm1381, %v2417, %v2470
  %v2472 = vsel %vm1383, %v2426, %v2471
  %v2473 = vsel %vm1385, %v2435, %v2472
  %v2474 = vsel %vm1387, %v2444, %v2473
  %v2475 = vsel %vm1389, %v2453, %v2474
  %v2476 = vsel %vm1391, %v2462, %v2475
  %v2479 = vsel %vm1197, %v2469, -1e+30
  %v2480 = vsel %vm1198, %v2476, -1e+30
  %v2481 = vsel %vm1404, %v2479, -inf
  %2482 = vmax.xlane.f32.xlu0 %v2481
  %v2483 = vpop.xlane.xlu0 %2482
  %v2484 = vsel %vm1404, %v2480, -inf
  %2485 = vmax.xlane.f32.xlu0 %v2484
  %v2486 = vpop.xlane.xlu0 %2485
  %v2487 = vsub.f32 %v2479, %v2483
  %v2488 = vsub.f32 %v2480, %v2486
  %v2489 = vmul.f32 %v2487, 1.442695
  %v2490 = vpow.pop %v2489
  %v2491 = vmul.f32 %v2488, 1.442695
  %v2492 = vpow.pop %v2491
  %v2493 = vsel %vm1404, %v2490, 0.0
  %2494 = vadd.xlane.f32.xlu0 %v2493
  %v2495 = vpop.xlane.xlu0 %2494
  %v2496 = vsel %vm1404, %v2492, 0.0
  %2497 = vadd.xlane.f32.xlu0 %v2496
  %v2498 = vpop.xlane.xlu0 %2497
  %v2499 = vrcp.pop %v2495
  %v2500 = vrcp.pop %v2498
  %v2501 = vmul.f32 %v2490, %v2499
  %v2502 = vmul.f32 %v2492, %v2500
  %s2503 = scalar_lea.vmem %s10, 1
  %v2504 = vld [vmem:[%s2503] sm:$0x1]
  %v2506 = vlaneseq
  %v2507 = vshrl.u32 %v2506, 7
  %v2508 = vsub.s32 0, %v2507
  %v2509 = vrot.slane %v2504, %v2508
  %v2512 = vsel %vm1404, %v2501, 0
  %v2515 = vsel %vm1404, %v2502, 0
  %2517 = vmatprep.subr.mxu0 0.0
  %2518 = vmatpush1.msra.mxu0 %v1699
  %2519 = vmatprep.subr.mxu0 0.0
  %2520 = vmatpush1.msra.mxu0 %v1704
  %2521 = vmatprep.subr.mxu0 0.0
  %2522 = vmatpush1.msra.mxu0 0.0
  %2523 = vmatprep.subr.mxu0 0.0
  %2524 = vmatpush1.msra.mxu0 0.0
  %2525 = vmatprep.subr.mxu0 0.0
  %2526 = vmatpush1.msra.mxu0 0.0
  %2527 = vmatprep.subr.mxu0 0.0
  %2528 = vmatpush1.msra.mxu0 0.0
  %2529 = vmatprep.subr.mxu0 0.0
  %2530 = vmatpush1.msra.mxu0 0.0
  %2531 = vmatprep.subr.mxu0 0.0
  %2532 = vmatpush1.msra.mxu0 0.0
  %2533 = vmatprep.subr.mxu0 0.0
  %2534 = vmatpush1.msra.mxu0 0.0
  %2535 = vmatprep.subr.mxu0 0.0
  %2536 = vmatpush1.msra.mxu0 0.0
  %2537 = vmatprep.subr.mxu0 0.0
  %2538 = vmatpush1.msra.mxu0 0.0
  %2539 = vmatprep.subr.mxu0 0.0
  %2540 = vmatpush1.msra.mxu0 0.0
  %2541 = vmatprep.subr.mxu0 0.0
  %2542 = vmatpush1.msra.mxu0 0.0
  %2543 = vmatprep.subr.mxu0 0.0
  %2544 = vmatpush1.msra.mxu0 0.0
  %2545 = vmatprep.subr.mxu0 0.0
  %2546 = vmatpush1.msra.mxu0 0.0
  %2547 = vmatprep.subr.mxu0 0.0
  %2548 = vmatpush1.msra.mxu0 0.0
  %2549 = vmatprep.subr.mxu0 0.0
  %2550 = vmatpush1.msra.mxu0 0.0
  %2551 = vmatprep.subr.mxu0 0.0
  %2552 = vmatpush1.msra.mxu0 0.0
  %2553 = vmatprep.subr.mxu0 0.0
  %2554 = vmatpush1.msra.mxu0 0.0
  %2555 = vmatprep.subr.mxu0 0.0
  %2556 = vmatpush1.msra.mxu0 0.0
  %2557 = vmatprep.subr.mxu0 0.0
  %2558 = vmatpush1.msra.mxu0 0.0
  %2559 = vmatprep.subr.mxu0 0.0
  %2560 = vmatpush1.msra.mxu0 0.0
  %2561 = vmatprep.subr.mxu0 0.0
  %2562 = vmatpush1.msra.mxu0 0.0
  %2563 = vmatprep.subr.mxu0 0.0
  %2564 = vmatpush1.msra.mxu0 0.0
  %2565 = vmatprep.subr.mxu0 0.0
  %2566 = vmatpush1.msra.mxu0 0.0
  %2567 = vmatprep.subr.mxu0 0.0
  %2568 = vmatpush1.msra.mxu0 0.0
  %2569 = vmatprep.subr.mxu0 0.0
  %2570 = vmatpush1.msra.mxu0 0.0
  %2571 = vmatprep.subr.mxu0 0.0
  %2572 = vmatpush1.msra.mxu0 0.0
  %2573 = vmatprep.subr.mxu0 0.0
  %2574 = vmatpush1.msra.mxu0 0.0
  %2575 = vmatprep.subr.mxu0 0.0
  %2576 = vmatpush1.msra.mxu0 0.0
  %2577 = vmatprep.subr.mxu0 0.0
  %2578 = vmatpush1.msra.mxu0 0.0
  %2579 = vmatprep.subr.mxu0 0.0
  %2580 = vmatpush1.msra.mxu0 0.0
  %2581 = vmatprep.mubr.f32.mxu0 0.0
  %2582 = vmatmul.mubr.f32.gmra.mrb[0].mxu0 %v2512
  %v2583 = vpop.f32.mrb[0].mxu0
  %v2584 = vadd.f32 %v2509, %v2583
  %v2585 = vpop.f32.mrb[0].mxu0
  %2586 = vmatprep.mubr.f32.mxu0 0.0
  %2587 = vmatmul.mubr.f32.gmra.mrb[0].mxu0 %v2515
  %v2588 = vpop.f32.mrb[0].mxu0
  %v2589 = vadd.f32 %v2509, %v2588
  %v2590 = vpop.f32.mrb[0].mxu0
  %2591 = vdwg.mxu0
  %v2592 = vmax.f32 %v2584, 0.0
  %v2593 = vmax.f32 %v2589, 0.0
  %s2594 = scalar_lea.vmem %s5, 160
  %v2595 = vld [vmem:[%s2594] sm:$0xff]
  %v2596 = vld [vmem:[%s2594 + $0x8] sm:$0xff]
  %v2597 = vld [vmem:[%s2594 + $0x10] sm:$0xff]
  %v2598 = vld [vmem:[%s2594 + $0x18] sm:$0xff]
  %s2599 = scalar_lea.vmem %s6, 5
  %v2600 = vld [vmem:[%s2599] sm:$0x1]
  %v2602 = vlaneseq
  %v2603 = vshrl.u32 %v2602, 7
  %v2604 = vsub.s32 0, %v2603
  %v2605 = vrot.slane %v2600, %v2604
  %v2608 = vsel %vm152, %v2592, 0
  %v2611 = vsel %vm152, %v2593, 0
  %2613 = vmatprep.subr.mxu0 0.0
  %2614 = vmatpush1.msra.mxu0 %v2595
  %2615 = vmatprep.subr.mxu0 0.0
  %2616 = vmatpush1.msra.mxu0 %v2596
  %2617 = vmatprep.subr.mxu0 0.0
  %2618 = vmatpush1.msra.mxu0 %v2597
  %2619 = vmatprep.subr.mxu0 0.0
  %2620 = vmatpush1.msra.mxu0 %v2598
  %2621 = vmatprep.subr.mxu0 0.0
  %2622 = vmatpush1.msra.mxu0 0.0
  %2623 = vmatprep.subr.mxu0 0.0
  %2624 = vmatpush1.msra.mxu0 0.0
  %2625 = vmatprep.subr.mxu0 0.0
  %2626 = vmatpush1.msra.mxu0 0.0
  %2627 = vmatprep.subr.mxu0 0.0
  %2628 = vmatpush1.msra.mxu0 0.0
  %2629 = vmatprep.subr.mxu0 0.0
  %2630 = vmatpush1.msra.mxu0 0.0
  %2631 = vmatprep.subr.mxu0 0.0
  %2632 = vmatpush1.msra.mxu0 0.0
  %2633 = vmatprep.subr.mxu0 0.0
  %2634 = vmatpush1.msra.mxu0 0.0
  %2635 = vmatprep.subr.mxu0 0.0
  %2636 = vmatpush1.msra.mxu0 0.0
  %2637 = vmatprep.subr.mxu0 0.0
  %2638 = vmatpush1.msra.mxu0 0.0
  %2639 = vmatprep.subr.mxu0 0.0
  %2640 = vmatpush1.msra.mxu0 0.0
  %2641 = vmatprep.subr.mxu0 0.0
  %2642 = vmatpush1.msra.mxu0 0.0
  %2643 = vmatprep.subr.mxu0 0.0
  %2644 = vmatpush1.msra.mxu0 0.0
  %2645 = vmatprep.subr.mxu0 0.0
  %2646 = vmatpush1.msra.mxu0 0.0
  %2647 = vmatprep.subr.mxu0 0.0
  %2648 = vmatpush1.msra.mxu0 0.0
  %2649 = vmatprep.subr.mxu0 0.0
  %2650 = vmatpush1.msra.mxu0 0.0
  %2651 = vmatprep.subr.mxu0 0.0
  %2652 = vmatpush1.msra.mxu0 0.0
  %2653 = vmatprep.subr.mxu0 0.0
  %2654 = vmatpush1.msra.mxu0 0.0
  %2655 = vmatprep.subr.mxu0 0.0
  %2656 = vmatpush1.msra.mxu0 0.0
  %2657 = vmatprep.subr.mxu0 0.0
  %2658 = vmatpush1.msra.mxu0 0.0
  %2659 = vmatprep.subr.mxu0 0.0
  %2660 = vmatpush1.msra.mxu0 0.0
  %2661 = vmatprep.subr.mxu0 0.0
  %2662 = vmatpush1.msra.mxu0 0.0
  %2663 = vmatprep.subr.mxu0 0.0
  %2664 = vmatpush1.msra.mxu0 0.0
  %2665 = vmatprep.subr.mxu0 0.0
  %2666 = vmatpush1.msra.mxu0 0.0
  %2667 = vmatprep.subr.mxu0 0.0
  %2668 = vmatpush1.msra.mxu0 0.0
  %2669 = vmatprep.subr.mxu0 0.0
  %2670 = vmatpush1.msra.mxu0 0.0
  %2671 = vmatprep.subr.mxu0 0.0
  %2672 = vmatpush1.msra.mxu0 0.0
  %2673 = vmatprep.subr.mxu0 0.0
  %2674 = vmatpush1.msra.mxu0 0.0
  %2675 = vmatprep.subr.mxu0 0.0
  %2676 = vmatpush1.msra.mxu0 0.0
  %2677 = vmatprep.mubr.f32.mxu0 0.0
  %2678 = vmatmul.mubr.f32.gmra.mrb[0].mxu0 %v2608
  %v2679 = vpop.f32.mrb[0].mxu0
  %v2680 = vadd.f32 %v2605, %v2679
  %v2681 = vpop.f32.mrb[0].mxu0
  %2682 = vmatprep.mubr.f32.mxu0 0.0
  %2683 = vmatmul.mubr.f32.gmra.mrb[0].mxu0 %v2611
  %v2684 = vpop.f32.mrb[0].mxu0
  %v2685 = vadd.f32 %v2605, %v2684
  %v2686 = vpop.f32.mrb[0].mxu0
  %2687 = vdwg.mxu0
  %v2688 = vmax.f32 %v2680, 0.0
  %v2689 = vmax.f32 %v2685, 0.0
  %s2690 = scalar_lea.vmem %s7, 64
  %v2691 = vld [vmem:[%s2690] sm:$0xff]
  %v2692 = vld [vmem:[%s2690 + $0x8] sm:$0xff]
  %v2693 = vld [vmem:[%s2690 + $0x10] sm:$0xff]
  %v2694 = vld [vmem:[%s2690 + $0x18] sm:$0xff]
  %s2695 = scalar_lea.vmem %s8, 2
  %v2696 = vld [vmem:[%s2695] sm:$0x1]
  %v2698 = vlaneseq
  %v2699 = vshrl.u32 %v2698, 7
  %v2700 = vsub.s32 0, %v2699
  %v2701 = vrot.slane %v2696, %v2700
  %v2704 = vsel %vm152, %v2688, 0
  %v2707 = vsel %vm152, %v2689, 0
  %2709 = vmatprep.subr.mxu0 0.0
  %2710 = vmatpush1.msra.mxu0 %v2691
  %2711 = vmatprep.subr.mxu0 0.0
  %2712 = vmatpush1.msra.mxu0 %v2692
  %2713 = vmatprep.subr.mxu0 0.0
  %2714 = vmatpush1.msra.mxu0 %v2693
  %2715 = vmatprep.subr.mxu0 0.0
  %2716 = vmatpush1.msra.mxu0 %v2694
  %2717 = vmatprep.subr.mxu0 0.0
  %2718 = vmatpush1.msra.mxu0 0.0
  %2719 = vmatprep.subr.mxu0 0.0
  %2720 = vmatpush1.msra.mxu0 0.0
  %2721 = vmatprep.subr.mxu0 0.0
  %2722 = vmatpush1.msra.mxu0 0.0
  %2723 = vmatprep.subr.mxu0 0.0
  %2724 = vmatpush1.msra.mxu0 0.0
  %2725 = vmatprep.subr.mxu0 0.0
  %2726 = vmatpush1.msra.mxu0 0.0
  %2727 = vmatprep.subr.mxu0 0.0
  %2728 = vmatpush1.msra.mxu0 0.0
  %2729 = vmatprep.subr.mxu0 0.0
  %2730 = vmatpush1.msra.mxu0 0.0
  %2731 = vmatprep.subr.mxu0 0.0
  %2732 = vmatpush1.msra.mxu0 0.0
  %2733 = vmatprep.subr.mxu0 0.0
  %2734 = vmatpush1.msra.mxu0 0.0
  %2735 = vmatprep.subr.mxu0 0.0
  %2736 = vmatpush1.msra.mxu0 0.0
  %2737 = vmatprep.subr.mxu0 0.0
  %2738 = vmatpush1.msra.mxu0 0.0
  %2739 = vmatprep.subr.mxu0 0.0
  %2740 = vmatpush1.msra.mxu0 0.0
  %2741 = vmatprep.subr.mxu0 0.0
  %2742 = vmatpush1.msra.mxu0 0.0
  %2743 = vmatprep.subr.mxu0 0.0
  %2744 = vmatpush1.msra.mxu0 0.0
  %2745 = vmatprep.subr.mxu0 0.0
  %2746 = vmatpush1.msra.mxu0 0.0
  %2747 = vmatprep.subr.mxu0 0.0
  %2748 = vmatpush1.msra.mxu0 0.0
  %2749 = vmatprep.subr.mxu0 0.0
  %2750 = vmatpush1.msra.mxu0 0.0
  %2751 = vmatprep.subr.mxu0 0.0
  %2752 = vmatpush1.msra.mxu0 0.0
  %2753 = vmatprep.subr.mxu0 0.0
  %2754 = vmatpush1.msra.mxu0 0.0
  %2755 = vmatprep.subr.mxu0 0.0
  %2756 = vmatpush1.msra.mxu0 0.0
  %2757 = vmatprep.subr.mxu0 0.0
  %2758 = vmatpush1.msra.mxu0 0.0
  %2759 = vmatprep.subr.mxu0 0.0
  %2760 = vmatpush1.msra.mxu0 0.0
  %2761 = vmatprep.subr.mxu0 0.0
  %2762 = vmatpush1.msra.mxu0 0.0
  %2763 = vmatprep.subr.mxu0 0.0
  %2764 = vmatpush1.msra.mxu0 0.0
  %2765 = vmatprep.subr.mxu0 0.0
  %2766 = vmatpush1.msra.mxu0 0.0
  %2767 = vmatprep.subr.mxu0 0.0
  %2768 = vmatpush1.msra.mxu0 0.0
  %2769 = vmatprep.subr.mxu0 0.0
  %2770 = vmatpush1.msra.mxu0 0.0
  %2771 = vmatprep.subr.mxu0 0.0
  %2772 = vmatpush1.msra.mxu0 0.0
  %2773 = vmatprep.mubr.f32.mxu0 0.0
  %2774 = vmatmul.mubr.f32.gmra.mrb[0].mxu0 %v2704
  %v2775 = vpop.f32.mrb[0].mxu0
  %v2776 = vadd.f32 %v2701, %v2775
  %v2777 = vpop.f32.mrb[0].mxu0
  %2778 = vmatprep.mubr.f32.mxu0 0.0
  %2779 = vmatmul.mubr.f32.gmra.mrb[0].mxu0 %v2707
  %v2780 = vpop.f32.mrb[0].mxu0
  %v2781 = vadd.f32 %v2701, %v2780
  %v2782 = vpop.f32.mrb[0].mxu0
  %2783 = vdwg.mxu0
  %v2786 = vcombine.high %v2776, %v2776
  %v2788 = vunpack.c.l.s4 1966171168
  %v2789 = vunpack.c.0.s8 %v2788
  %v2790 = vlaneseq
  %v2791 = vshrl.u32 %v2790, 7
  %v2792 = vsub.s32 %v2789, %v2791
  %v2793 = vrot.slane %v2776, %v2792
  %v2795 = vunpack.c.l.s4 1966171168
  %v2796 = vunpack.c.0.s8 %v2795
  %v2797 = vlaneseq
  %v2798 = vshrl.u32 %v2797, 7
  %v2799 = vsub.s32 %v2796, %v2798
  %v2800 = vrot.slane %v2786, %v2799
  %v2801 = vcombine.high %v2793, %v2793
  %v2802 = vcombine.high %v2800, %v2800
  %v2804 = vunpack.c.l.s4 1966171168
  %v2805 = vunpack.c.0.s8 %v2804
  %v2806 = vlaneseq
  %v2807 = vshrl.u32 %v2806, 7
  %v2808 = vsub.s32 %v2805, %v2807
  %v2809 = vrot.slane %v2793, %v2808
  %v2811 = vunpack.c.l.s4 1966171168
  %v2812 = vunpack.c.0.s8 %v2811
  %v2813 = vlaneseq
  %v2814 = vshrl.u32 %v2813, 7
  %v2815 = vsub.s32 %v2812, %v2814
  %v2816 = vrot.slane %v2800, %v2815
  %v2818 = vunpack.c.l.s4 1966171168
  %v2819 = vunpack.c.0.s8 %v2818
  %v2820 = vlaneseq
  %v2821 = vshrl.u32 %v2820, 7
  %v2822 = vsub.s32 %v2819, %v2821
  %v2823 = vrot.slane %v2801, %v2822
  %v2825 = vunpack.c.l.s4 1966171168
  %v2826 = vunpack.c.0.s8 %v2825
  %v2827 = vlaneseq
  %v2828 = vshrl.u32 %v2827, 7
  %v2829 = vsub.s32 %v2826, %v2828
  %v2830 = vrot.slane %v2802, %v2829
  %v2831 = vcombine.high %v2809, %v2809
  %v2832 = vcombine.high %v2816, %v2816
  %v2833 = vcombine.high %v2823, %v2823
  %v2834 = vcombine.high %v2830, %v2830
  %v2835 = vcombine.high %v2781, %v2781
  %v2837 = vunpack.c.l.s4 1966171168
  %v2838 = vunpack.c.0.s8 %v2837
  %v2839 = vlaneseq
  %v2840 = vshrl.u32 %v2839, 7
  %v2841 = vsub.s32 %v2838, %v2840
  %v2842 = vrot.slane %v2781, %v2841
  %v2844 = vunpack.c.l.s4 1966171168
  %v2845 = vunpack.c.0.s8 %v2844
  %v2846 = vlaneseq
  %v2847 = vshrl.u32 %v2846, 7
  %v2848 = vsub.s32 %v2845, %v2847
  %v2849 = vrot.slane %v2835, %v2848
  %v2850 = vcombine.high %v2842, %v2842
  %v2851 = vcombine.high %v2849, %v2849
  %v2853 = vunpack.c.l.s4 1966171168
  %v2854 = vunpack.c.0.s8 %v2853
  %v2855 = vlaneseq
  %v2856 = vshrl.u32 %v2855, 7
  %v2857 = vsub.s32 %v2854, %v2856
  %v2858 = vrot.slane %v2842, %v2857
  %v2860 = vunpack.c.l.s4 1966171168
  %v2861 = vunpack.c.0.s8 %v2860
  %v2862 = vlaneseq
  %v2863 = vshrl.u32 %v2862, 7
  %v2864 = vsub.s32 %v2861, %v2863
  %v2865 = vrot.slane %v2849, %v2864
  %v2867 = vunpack.c.l.s4 1966171168
  %v2868 = vunpack.c.0.s8 %v2867
  %v2869 = vlaneseq
  %v2870 = vshrl.u32 %v2869, 7
  %v2871 = vsub.s32 %v2868, %v2870
  %v2872 = vrot.slane %v2850, %v2871
  %v2874 = vunpack.c.l.s4 1966171168
  %v2875 = vunpack.c.0.s8 %v2874
  %v2876 = vlaneseq
  %v2877 = vshrl.u32 %v2876, 7
  %v2878 = vsub.s32 %v2875, %v2877
  %v2879 = vrot.slane %v2851, %v2878
  %v2880 = vcombine.high %v2858, %v2858
  %v2881 = vcombine.high %v2865, %v2865
  %v2882 = vcombine.high %v2872, %v2872
  %v2883 = vcombine.high %v2879, %v2879
  %v2884 = vlaneseq
  %v2885 = vshrl.u32 %v2884, 7
  %v2886 = vsub.s32 0, %v2885
  %v2887 = vrot.slane %v2809, %v2886
  %v2888 = vlaneseq
  %v2889 = vshrl.u32 %v2888, 7
  %v2890 = vsub.s32 0, %v2889
  %v2891 = vrot.slane %v2823, %v2890
  %v2892 = vlaneseq
  %v2893 = vshrl.u32 %v2892, 7
  %v2894 = vsub.s32 0, %v2893
  %v2895 = vrot.slane %v2831, %v2894
  %v2896 = vlaneseq
  %v2897 = vshrl.u32 %v2896, 7
  %v2898 = vsub.s32 0, %v2897
  %v2899 = vrot.slane %v2833, %v2898
  %v2900 = vlaneseq
  %v2901 = vshrl.u32 %v2900, 7
  %v2902 = vsub.s32 0, %v2901
  %v2903 = vrot.slane %v2816, %v2902
  %v2904 = vlaneseq
  %v2905 = vshrl.u32 %v2904, 7
  %v2906 = vsub.s32 0, %v2905
  %v2907 = vrot.slane %v2830, %v2906
  %v2908 = vlaneseq
  %v2909 = vshrl.u32 %v2908, 7
  %v2910 = vsub.s32 0, %v2909
  %v2911 = vrot.slane %v2832, %v2910
  %v2912 = vlaneseq
  %v2913 = vshrl.u32 %v2912, 7
  %v2914 = vsub.s32 0, %v2913
  %v2915 = vrot.slane %v2834, %v2914
  %v2916 = vlaneseq
  %v2917 = vshrl.u32 %v2916, 7
  %v2918 = vsub.s32 0, %v2917
  %v2919 = vrot.slane %v2858, %v2918
  %v2920 = vlaneseq
  %v2921 = vshrl.u32 %v2920, 7
  %v2922 = vsub.s32 0, %v2921
  %v2923 = vrot.slane %v2872, %v2922
  %v2924 = vlaneseq
  %v2925 = vshrl.u32 %v2924, 7
  %v2926 = vsub.s32 0, %v2925
  %v2927 = vrot.slane %v2880, %v2926
  %v2928 = vlaneseq
  %v2929 = vshrl.u32 %v2928, 7
  %v2930 = vsub.s32 0, %v2929
  %v2931 = vrot.slane %v2882, %v2930
  %v2932 = vlaneseq
  %v2933 = vshrl.u32 %v2932, 7
  %v2934 = vsub.s32 0, %v2933
  %v2935 = vrot.slane %v2865, %v2934
  %v2936 = vlaneseq
  %v2937 = vshrl.u32 %v2936, 7
  %v2938 = vsub.s32 0, %v2937
  %v2939 = vrot.slane %v2879, %v2938
  %v2940 = vlaneseq
  %v2941 = vshrl.u32 %v2940, 7
  %v2942 = vsub.s32 0, %v2941
  %v2943 = vrot.slane %v2881, %v2942
  %v2944 = vlaneseq
  %v2945 = vshrl.u32 %v2944, 7
  %v2946 = vsub.s32 0, %v2945
  %v2947 = vrot.slane %v2883, %v2946
  %2964 = vrot.lane.b32.xlu0 %v2776, 32
  %v2965 = vpop.permute.xlu0 %2964
  %2966 = vrot.lane.b32.xlu0 %v2781, 32
  %v2967 = vpop.permute.xlu0 %2966
  %v2970 = vadd.f32 %v2887, %v2965
  %v2971 = vadd.f32 %v2887, %v2967
  %v2972 = vadd.f32 %v2891, %v2965
  %v2973 = vadd.f32 %v2891, %v2967
  %v2974 = vadd.f32 %v2895, %v2965
  %v2975 = vadd.f32 %v2895, %v2967
  %v2976 = vadd.f32 %v2899, %v2965
  %v2977 = vadd.f32 %v2899, %v2967
  %v2978 = vadd.f32 %v2903, %v2965
  %v2979 = vadd.f32 %v2903, %v2967
  %v2980 = vadd.f32 %v2907, %v2965
  %v2981 = vadd.f32 %v2907, %v2967
  %v2982 = vadd.f32 %v2911, %v2965
  %v2983 = vadd.f32 %v2911, %v2967
  %v2984 = vadd.f32 %v2915, %v2965
  %v2985 = vadd.f32 %v2915, %v2967
  %v2986 = vadd.f32 %v2919, %v2965
  %v2987 = vadd.f32 %v2919, %v2967
  %v2988 = vadd.f32 %v2923, %v2965
  %v2989 = vadd.f32 %v2923, %v2967
  %v2990 = vadd.f32 %v2927, %v2965
  %v2991 = vadd.f32 %v2927, %v2967
  %v2992 = vadd.f32 %v2931, %v2965
  %v2993 = vadd.f32 %v2931, %v2967
  %v2994 = vadd.f32 %v2935, %v2965
  %v2995 = vadd.f32 %v2935, %v2967
  %v2996 = vadd.f32 %v2939, %v2965
  %v2997 = vadd.f32 %v2939, %v2967
  %v2998 = vadd.f32 %v2943, %v2965
  %v2999 = vadd.f32 %v2943, %v2967
  %v3000 = vadd.f32 %v2947, %v2965
  %v3001 = vadd.f32 %v2947, %v2967
  %vm3002 = vcmp.gt.f32.partialorder %v2970, 0.0
  %vm3003 = vcmp.gt.f32.partialorder %v2971, 0.0
  %vm3004 = vcmp.gt.f32.partialorder %v2972, 0.0
  %vm3005 = vcmp.gt.f32.partialorder %v2973, 0.0
  %vm3006 = vcmp.gt.f32.partialorder %v2974, 0.0
  %vm3007 = vcmp.gt.f32.partialorder %v2975, 0.0
  %vm3008 = vcmp.gt.f32.partialorder %v2976, 0.0
  %vm3009 = vcmp.gt.f32.partialorder %v2977, 0.0
  %vm3010 = vcmp.gt.f32.partialorder %v2978, 0.0
  %vm3011 = vcmp.gt.f32.partialorder %v2979, 0.0
  %vm3012 = vcmp.gt.f32.partialorder %v2980, 0.0
  %vm3013 = vcmp.gt.f32.partialorder %v2981, 0.0
  %vm3014 = vcmp.gt.f32.partialorder %v2982, 0.0
  %vm3015 = vcmp.gt.f32.partialorder %v2983, 0.0
  %vm3016 = vcmp.gt.f32.partialorder %v2984, 0.0
  %vm3017 = vcmp.gt.f32.partialorder %v2985, 0.0
  %vm3018 = vcmp.gt.f32.partialorder %v2986, 0.0
  %vm3019 = vcmp.gt.f32.partialorder %v2987, 0.0
  %vm3020 = vcmp.gt.f32.partialorder %v2988, 0.0
  %vm3021 = vcmp.gt.f32.partialorder %v2989, 0.0
  %vm3022 = vcmp.gt.f32.partialorder %v2990, 0.0
  %vm3023 = vcmp.gt.f32.partialorder %v2991, 0.0
  %vm3024 = vcmp.gt.f32.partialorder %v2992, 0.0
  %vm3025 = vcmp.gt.f32.partialorder %v2993, 0.0
  %vm3026 = vcmp.gt.f32.partialorder %v2994, 0.0
  %vm3027 = vcmp.gt.f32.partialorder %v2995, 0.0
  %vm3028 = vcmp.gt.f32.partialorder %v2996, 0.0
  %vm3029 = vcmp.gt.f32.partialorder %v2997, 0.0
  %vm3030 = vcmp.gt.f32.partialorder %v2998, 0.0
  %vm3031 = vcmp.gt.f32.partialorder %v2999, 0.0
  %vm3032 = vcmp.gt.f32.partialorder %v3000, 0.0
  %vm3033 = vcmp.gt.f32.partialorder %v3001, 0.0
  %v3034 = vmul.f32 %v2970, 0.2
  %v3035 = vmul.f32 %v2971, 0.2
  %v3036 = vmul.f32 %v2972, 0.2
  %v3037 = vmul.f32 %v2973, 0.2
  %v3038 = vmul.f32 %v2974, 0.2
  %v3039 = vmul.f32 %v2975, 0.2
  %v3040 = vmul.f32 %v2976, 0.2
  %v3041 = vmul.f32 %v2977, 0.2
  %v3042 = vmul.f32 %v2978, 0.2
  %v3043 = vmul.f32 %v2979, 0.2
  %v3044 = vmul.f32 %v2980, 0.2
  %v3045 = vmul.f32 %v2981, 0.2
  %v3046 = vmul.f32 %v2982, 0.2
  %v3047 = vmul.f32 %v2983, 0.2
  %v3048 = vmul.f32 %v2984, 0.2
  %v3049 = vmul.f32 %v2985, 0.2
  %v3050 = vmul.f32 %v2986, 0.2
  %v3051 = vmul.f32 %v2987, 0.2
  %v3052 = vmul.f32 %v2988, 0.2
  %v3053 = vmul.f32 %v2989, 0.2
  %v3054 = vmul.f32 %v2990, 0.2
  %v3055 = vmul.f32 %v2991, 0.2
  %v3056 = vmul.f32 %v2992, 0.2
  %v3057 = vmul.f32 %v2993, 0.2
  %v3058 = vmul.f32 %v2994, 0.2
  %v3059 = vmul.f32 %v2995, 0.2
  %v3060 = vmul.f32 %v2996, 0.2
  %v3061 = vmul.f32 %v2997, 0.2
  %v3062 = vmul.f32 %v2998, 0.2
  %v3063 = vmul.f32 %v2999, 0.2
  %v3064 = vmul.f32 %v3000, 0.2
  %v3065 = vmul.f32 %v3001, 0.2
  %v3066 = vsel %vm3002, %v2970, %v3034
  %v3067 = vsel %vm3003, %v2971, %v3035
  %v3068 = vsel %vm3004, %v2972, %v3036
  %v3069 = vsel %vm3005, %v2973, %v3037
  %v3070 = vsel %vm3006, %v2974, %v3038
  %v3071 = vsel %vm3007, %v2975, %v3039
  %v3072 = vsel %vm3008, %v2976, %v3040
  %v3073 = vsel %vm3009, %v2977, %v3041
  %v3074 = vsel %vm3010, %v2978, %v3042
  %v3075 = vsel %vm3011, %v2979, %v3043
  %v3076 = vsel %vm3012, %v2980, %v3044
  %v3077 = vsel %vm3013, %v2981, %v3045
  %v3078 = vsel %vm3014, %v2982, %v3046
  %v3079 = vsel %vm3015, %v2983, %v3047
  %v3080 = vsel %vm3016, %v2984, %v3048
  %v3081 = vsel %vm3017, %v2985, %v3049
  %v3082 = vsel %vm3018, %v2986, %v3050
  %v3083 = vsel %vm3019, %v2987, %v3051
  %v3084 = vsel %vm3020, %v2988, %v3052
  %v3085 = vsel %vm3021, %v2989, %v3053
  %v3086 = vsel %vm3022, %v2990, %v3054
  %v3087 = vsel %vm3023, %v2991, %v3055
  %v3088 = vsel %vm3024, %v2992, %v3056
  %v3089 = vsel %vm3025, %v2993, %v3057
  %v3090 = vsel %vm3026, %v2994, %v3058
  %v3091 = vsel %vm3027, %v2995, %v3059
  %v3092 = vsel %vm3028, %v2996, %v3060
  %v3093 = vsel %vm3029, %v2997, %v3061
  %v3094 = vsel %vm3030, %v2998, %v3062
  %v3095 = vsel %vm3031, %v2999, %v3063
  %v3096 = vsel %vm3032, %v3000, %v3064
  %v3097 = vsel %vm3033, %v3001, %v3065
  %s3098 = scalar_lea.vmem %s9, 2
  %v3099 = vld [vmem:[%s3098] sm:$0x1]
  %v3101 = vlaneseq
  %v3102 = vshrl.u32 %v3101, 7
  %v3103 = vsub.s32 0, %v3102
  %v3104 = vrot.slane %v3099, %v3103
  %3105 = vrot.lane.b32.xlu0 %v3104, 32
  %v3106 = vpop.permute.xlu0 %3105
  %v3108 = vmul.f32 %v3066, %v3106
  %v3109 = vmul.f32 %v3067, %v3106
  %v3110 = vmul.f32 %v3068, %v3106
  %v3111 = vmul.f32 %v3069, %v3106
  %v3112 = vmul.f32 %v3070, %v3106
  %v3113 = vmul.f32 %v3071, %v3106
  %v3114 = vmul.f32 %v3072, %v3106
  %v3115 = vmul.f32 %v3073, %v3106
  %v3116 = vmul.f32 %v3074, %v3106
  %v3117 = vmul.f32 %v3075, %v3106
  %v3118 = vmul.f32 %v3076, %v3106
  %v3119 = vmul.f32 %v3077, %v3106
  %v3120 = vmul.f32 %v3078, %v3106
  %v3121 = vmul.f32 %v3079, %v3106
  %v3122 = vmul.f32 %v3080, %v3106
  %v3123 = vmul.f32 %v3081, %v3106
  %v3124 = vmul.f32 %v3082, %v3106
  %v3125 = vmul.f32 %v3083, %v3106
  %v3126 = vmul.f32 %v3084, %v3106
  %v3127 = vmul.f32 %v3085, %v3106
  %v3128 = vmul.f32 %v3086, %v3106
  %v3129 = vmul.f32 %v3087, %v3106
  %v3130 = vmul.f32 %v3088, %v3106
  %v3131 = vmul.f32 %v3089, %v3106
  %v3132 = vmul.f32 %v3090, %v3106
  %v3133 = vmul.f32 %v3091, %v3106
  %v3134 = vmul.f32 %v3092, %v3106
  %v3135 = vmul.f32 %v3093, %v3106
  %v3136 = vmul.f32 %v3094, %v3106
  %v3137 = vmul.f32 %v3095, %v3106
  %v3138 = vmul.f32 %v3096, %v3106
  %v3139 = vmul.f32 %v3097, %v3106
  %3172 = vrot.lane.b32.xlu0 %v3108, 96
  %v3173 = vpop.permute.xlu0 %3172
  %3174 = vrot.lane.b32.xlu0 %v3109, 96
  %v3175 = vpop.permute.xlu0 %3174
  %3176 = vrot.lane.b32.xlu0 %v3110, 96
  %v3177 = vpop.permute.xlu0 %3176
  %3178 = vrot.lane.b32.xlu0 %v3111, 96
  %v3179 = vpop.permute.xlu0 %3178
  %3180 = vrot.lane.b32.xlu0 %v3112, 96
  %v3181 = vpop.permute.xlu0 %3180
  %3182 = vrot.lane.b32.xlu0 %v3113, 96
  %v3183 = vpop.permute.xlu0 %3182
  %3184 = vrot.lane.b32.xlu0 %v3114, 96
  %v3185 = vpop.permute.xlu0 %3184
  %3186 = vrot.lane.b32.xlu0 %v3115, 96
  %v3187 = vpop.permute.xlu0 %3186
  %3188 = vrot.lane.b32.xlu0 %v3116, 96
  %v3189 = vpop.permute.xlu0 %3188
  %3190 = vrot.lane.b32.xlu0 %v3117, 96
  %v3191 = vpop.permute.xlu0 %3190
  %3192 = vrot.lane.b32.xlu0 %v3118, 96
  %v3193 = vpop.permute.xlu0 %3192
  %3194 = vrot.lane.b32.xlu0 %v3119, 96
  %v3195 = vpop.permute.xlu0 %3194
  %3196 = vrot.lane.b32.xlu0 %v3120, 96
  %v3197 = vpop.permute.xlu0 %3196
  %3198 = vrot.lane.b32.xlu0 %v3121, 96
  %v3199 = vpop.permute.xlu0 %3198
  %3200 = vrot.lane.b32.xlu0 %v3122, 96
  %v3201 = vpop.permute.xlu0 %3200
  %3202 = vrot.lane.b32.xlu0 %v3123, 96
  %v3203 = vpop.permute.xlu0 %3202
  %3204 = vrot.lane.b32.xlu0 %v3124, 96
  %v3205 = vpop.permute.xlu0 %3204
  %3206 = vrot.lane.b32.xlu0 %v3125, 96
  %v3207 = vpop.permute.xlu0 %3206
  %3208 = vrot.lane.b32.xlu0 %v3126, 96
  %v3209 = vpop.permute.xlu0 %3208
  %3210 = vrot.lane.b32.xlu0 %v3127, 96
  %v3211 = vpop.permute.xlu0 %3210
  %3212 = vrot.lane.b32.xlu0 %v3128, 96
  %v3213 = vpop.permute.xlu0 %3212
  %3214 = vrot.lane.b32.xlu0 %v3129, 96
  %v3215 = vpop.permute.xlu0 %3214
  %3216 = vrot.lane.b32.xlu0 %v3130, 96
  %v3217 = vpop.permute.xlu0 %3216
  %3218 = vrot.lane.b32.xlu0 %v3131, 96
  %v3219 = vpop.permute.xlu0 %3218
  %3220 = vrot.lane.b32.xlu0 %v3132, 96
  %v3221 = vpop.permute.xlu0 %3220
  %3222 = vrot.lane.b32.xlu0 %v3133, 96
  %v3223 = vpop.permute.xlu0 %3222
  %3224 = vrot.lane.b32.xlu0 %v3134, 96
  %v3225 = vpop.permute.xlu0 %3224
  %3226 = vrot.lane.b32.xlu0 %v3135, 96
  %v3227 = vpop.permute.xlu0 %3226
  %3228 = vrot.lane.b32.xlu0 %v3136, 96
  %v3229 = vpop.permute.xlu0 %3228
  %3230 = vrot.lane.b32.xlu0 %v3137, 96
  %v3231 = vpop.permute.xlu0 %3230
  %3232 = vrot.lane.b32.xlu0 %v3138, 96
  %v3233 = vpop.permute.xlu0 %3232
  %3234 = vrot.lane.b32.xlu0 %v3139, 96
  %v3235 = vpop.permute.xlu0 %3234
  %v3268 = vsel %vm152, %v3173, 0.0
  %3269 = vadd.xlane.f32.xlu0 %v3268
  %v3270 = vpop.xlane.xlu0 %3269
  %v3271 = vsel %vm152, %v3175, 0.0
  %3272 = vadd.xlane.f32.xlu0 %v3271
  %v3273 = vpop.xlane.xlu0 %3272
  %v3274 = vsel %vm152, %v3177, 0.0
  %3275 = vadd.xlane.f32.xlu0 %v3274
  %v3276 = vpop.xlane.xlu0 %3275
  %v3277 = vsel %vm152, %v3179, 0.0
  %3278 = vadd.xlane.f32.xlu0 %v3277
  %v3279 = vpop.xlane.xlu0 %3278
  %v3280 = vsel %vm152, %v3181, 0.0
  %3281 = vadd.xlane.f32.xlu0 %v3280
  %v3282 = vpop.xlane.xlu0 %3281
  %v3283 = vsel %vm152, %v3183, 0.0
  %3284 = vadd.xlane.f32.xlu0 %v3283
  %v3285 = vpop.xlane.xlu0 %3284
  %v3286 = vsel %vm152, %v3185, 0.0
  %3287 = vadd.xlane.f32.xlu0 %v3286
  %v3288 = vpop.xlane.xlu0 %3287
  %v3289 = vsel %vm152, %v3187, 0.0
  %3290 = vadd.xlane.f32.xlu0 %v3289
  %v3291 = vpop.xlane.xlu0 %3290
  %v3292 = vsel %vm152, %v3189, 0.0
  %3293 = vadd.xlane.f32.xlu0 %v3292
  %v3294 = vpop.xlane.xlu0 %3293
  %v3295 = vsel %vm152, %v3191, 0.0
  %3296 = vadd.xlane.f32.xlu0 %v3295
  %v3297 = vpop.xlane.xlu0 %3296
  %v3298 = vsel %vm152, %v3193, 0.0
  %3299 = vadd.xlane.f32.xlu0 %v3298
  %v3300 = vpop.xlane.xlu0 %3299
  %v3301 = vsel %vm152, %v3195, 0.0
  %3302 = vadd.xlane.f32.xlu0 %v3301
  %v3303 = vpop.xlane.xlu0 %3302
  %v3304 = vsel %vm152, %v3197, 0.0
  %3305 = vadd.xlane.f32.xlu0 %v3304
  %v3306 = vpop.xlane.xlu0 %3305
  %v3307 = vsel %vm152, %v3199, 0.0
  %3308 = vadd.xlane.f32.xlu0 %v3307
  %v3309 = vpop.xlane.xlu0 %3308
  %v3310 = vsel %vm152, %v3201, 0.0
  %3311 = vadd.xlane.f32.xlu0 %v3310
  %v3312 = vpop.xlane.xlu0 %3311
  %v3313 = vsel %vm152, %v3203, 0.0
  %3314 = vadd.xlane.f32.xlu0 %v3313
  %v3315 = vpop.xlane.xlu0 %3314
  %v3316 = vsel %vm152, %v3205, 0.0
  %3317 = vadd.xlane.f32.xlu0 %v3316
  %v3318 = vpop.xlane.xlu0 %3317
  %v3319 = vsel %vm152, %v3207, 0.0
  %3320 = vadd.xlane.f32.xlu0 %v3319
  %v3321 = vpop.xlane.xlu0 %3320
  %v3322 = vsel %vm152, %v3209, 0.0
  %3323 = vadd.xlane.f32.xlu0 %v3322
  %v3324 = vpop.xlane.xlu0 %3323
  %v3325 = vsel %vm152, %v3211, 0.0
  %3326 = vadd.xlane.f32.xlu0 %v3325
  %v3327 = vpop.xlane.xlu0 %3326
  %v3328 = vsel %vm152, %v3213, 0.0
  %3329 = vadd.xlane.f32.xlu0 %v3328
  %v3330 = vpop.xlane.xlu0 %3329
  %v3331 = vsel %vm152, %v3215, 0.0
  %3332 = vadd.xlane.f32.xlu0 %v3331
  %v3333 = vpop.xlane.xlu0 %3332
  %v3334 = vsel %vm152, %v3217, 0.0
  %3335 = vadd.xlane.f32.xlu0 %v3334
  %v3336 = vpop.xlane.xlu0 %3335
  %v3337 = vsel %vm152, %v3219, 0.0
  %3338 = vadd.xlane.f32.xlu0 %v3337
  %v3339 = vpop.xlane.xlu0 %3338
  %v3340 = vsel %vm152, %v3221, 0.0
  %3341 = vadd.xlane.f32.xlu0 %v3340
  %v3342 = vpop.xlane.xlu0 %3341
  %v3343 = vsel %vm152, %v3223, 0.0
  %3344 = vadd.xlane.f32.xlu0 %v3343
  %v3345 = vpop.xlane.xlu0 %3344
  %v3346 = vsel %vm152, %v3225, 0.0
  %3347 = vadd.xlane.f32.xlu0 %v3346
  %v3348 = vpop.xlane.xlu0 %3347
  %v3349 = vsel %vm152, %v3227, 0.0
  %3350 = vadd.xlane.f32.xlu0 %v3349
  %v3351 = vpop.xlane.xlu0 %3350
  %v3352 = vsel %vm152, %v3229, 0.0
  %3353 = vadd.xlane.f32.xlu0 %v3352
  %v3354 = vpop.xlane.xlu0 %3353
  %v3355 = vsel %vm152, %v3231, 0.0
  %3356 = vadd.xlane.f32.xlu0 %v3355
  %v3357 = vpop.xlane.xlu0 %3356
  %v3358 = vsel %vm152, %v3233, 0.0
  %3359 = vadd.xlane.f32.xlu0 %v3358
  %v3360 = vpop.xlane.xlu0 %3359
  %v3361 = vsel %vm152, %v3235, 0.0
  %3362 = vadd.xlane.f32.xlu0 %v3361
  %v3363 = vpop.xlane.xlu0 %3362
  %v3396 = vlaneseq
  %v3397 = vshrl.u32 %v3396, 7
  %v3398 = vsub.s32 %v1232, %v3397
  %v3399 = vrot.slane %v3270, %v3398
  %v3400 = vlaneseq
  %v3401 = vshrl.u32 %v3400, 7
  %v3402 = vsub.s32 %v1237, %v3401
  %v3403 = vrot.slane %v3273, %v3402
  %v3404 = vsel %vm1242, %v3403, %v3399
  %v3405 = vlaneseq
  %v3406 = vshrl.u32 %v3405, 7
  %v3407 = vsub.s32 %v1232, %v3406
  %v3408 = vrot.slane %v3276, %v3407
  %v3409 = vlaneseq
  %v3410 = vshrl.u32 %v3409, 7
  %v3411 = vsub.s32 %v1237, %v3410
  %v3412 = vrot.slane %v3279, %v3411
  %v3413 = vsel %vm1242, %v3412, %v3408
  %v3414 = vlaneseq
  %v3415 = vshrl.u32 %v3414, 7
  %v3416 = vsub.s32 %v1232, %v3415
  %v3417 = vrot.slane %v3282, %v3416
  %v3418 = vlaneseq
  %v3419 = vshrl.u32 %v3418, 7
  %v3420 = vsub.s32 %v1237, %v3419
  %v3421 = vrot.slane %v3285, %v3420
  %v3422 = vsel %vm1242, %v3421, %v3417
  %v3423 = vlaneseq
  %v3424 = vshrl.u32 %v3423, 7
  %v3425 = vsub.s32 %v1232, %v3424
  %v3426 = vrot.slane %v3288, %v3425
  %v3427 = vlaneseq
  %v3428 = vshrl.u32 %v3427, 7
  %v3429 = vsub.s32 %v1237, %v3428
  %v3430 = vrot.slane %v3291, %v3429
  %v3431 = vsel %vm1242, %v3430, %v3426
  %v3432 = vlaneseq
  %v3433 = vshrl.u32 %v3432, 7
  %v3434 = vsub.s32 %v1232, %v3433
  %v3435 = vrot.slane %v3294, %v3434
  %v3436 = vlaneseq
  %v3437 = vshrl.u32 %v3436, 7
  %v3438 = vsub.s32 %v1237, %v3437
  %v3439 = vrot.slane %v3297, %v3438
  %v3440 = vsel %vm1242, %v3439, %v3435
  %v3441 = vlaneseq
  %v3442 = vshrl.u32 %v3441, 7
  %v3443 = vsub.s32 %v1232, %v3442
  %v3444 = vrot.slane %v3300, %v3443
  %v3445 = vlaneseq
  %v3446 = vshrl.u32 %v3445, 7
  %v3447 = vsub.s32 %v1237, %v3446
  %v3448 = vrot.slane %v3303, %v3447
  %v3449 = vsel %vm1242, %v3448, %v3444
  %v3450 = vlaneseq
  %v3451 = vshrl.u32 %v3450, 7
  %v3452 = vsub.s32 %v1232, %v3451
  %v3453 = vrot.slane %v3306, %v3452
  %v3454 = vlaneseq
  %v3455 = vshrl.u32 %v3454, 7
  %v3456 = vsub.s32 %v1237, %v3455
  %v3457 = vrot.slane %v3309, %v3456
  %v3458 = vsel %vm1242, %v3457, %v3453
  %v3459 = vlaneseq
  %v3460 = vshrl.u32 %v3459, 7
  %v3461 = vsub.s32 %v1232, %v3460
  %v3462 = vrot.slane %v3312, %v3461
  %v3463 = vlaneseq
  %v3464 = vshrl.u32 %v3463, 7
  %v3465 = vsub.s32 %v1237, %v3464
  %v3466 = vrot.slane %v3315, %v3465
  %v3467 = vsel %vm1242, %v3466, %v3462
  %v3468 = vlaneseq
  %v3469 = vshrl.u32 %v3468, 7
  %v3470 = vsub.s32 %v1232, %v3469
  %v3471 = vrot.slane %v3318, %v3470
  %v3472 = vlaneseq
  %v3473 = vshrl.u32 %v3472, 7
  %v3474 = vsub.s32 %v1237, %v3473
  %v3475 = vrot.slane %v3321, %v3474
  %v3476 = vsel %vm1242, %v3475, %v3471
  %v3477 = vlaneseq
  %v3478 = vshrl.u32 %v3477, 7
  %v3479 = vsub.s32 %v1232, %v3478
  %v3480 = vrot.slane %v3324, %v3479
  %v3481 = vlaneseq
  %v3482 = vshrl.u32 %v3481, 7
  %v3483 = vsub.s32 %v1237, %v3482
  %v3484 = vrot.slane %v3327, %v3483
  %v3485 = vsel %vm1242, %v3484, %v3480
  %v3486 = vlaneseq
  %v3487 = vshrl.u32 %v3486, 7
  %v3488 = vsub.s32 %v1232, %v3487
  %v3489 = vrot.slane %v3330, %v3488
  %v3490 = vlaneseq
  %v3491 = vshrl.u32 %v3490, 7
  %v3492 = vsub.s32 %v1237, %v3491
  %v3493 = vrot.slane %v3333, %v3492
  %v3494 = vsel %vm1242, %v3493, %v3489
  %v3495 = vlaneseq
  %v3496 = vshrl.u32 %v3495, 7
  %v3497 = vsub.s32 %v1232, %v3496
  %v3498 = vrot.slane %v3336, %v3497
  %v3499 = vlaneseq
  %v3500 = vshrl.u32 %v3499, 7
  %v3501 = vsub.s32 %v1237, %v3500
  %v3502 = vrot.slane %v3339, %v3501
  %v3503 = vsel %vm1242, %v3502, %v3498
  %v3504 = vlaneseq
  %v3505 = vshrl.u32 %v3504, 7
  %v3506 = vsub.s32 %v1232, %v3505
  %v3507 = vrot.slane %v3342, %v3506
  %v3508 = vlaneseq
  %v3509 = vshrl.u32 %v3508, 7
  %v3510 = vsub.s32 %v1237, %v3509
  %v3511 = vrot.slane %v3345, %v3510
  %v3512 = vsel %vm1242, %v3511, %v3507
  %v3513 = vlaneseq
  %v3514 = vshrl.u32 %v3513, 7
  %v3515 = vsub.s32 %v1232, %v3514
  %v3516 = vrot.slane %v3348, %v3515
  %v3517 = vlaneseq
  %v3518 = vshrl.u32 %v3517, 7
  %v3519 = vsub.s32 %v1237, %v3518
  %v3520 = vrot.slane %v3351, %v3519
  %v3521 = vsel %vm1242, %v3520, %v3516
  %v3522 = vlaneseq
  %v3523 = vshrl.u32 %v3522, 7
  %v3524 = vsub.s32 %v1232, %v3523
  %v3525 = vrot.slane %v3354, %v3524
  %v3526 = vlaneseq
  %v3527 = vshrl.u32 %v3526, 7
  %v3528 = vsub.s32 %v1237, %v3527
  %v3529 = vrot.slane %v3357, %v3528
  %v3530 = vsel %vm1242, %v3529, %v3525
  %v3531 = vlaneseq
  %v3532 = vshrl.u32 %v3531, 7
  %v3533 = vsub.s32 %v1232, %v3532
  %v3534 = vrot.slane %v3360, %v3533
  %v3535 = vlaneseq
  %v3536 = vshrl.u32 %v3535, 7
  %v3537 = vsub.s32 %v1237, %v3536
  %v3538 = vrot.slane %v3363, %v3537
  %v3539 = vsel %vm1242, %v3538, %v3534
  %v3540 = vsel %vm1379, %v3413, %v3404
  %v3541 = vsel %vm1381, %v3422, %v3540
  %v3542 = vsel %vm1383, %v3431, %v3541
  %v3543 = vsel %vm1385, %v3440, %v3542
  %v3544 = vsel %vm1387, %v3449, %v3543
  %v3545 = vsel %vm1389, %v3458, %v3544
  %v3546 = vsel %vm1391, %v3467, %v3545
  %v3547 = vsel %vm1379, %v3485, %v3476
  %v3548 = vsel %vm1381, %v3494, %v3547
  %v3549 = vsel %vm1383, %v3503, %v3548
  %v3550 = vsel %vm1385, %v3512, %v3549
  %v3551 = vsel %vm1387, %v3521, %v3550
  %v3552 = vsel %vm1389, %v3530, %v3551
  %v3553 = vsel %vm1391, %v3539, %v3552
  %v3556 = vsel %vm1197, %v3546, -1e+30
  %v3557 = vsel %vm1198, %v3553, -1e+30
  %v3558 = vsel %vm1404, %v3556, -inf
  %3559 = vmax.xlane.f32.xlu0 %v3558
  %v3560 = vpop.xlane.xlu0 %3559
  %v3561 = vsel %vm1404, %v3557, -inf
  %3562 = vmax.xlane.f32.xlu0 %v3561
  %v3563 = vpop.xlane.xlu0 %3562
  %v3564 = vsub.f32 %v3556, %v3560
  %v3565 = vsub.f32 %v3557, %v3563
  %v3566 = vmul.f32 %v3564, 1.442695
  %v3567 = vpow.pop %v3566
  %v3568 = vmul.f32 %v3565, 1.442695
  %v3569 = vpow.pop %v3568
  %v3570 = vsel %vm1404, %v3567, 0.0
  %3571 = vadd.xlane.f32.xlu0 %v3570
  %v3572 = vpop.xlane.xlu0 %3571
  %v3573 = vsel %vm1404, %v3569, 0.0
  %3574 = vadd.xlane.f32.xlu0 %v3573
  %v3575 = vpop.xlane.xlu0 %3574
  %v3576 = vrcp.pop %v3572
  %v3577 = vrcp.pop %v3575
  %v3578 = vmul.f32 %v3567, %v3576
  %v3579 = vmul.f32 %v3569, %v3577
  %s3580 = scalar_lea.vmem %s10, 2
  %v3581 = vld [vmem:[%s3580] sm:$0x1]
  %v3583 = vlaneseq
  %v3584 = vshrl.u32 %v3583, 7
  %v3585 = vsub.s32 0, %v3584
  %v3586 = vrot.slane %v3581, %v3585
  %v3589 = vsel %vm1404, %v3578, 0
  %v3592 = vsel %vm1404, %v3579, 0
  %3594 = vmatprep.subr.mxu0 0.0
  %3595 = vmatpush1.msra.mxu0 %v2776
  %3596 = vmatprep.subr.mxu0 0.0
  %3597 = vmatpush1.msra.mxu0 %v2781
  %3598 = vmatprep.subr.mxu0 0.0
  %3599 = vmatpush1.msra.mxu0 0.0
  %3600 = vmatprep.subr.mxu0 0.0
  %3601 = vmatpush1.msra.mxu0 0.0
  %3602 = vmatprep.subr.mxu0 0.0
  %3603 = vmatpush1.msra.mxu0 0.0
  %3604 = vmatprep.subr.mxu0 0.0
  %3605 = vmatpush1.msra.mxu0 0.0
  %3606 = vmatprep.subr.mxu0 0.0
  %3607 = vmatpush1.msra.mxu0 0.0
  %3608 = vmatprep.subr.mxu0 0.0
  %3609 = vmatpush1.msra.mxu0 0.0
  %3610 = vmatprep.subr.mxu0 0.0
  %3611 = vmatpush1.msra.mxu0 0.0
  %3612 = vmatprep.subr.mxu0 0.0
  %3613 = vmatpush1.msra.mxu0 0.0
  %3614 = vmatprep.subr.mxu0 0.0
  %3615 = vmatpush1.msra.mxu0 0.0
  %3616 = vmatprep.subr.mxu0 0.0
  %3617 = vmatpush1.msra.mxu0 0.0
  %3618 = vmatprep.subr.mxu0 0.0
  %3619 = vmatpush1.msra.mxu0 0.0
  %3620 = vmatprep.subr.mxu0 0.0
  %3621 = vmatpush1.msra.mxu0 0.0
  %3622 = vmatprep.subr.mxu0 0.0
  %3623 = vmatpush1.msra.mxu0 0.0
  %3624 = vmatprep.subr.mxu0 0.0
  %3625 = vmatpush1.msra.mxu0 0.0
  %3626 = vmatprep.subr.mxu0 0.0
  %3627 = vmatpush1.msra.mxu0 0.0
  %3628 = vmatprep.subr.mxu0 0.0
  %3629 = vmatpush1.msra.mxu0 0.0
  %3630 = vmatprep.subr.mxu0 0.0
  %3631 = vmatpush1.msra.mxu0 0.0
  %3632 = vmatprep.subr.mxu0 0.0
  %3633 = vmatpush1.msra.mxu0 0.0
  %3634 = vmatprep.subr.mxu0 0.0
  %3635 = vmatpush1.msra.mxu0 0.0
  %3636 = vmatprep.subr.mxu0 0.0
  %3637 = vmatpush1.msra.mxu0 0.0
  %3638 = vmatprep.subr.mxu0 0.0
  %3639 = vmatpush1.msra.mxu0 0.0
  %3640 = vmatprep.subr.mxu0 0.0
  %3641 = vmatpush1.msra.mxu0 0.0
  %3642 = vmatprep.subr.mxu0 0.0
  %3643 = vmatpush1.msra.mxu0 0.0
  %3644 = vmatprep.subr.mxu0 0.0
  %3645 = vmatpush1.msra.mxu0 0.0
  %3646 = vmatprep.subr.mxu0 0.0
  %3647 = vmatpush1.msra.mxu0 0.0
  %3648 = vmatprep.subr.mxu0 0.0
  %3649 = vmatpush1.msra.mxu0 0.0
  %3650 = vmatprep.subr.mxu0 0.0
  %3651 = vmatpush1.msra.mxu0 0.0
  %3652 = vmatprep.subr.mxu0 0.0
  %3653 = vmatpush1.msra.mxu0 0.0
  %3654 = vmatprep.subr.mxu0 0.0
  %3655 = vmatpush1.msra.mxu0 0.0
  %3656 = vmatprep.subr.mxu0 0.0
  %3657 = vmatpush1.msra.mxu0 0.0
  %3658 = vmatprep.mubr.f32.mxu0 0.0
  %3659 = vmatmul.mubr.f32.gmra.mrb[0].mxu0 %v3589
  %v3660 = vpop.f32.mrb[0].mxu0
  %v3661 = vadd.f32 %v3586, %v3660
  %v3662 = vpop.f32.mrb[0].mxu0
  %3663 = vmatprep.mubr.f32.mxu0 0.0
  %3664 = vmatmul.mubr.f32.gmra.mrb[0].mxu0 %v3592
  %v3665 = vpop.f32.mrb[0].mxu0
  %v3666 = vadd.f32 %v3586, %v3665
  %v3667 = vpop.f32.mrb[0].mxu0
  %3668 = vdwg.mxu0
  %v3669 = vmax.f32 %v3661, 0.0
  %v3670 = vmax.f32 %v3666, 0.0
  %v3671 = vld [vmem:[%s11] sm:$0xff]
  %v3672 = vld [vmem:[%s11 + $0x8] sm:$0xff]
  %v3673 = vld [vmem:[%s11 + $0x10] sm:$0xff]
  %v3674 = vld [vmem:[%s11 + $0x18] sm:$0xff]
  %v3675 = vld [vmem:[%s12] sm:$0x1]
  %v3677 = vlaneseq
  %v3678 = vshrl.u32 %v3677, 7
  %v3679 = vsub.s32 0, %v3678
  %v3680 = vrot.slane %v3675, %v3679
  %v3683 = vsel %vm152, %v3669, 0
  %v3686 = vsel %vm152, %v3670, 0
  %3688 = vmatprep.subr.mxu0 0.0
  %3689 = vmatpush1.msra.mxu0 %v3671
  %3690 = vmatprep.subr.mxu0 0.0
  %3691 = vmatpush1.msra.mxu0 %v3672
  %3692 = vmatprep.subr.mxu0 0.0
  %3693 = vmatpush1.msra.mxu0 %v3673
  %3694 = vmatprep.subr.mxu0 0.0
  %3695 = vmatpush1.msra.mxu0 %v3674
  %3696 = vmatprep.subr.mxu0 0.0
  %3697 = vmatpush1.msra.mxu0 0.0
  %3698 = vmatprep.subr.mxu0 0.0
  %3699 = vmatpush1.msra.mxu0 0.0
  %3700 = vmatprep.subr.mxu0 0.0
  %3701 = vmatpush1.msra.mxu0 0.0
  %3702 = vmatprep.subr.mxu0 0.0
  %3703 = vmatpush1.msra.mxu0 0.0
  %3704 = vmatprep.subr.mxu0 0.0
  %3705 = vmatpush1.msra.mxu0 0.0
  %3706 = vmatprep.subr.mxu0 0.0
  %3707 = vmatpush1.msra.mxu0 0.0
  %3708 = vmatprep.subr.mxu0 0.0
  %3709 = vmatpush1.msra.mxu0 0.0
  %3710 = vmatprep.subr.mxu0 0.0
  %3711 = vmatpush1.msra.mxu0 0.0
  %3712 = vmatprep.subr.mxu0 0.0
  %3713 = vmatpush1.msra.mxu0 0.0
  %3714 = vmatprep.subr.mxu0 0.0
  %3715 = vmatpush1.msra.mxu0 0.0
  %3716 = vmatprep.subr.mxu0 0.0
  %3717 = vmatpush1.msra.mxu0 0.0
  %3718 = vmatprep.subr.mxu0 0.0
  %3719 = vmatpush1.msra.mxu0 0.0
  %3720 = vmatprep.subr.mxu0 0.0
  %3721 = vmatpush1.msra.mxu0 0.0
  %3722 = vmatprep.subr.mxu0 0.0
  %3723 = vmatpush1.msra.mxu0 0.0
  %3724 = vmatprep.subr.mxu0 0.0
  %3725 = vmatpush1.msra.mxu0 0.0
  %3726 = vmatprep.subr.mxu0 0.0
  %3727 = vmatpush1.msra.mxu0 0.0
  %3728 = vmatprep.subr.mxu0 0.0
  %3729 = vmatpush1.msra.mxu0 0.0
  %3730 = vmatprep.subr.mxu0 0.0
  %3731 = vmatpush1.msra.mxu0 0.0
  %3732 = vmatprep.subr.mxu0 0.0
  %3733 = vmatpush1.msra.mxu0 0.0
  %3734 = vmatprep.subr.mxu0 0.0
  %3735 = vmatpush1.msra.mxu0 0.0
  %3736 = vmatprep.subr.mxu0 0.0
  %3737 = vmatpush1.msra.mxu0 0.0
  %3738 = vmatprep.subr.mxu0 0.0
  %3739 = vmatpush1.msra.mxu0 0.0
  %3740 = vmatprep.subr.mxu0 0.0
  %3741 = vmatpush1.msra.mxu0 0.0
  %3742 = vmatprep.subr.mxu0 0.0
  %3743 = vmatpush1.msra.mxu0 0.0
  %3744 = vmatprep.subr.mxu0 0.0
  %3745 = vmatpush1.msra.mxu0 0.0
  %3746 = vmatprep.subr.mxu0 0.0
  %3747 = vmatpush1.msra.mxu0 0.0
  %3748 = vmatprep.subr.mxu0 0.0
  %3749 = vmatpush1.msra.mxu0 0.0
  %3750 = vmatprep.subr.mxu0 0.0
  %3751 = vmatpush1.msra.mxu0 0.0
  %3752 = vmatprep.mubr.f32.mxu0 0.0
  %3753 = vmatmul.mubr.f32.gmra.mrb[0].mxu0 %v3683
  %v3754 = vpop.f32.mrb[0].mxu0
  %v3755 = vadd.f32 %v3680, %v3754
  %v3756 = vpop.f32.mrb[0].mxu0
  %3757 = vmatprep.mubr.f32.mxu0 0.0
  %3758 = vmatmul.mubr.f32.gmra.mrb[0].mxu0 %v3686
  %v3759 = vpop.f32.mrb[0].mxu0
  %v3760 = vadd.f32 %v3680, %v3759
  %v3761 = vpop.f32.mrb[0].mxu0
  %3762 = vdwg.mxu0
  %v3763 = vld [vmem:[%s2] sm:$0xff]
  %v3764 = vld [vmem:[%s2 + $0x8] sm:$0xff]
  %v3765 = vld [vmem:[%s13] sm:$0x1]
  %v3767 = vlaneseq
  %v3768 = vshrl.u32 %v3767, 7
  %v3769 = vsub.s32 0, %v3768
  %v3770 = vrot.slane %v3765, %v3769
  %v3773 = vsel %vm1404, %v3763, 0
  %v3776 = vsel %vm1404, %v3764, 0
  %3778 = vmatprep.subr.mxu0 0.0
  %3779 = vmatpush1.msra.mxu0 %v3755
  %3780 = vmatprep.subr.mxu0 0.0
  %3781 = vmatpush1.msra.mxu0 %v3760
  %3782 = vmatprep.subr.mxu0 0.0
  %3783 = vmatpush1.msra.mxu0 0.0
  %3784 = vmatprep.subr.mxu0 0.0
  %3785 = vmatpush1.msra.mxu0 0.0
  %3786 = vmatprep.subr.mxu0 0.0
  %3787 = vmatpush1.msra.mxu0 0.0
  %3788 = vmatprep.subr.mxu0 0.0
  %3789 = vmatpush1.msra.mxu0 0.0
  %3790 = vmatprep.subr.mxu0 0.0
  %3791 = vmatpush1.msra.mxu0 0.0
  %3792 = vmatprep.subr.mxu0 0.0
  %3793 = vmatpush1.msra.mxu0 0.0
  %3794 = vmatprep.subr.mxu0 0.0
  %3795 = vmatpush1.msra.mxu0 0.0
  %3796 = vmatprep.subr.mxu0 0.0
  %3797 = vmatpush1.msra.mxu0 0.0
  %3798 = vmatprep.subr.mxu0 0.0
  %3799 = vmatpush1.msra.mxu0 0.0
  %3800 = vmatprep.subr.mxu0 0.0
  %3801 = vmatpush1.msra.mxu0 0.0
  %3802 = vmatprep.subr.mxu0 0.0
  %3803 = vmatpush1.msra.mxu0 0.0
  %3804 = vmatprep.subr.mxu0 0.0
  %3805 = vmatpush1.msra.mxu0 0.0
  %3806 = vmatprep.subr.mxu0 0.0
  %3807 = vmatpush1.msra.mxu0 0.0
  %3808 = vmatprep.subr.mxu0 0.0
  %3809 = vmatpush1.msra.mxu0 0.0
  %3810 = vmatprep.subr.mxu0 0.0
  %3811 = vmatpush1.msra.mxu0 0.0
  %3812 = vmatprep.subr.mxu0 0.0
  %3813 = vmatpush1.msra.mxu0 0.0
  %3814 = vmatprep.subr.mxu0 0.0
  %3815 = vmatpush1.msra.mxu0 0.0
  %3816 = vmatprep.subr.mxu0 0.0
  %3817 = vmatpush1.msra.mxu0 0.0
  %3818 = vmatprep.subr.mxu0 0.0
  %3819 = vmatpush1.msra.mxu0 0.0
  %3820 = vmatprep.subr.mxu0 0.0
  %3821 = vmatpush1.msra.mxu0 0.0
  %3822 = vmatprep.subr.mxu0 0.0
  %3823 = vmatpush1.msra.mxu0 0.0
  %3824 = vmatprep.subr.mxu0 0.0
  %3825 = vmatpush1.msra.mxu0 0.0
  %3826 = vmatprep.subr.mxu0 0.0
  %3827 = vmatpush1.msra.mxu0 0.0
  %3828 = vmatprep.subr.mxu0 0.0
  %3829 = vmatpush1.msra.mxu0 0.0
  %3830 = vmatprep.subr.mxu0 0.0
  %3831 = vmatpush1.msra.mxu0 0.0
  %3832 = vmatprep.subr.mxu0 0.0
  %3833 = vmatpush1.msra.mxu0 0.0
  %3834 = vmatprep.subr.mxu0 0.0
  %3835 = vmatpush1.msra.mxu0 0.0
  %3836 = vmatprep.subr.mxu0 0.0
  %3837 = vmatpush1.msra.mxu0 0.0
  %3838 = vmatprep.subr.mxu0 0.0
  %3839 = vmatpush1.msra.mxu0 0.0
  %3840 = vmatprep.subr.mxu0 0.0
  %3841 = vmatpush1.msra.mxu0 0.0
  %3842 = vmatprep.mubr.f32.mxu0 0.0
  %3843 = vmatmul.mubr.f32.gmra.mrb[0].mxu0 %v3773
  %v3844 = vpop.f32.mrb[0].mxu0
  %v3845 = vadd.f32 %v3770, %v3844
  %v3846 = vpop.f32.mrb[0].mxu0
  %3847 = vmatprep.mubr.f32.mxu0 0.0
  %3848 = vmatmul.mubr.f32.gmra.mrb[0].mxu0 %v3776
  %v3849 = vpop.f32.mrb[0].mxu0
  %v3850 = vadd.f32 %v3770, %v3849
  %v3851 = vpop.f32.mrb[0].mxu0
  %3852 = vdwg.mxu0
  %vm3853 = vcmask 523264
  %3854 = vst.msk [vmem:[%s14] sm:$0xff] %vm3853, %v3845
  %3855 = vst.msk [vmem:[%s14 + $0x8] sm:$0xff] %vm3853, %v3850
  // Predicated region
  $region58: #{flexible_net_forward.2} parent=0 // pred_check
    _
  $region59: #{flexible_net_forward.2} parent=0 // pred_check_branch
    %3857 = sbr.rel (0) target = $region61
  $region60: #{flexible_net_forward.2} parent=0 // pred_region
    _
  $region61: #{flexible_net_forward.2} parent=0 // pred_fallthru
    _
  // Predicated region
  $region62: #{flexible_net_forward.2} parent=0 // pred_check
    _
  $region63: #{flexible_net_forward.2} parent=0 // pred_check_branch
    %3859 = sbr.rel (0) target = $region65
  $region64: #{flexible_net_forward.2} parent=0 // pred_region
    _
  $region65: #{flexible_net_forward.2} parent=0 // pred_fallthru
    _

// kernel: flexible_net_forward.3
$region0: #{flexible_net_forward.3}
  #allocation0 [shape = 'u32[]', space=smem, size = 0x4, offset = 0x4, fixed_abs, tag = 'smem constant byte address 0x4 - core index']
  #allocation1 [shape = 'u32[144,128]{1,0:T(1,128)}', space=vmem, size = 0x12000, scoped, tag = 'internal scratch']
  #allocation2 [shape = 'f32[1,1]{1,0:T(1,128)S(1)}', space=vmem, size = 0x200, scoped, tag = 'scoped memory for flexible_net_forward.3']
  %s0 = inlined_call_operand.vmem [shape: f32[2,16,64], index: 0, kind: input, shape index: {}]
  %s1 = inlined_call_operand.vmem [shape: f32[75,32], index: 1, kind: input, shape index: {}]
  %s2 = inlined_call_operand.vmem [shape: f32[1,32], index: 2, kind: input, shape index: {}]
  %s3 = inlined_call_operand.vmem [shape: f32[4,1,32], index: 3, kind: input, shape index: {}]
  %s4 = inlined_call_operand.vmem [shape: f32[3,32,32], index: 4, kind: input, shape index: {}]
  %s5 = inlined_call_operand.vmem [shape: f32[3,1,32], index: 5, kind: input, shape index: {}]
  %s6 = inlined_call_operand.vmem [shape: f32[32,96], index: 6, kind: input, shape index: {}]
  %s7 = inlined_call_operand.vmem [shape: f32[1,96], index: 7, kind: input, shape index: {}]
  %s8 = inlined_call_operand.vmem [shape: f32[32,64], index: 8, kind: input, shape index: {}]
  %s9 = inlined_call_operand.vmem [shape: f32[1,64], index: 9, kind: input, shape index: {}]
  %s10 = inlined_call_operand.vmem [shape: f32[32,1], index: 10, kind: input, shape index: {}]
  %s11 = inlined_call_operand.<no memory space> [shape: f32[1,1], index: 11, kind: input, shape index: {}]
  %s12 = inlined_call_operand.vmem [shape: f32[2,1,1], index: 12, kind: output, shape index: {}]
  %s13 = sld [smem:[#allocation0]]
  $region81: #{flexible_net_forward.3} parent=0
    _
  %s15 = ssub.s32 1, %s13
  %s16 = scalar_select 0, %s15, %s13
  %v17 = vstv %s11
  %18 = vst [vmem:[#allocation2] sm:$0x1] %v17
  loop: start=0, step=1, limit=4
  $region2: #{flexible_net_forward.3} parent=0 // loop_pre_header
    _
  $region3: #{flexible_net_forward.3} parent=0 // loop_header
    %s20 = sphi 0, %s24
    %p21 = scmp.ge.s32.totalorder %s20, 4
    %s30 = sphi 0, %s32
    %s33 = sphi 0, %s30
    %s34 = sphi 0, %s33
    %s50 = sphi 0, %s34
    %s54 = sphi 0, %s54
    %s56 = sphi 0, %s54
    %s57 = sphi 0, %s56
    %s71 = sphi 0, %s57
    %s75 = sphi 0, %s75
    %s77 = sphi 0, %s75
    %s78 = sphi 0, %s77
    %s92 = sphi 0, %s78
    %s96 = sphi 0, %s96
    %s98 = sphi 0, %s96
    %s99 = sphi 0, %s98
    %s113 = sphi 0, %s99
    %s117 = sphi 0, %s117
    %s119 = sphi 0, %s117
    %s120 = sphi 0, %s119
    %s134 = sphi 0, %s120
    %s138 = sphi 0, %s138
    %s140 = sphi 0, %s138
    %s141 = sphi 0, %s140
    %s155 = sphi 0, %s141
    %s159 = sphi 0, %s159
    %s161 = sphi 0, %s159
    %s162 = sphi 0, %s161
    %s176 = sphi 0, %s162
    %s180 = sphi 0, %s180
    %s182 = sphi 0, %s180
    %s183 = sphi 0, %s182
    %s197 = sphi 0, %s183
    %s201 = sphi 0, %s201
    %s203 = sphi 0, %s201
    %s204 = sphi 0, %s203
    %s218 = sphi 0, %s204
    %s222 = sphi 0, %s222
    %s224 = sphi 0, %s222
    %s225 = sphi 0, %s224
    %s239 = sphi 0, %s225
    %s243 = sphi 0, %s243
    %s245 = sphi 0, %s243
    %s246 = sphi 0, %s245
    %s260 = sphi 0, %s246
    %s264 = sphi 0, %s264
    %s266 = sphi 0, %s264
    %s267 = sphi 0, %s266
    %s281 = sphi 0, %s267
    %s287 = sphi 0, %s289
    %s290 = sphi 0, %s287
    %s291 = sphi 0, %s290
    %s307 = sphi 0, %s291
  $region4: #{flexible_net_forward.3} parent=0 // loop_header_branch
    %23 = sbr.rel (%p21) target = $region8
  $region5: #{flexible_net_forward.3} parent=0 // loop_body
    %s25 = ssub.s32 %s20, 1
    %s26 = ssub.s32 %s20, 2
    %s27 = sadd.s32 %s20, 1
    %s28 = ssub.s32 %s20, %s27
    %p29 = scmp.eq.s32.totalorder %s28, 0
    %s31 = sadd.s32 %s30, 1
    %s32 = scalar_select %p29, %s30, %s31
    %p35 = pneg %p29
    %p36 = scmp.eq.s32.totalorder %s20, 1
    %p37 = por %p35, %p36
    %p38 = scmp.ne.s32.totalorder %s30, %s33
    %p39 = scmp.eq.s32.totalorder %s20, 0
    %p40 = por %p38, %p39
    %p41 = scmp.ne.s32.totalorder %s30, %s33
    %p42 = scmp.eq.s32.totalorder %s25, 1
    %p43 = por %p41, %p42
    %p44 = scmp.ne.s32.totalorder %s33, %s34
    %p45 = scmp.eq.s32.totalorder %s25, 0
    %p46 = por %p44, %p45
    %p47 = scmp.ne.s32.totalorder %s33, %s34
    %p48 = scmp.eq.s32.totalorder %s26, 1
    %p49 = por %p47, %p48
    %p51 = scmp.ne.s32.totalorder %s34, %s50
    %p52 = scmp.eq.s32.totalorder %s26, 0
    %p53 = por %p51, %p52
    %s55 = sadd.s32 %s54, 1
    %p58 = scmp.eq.s32.totalorder %s20, 1
    %p59 = scmp.ne.s32.totalorder %s54, %s56
    %p60 = scmp.eq.s32.totalorder %s20, 0
    %p61 = por %p59, %p60
    %p62 = scmp.ne.s32.totalorder %s54, %s56
    %p63 = scmp.eq.s32.totalorder %s25, 1
    %p64 = por %p62, %p63
    %p65 = scmp.ne.s32.totalorder %s56, %s57
    %p66 = scmp.eq.s32.totalorder %s25, 0
    %p67 = por %p65, %p66
    %p68 = scmp.ne.s32.totalorder %s56, %s57
    %p69 = scmp.eq.s32.totalorder %s26, 1
    %p70 = por %p68, %p69
    %p72 = scmp.ne.s32.totalorder %s57, %s71
    %p73 = scmp.eq.s32.totalorder %s26, 0
    %p74 = por %p72, %p73
    %s76 = sadd.s32 %s75, 1
    %p79 = scmp.eq.s32.totalorder %s20, 1
    %p80 = scmp.ne.s32.totalorder %s75, %s77
    %p81 = scmp.eq.s32.totalorder %s20, 0
    %p82 = por %p80, %p81
    %p83 = scmp.ne.s32.totalorder %s75, %s77
    %p84 = scmp.eq.s32.totalorder %s25, 1
    %p85 = por %p83, %p84
    %p86 = scmp.ne.s32.totalorder %s77, %s78
    %p87 = scmp.eq.s32.totalorder %s25, 0
    %p88 = por %p86, %p87
    %p89 = scmp.ne.s32.totalorder %s77, %s78
    %p90 = scmp.eq.s32.totalorder %s26, 1
    %p91 = por %p89, %p90
    %p93 = scmp.ne.s32.totalorder %s78, %s92
    %p94 = scmp.eq.s32.totalorder %s26, 0
    %p95 = por %p93, %p94
    %s97 = sadd.s32 %s96, 1
    %p100 = scmp.eq.s32.totalorder %s20, 1
    %p101 = scmp.ne.s32.totalorder %s96, %s98
    %p102 = scmp.eq.s32.totalorder %s20, 0
    %p103 = por %p101, %p102
    %p104 = scmp.ne.s32.totalorder %s96, %s98
    %p105 = scmp.eq.s32.totalorder %s25, 1
    %p106 = por %p104, %p105
    %p107 = scmp.ne.s32.totalorder %s98, %s99
    %p108 = scmp.eq.s32.totalorder %s25, 0
    %p109 = por %p107, %p108
    %p110 = scmp.ne.s32.totalorder %s98, %s99
    %p111 = scmp.eq.s32.totalorder %s26, 1
    %p112 = por %p110, %p111
    %p114 = scmp.ne.s32.totalorder %s99, %s113
    %p115 = scmp.eq.s32.totalorder %s26, 0
    %p116 = por %p114, %p115
    %s118 = sadd.s32 %s117, 1
    %p121 = scmp.eq.s32.totalorder %s20, 1
    %p122 = scmp.ne.s32.totalorder %s117, %s119
    %p123 = scmp.eq.s32.totalorder %s20, 0
    %p124 = por %p122, %p123
    %p125 = scmp.ne.s32.totalorder %s117, %s119
    %p126 = scmp.eq.s32.totalorder %s25, 1
    %p127 = por %p125, %p126
    %p128 = scmp.ne.s32.totalorder %s119, %s120
    %p129 = scmp.eq.s32.totalorder %s25, 0
    %p130 = por %p128, %p129
    %p131 = scmp.ne.s32.totalorder %s119, %s120
    %p132 = scmp.eq.s32.totalorder %s26, 1
    %p133 = por %p131, %p132
    %p135 = scmp.ne.s32.totalorder %s120, %s134
    %p136 = scmp.eq.s32.totalorder %s26, 0
    %p137 = por %p135, %p136
    %s139 = sadd.s32 %s138, 1
    %p142 = scmp.eq.s32.totalorder %s20, 1
    %p143 = scmp.ne.s32.totalorder %s138, %s140
    %p144 = scmp.eq.s32.totalorder %s20, 0
    %p145 = por %p143, %p144
    %p146 = scmp.ne.s32.totalorder %s138, %s140
    %p147 = scmp.eq.s32.totalorder %s25, 1
    %p148 = por %p146, %p147
    %p149 = scmp.ne.s32.totalorder %s140, %s141
    %p150 = scmp.eq.s32.totalorder %s25, 0
    %p151 = por %p149, %p150
    %p152 = scmp.ne.s32.totalorder %s140, %s141
    %p153 = scmp.eq.s32.totalorder %s26, 1
    %p154 = por %p152, %p153
    %p156 = scmp.ne.s32.totalorder %s141, %s155
    %p157 = scmp.eq.s32.totalorder %s26, 0
    %p158 = por %p156, %p157
    %s160 = sadd.s32 %s159, 1
    %p163 = scmp.eq.s32.totalorder %s20, 1
    %p164 = scmp.ne.s32.totalorder %s159, %s161
    %p165 = scmp.eq.s32.totalorder %s20, 0
    %p166 = por %p164, %p165
    %p167 = scmp.ne.s32.totalorder %s159, %s161
    %p168 = scmp.eq.s32.totalorder %s25, 1
    %p169 = por %p167, %p168
    %p170 = scmp.ne.s32.totalorder %s161, %s162
    %p171 = scmp.eq.s32.totalorder %s25, 0
    %p172 = por %p170, %p171
    %p173 = scmp.ne.s32.totalorder %s161, %s162
    %p174 = scmp.eq.s32.totalorder %s26, 1
    %p175 = por %p173, %p174
    %p177 = scmp.ne.s32.totalorder %s162, %s176
    %p178 = scmp.eq.s32.totalorder %s26, 0
    %p179 = por %p177, %p178
    %s181 = sadd.s32 %s180, 1
    %p184 = scmp.eq.s32.totalorder %s20, 1
    %p185 = scmp.ne.s32.totalorder %s180, %s182
    %p186 = scmp.eq.s32.totalorder %s20, 0
    %p187 = por %p185, %p186
    %p188 = scmp.ne.s32.totalorder %s180, %s182
    %p189 = scmp.eq.s32.totalorder %s25, 1
    %p190 = por %p188, %p189
    %p191 = scmp.ne.s32.totalorder %s182, %s183
    %p192 = scmp.eq.s32.totalorder %s25, 0
    %p193 = por %p191, %p192
    %p194 = scmp.ne.s32.totalorder %s182, %s183
    %p195 = scmp.eq.s32.totalorder %s26, 1
    %p196 = por %p194, %p195
    %p198 = scmp.ne.s32.totalorder %s183, %s197
    %p199 = scmp.eq.s32.totalorder %s26, 0
    %p200 = por %p198, %p199
    %s202 = sadd.s32 %s201, 1
    %p205 = scmp.eq.s32.totalorder %s20, 1
    %p206 = scmp.ne.s32.totalorder %s201, %s203
    %p207 = scmp.eq.s32.totalorder %s20, 0
    %p208 = por %p206, %p207
    %p209 = scmp.ne.s32.totalorder %s201, %s203
    %p210 = scmp.eq.s32.totalorder %s25, 1
    %p211 = por %p209, %p210
    %p212 = scmp.ne.s32.totalorder %s203, %s204
    %p213 = scmp.eq.s32.totalorder %s25, 0
    %p214 = por %p212, %p213
    %p215 = scmp.ne.s32.totalorder %s203, %s204
    %p216 = scmp.eq.s32.totalorder %s26, 1
    %p217 = por %p215, %p216
    %p219 = scmp.ne.s32.totalorder %s204, %s218
    %p220 = scmp.eq.s32.totalorder %s26, 0
    %p221 = por %p219, %p220
    %s223 = sadd.s32 %s222, 1
    %p226 = scmp.eq.s32.totalorder %s20, 1
    %p227 = scmp.ne.s32.totalorder %s222, %s224
    %p228 = scmp.eq.s32.totalorder %s20, 0
    %p229 = por %p227, %p228
    %p230 = scmp.ne.s32.totalorder %s222, %s224
    %p231 = scmp.eq.s32.totalorder %s25, 1
    %p232 = por %p230, %p231
    %p233 = scmp.ne.s32.totalorder %s224, %s225
    %p234 = scmp.eq.s32.totalorder %s25, 0
    %p235 = por %p233, %p234
    %p236 = scmp.ne.s32.totalorder %s224, %s225
    %p237 = scmp.eq.s32.totalorder %s26, 1
    %p238 = por %p236, %p237
    %p240 = scmp.ne.s32.totalorder %s225, %s239
    %p241 = scmp.eq.s32.totalorder %s26, 0
    %p242 = por %p240, %p241
    %s244 = sadd.s32 %s243, 1
    %p247 = scmp.eq.s32.totalorder %s20, 1
    %p248 = scmp.ne.s32.totalorder %s243, %s245
    %p249 = scmp.eq.s32.totalorder %s20, 0
    %p250 = por %p248, %p249
    %p251 = scmp.ne.s32.totalorder %s243, %s245
    %p252 = scmp.eq.s32.totalorder %s25, 1
    %p253 = por %p251, %p252
    %p254 = scmp.ne.s32.totalorder %s245, %s246
    %p255 = scmp.eq.s32.totalorder %s25, 0
    %p256 = por %p254, %p255
    %p257 = scmp.ne.s32.totalorder %s245, %s246
    %p258 = scmp.eq.s32.totalorder %s26, 1
    %p259 = por %p257, %p258
    %p261 = scmp.ne.s32.totalorder %s246, %s260
    %p262 = scmp.eq.s32.totalorder %s26, 0
    %p263 = por %p261, %p262
    %s265 = sadd.s32 %s264, 1
    %p268 = scmp.eq.s32.totalorder %s20, 1
    %p269 = scmp.ne.s32.totalorder %s264, %s266
    %p270 = scmp.eq.s32.totalorder %s20, 0
    %p271 = por %p269, %p270
    %p272 = scmp.ne.s32.totalorder %s264, %s266
    %p273 = scmp.eq.s32.totalorder %s25, 1
    %p274 = por %p272, %p273
    %p275 = scmp.ne.s32.totalorder %s266, %s267
    %p276 = scmp.eq.s32.totalorder %s25, 0
    %p277 = por %p275, %p276
    %p278 = scmp.ne.s32.totalorder %s266, %s267
    %p279 = scmp.eq.s32.totalorder %s26, 1
    %p280 = por %p278, %p279
    %p282 = scmp.ne.s32.totalorder %s267, %s281
    %p283 = scmp.eq.s32.totalorder %s26, 0
    %p284 = por %p282, %p283
    %s285 = ssub.s32 %s20, %s27
    %p286 = scmp.eq.s32.totalorder %s285, 0
    %s288 = sadd.s32 %s287, 1
    %s289 = scalar_select %p286, %s287, %s288
    %p292 = pneg %p286
    %p293 = scmp.eq.s32.totalorder %s20, 1
    %p294 = por %p292, %p293
    %p295 = scmp.ne.s32.totalorder %s287, %s290
    %p296 = scmp.eq.s32.totalorder %s20, 0
    %p297 = por %p295, %p296
    %p298 = scmp.ne.s32.totalorder %s287, %s290
    %p299 = scmp.eq.s32.totalorder %s25, 1
    %p300 = por %p298, %p299
    %p301 = scmp.ne.s32.totalorder %s290, %s291
    %p302 = scmp.eq.s32.totalorder %s25, 0
    %p303 = por %p301, %p302
    %p304 = scmp.ne.s32.totalorder %s290, %s291
    %p305 = scmp.eq.s32.totalorder %s26, 1
    %p306 = por %p304, %p305
    %p308 = scmp.ne.s32.totalorder %s291, %s307
    %p309 = scmp.eq.s32.totalorder %s26, 0
    %p310 = por %p308, %p309
    %p311 = scmp.le.s32.totalorder 1, %s20
    %p312 = scmp.lt.s32.totalorder %s20, 3
    %p313 = pnand %p311, %p312
    %p314 = pneg %p313
    // Predicated region
    $region9: #{flexible_net_forward.3} parent=5 // pred_check
      _
    $region10: #{flexible_net_forward.3} parent=5 // pred_check_branch
      %316 = sbr.rel (%p313) target = $region12
    $region11: #{flexible_net_forward.3} parent=5 // pred_region
      %s317 = ssub.s32 %s20, 1
      // Predicated region
      $region13: #{flexible_net_forward.3} parent=11 // pred_check
        %p318 = pneg %p67
      $region14: #{flexible_net_forward.3} parent=11 // pred_check_branch
        %320 = sbr.rel (%p318) target = $region16
      $region15: #{flexible_net_forward.3} parent=11 // pred_region
        _
      $region16: #{flexible_net_forward.3} parent=11 // pred_fallthru
        _
      // Predicated region
      $region17: #{flexible_net_forward.3} parent=11 // pred_check
        %p321 = pneg %p88
      $region18: #{flexible_net_forward.3} parent=11 // pred_check_branch
        %323 = sbr.rel (%p321) target = $region20
      $region19: #{flexible_net_forward.3} parent=11 // pred_region
        _
      $region20: #{flexible_net_forward.3} parent=11 // pred_fallthru
        _
      // Predicated region
      $region21: #{flexible_net_forward.3} parent=11 // pred_check
        %p324 = pneg %p109
      $region22: #{flexible_net_forward.3} parent=11 // pred_check_branch
        %326 = sbr.rel (%p324) target = $region24
      $region23: #{flexible_net_forward.3} parent=11 // pred_region
        _
      $region24: #{flexible_net_forward.3} parent=11 // pred_fallthru
        _
      // Predicated region
      $region25: #{flexible_net_forward.3} parent=11 // pred_check
        %p327 = pneg %p130
      $region26: #{flexible_net_forward.3} parent=11 // pred_check_branch
        %329 = sbr.rel (%p327) target = $region28
      $region27: #{flexible_net_forward.3} parent=11 // pred_region
        _
      $region28: #{flexible_net_forward.3} parent=11 // pred_fallthru
        _
      // Predicated region
      $region29: #{flexible_net_forward.3} parent=11 // pred_check
        %p330 = pneg %p151
      $region30: #{flexible_net_forward.3} parent=11 // pred_check_branch
        %332 = sbr.rel (%p330) target = $region32
      $region31: #{flexible_net_forward.3} parent=11 // pred_region
        _
      $region32: #{flexible_net_forward.3} parent=11 // pred_fallthru
        _
      // Predicated region
      $region33: #{flexible_net_forward.3} parent=11 // pred_check
        %p333 = pneg %p172
      $region34: #{flexible_net_forward.3} parent=11 // pred_check_branch
        %335 = sbr.rel (%p333) target = $region36
      $region35: #{flexible_net_forward.3} parent=11 // pred_region
        _
      $region36: #{flexible_net_forward.3} parent=11 // pred_fallthru
        _
      // Predicated region
      $region37: #{flexible_net_forward.3} parent=11 // pred_check
        %p336 = pneg %p193
      $region38: #{flexible_net_forward.3} parent=11 // pred_check_branch
        %338 = sbr.rel (%p336) target = $region40
      $region39: #{flexible_net_forward.3} parent=11 // pred_region
        _
      $region40: #{flexible_net_forward.3} parent=11 // pred_fallthru
        _
      // Predicated region
      $region41: #{flexible_net_forward.3} parent=11 // pred_check
        %p339 = pneg %p214
      $region42: #{flexible_net_forward.3} parent=11 // pred_check_branch
        %341 = sbr.rel (%p339) target = $region44
      $region43: #{flexible_net_forward.3} parent=11 // pred_region
        _
      $region44: #{flexible_net_forward.3} parent=11 // pred_fallthru
        _
      // Predicated region
      $region45: #{flexible_net_forward.3} parent=11 // pred_check
        %p342 = pneg %p235
      $region46: #{flexible_net_forward.3} parent=11 // pred_check_branch
        %344 = sbr.rel (%p342) target = $region48
      $region47: #{flexible_net_forward.3} parent=11 // pred_region
        _
      $region48: #{flexible_net_forward.3} parent=11 // pred_fallthru
        _
      // Predicated region
      $region49: #{flexible_net_forward.3} parent=11 // pred_check
        %p345 = pneg %p256
      $region50: #{flexible_net_forward.3} parent=11 // pred_check_branch
        %347 = sbr.rel (%p345) target = $region52
      $region51: #{flexible_net_forward.3} parent=11 // pred_region
        _
      $region52: #{flexible_net_forward.3} parent=11 // pred_fallthru
        _
      // Predicated region
      $region53: #{flexible_net_forward.3} parent=11 // pred_check
        %p348 = pneg %p277
      $region54: #{flexible_net_forward.3} parent=11 // pred_check_branch
        %350 = sbr.rel (%p348) target = $region56
      $region55: #{flexible_net_forward.3} parent=11 // pred_region
        _
      $region56: #{flexible_net_forward.3} parent=11 // pred_fallthru
        _
    $region12: #{flexible_net_forward.3} parent=5 // pred_fallthru
      _
    %p351 = scmp.lt.s32.totalorder %s20, 2
    // Predicated region
    $region57: #{flexible_net_forward.3} parent=5 // pred_check
      %p352 = pneg %p351
    $region58: #{flexible_net_forward.3} parent=5 // pred_check_branch
      %354 = sbr.rel (%p352) target = $region60
    $region59: #{flexible_net_forward.3} parent=5 // pred_region
      // Predicated region
      $region61: #{flexible_net_forward.3} parent=59 // pred_check
        %p355 = pneg %p40
      $region62: #{flexible_net_forward.3} parent=59 // pred_check_branch
        %357 = sbr.rel (%p355) target = $region64
      $region63: #{flexible_net_forward.3} parent=59 // pred_region
        %p358 = scmp.lt.s32.totalorder %s20, 1
        %s359 = scalar_select %p358, %s20, 1
        %s360 = smul.addr %s359, 2
        %s361 = smul.addr %s360, 8
        %s362 = scalar_lea.vmem %s0, %s361
      $region64: #{flexible_net_forward.3} parent=59 // pred_fallthru
        _
    $region60: #{flexible_net_forward.3} parent=5 // pred_fallthru
      _
    %p363 = scmp.le.s32.totalorder 1, %s20
    %p364 = scmp.lt.s32.totalorder %s20, 3
    %p365 = pnand %p363, %p364
    %p366 = pneg %p365
    // Predicated region
    $region65: #{flexible_net_forward.3} parent=5 // pred_check
      _
    $region66: #{flexible_net_forward.3} parent=5 // pred_check_branch
      %368 = sbr.rel (%p365) target = $region68
    $region67: #{flexible_net_forward.3} parent=5 // pred_region
      %s369 = ssub.s32 %s20, 1
      %p370 = scmp.lt.s32.totalorder %s25, 1
      %s371 = scalar_select %p370, %s25, 1
      %s372 = smul.addr %s371, 2
      %s373 = smul.addr %s372, 8
      %s374 = scalar_lea.vmem %s0, %s373
      %p375 = pneg %p46
      %p376 = pneg %p43
      %p377 = pneg %p67
      %p378 = pneg %p64
      %p379 = pneg %p88
      %p380 = pneg %p85
      %p381 = pneg %p109
      %p382 = pneg %p106
      %p383 = pneg %p130
      %p384 = pneg %p127
      %p385 = pneg %p151
      %p386 = pneg %p148
      %p387 = pneg %p172
      %p388 = pneg %p169
      %p389 = pneg %p193
      %p390 = pneg %p190
      %p391 = pneg %p214
      %p392 = pneg %p211
      %p393 = pneg %p235
      %p394 = pneg %p232
      %p395 = pneg %p256
      %p396 = pneg %p253
      %p397 = pneg %p277
      %p398 = pneg %p274
      %p399 = pneg %p303
      %p400 = pneg %p300
      %p401 = scmp.lt.s32.totalorder %s25, 1
      %s402 = scalar_select %p401, %s25, 1
      %s403 = scalar_lea.vmem %s12, %s402
      %p404 = scmp.lt.s32.totalorder %s25, 1
      %s405 = scalar_select %p404, %s25, 1
      %s406 = smul.addr %s405, 2
      %s407 = smul.addr %s406, 8
      %s408 = scalar_lea.vmem %s0, %s407
      %p409 = scmp.lt.s32.totalorder %s25, 1
      %s410 = scalar_select %p409, %s25, 1
      %s411 = scalar_lea.vmem %s12, %s410
      %v412 = vld [vmem:[%s408] sm:$0xff]
      %v413 = vld [vmem:[%s408 + $0x8] sm:$0xff]
      %v414 = vld [vmem:[%s1] sm:$0xff]
      %v415 = vld [vmem:[%s1 + $0x8] sm:$0xff]
      %v416 = vld [vmem:[%s1 + $0x10] sm:$0xff]
      %v417 = vld [vmem:[%s1 + $0x18] sm:$0xff]
      %v418 = vld [vmem:[%s1 + $0x20] sm:$0xff]
      %v419 = vld [vmem:[%s1 + $0x28] sm:$0xff]
      %v420 = vld [vmem:[%s1 + $0x30] sm:$0xff]
      %v421 = vld [vmem:[%s1 + $0x38] sm:$0xff]
      %v422 = vld [vmem:[%s1 + $0x40] sm:$0xff]
      %v423 = vld [vmem:[%s1 + $0x48] sm:$0x7]
      %v424 = vld [vmem:[%s3] sm:$0x1]
      %v426 = vlaneseq
      %v427 = vshrl.u32 %v426, 7
      %v428 = vsub.s32 0, %v427
      %v429 = vrot.slane %v424, %v428
      %v431 = vmul.f32 %v414, %v429
      %v432 = vmul.f32 %v415, %v429
      %v433 = vmul.f32 %v416, %v429
      %v434 = vmul.f32 %v417, %v429
      %v435 = vmul.f32 %v418, %v429
      %v436 = vmul.f32 %v419, %v429
      %v437 = vmul.f32 %v420, %v429
      %v438 = vmul.f32 %v421, %v429
      %v439 = vmul.f32 %v422, %v429
      %v440 = vmul.f32 %v423, %v429
      %vm441 = vcmask 261120
      %v443 = vsel %vm441, %v431, 0
      %v446 = vsel %vm441, %v432, 0
      %v449 = vsel %vm441, %v433, 0
      %v452 = vsel %vm441, %v434, 0
      %v455 = vsel %vm441, %v435, 0
      %v458 = vsel %vm441, %v436, 0
      %v461 = vsel %vm441, %v437, 0
      %v464 = vsel %vm441, %v438, 0
      %v467 = vsel %vm441, %v439, 0
      %v470 = vsel %vm441, %v440, 0
      %v473 = vsel %vm441, %v412, 0
      %v476 = vsel %vm441, %v413, 0
      %478 = vmatprep.subr.mxu0 0.0
      %479 = vmatpush1.xpose.msra.mxu0 %v473
      %480 = vmatprep.subr.mxu0 0.0
      %481 = vmatpush1.xpose.msra.mxu0 %v476
      %482 = vmatprep.subr.mxu0 0.0
      %483 = vmatpush1.xpose.msra.mxu0 0.0
      %484 = vmatprep.subr.mxu0 0.0
      %485 = vmatpush1.xpose.msra.mxu0 0.0
      %486 = vmatprep.subr.mxu0 0.0
      %487 = vmatpush1.xpose.msra.mxu0 0.0
      %488 = vmatprep.subr.mxu0 0.0
      %489 = vmatpush1.xpose.msra.mxu0 0.0
      %490 = vmatprep.subr.mxu0 0.0
      %491 = vmatpush1.xpose.msra.mxu0 0.0
      %492 = vmatprep.subr.mxu0 0.0
      %493 = vmatpush1.xpose.msra.mxu0 0.0
      %494 = vmatprep.subr.mxu0 0.0
      %495 = vmatpush1.xpose.msra.mxu0 0.0
      %496 = vmatprep.subr.mxu0 0.0
      %497 = vmatpush1.xpose.msra.mxu0 0.0
      %498 = vmatprep.subr.mxu0 0.0
      %499 = vmatpush1.xpose.msra.mxu0 0.0
      %500 = vmatprep.subr.mxu0 0.0
      %501 = vmatpush1.xpose.msra.mxu0 0.0
      %502 = vmatprep.subr.mxu0 0.0
      %503 = vmatpush1.xpose.msra.mxu0 0.0
      %504 = vmatprep.subr.mxu0 0.0
      %505 = vmatpush1.xpose.msra.mxu0 0.0
      %506 = vmatprep.subr.mxu0 0.0
      %507 = vmatpush1.xpose.msra.mxu0 0.0
      %508 = vmatprep.subr.mxu0 0.0
      %509 = vmatpush1.xpose.msra.mxu0 0.0
      %510 = vmatprep.subr.mxu0 0.0
      %511 = vmatpush1.xpose.msra.mxu0 0.0
      %512 = vmatprep.subr.mxu0 0.0
      %513 = vmatpush1.xpose.msra.mxu0 0.0
      %514 = vmatprep.subr.mxu0 0.0
      %515 = vmatpush1.xpose.msra.mxu0 0.0
      %516 = vmatprep.subr.mxu0 0.0
      %517 = vmatpush1.xpose.msra.mxu0 0.0
      %518 = vmatprep.subr.mxu0 0.0
      %519 = vmatpush1.xpose.msra.mxu0 0.0
      %520 = vmatprep.subr.mxu0 0.0
      %521 = vmatpush1.xpose.msra.mxu0 0.0
      %522 = vmatprep.subr.mxu0 0.0
      %523 = vmatpush1.xpose.msra.mxu0 0.0
      %524 = vmatprep.subr.mxu0 0.0
      %525 = vmatpush1.xpose.msra.mxu0 0.0
      %526 = vmatprep.subr.mxu0 0.0
      %527 = vmatpush1.xpose.msra.mxu0 0.0
      %528 = vmatprep.subr.mxu0 0.0
      %529 = vmatpush1.xpose.msra.mxu0 0.0
      %530 = vmatprep.subr.mxu0 0.0
      %531 = vmatpush1.xpose.msra.mxu0 0.0
      %532 = vmatprep.subr.mxu0 0.0
      %533 = vmatpush1.xpose.msra.mxu0 0.0
      %534 = vmatprep.subr.mxu0 0.0
      %535 = vmatpush1.xpose.msra.mxu0 0.0
      %536 = vmatprep.subr.mxu0 0.0
      %537 = vmatpush1.xpose.msra.mxu0 0.0
      %538 = vmatprep.subr.mxu0 0.0
      %539 = vmatpush1.xpose.msra.mxu0 0.0
      %540 = vmatprep.subr.mxu0 0.0
      %541 = vmatpush1.xpose.msra.mxu0 0.0
      %542 = vmatprep.mubr.f32.mxu0 0.0
      %543 = vmatmul.mubr.f32.gmra.mrb[0].mxu0 %v443
      %v544 = vpop.f32.mrb[0].mxu0
      %v545 = vadd.f32 0.0, %v544
      %v546 = vpop.f32.mrb[0].mxu0
      %547 = vmatprep.mubr.f32.mxu0 0.0
      %548 = vmatmul.mubr.f32.gmra.mrb[0].mxu0 %v446
      %v549 = vpop.f32.mrb[0].mxu0
      %v550 = vadd.f32 0.0, %v549
      %v551 = vpop.f32.mrb[0].mxu0
      %552 = vmatprep.mubr.f32.mxu0 0.0
      %553 = vmatmul.mubr.f32.gmra.mrb[0].mxu0 %v449
      %v554 = vpop.f32.mrb[0].mxu0
      %v555 = vadd.f32 0.0, %v554
      %v556 = vpop.f32.mrb[0].mxu0
      %557 = vmatprep.mubr.f32.mxu0 0.0
      %558 = vmatmul.mubr.f32.gmra.mrb[0].mxu0 %v452
      %v559 = vpop.f32.mrb[0].mxu0
      %v560 = vadd.f32 0.0, %v559
      %v561 = vpop.f32.mrb[0].mxu0
      %562 = vmatprep.mubr.f32.mxu0 0.0
      %563 = vmatmul.mubr.f32.gmra.mrb[0].mxu0 %v455
      %v564 = vpop.f32.mrb[0].mxu0
      %v565 = vadd.f32 0.0, %v564
      %v566 = vpop.f32.mrb[0].mxu0
      %567 = vmatprep.mubr.f32.mxu0 0.0
      %568 = vmatmul.mubr.f32.gmra.mrb[0].mxu0 %v458
      %v569 = vpop.f32.mrb[0].mxu0
      %v570 = vadd.f32 0.0, %v569
      %v571 = vpop.f32.mrb[0].mxu0
      %572 = vmatprep.mubr.f32.mxu0 0.0
      %573 = vmatmul.mubr.f32.gmra.mrb[0].mxu0 %v461
      %v574 = vpop.f32.mrb[0].mxu0
      %v575 = vadd.f32 0.0, %v574
      %v576 = vpop.f32.mrb[0].mxu0
      %577 = vmatprep.mubr.f32.mxu0 0.0
      %578 = vmatmul.mubr.f32.gmra.mrb[0].mxu0 %v464
      %v579 = vpop.f32.mrb[0].mxu0
      %v580 = vadd.f32 0.0, %v579
      %v581 = vpop.f32.mrb[0].mxu0
      %582 = vmatprep.mubr.f32.mxu0 0.0
      %583 = vmatmul.mubr.f32.gmra.mrb[0].mxu0 %v467
      %v584 = vpop.f32.mrb[0].mxu0
      %v585 = vadd.f32 0.0, %v584
      %v586 = vpop.f32.mrb[0].mxu0
      %587 = vmatprep.mubr.f32.mxu0 0.0
      %588 = vmatmul.mubr.f32.gmra.mrb[0].mxu0 %v470
      %v589 = vpop.f32.mrb[0].mxu0
      %v590 = vadd.f32 0.0, %v589
      %v591 = vpop.f32.mrb[0].mxu0
      %592 = vdwg.mxu0
      %v593 = vmul.f32 %v545, 0.17677669
      %v594 = vmul.f32 %v550, 0.17677669
      %v595 = vmul.f32 %v555, 0.17677669
      %v596 = vmul.f32 %v560, 0.17677669
      %v597 = vmul.f32 %v565, 0.17677669
      %v598 = vmul.f32 %v570, 0.17677669
      %v599 = vmul.f32 %v575, 0.17677669
      %v600 = vmul.f32 %v580, 0.17677669
      %v601 = vmul.f32 %v585, 0.17677669
      %v602 = vmul.f32 %v590, 0.17677669
      %vm603 = vcmask 130048
      %v604 = vsel %vm603, %v593, -inf
      %v605 = vsel %vm603, %v594, -inf
      %v606 = vsel %vm603, %v595, -inf
      %v607 = vsel %vm603, %v596, -inf
      %v608 = vsel %vm603, %v597, -inf
      %v609 = vmax.f32 %v604, %v608
      %v610 = vsel %vm603, %v598, -inf
      %v611 = vmax.f32 %v605, %v610
      %v612 = vsel %vm603, %v599, -inf
      %v613 = vmax.f32 %v606, %v612
      %v614 = vsel %vm603, %v600, -inf
      %v615 = vmax.f32 %v607, %v614
      %v616 = vsel %vm603, %v601, -inf
      %v617 = vmax.f32 %v609, %v616
      %vm618 = vcmask 124928
      %v619 = vsel %vm618, %v602, -inf
      %v620 = vmax.f32 %v611, %v619
      %v621 = vmax.f32 %v617, %v620
      %v622 = vmax.f32 %v613, %v615
      %v623 = vmax.f32 %v621, %v622
      %v624 = vrot.slane %v623, 4
      %v625 = vmax.f32 %v623, %v624
      %v626 = vrot.slane %v625, 2
      %v627 = vmax.f32 %v625, %v626
      %v628 = vrot.slane %v627, 1
      %v629 = vmax.f32 %v627, %v628
      %v630 = vsub.f32 %v593, %v629
      %v631 = vsub.f32 %v594, %v629
      %v632 = vsub.f32 %v595, %v629
      %v633 = vsub.f32 %v596, %v629
      %v634 = vsub.f32 %v597, %v629
      %v635 = vsub.f32 %v598, %v629
      %v636 = vsub.f32 %v599, %v629
      %v637 = vsub.f32 %v600, %v629
      %v638 = vsub.f32 %v601, %v629
      %v639 = vsub.f32 %v602, %v629
      %v640 = vmul.f32 %v630, 1.442695
      %v641 = vpow.pop %v640
      %v642 = vmul.f32 %v631, 1.442695
      %v643 = vpow.pop %v642
      %v644 = vmul.f32 %v632, 1.442695
      %v645 = vpow.pop %v644
      %v646 = vmul.f32 %v633, 1.442695
      %v647 = vpow.pop %v646
      %v648 = vmul.f32 %v634, 1.442695
      %v649 = vpow.pop %v648
      %v650 = vmul.f32 %v635, 1.442695
      %v651 = vpow.pop %v650
      %v652 = vmul.f32 %v636, 1.442695
      %v653 = vpow.pop %v652
      %v654 = vmul.f32 %v637, 1.442695
      %v655 = vpow.pop %v654
      %v656 = vmul.f32 %v638, 1.442695
      %v657 = vpow.pop %v656
      %v658 = vmul.f32 %v639, 1.442695
      %v659 = vpow.pop %v658
      %v660 = vsel %vm603, %v641, 0.0
      %v661 = vsel %vm603, %v643, 0.0
      %v662 = vadd.f32 %v660, %v661
      %v663 = vsel %vm603, %v645, 0.0
      %v664 = vadd.f32 %v662, %v663
      %v665 = vsel %vm603, %v647, 0.0
      %v666 = vadd.f32 %v664, %v665
      %v667 = vsel %vm603, %v649, 0.0
      %v668 = vadd.f32 %v666, %v667
      %v669 = vsel %vm603, %v651, 0.0
      %v670 = vadd.f32 %v668, %v669
      %v671 = vsel %vm603, %v653, 0.0
      %v672 = vadd.f32 %v670, %v671
      %v673 = vsel %vm603, %v655, 0.0
      %v674 = vadd.f32 %v672, %v673
      %v675 = vsel %vm603, %v657, 0.0
      %v676 = vadd.f32 %v674, %v675
      %v677 = vsel %vm618, %v659, 0.0
      %v678 = vadd.f32 %v676, %v677
      %v679 = vrot.slane %v678, 4
      %v680 = vadd.f32 %v678, %v679
      %v681 = vrot.slane %v680, 2
      %v682 = vadd.f32 %v680, %v681
      %v683 = vrot.slane %v682, 1
      %v684 = vadd.f32 %v682, %v683
      %v685 = vrcp.pop %v684
      %v686 = vmul.f32 %v641, %v685
      %v687 = vmul.f32 %v643, %v685
      %v688 = vmul.f32 %v645, %v685
      %v689 = vmul.f32 %v647, %v685
      %v690 = vmul.f32 %v649, %v685
      %v691 = vmul.f32 %v651, %v685
      %v692 = vmul.f32 %v653, %v685
      %v693 = vmul.f32 %v655, %v685
      %v694 = vmul.f32 %v657, %v685
      %v695 = vmul.f32 %v659, %v685
      %696 = vrot.lane.b32.xlu0 %v429, 32
      %v697 = vpop.permute.xlu0 %696
      %v699 = vmul.f32 %v412, %v697
      %v700 = vmul.f32 %v413, %v697
      %s701 = scalar_lea.vmem %s3, 1
      %v702 = vld [vmem:[%s701] sm:$0x1]
      %v704 = vlaneseq
      %v705 = vshrl.u32 %v704, 7
      %v706 = vsub.s32 0, %v705
      %v707 = vrot.slane %v702, %v706
      %v709 = vmul.f32 %v414, %v707
      %v710 = vmul.f32 %v415, %v707
      %v711 = vmul.f32 %v416, %v707
      %v712 = vmul.f32 %v417, %v707
      %v713 = vmul.f32 %v418, %v707
      %v714 = vmul.f32 %v419, %v707
      %v715 = vmul.f32 %v420, %v707
      %v716 = vmul.f32 %v421, %v707
      %v717 = vmul.f32 %v422, %v707
      %v718 = vmul.f32 %v423, %v707
      %v720 = vsel %vm441, %v709, 0
      %v723 = vsel %vm441, %v710, 0
      %v726 = vsel %vm441, %v711, 0
      %v729 = vsel %vm441, %v712, 0
      %v732 = vsel %vm441, %v713, 0
      %v735 = vsel %vm441, %v714, 0
      %v738 = vsel %vm441, %v715, 0
      %v741 = vsel %vm441, %v716, 0
      %v744 = vsel %vm441, %v717, 0
      %v747 = vsel %vm441, %v718, 0
      %749 = vmatprep.subr.mxu0 0.0
      %750 = vmatpush1.xpose.msra.mxu0 %v473
      %751 = vmatprep.subr.mxu0 0.0
      %752 = vmatpush1.xpose.msra.mxu0 %v476
      %753 = vmatprep.subr.mxu0 0.0
      %754 = vmatpush1.xpose.msra.mxu0 0.0
      %755 = vmatprep.subr.mxu0 0.0
      %756 = vmatpush1.xpose.msra.mxu0 0.0
      %757 = vmatprep.subr.mxu0 0.0
      %758 = vmatpush1.xpose.msra.mxu0 0.0
      %759 = vmatprep.subr.mxu0 0.0
      %760 = vmatpush1.xpose.msra.mxu0 0.0
      %761 = vmatprep.subr.mxu0 0.0
      %762 = vmatpush1.xpose.msra.mxu0 0.0
      %763 = vmatprep.subr.mxu0 0.0
      %764 = vmatpush1.xpose.msra.mxu0 0.0
      %765 = vmatprep.subr.mxu0 0.0
      %766 = vmatpush1.xpose.msra.mxu0 0.0
      %767 = vmatprep.subr.mxu0 0.0
      %768 = vmatpush1.xpose.msra.mxu0 0.0
      %769 = vmatprep.subr.mxu0 0.0
      %770 = vmatpush1.xpose.msra.mxu0 0.0
      %771 = vmatprep.subr.mxu0 0.0
      %772 = vmatpush1.xpose.msra.mxu0 0.0
      %773 = vmatprep.subr.mxu0 0.0
      %774 = vmatpush1.xpose.msra.mxu0 0.0
      %775 = vmatprep.subr.mxu0 0.0
      %776 = vmatpush1.xpose.msra.mxu0 0.0
      %777 = vmatprep.subr.mxu0 0.0
      %778 = vmatpush1.xpose.msra.mxu0 0.0
      %779 = vmatprep.subr.mxu0 0.0
      %780 = vmatpush1.xpose.msra.mxu0 0.0
      %781 = vmatprep.subr.mxu0 0.0
      %782 = vmatpush1.xpose.msra.mxu0 0.0
      %783 = vmatprep.subr.mxu0 0.0
      %784 = vmatpush1.xpose.msra.mxu0 0.0
      %785 = vmatprep.subr.mxu0 0.0
      %786 = vmatpush1.xpose.msra.mxu0 0.0
      %787 = vmatprep.subr.mxu0 0.0
      %788 = vmatpush1.xpose.msra.mxu0 0.0
      %789 = vmatprep.subr.mxu0 0.0
      %790 = vmatpush1.xpose.msra.mxu0 0.0
      %791 = vmatprep.subr.mxu0 0.0
      %792 = vmatpush1.xpose.msra.mxu0 0.0
      %793 = vmatprep.subr.mxu0 0.0
      %794 = vmatpush1.xpose.msra.mxu0 0.0
      %795 = vmatprep.subr.mxu0 0.0
      %796 = vmatpush1.xpose.msra.mxu0 0.0
      %797 = vmatprep.subr.mxu0 0.0
      %798 = vmatpush1.xpose.msra.mxu0 0.0
      %799 = vmatprep.subr.mxu0 0.0
      %800 = vmatpush1.xpose.msra.mxu0 0.0
      %801 = vmatprep.subr.mxu0 0.0
      %802 = vmatpush1.xpose.msra.mxu0 0.0
      %803 = vmatprep.subr.mxu0 0.0
      %804 = vmatpush1.xpose.msra.mxu0 0.0
      %805 = vmatprep.subr.mxu0 0.0
      %806 = vmatpush1.xpose.msra.mxu0 0.0
      %807 = vmatprep.subr.mxu0 0.0
      %808 = vmatpush1.xpose.msra.mxu0 0.0
      %809 = vmatprep.subr.mxu0 0.0
      %810 = vmatpush1.xpose.msra.mxu0 0.0
      %811 = vmatprep.subr.mxu0 0.0
      %812 = vmatpush1.xpose.msra.mxu0 0.0
      %813 = vmatprep.mubr.f32.mxu0 0.0
      %814 = vmatmul.mubr.f32.gmra.mrb[0].mxu0 %v720
      %v815 = vpop.f32.mrb[0].mxu0
      %v816 = vadd.f32 0.0, %v815
      %v817 = vpop.f32.mrb[0].mxu0
      %818 = vmatprep.mubr.f32.mxu0 0.0
      %819 = vmatmul.mubr.f32.gmra.mrb[0].mxu0 %v723
      %v820 = vpop.f32.mrb[0].mxu0
      %v821 = vadd.f32 0.0, %v820
      %v822 = vpop.f32.mrb[0].mxu0
      %823 = vmatprep.mubr.f32.mxu0 0.0
      %824 = vmatmul.mubr.f32.gmra.mrb[0].mxu0 %v726
      %v825 = vpop.f32.mrb[0].mxu0
      %v826 = vadd.f32 0.0, %v825
      %v827 = vpop.f32.mrb[0].mxu0
      %828 = vmatprep.mubr.f32.mxu0 0.0
      %829 = vmatmul.mubr.f32.gmra.mrb[0].mxu0 %v729
      %v830 = vpop.f32.mrb[0].mxu0
      %v831 = vadd.f32 0.0, %v830
      %v832 = vpop.f32.mrb[0].mxu0
      %833 = vmatprep.mubr.f32.mxu0 0.0
      %834 = vmatmul.mubr.f32.gmra.mrb[0].mxu0 %v732
      %v835 = vpop.f32.mrb[0].mxu0
      %v836 = vadd.f32 0.0, %v835
      %v837 = vpop.f32.mrb[0].mxu0
      %838 = vmatprep.mubr.f32.mxu0 0.0
      %839 = vmatmul.mubr.f32.gmra.mrb[0].mxu0 %v735
      %v840 = vpop.f32.mrb[0].mxu0
      %v841 = vadd.f32 0.0, %v840
      %v842 = vpop.f32.mrb[0].mxu0
      %843 = vmatprep.mubr.f32.mxu0 0.0
      %844 = vmatmul.mubr.f32.gmra.mrb[0].mxu0 %v738
      %v845 = vpop.f32.mrb[0].mxu0
      %v846 = vadd.f32 0.0, %v845
      %v847 = vpop.f32.mrb[0].mxu0
      %848 = vmatprep.mubr.f32.mxu0 0.0
      %849 = vmatmul.mubr.f32.gmra.mrb[0].mxu0 %v741
      %v850 = vpop.f32.mrb[0].mxu0
      %v851 = vadd.f32 0.0, %v850
      %v852 = vpop.f32.mrb[0].mxu0
      %853 = vmatprep.mubr.f32.mxu0 0.0
      %854 = vmatmul.mubr.f32.gmra.mrb[0].mxu0 %v744
      %v855 = vpop.f32.mrb[0].mxu0
      %v856 = vadd.f32 0.0, %v855
      %v857 = vpop.f32.mrb[0].mxu0
      %858 = vmatprep.mubr.f32.mxu0 0.0
      %859 = vmatmul.mubr.f32.gmra.mrb[0].mxu0 %v747
      %v860 = vpop.f32.mrb[0].mxu0
      %v861 = vadd.f32 0.0, %v860
      %v862 = vpop.f32.mrb[0].mxu0
      %863 = vdwg.mxu0
      %v864 = vmul.f32 %v816, 0.17677669
      %v865 = vmul.f32 %v821, 0.17677669
      %v866 = vmul.f32 %v826, 0.17677669
      %v867 = vmul.f32 %v831, 0.17677669
      %v868 = vmul.f32 %v836, 0.17677669
      %v869 = vmul.f32 %v841, 0.17677669
      %v870 = vmul.f32 %v846, 0.17677669
      %v871 = vmul.f32 %v851, 0.17677669
      %v872 = vmul.f32 %v856, 0.17677669
      %v873 = vmul.f32 %v861, 0.17677669
      %v874 = vsel %vm603, %v864, -inf
      %v875 = vsel %vm603, %v865, -inf
      %v876 = vsel %vm603, %v866, -inf
      %v877 = vsel %vm603, %v867, -inf
      %v878 = vsel %vm603, %v868, -inf
      %v879 = vmax.f32 %v874, %v878
      %v880 = vsel %vm603, %v869, -inf
      %v881 = vmax.f32 %v875, %v880
      %v882 = vsel %vm603, %v870, -inf
      %v883 = vmax.f32 %v876, %v882
      %v884 = vsel %vm603, %v871, -inf
      %v885 = vmax.f32 %v877, %v884
      %v886 = vsel %vm603, %v872, -inf
      %v887 = vmax.f32 %v879, %v886
      %v888 = vsel %vm618, %v873, -inf
      %v889 = vmax.f32 %v881, %v888
      %v890 = vmax.f32 %v887, %v889
      %v891 = vmax.f32 %v883, %v885
      %v892 = vmax.f32 %v890, %v891
      %v893 = vrot.slane %v892, 4
      %v894 = vmax.f32 %v892, %v893
      %v895 = vrot.slane %v894, 2
      %v896 = vmax.f32 %v894, %v895
      %v897 = vrot.slane %v896, 1
      %v898 = vmax.f32 %v896, %v897
      %v899 = vsub.f32 %v864, %v898
      %v900 = vsub.f32 %v865, %v898
      %v901 = vsub.f32 %v866, %v898
      %v902 = vsub.f32 %v867, %v898
      %v903 = vsub.f32 %v868, %v898
      %v904 = vsub.f32 %v869, %v898
      %v905 = vsub.f32 %v870, %v898
      %v906 = vsub.f32 %v871, %v898
      %v907 = vsub.f32 %v872, %v898
      %v908 = vsub.f32 %v873, %v898
      %v909 = vmul.f32 %v899, 1.442695
      %v910 = vpow.pop %v909
      %v911 = vmul.f32 %v900, 1.442695
      %v912 = vpow.pop %v911
      %v913 = vmul.f32 %v901, 1.442695
      %v914 = vpow.pop %v913
      %v915 = vmul.f32 %v902, 1.442695
      %v916 = vpow.pop %v915
      %v917 = vmul.f32 %v903, 1.442695
      %v918 = vpow.pop %v917
      %v919 = vmul.f32 %v904, 1.442695
      %v920 = vpow.pop %v919
      %v921 = vmul.f32 %v905, 1.442695
      %v922 = vpow.pop %v921
      %v923 = vmul.f32 %v906, 1.442695
      %v924 = vpow.pop %v923
      %v925 = vmul.f32 %v907, 1.442695
      %v926 = vpow.pop %v925
      %v927 = vmul.f32 %v908, 1.442695
      %v928 = vpow.pop %v927
      %v929 = vsel %vm603, %v910, 0.0
      %v930 = vsel %vm603, %v912, 0.0
      %v931 = vadd.f32 %v929, %v930
      %v932 = vsel %vm603, %v914, 0.0
      %v933 = vadd.f32 %v931, %v932
      %v934 = vsel %vm603, %v916, 0.0
      %v935 = vadd.f32 %v933, %v934
      %v936 = vsel %vm603, %v918, 0.0
      %v937 = vadd.f32 %v935, %v936
      %v938 = vsel %vm603, %v920, 0.0
      %v939 = vadd.f32 %v937, %v938
      %v940 = vsel %vm603, %v922, 0.0
      %v941 = vadd.f32 %v939, %v940
      %v942 = vsel %vm603, %v924, 0.0
      %v943 = vadd.f32 %v941, %v942
      %v944 = vsel %vm603, %v926, 0.0
      %v945 = vadd.f32 %v943, %v944
      %v946 = vsel %vm618, %v928, 0.0
      %v947 = vadd.f32 %v945, %v946
      %v948 = vrot.slane %v947, 4
      %v949 = vadd.f32 %v947, %v948
      %v950 = vrot.slane %v949, 2
      %v951 = vadd.f32 %v949, %v950
      %v952 = vrot.slane %v951, 1
      %v953 = vadd.f32 %v951, %v952
      %v954 = vrcp.pop %v953
      %v955 = vmul.f32 %v910, %v954
      %v956 = vmul.f32 %v912, %v954
      %v957 = vmul.f32 %v914, %v954
      %v958 = vmul.f32 %v916, %v954
      %v959 = vmul.f32 %v918, %v954
      %v960 = vmul.f32 %v920, %v954
      %v961 = vmul.f32 %v922, %v954
      %v962 = vmul.f32 %v924, %v954
      %v963 = vmul.f32 %v926, %v954
      %v964 = vmul.f32 %v928, %v954
      %965 = vrot.lane.b32.xlu0 %v707, 32
      %v966 = vpop.permute.xlu0 %965
      %v968 = vmul.f32 %v412, %v966
      %v969 = vmul.f32 %v413, %v966
      %972 = vrot.lane.b32.xlu0 %v968, 96
      %v973 = vpop.permute.xlu0 %972
      %974 = vrot.lane.b32.xlu0 %v969, 96
      %v975 = vpop.permute.xlu0 %974
      %v979 = vsel %vm603, %v955, 0
      %v982 = vsel %vm603, %v956, 0
      %v985 = vsel %vm603, %v957, 0
      %v988 = vsel %vm603, %v958, 0
      %v991 = vsel %vm603, %v959, 0
      %v994 = vsel %vm603, %v960, 0
      %v997 = vsel %vm603, %v961, 0
      %v1000 = vsel %vm603, %v962, 0
      %v1003 = vsel %vm603, %v963, 0
      %v1006 = vsel %vm603, %v964, 0
      %1008 = vmatprep.subr.mxu0 0.0
      %1009 = vmatpush1.msra.mxu0 %v973
      %1010 = vmatprep.subr.mxu0 0.0
      %1011 = vmatpush1.msra.mxu0 %v975
      %1012 = vmatprep.subr.mxu0 0.0
      %1013 = vmatpush1.msra.mxu0 0.0
      %1014 = vmatprep.subr.mxu0 0.0
      %1015 = vmatpush1.msra.mxu0 0.0
      %1016 = vmatprep.subr.mxu0 0.0
      %1017 = vmatpush1.msra.mxu0 0.0
      %1018 = vmatprep.subr.mxu0 0.0
      %1019 = vmatpush1.msra.mxu0 0.0
      %1020 = vmatprep.subr.mxu0 0.0
      %1021 = vmatpush1.msra.mxu0 0.0
      %1022 = vmatprep.subr.mxu0 0.0
      %1023 = vmatpush1.msra.mxu0 0.0
      %1024 = vmatprep.subr.mxu0 0.0
      %1025 = vmatpush1.msra.mxu0 0.0
      %1026 = vmatprep.subr.mxu0 0.0
      %1027 = vmatpush1.msra.mxu0 0.0
      %1028 = vmatprep.subr.mxu0 0.0
      %1029 = vmatpush1.msra.mxu0 0.0
      %1030 = vmatprep.subr.mxu0 0.0
      %1031 = vmatpush1.msra.mxu0 0.0
      %1032 = vmatprep.subr.mxu0 0.0
      %1033 = vmatpush1.msra.mxu0 0.0
      %1034 = vmatprep.subr.mxu0 0.0
      %1035 = vmatpush1.msra.mxu0 0.0
      %1036 = vmatprep.subr.mxu0 0.0
      %1037 = vmatpush1.msra.mxu0 0.0
      %1038 = vmatprep.subr.mxu0 0.0
      %1039 = vmatpush1.msra.mxu0 0.0
      %1040 = vmatprep.subr.mxu0 0.0
      %1041 = vmatpush1.msra.mxu0 0.0
      %1042 = vmatprep.subr.mxu0 0.0
      %1043 = vmatpush1.msra.mxu0 0.0
      %1044 = vmatprep.subr.mxu0 0.0
      %1045 = vmatpush1.msra.mxu0 0.0
      %1046 = vmatprep.subr.mxu0 0.0
      %1047 = vmatpush1.msra.mxu0 0.0
      %1048 = vmatprep.subr.mxu0 0.0
      %1049 = vmatpush1.msra.mxu0 0.0
      %1050 = vmatprep.subr.mxu0 0.0
      %1051 = vmatpush1.msra.mxu0 0.0
      %1052 = vmatprep.subr.mxu0 0.0
      %1053 = vmatpush1.msra.mxu0 0.0
      %1054 = vmatprep.subr.mxu0 0.0
      %1055 = vmatpush1.msra.mxu0 0.0
      %1056 = vmatprep.subr.mxu0 0.0
      %1057 = vmatpush1.msra.mxu0 0.0
      %1058 = vmatprep.subr.mxu0 0.0
      %1059 = vmatpush1.msra.mxu0 0.0
      %1060 = vmatprep.subr.mxu0 0.0
      %1061 = vmatpush1.msra.mxu0 0.0
      %1062 = vmatprep.subr.mxu0 0.0
      %1063 = vmatpush1.msra.mxu0 0.0
      %1064 = vmatprep.subr.mxu0 0.0
      %1065 = vmatpush1.msra.mxu0 0.0
      %1066 = vmatprep.subr.mxu0 0.0
      %1067 = vmatpush1.msra.mxu0 0.0
      %1068 = vmatprep.subr.mxu0 0.0
      %1069 = vmatpush1.msra.mxu0 0.0
      %1070 = vmatprep.subr.mxu0 0.0
      %1071 = vmatpush1.msra.mxu0 0.0
      %1072 = vmatprep.mubr.f32.mxu0 0.0
      %1073 = vmatmul.mubr.f32.gmra.mrb[0].mxu0 %v979
      %v1074 = vpop.f32.mrb[0].mxu0
      %v1075 = vadd.f32 0.0, %v1074
      %v1076 = vpop.f32.mrb[0].mxu0
      %1077 = vmatprep.mubr.f32.mxu0 0.0
      %1078 = vmatmul.mubr.f32.gmra.mrb[0].mxu0 %v982
      %v1079 = vpop.f32.mrb[0].mxu0
      %v1080 = vadd.f32 0.0, %v1079
      %v1081 = vpop.f32.mrb[0].mxu0
      %1082 = vmatprep.mubr.f32.mxu0 0.0
      %1083 = vmatmul.mubr.f32.gmra.mrb[0].mxu0 %v985
      %v1084 = vpop.f32.mrb[0].mxu0
      %v1085 = vadd.f32 0.0, %v1084
      %v1086 = vpop.f32.mrb[0].mxu0
      %1087 = vmatprep.mubr.f32.mxu0 0.0
      %1088 = vmatmul.mubr.f32.gmra.mrb[0].mxu0 %v988
      %v1089 = vpop.f32.mrb[0].mxu0
      %v1090 = vadd.f32 0.0, %v1089
      %v1091 = vpop.f32.mrb[0].mxu0
      %1092 = vmatprep.mubr.f32.mxu0 0.0
      %1093 = vmatmul.mubr.f32.gmra.mrb[0].mxu0 %v991
      %v1094 = vpop.f32.mrb[0].mxu0
      %v1095 = vadd.f32 0.0, %v1094
      %v1096 = vpop.f32.mrb[0].mxu0
      %1097 = vmatprep.mubr.f32.mxu0 0.0
      %1098 = vmatmul.mubr.f32.gmra.mrb[0].mxu0 %v994
      %v1099 = vpop.f32.mrb[0].mxu0
      %v1100 = vadd.f32 0.0, %v1099
      %v1101 = vpop.f32.mrb[0].mxu0
      %1102 = vmatprep.mubr.f32.mxu0 0.0
      %1103 = vmatmul.mubr.f32.gmra.mrb[0].mxu0 %v997
      %v1104 = vpop.f32.mrb[0].mxu0
      %v1105 = vadd.f32 0.0, %v1104
      %v1106 = vpop.f32.mrb[0].mxu0
      %1107 = vmatprep.mubr.f32.mxu0 0.0
      %1108 = vmatmul.mubr.f32.gmra.mrb[0].mxu0 %v1000
      %v1109 = vpop.f32.mrb[0].mxu0
      %v1110 = vadd.f32 0.0, %v1109
      %v1111 = vpop.f32.mrb[0].mxu0
      %1112 = vmatprep.mubr.f32.mxu0 0.0
      %1113 = vmatmul.mubr.f32.gmra.mrb[0].mxu0 %v1003
      %v1114 = vpop.f32.mrb[0].mxu0
      %v1115 = vadd.f32 0.0, %v1114
      %v1116 = vpop.f32.mrb[0].mxu0
      %1117 = vmatprep.mubr.f32.mxu0 0.0
      %1118 = vmatmul.mubr.f32.gmra.mrb[0].mxu0 %v1006
      %v1119 = vpop.f32.mrb[0].mxu0
      %v1120 = vadd.f32 0.0, %v1119
      %v1121 = vpop.f32.mrb[0].mxu0
      %1122 = vdwg.mxu0
      %1125 = vrot.lane.b32.xlu0 %v699, 96
      %v1126 = vpop.permute.xlu0 %1125
      %1127 = vrot.lane.b32.xlu0 %v700, 96
      %v1128 = vpop.permute.xlu0 %1127
      %v1132 = vsel %vm603, %v686, 0
      %v1135 = vsel %vm603, %v687, 0
      %v1138 = vsel %vm603, %v688, 0
      %v1141 = vsel %vm603, %v689, 0
      %v1144 = vsel %vm603, %v690, 0
      %v1147 = vsel %vm603, %v691, 0
      %v1150 = vsel %vm603, %v692, 0
      %v1153 = vsel %vm603, %v693, 0
      %v1156 = vsel %vm603, %v694, 0
      %v1159 = vsel %vm603, %v695, 0
      %1161 = vmatprep.subr.mxu0 0.0
      %1162 = vmatpush1.msra.mxu0 %v1126
      %1163 = vmatprep.subr.mxu0 0.0
      %1164 = vmatpush1.msra.mxu0 %v1128
      %1165 = vmatprep.subr.mxu0 0.0
      %1166 = vmatpush1.msra.mxu0 0.0
      %1167 = vmatprep.subr.mxu0 0.0
      %1168 = vmatpush1.msra.mxu0 0.0
      %1169 = vmatprep.subr.mxu0 0.0
      %1170 = vmatpush1.msra.mxu0 0.0
      %1171 = vmatprep.subr.mxu0 0.0
      %1172 = vmatpush1.msra.mxu0 0.0
      %1173 = vmatprep.subr.mxu0 0.0
      %1174 = vmatpush1.msra.mxu0 0.0
      %1175 = vmatprep.subr.mxu0 0.0
      %1176 = vmatpush1.msra.mxu0 0.0
      %1177 = vmatprep.subr.mxu0 0.0
      %1178 = vmatpush1.msra.mxu0 0.0
      %1179 = vmatprep.subr.mxu0 0.0
      %1180 = vmatpush1.msra.mxu0 0.0
      %1181 = vmatprep.subr.mxu0 0.0
      %1182 = vmatpush1.msra.mxu0 0.0
      %1183 = vmatprep.subr.mxu0 0.0
      %1184 = vmatpush1.msra.mxu0 0.0
      %1185 = vmatprep.subr.mxu0 0.0
      %1186 = vmatpush1.msra.mxu0 0.0
      %1187 = vmatprep.subr.mxu0 0.0
      %1188 = vmatpush1.msra.mxu0 0.0
      %1189 = vmatprep.subr.mxu0 0.0
      %1190 = vmatpush1.msra.mxu0 0.0
      %1191 = vmatprep.subr.mxu0 0.0
      %1192 = vmatpush1.msra.mxu0 0.0
      %1193 = vmatprep.subr.mxu0 0.0
      %1194 = vmatpush1.msra.mxu0 0.0
      %1195 = vmatprep.subr.mxu0 0.0
      %1196 = vmatpush1.msra.mxu0 0.0
      %1197 = vmatprep.subr.mxu0 0.0
      %1198 = vmatpush1.msra.mxu0 0.0
      %1199 = vmatprep.subr.mxu0 0.0
      %1200 = vmatpush1.msra.mxu0 0.0
      %1201 = vmatprep.subr.mxu0 0.0
      %1202 = vmatpush1.msra.mxu0 0.0
      %1203 = vmatprep.subr.mxu0 0.0
      %1204 = vmatpush1.msra.mxu0 0.0
      %1205 = vmatprep.subr.mxu0 0.0
      %1206 = vmatpush1.msra.mxu0 0.0
      %1207 = vmatprep.subr.mxu0 0.0
      %1208 = vmatpush1.msra.mxu0 0.0
      %1209 = vmatprep.subr.mxu0 0.0
      %1210 = vmatpush1.msra.mxu0 0.0
      %1211 = vmatprep.subr.mxu0 0.0
      %1212 = vmatpush1.msra.mxu0 0.0
      %1213 = vmatprep.subr.mxu0 0.0
      %1214 = vmatpush1.msra.mxu0 0.0
      %1215 = vmatprep.subr.mxu0 0.0
      %1216 = vmatpush1.msra.mxu0 0.0
      %1217 = vmatprep.subr.mxu0 0.0
      %1218 = vmatpush1.msra.mxu0 0.0
      %1219 = vmatprep.subr.mxu0 0.0
      %1220 = vmatpush1.msra.mxu0 0.0
      %1221 = vmatprep.subr.mxu0 0.0
      %1222 = vmatpush1.msra.mxu0 0.0
      %1223 = vmatprep.subr.mxu0 0.0
      %1224 = vmatpush1.msra.mxu0 0.0
      %1225 = vmatprep.mubr.f32.mxu0 0.0
      %1226 = vmatmul.mubr.f32.gmra.mrb[0].mxu0 %v1132
      %v1227 = vpop.f32.mrb[0].mxu0
      %v1228 = vadd.f32 %v1075, %v1227
      %v1229 = vpop.f32.mrb[0].mxu0
      %1230 = vmatprep.mubr.f32.mxu0 0.0
      %1231 = vmatmul.mubr.f32.gmra.mrb[0].mxu0 %v1135
      %v1232 = vpop.f32.mrb[0].mxu0
      %v1233 = vadd.f32 %v1080, %v1232
      %v1234 = vpop.f32.mrb[0].mxu0
      %1235 = vmatprep.mubr.f32.mxu0 0.0
      %1236 = vmatmul.mubr.f32.gmra.mrb[0].mxu0 %v1138
      %v1237 = vpop.f32.mrb[0].mxu0
      %v1238 = vadd.f32 %v1085, %v1237
      %v1239 = vpop.f32.mrb[0].mxu0
      %1240 = vmatprep.mubr.f32.mxu0 0.0
      %1241 = vmatmul.mubr.f32.gmra.mrb[0].mxu0 %v1141
      %v1242 = vpop.f32.mrb[0].mxu0
      %v1243 = vadd.f32 %v1090, %v1242
      %v1244 = vpop.f32.mrb[0].mxu0
      %1245 = vmatprep.mubr.f32.mxu0 0.0
      %1246 = vmatmul.mubr.f32.gmra.mrb[0].mxu0 %v1144
      %v1247 = vpop.f32.mrb[0].mxu0
      %v1248 = vadd.f32 %v1095, %v1247
      %v1249 = vpop.f32.mrb[0].mxu0
      %1250 = vmatprep.mubr.f32.mxu0 0.0
      %1251 = vmatmul.mubr.f32.gmra.mrb[0].mxu0 %v1147
      %v1252 = vpop.f32.mrb[0].mxu0
      %v1253 = vadd.f32 %v1100, %v1252
      %v1254 = vpop.f32.mrb[0].mxu0
      %1255 = vmatprep.mubr.f32.mxu0 0.0
      %1256 = vmatmul.mubr.f32.gmra.mrb[0].mxu0 %v1150
      %v1257 = vpop.f32.mrb[0].mxu0
      %v1258 = vadd.f32 %v1105, %v1257
      %v1259 = vpop.f32.mrb[0].mxu0
      %1260 = vmatprep.mubr.f32.mxu0 0.0
      %1261 = vmatmul.mubr.f32.gmra.mrb[0].mxu0 %v1153
      %v1262 = vpop.f32.mrb[0].mxu0
      %v1263 = vadd.f32 %v1110, %v1262
      %v1264 = vpop.f32.mrb[0].mxu0
      %1265 = vmatprep.mubr.f32.mxu0 0.0
      %1266 = vmatmul.mubr.f32.gmra.mrb[0].mxu0 %v1156
      %v1267 = vpop.f32.mrb[0].mxu0
      %v1268 = vadd.f32 %v1115, %v1267
      %v1269 = vpop.f32.mrb[0].mxu0
      %1270 = vmatprep.mubr.f32.mxu0 0.0
      %1271 = vmatmul.mubr.f32.gmra.mrb[0].mxu0 %v1159
      %v1272 = vpop.f32.mrb[0].mxu0
      %v1273 = vadd.f32 %v1120, %v1272
      %v1274 = vpop.f32.mrb[0].mxu0
      %1275 = vdwg.mxu0
      %s1276 = scalar_lea.vmem %s3, 2
      %v1277 = vld [vmem:[%s1276] sm:$0x1]
      %v1279 = vlaneseq
      %v1280 = vshrl.u32 %v1279, 7
      %v1281 = vsub.s32 0, %v1280
      %v1282 = vrot.slane %v1277, %v1281
      %v1284 = vmul.f32 %v414, %v1282
      %v1285 = vmul.f32 %v415, %v1282
      %v1286 = vmul.f32 %v416, %v1282
      %v1287 = vmul.f32 %v417, %v1282
      %v1288 = vmul.f32 %v418, %v1282
      %v1289 = vmul.f32 %v419, %v1282
      %v1290 = vmul.f32 %v420, %v1282
      %v1291 = vmul.f32 %v421, %v1282
      %v1292 = vmul.f32 %v422, %v1282
      %v1293 = vmul.f32 %v423, %v1282
      %v1295 = vsel %vm441, %v1284, 0
      %v1298 = vsel %vm441, %v1285, 0
      %v1301 = vsel %vm441, %v1286, 0
      %v1304 = vsel %vm441, %v1287, 0
      %v1307 = vsel %vm441, %v1288, 0
      %v1310 = vsel %vm441, %v1289, 0
      %v1313 = vsel %vm441, %v1290, 0
      %v1316 = vsel %vm441, %v1291, 0
      %v1319 = vsel %vm441, %v1292, 0
      %v1322 = vsel %vm441, %v1293, 0
      %1324 = vmatprep.subr.mxu0 0.0
      %1325 = vmatpush1.xpose.msra.mxu0 %v473
      %1326 = vmatprep.subr.mxu0 0.0
      %1327 = vmatpush1.xpose.msra.mxu0 %v476
      %1328 = vmatprep.subr.mxu0 0.0
      %1329 = vmatpush1.xpose.msra.mxu0 0.0
      %1330 = vmatprep.subr.mxu0 0.0
      %1331 = vmatpush1.xpose.msra.mxu0 0.0
      %1332 = vmatprep.subr.mxu0 0.0
      %1333 = vmatpush1.xpose.msra.mxu0 0.0
      %1334 = vmatprep.subr.mxu0 0.0
      %1335 = vmatpush1.xpose.msra.mxu0 0.0
      %1336 = vmatprep.subr.mxu0 0.0
      %1337 = vmatpush1.xpose.msra.mxu0 0.0
      %1338 = vmatprep.subr.mxu0 0.0
      %1339 = vmatpush1.xpose.msra.mxu0 0.0
      %1340 = vmatprep.subr.mxu0 0.0
      %1341 = vmatpush1.xpose.msra.mxu0 0.0
      %1342 = vmatprep.subr.mxu0 0.0
      %1343 = vmatpush1.xpose.msra.mxu0 0.0
      %1344 = vmatprep.subr.mxu0 0.0
      %1345 = vmatpush1.xpose.msra.mxu0 0.0
      %1346 = vmatprep.subr.mxu0 0.0
      %1347 = vmatpush1.xpose.msra.mxu0 0.0
      %1348 = vmatprep.subr.mxu0 0.0
      %1349 = vmatpush1.xpose.msra.mxu0 0.0
      %1350 = vmatprep.subr.mxu0 0.0
      %1351 = vmatpush1.xpose.msra.mxu0 0.0
      %1352 = vmatprep.subr.mxu0 0.0
      %1353 = vmatpush1.xpose.msra.mxu0 0.0
      %1354 = vmatprep.subr.mxu0 0.0
      %1355 = vmatpush1.xpose.msra.mxu0 0.0
      %1356 = vmatprep.subr.mxu0 0.0
      %1357 = vmatpush1.xpose.msra.mxu0 0.0
      %1358 = vmatprep.subr.mxu0 0.0
      %1359 = vmatpush1.xpose.msra.mxu0 0.0
      %1360 = vmatprep.subr.mxu0 0.0
      %1361 = vmatpush1.xpose.msra.mxu0 0.0
      %1362 = vmatprep.subr.mxu0 0.0
      %1363 = vmatpush1.xpose.msra.mxu0 0.0
      %1364 = vmatprep.subr.mxu0 0.0
      %1365 = vmatpush1.xpose.msra.mxu0 0.0
      %1366 = vmatprep.subr.mxu0 0.0
      %1367 = vmatpush1.xpose.msra.mxu0 0.0
      %1368 = vmatprep.subr.mxu0 0.0
      %1369 = vmatpush1.xpose.msra.mxu0 0.0
      %1370 = vmatprep.subr.mxu0 0.0
      %1371 = vmatpush1.xpose.msra.mxu0 0.0
      %1372 = vmatprep.subr.mxu0 0.0
      %1373 = vmatpush1.xpose.msra.mxu0 0.0
      %1374 = vmatprep.subr.mxu0 0.0
      %1375 = vmatpush1.xpose.msra.mxu0 0.0
      %1376 = vmatprep.subr.mxu0 0.0
      %1377 = vmatpush1.xpose.msra.mxu0 0.0
      %1378 = vmatprep.subr.mxu0 0.0
      %1379 = vmatpush1.xpose.msra.mxu0 0.0
      %1380 = vmatprep.subr.mxu0 0.0
      %1381 = vmatpush1.xpose.msra.mxu0 0.0
      %1382 = vmatprep.subr.mxu0 0.0
      %1383 = vmatpush1.xpose.msra.mxu0 0.0
      %1384 = vmatprep.subr.mxu0 0.0
      %1385 = vmatpush1.xpose.msra.mxu0 0.0
      %1386 = vmatprep.subr.mxu0 0.0
      %1387 = vmatpush1.xpose.msra.mxu0 0.0
      %1388 = vmatprep.mubr.f32.mxu0 0.0
      %1389 = vmatmul.mubr.f32.gmra.mrb[0].mxu0 %v1295
      %v1390 = vpop.f32.mrb[0].mxu0
      %v1391 = vadd.f32 0.0, %v1390
      %v1392 = vpop.f32.mrb[0].mxu0
      %1393 = vmatprep.mubr.f32.mxu0 0.0
      %1394 = vmatmul.mubr.f32.gmra.mrb[0].mxu0 %v1298
      %v1395 = vpop.f32.mrb[0].mxu0
      %v1396 = vadd.f32 0.0, %v1395
      %v1397 = vpop.f32.mrb[0].mxu0
      %1398 = vmatprep.mubr.f32.mxu0 0.0
      %1399 = vmatmul.mubr.f32.gmra.mrb[0].mxu0 %v1301
      %v1400 = vpop.f32.mrb[0].mxu0
      %v1401 = vadd.f32 0.0, %v1400
      %v1402 = vpop.f32.mrb[0].mxu0
      %1403 = vmatprep.mubr.f32.mxu0 0.0
      %1404 = vmatmul.mubr.f32.gmra.mrb[0].mxu0 %v1304
      %v1405 = vpop.f32.mrb[0].mxu0
      %v1406 = vadd.f32 0.0, %v1405
      %v1407 = vpop.f32.mrb[0].mxu0
      %1408 = vmatprep.mubr.f32.mxu0 0.0
      %1409 = vmatmul.mubr.f32.gmra.mrb[0].mxu0 %v1307
      %v1410 = vpop.f32.mrb[0].mxu0
      %v1411 = vadd.f32 0.0, %v1410
      %v1412 = vpop.f32.mrb[0].mxu0
      %1413 = vmatprep.mubr.f32.mxu0 0.0
      %1414 = vmatmul.mubr.f32.gmra.mrb[0].mxu0 %v1310
      %v1415 = vpop.f32.mrb[0].mxu0
      %v1416 = vadd.f32 0.0, %v1415
      %v1417 = vpop.f32.mrb[0].mxu0
      %1418 = vmatprep.mubr.f32.mxu0 0.0
      %1419 = vmatmul.mubr.f32.gmra.mrb[0].mxu0 %v1313
      %v1420 = vpop.f32.mrb[0].mxu0
      %v1421 = vadd.f32 0.0, %v1420
      %v1422 = vpop.f32.mrb[0].mxu0
      %1423 = vmatprep.mubr.f32.mxu0 0.0
      %1424 = vmatmul.mubr.f32.gmra.mrb[0].mxu0 %v1316
      %v1425 = vpop.f32.mrb[0].mxu0
      %v1426 = vadd.f32 0.0, %v1425
      %v1427 = vpop.f32.mrb[0].mxu0
      %1428 = vmatprep.mubr.f32.mxu0 0.0
      %1429 = vmatmul.mubr.f32.gmra.mrb[0].mxu0 %v1319
      %v1430 = vpop.f32.mrb[0].mxu0
      %v1431 = vadd.f32 0.0, %v1430
      %v1432 = vpop.f32.mrb[0].mxu0
      %1433 = vmatprep.mubr.f32.mxu0 0.0
      %1434 = vmatmul.mubr.f32.gmra.mrb[0].mxu0 %v1322
      %v1435 = vpop.f32.mrb[0].mxu0
      %v1436 = vadd.f32 0.0, %v1435
      %v1437 = vpop.f32.mrb[0].mxu0
      %1438 = vdwg.mxu0
      %v1439 = vmul.f32 %v1391, 0.17677669
      %v1440 = vmul.f32 %v1396, 0.17677669
      %v1441 = vmul.f32 %v1401, 0.17677669
      %v1442 = vmul.f32 %v1406, 0.17677669
      %v1443 = vmul.f32 %v1411, 0.17677669
      %v1444 = vmul.f32 %v1416, 0.17677669
      %v1445 = vmul.f32 %v1421, 0.17677669
      %v1446 = vmul.f32 %v1426, 0.17677669
      %v1447 = vmul.f32 %v1431, 0.17677669
      %v1448 = vmul.f32 %v1436, 0.17677669
      %v1449 = vsel %vm603, %v1439, -inf
      %v1450 = vsel %vm603, %v1440, -inf
      %v1451 = vsel %vm603, %v1441, -inf
      %v1452 = vsel %vm603, %v1442, -inf
      %v1453 = vsel %vm603, %v1443, -inf
      %v1454 = vmax.f32 %v1449, %v1453
      %v1455 = vsel %vm603, %v1444, -inf
      %v1456 = vmax.f32 %v1450, %v1455
      %v1457 = vsel %vm603, %v1445, -inf
      %v1458 = vmax.f32 %v1451, %v1457
      %v1459 = vsel %vm603, %v1446, -inf
      %v1460 = vmax.f32 %v1452, %v1459
      %v1461 = vsel %vm603, %v1447, -inf
      %v1462 = vmax.f32 %v1454, %v1461
      %v1463 = vsel %vm618, %v1448, -inf
      %v1464 = vmax.f32 %v1456, %v1463
      %v1465 = vmax.f32 %v1462, %v1464
      %v1466 = vmax.f32 %v1458, %v1460
      %v1467 = vmax.f32 %v1465, %v1466
      %v1468 = vrot.slane %v1467, 4
      %v1469 = vmax.f32 %v1467, %v1468
      %v1470 = vrot.slane %v1469, 2
      %v1471 = vmax.f32 %v1469, %v1470
      %v1472 = vrot.slane %v1471, 1
      %v1473 = vmax.f32 %v1471, %v1472
      %v1474 = vsub.f32 %v1439, %v1473
      %v1475 = vsub.f32 %v1440, %v1473
      %v1476 = vsub.f32 %v1441, %v1473
      %v1477 = vsub.f32 %v1442, %v1473
      %v1478 = vsub.f32 %v1443, %v1473
      %v1479 = vsub.f32 %v1444, %v1473
      %v1480 = vsub.f32 %v1445, %v1473
      %v1481 = vsub.f32 %v1446, %v1473
      %v1482 = vsub.f32 %v1447, %v1473
      %v1483 = vsub.f32 %v1448, %v1473
      %v1484 = vmul.f32 %v1474, 1.442695
      %v1485 = vpow.pop %v1484
      %v1486 = vmul.f32 %v1475, 1.442695
      %v1487 = vpow.pop %v1486
      %v1488 = vmul.f32 %v1476, 1.442695
      %v1489 = vpow.pop %v1488
      %v1490 = vmul.f32 %v1477, 1.442695
      %v1491 = vpow.pop %v1490
      %v1492 = vmul.f32 %v1478, 1.442695
      %v1493 = vpow.pop %v1492
      %v1494 = vmul.f32 %v1479, 1.442695
      %v1495 = vpow.pop %v1494
      %v1496 = vmul.f32 %v1480, 1.442695
      %v1497 = vpow.pop %v1496
      %v1498 = vmul.f32 %v1481, 1.442695
      %v1499 = vpow.pop %v1498
      %v1500 = vmul.f32 %v1482, 1.442695
      %v1501 = vpow.pop %v1500
      %v1502 = vmul.f32 %v1483, 1.442695
      %v1503 = vpow.pop %v1502
      %v1504 = vsel %vm603, %v1485, 0.0
      %v1505 = vsel %vm603, %v1487, 0.0
      %v1506 = vadd.f32 %v1504, %v1505
      %v1507 = vsel %vm603, %v1489, 0.0
      %v1508 = vadd.f32 %v1506, %v1507
      %v1509 = vsel %vm603, %v1491, 0.0
      %v1510 = vadd.f32 %v1508, %v1509
      %v1511 = vsel %vm603, %v1493, 0.0
      %v1512 = vadd.f32 %v1510, %v1511
      %v1513 = vsel %vm603, %v1495, 0.0
      %v1514 = vadd.f32 %v1512, %v1513
      %v1515 = vsel %vm603, %v1497, 0.0
      %v1516 = vadd.f32 %v1514, %v1515
      %v1517 = vsel %vm603, %v1499, 0.0
      %v1518 = vadd.f32 %v1516, %v1517
      %v1519 = vsel %vm603, %v1501, 0.0
      %v1520 = vadd.f32 %v1518, %v1519
      %v1521 = vsel %vm618, %v1503, 0.0
      %v1522 = vadd.f32 %v1520, %v1521
      %v1523 = vrot.slane %v1522, 4
      %v1524 = vadd.f32 %v1522, %v1523
      %v1525 = vrot.slane %v1524, 2
      %v1526 = vadd.f32 %v1524, %v1525
      %v1527 = vrot.slane %v1526, 1
      %v1528 = vadd.f32 %v1526, %v1527
      %v1529 = vrcp.pop %v1528
      %v1530 = vmul.f32 %v1485, %v1529
      %v1531 = vmul.f32 %v1487, %v1529
      %v1532 = vmul.f32 %v1489, %v1529
      %v1533 = vmul.f32 %v1491, %v1529
      %v1534 = vmul.f32 %v1493, %v1529
      %v1535 = vmul.f32 %v1495, %v1529
      %v1536 = vmul.f32 %v1497, %v1529
      %v1537 = vmul.f32 %v1499, %v1529
      %v1538 = vmul.f32 %v1501, %v1529
      %v1539 = vmul.f32 %v1503, %v1529
      %1540 = vrot.lane.b32.xlu0 %v1282, 32
      %v1541 = vpop.permute.xlu0 %1540
      %v1543 = vmul.f32 %v412, %v1541
      %v1544 = vmul.f32 %v413, %v1541
      %1547 = vrot.lane.b32.xlu0 %v1543, 96
      %v1548 = vpop.permute.xlu0 %1547
      %1549 = vrot.lane.b32.xlu0 %v1544, 96
      %v1550 = vpop.permute.xlu0 %1549
      %v1554 = vsel %vm603, %v1530, 0
      %v1557 = vsel %vm603, %v1531, 0
      %v1560 = vsel %vm603, %v1532, 0
      %v1563 = vsel %vm603, %v1533, 0
      %v1566 = vsel %vm603, %v1534, 0
      %v1569 = vsel %vm603, %v1535, 0
      %v1572 = vsel %vm603, %v1536, 0
      %v1575 = vsel %vm603, %v1537, 0
      %v1578 = vsel %vm603, %v1538, 0
      %v1581 = vsel %vm603, %v1539, 0
      %1583 = vmatprep.subr.mxu0 0.0
      %1584 = vmatpush1.msra.mxu0 %v1548
      %1585 = vmatprep.subr.mxu0 0.0
      %1586 = vmatpush1.msra.mxu0 %v1550
      %1587 = vmatprep.subr.mxu0 0.0
      %1588 = vmatpush1.msra.mxu0 0.0
      %1589 = vmatprep.subr.mxu0 0.0
      %1590 = vmatpush1.msra.mxu0 0.0
      %1591 = vmatprep.subr.mxu0 0.0
      %1592 = vmatpush1.msra.mxu0 0.0
      %1593 = vmatprep.subr.mxu0 0.0
      %1594 = vmatpush1.msra.mxu0 0.0
      %1595 = vmatprep.subr.mxu0 0.0
      %1596 = vmatpush1.msra.mxu0 0.0
      %1597 = vmatprep.subr.mxu0 0.0
      %1598 = vmatpush1.msra.mxu0 0.0
      %1599 = vmatprep.subr.mxu0 0.0
      %1600 = vmatpush1.msra.mxu0 0.0
      %1601 = vmatprep.subr.mxu0 0.0
      %1602 = vmatpush1.msra.mxu0 0.0
      %1603 = vmatprep.subr.mxu0 0.0
      %1604 = vmatpush1.msra.mxu0 0.0
      %1605 = vmatprep.subr.mxu0 0.0
      %1606 = vmatpush1.msra.mxu0 0.0
      %1607 = vmatprep.subr.mxu0 0.0
      %1608 = vmatpush1.msra.mxu0 0.0
      %1609 = vmatprep.subr.mxu0 0.0
      %1610 = vmatpush1.msra.mxu0 0.0
      %1611 = vmatprep.subr.mxu0 0.0
      %1612 = vmatpush1.msra.mxu0 0.0
      %1613 = vmatprep.subr.mxu0 0.0
      %1614 = vmatpush1.msra.mxu0 0.0
      %1615 = vmatprep.subr.mxu0 0.0
      %1616 = vmatpush1.msra.mxu0 0.0
      %1617 = vmatprep.subr.mxu0 0.0
      %1618 = vmatpush1.msra.mxu0 0.0
      %1619 = vmatprep.subr.mxu0 0.0
      %1620 = vmatpush1.msra.mxu0 0.0
      %1621 = vmatprep.subr.mxu0 0.0
      %1622 = vmatpush1.msra.mxu0 0.0
      %1623 = vmatprep.subr.mxu0 0.0
      %1624 = vmatpush1.msra.mxu0 0.0
      %1625 = vmatprep.subr.mxu0 0.0
      %1626 = vmatpush1.msra.mxu0 0.0
      %1627 = vmatprep.subr.mxu0 0.0
      %1628 = vmatpush1.msra.mxu0 0.0
      %1629 = vmatprep.subr.mxu0 0.0
      %1630 = vmatpush1.msra.mxu0 0.0
      %1631 = vmatprep.subr.mxu0 0.0
      %1632 = vmatpush1.msra.mxu0 0.0
      %1633 = vmatprep.subr.mxu0 0.0
      %1634 = vmatpush1.msra.mxu0 0.0
      %1635 = vmatprep.subr.mxu0 0.0
      %1636 = vmatpush1.msra.mxu0 0.0
      %1637 = vmatprep.subr.mxu0 0.0
      %1638 = vmatpush1.msra.mxu0 0.0
      %1639 = vmatprep.subr.mxu0 0.0
      %1640 = vmatpush1.msra.mxu0 0.0
      %1641 = vmatprep.subr.mxu0 0.0
      %1642 = vmatpush1.msra.mxu0 0.0
      %1643 = vmatprep.subr.mxu0 0.0
      %1644 = vmatpush1.msra.mxu0 0.0
      %1645 = vmatprep.subr.mxu0 0.0
      %1646 = vmatpush1.msra.mxu0 0.0
      %1647 = vmatprep.mubr.f32.mxu0 0.0
      %1648 = vmatmul.mubr.f32.gmra.mrb[0].mxu0 %v1554
      %v1649 = vpop.f32.mrb[0].mxu0
      %v1650 = vadd.f32 0.0, %v1649
      %v1651 = vpop.f32.mrb[0].mxu0
      %1652 = vmatprep.mubr.f32.mxu0 0.0
      %1653 = vmatmul.mubr.f32.gmra.mrb[0].mxu0 %v1557
      %v1654 = vpop.f32.mrb[0].mxu0
      %v1655 = vadd.f32 0.0, %v1654
      %v1656 = vpop.f32.mrb[0].mxu0
      %1657 = vmatprep.mubr.f32.mxu0 0.0
      %1658 = vmatmul.mubr.f32.gmra.mrb[0].mxu0 %v1560
      %v1659 = vpop.f32.mrb[0].mxu0
      %v1660 = vadd.f32 0.0, %v1659
      %v1661 = vpop.f32.mrb[0].mxu0
      %1662 = vmatprep.mubr.f32.mxu0 0.0
      %1663 = vmatmul.mubr.f32.gmra.mrb[0].mxu0 %v1563
      %v1664 = vpop.f32.mrb[0].mxu0
      %v1665 = vadd.f32 0.0, %v1664
      %v1666 = vpop.f32.mrb[0].mxu0
      %1667 = vmatprep.mubr.f32.mxu0 0.0
      %1668 = vmatmul.mubr.f32.gmra.mrb[0].mxu0 %v1566
      %v1669 = vpop.f32.mrb[0].mxu0
      %v1670 = vadd.f32 0.0, %v1669
      %v1671 = vpop.f32.mrb[0].mxu0
      %1672 = vmatprep.mubr.f32.mxu0 0.0
      %1673 = vmatmul.mubr.f32.gmra.mrb[0].mxu0 %v1569
      %v1674 = vpop.f32.mrb[0].mxu0
      %v1675 = vadd.f32 0.0, %v1674
      %v1676 = vpop.f32.mrb[0].mxu0
      %1677 = vmatprep.mubr.f32.mxu0 0.0
      %1678 = vmatmul.mubr.f32.gmra.mrb[0].mxu0 %v1572
      %v1679 = vpop.f32.mrb[0].mxu0
      %v1680 = vadd.f32 0.0, %v1679
      %v1681 = vpop.f32.mrb[0].mxu0
      %1682 = vmatprep.mubr.f32.mxu0 0.0
      %1683 = vmatmul.mubr.f32.gmra.mrb[0].mxu0 %v1575
      %v1684 = vpop.f32.mrb[0].mxu0
      %v1685 = vadd.f32 0.0, %v1684
      %v1686 = vpop.f32.mrb[0].mxu0
      %1687 = vmatprep.mubr.f32.mxu0 0.0
      %1688 = vmatmul.mubr.f32.gmra.mrb[0].mxu0 %v1578
      %v1689 = vpop.f32.mrb[0].mxu0
      %v1690 = vadd.f32 0.0, %v1689
      %v1691 = vpop.f32.mrb[0].mxu0
      %1692 = vmatprep.mubr.f32.mxu0 0.0
      %1693 = vmatmul.mubr.f32.gmra.mrb[0].mxu0 %v1581
      %v1694 = vpop.f32.mrb[0].mxu0
      %v1695 = vadd.f32 0.0, %v1694
      %v1696 = vpop.f32.mrb[0].mxu0
      %1697 = vdwg.mxu0
      %v1698 = vadd.f32 %v1228, %v1650
      %v1699 = vadd.f32 %v1233, %v1655
      %v1700 = vadd.f32 %v1238, %v1660
      %v1701 = vadd.f32 %v1243, %v1665
      %v1702 = vadd.f32 %v1248, %v1670
      %v1703 = vadd.f32 %v1253, %v1675
      %v1704 = vadd.f32 %v1258, %v1680
      %v1705 = vadd.f32 %v1263, %v1685
      %v1706 = vadd.f32 %v1268, %v1690
      %v1707 = vadd.f32 %v1273, %v1695
      %s1708 = scalar_lea.vmem %s3, 3
      %v1709 = vld [vmem:[%s1708] sm:$0x1]
      %v1711 = vlaneseq
      %v1712 = vshrl.u32 %v1711, 7
      %v1713 = vsub.s32 0, %v1712
      %v1714 = vrot.slane %v1709, %v1713
      %v1716 = vmul.f32 %v414, %v1714
      %v1717 = vmul.f32 %v415, %v1714
      %v1718 = vmul.f32 %v416, %v1714
      %v1719 = vmul.f32 %v417, %v1714
      %v1720 = vmul.f32 %v418, %v1714
      %v1721 = vmul.f32 %v419, %v1714
      %v1722 = vmul.f32 %v420, %v1714
      %v1723 = vmul.f32 %v421, %v1714
      %v1724 = vmul.f32 %v422, %v1714
      %v1725 = vmul.f32 %v423, %v1714
      %v1727 = vsel %vm441, %v1716, 0
      %v1730 = vsel %vm441, %v1717, 0
      %v1733 = vsel %vm441, %v1718, 0
      %v1736 = vsel %vm441, %v1719, 0
      %v1739 = vsel %vm441, %v1720, 0
      %v1742 = vsel %vm441, %v1721, 0
      %v1745 = vsel %vm441, %v1722, 0
      %v1748 = vsel %vm441, %v1723, 0
      %v1751 = vsel %vm441, %v1724, 0
      %v1754 = vsel %vm441, %v1725, 0
      %1756 = vmatprep.subr.mxu0 0.0
      %1757 = vmatpush1.xpose.msra.mxu0 %v473
      %1758 = vmatprep.subr.mxu0 0.0
      %1759 = vmatpush1.xpose.msra.mxu0 %v476
      %1760 = vmatprep.subr.mxu0 0.0
      %1761 = vmatpush1.xpose.msra.mxu0 0.0
      %1762 = vmatprep.subr.mxu0 0.0
      %1763 = vmatpush1.xpose.msra.mxu0 0.0
      %1764 = vmatprep.subr.mxu0 0.0
      %1765 = vmatpush1.xpose.msra.mxu0 0.0
      %1766 = vmatprep.subr.mxu0 0.0
      %1767 = vmatpush1.xpose.msra.mxu0 0.0
      %1768 = vmatprep.subr.mxu0 0.0
      %1769 = vmatpush1.xpose.msra.mxu0 0.0
      %1770 = vmatprep.subr.mxu0 0.0
      %1771 = vmatpush1.xpose.msra.mxu0 0.0
      %1772 = vmatprep.subr.mxu0 0.0
      %1773 = vmatpush1.xpose.msra.mxu0 0.0
      %1774 = vmatprep.subr.mxu0 0.0
      %1775 = vmatpush1.xpose.msra.mxu0 0.0
      %1776 = vmatprep.subr.mxu0 0.0
      %1777 = vmatpush1.xpose.msra.mxu0 0.0
      %1778 = vmatprep.subr.mxu0 0.0
      %1779 = vmatpush1.xpose.msra.mxu0 0.0
      %1780 = vmatprep.subr.mxu0 0.0
      %1781 = vmatpush1.xpose.msra.mxu0 0.0
      %1782 = vmatprep.subr.mxu0 0.0
      %1783 = vmatpush1.xpose.msra.mxu0 0.0
      %1784 = vmatprep.subr.mxu0 0.0
      %1785 = vmatpush1.xpose.msra.mxu0 0.0
      %1786 = vmatprep.subr.mxu0 0.0
      %1787 = vmatpush1.xpose.msra.mxu0 0.0
      %1788 = vmatprep.subr.mxu0 0.0
      %1789 = vmatpush1.xpose.msra.mxu0 0.0
      %1790 = vmatprep.subr.mxu0 0.0
      %1791 = vmatpush1.xpose.msra.mxu0 0.0
      %1792 = vmatprep.subr.mxu0 0.0
      %1793 = vmatpush1.xpose.msra.mxu0 0.0
      %1794 = vmatprep.subr.mxu0 0.0
      %1795 = vmatpush1.xpose.msra.mxu0 0.0
      %1796 = vmatprep.subr.mxu0 0.0
      %1797 = vmatpush1.xpose.msra.mxu0 0.0
      %1798 = vmatprep.subr.mxu0 0.0
      %1799 = vmatpush1.xpose.msra.mxu0 0.0
      %1800 = vmatprep.subr.mxu0 0.0
      %1801 = vmatpush1.xpose.msra.mxu0 0.0
      %1802 = vmatprep.subr.mxu0 0.0
      %1803 = vmatpush1.xpose.msra.mxu0 0.0
      %1804 = vmatprep.subr.mxu0 0.0
      %1805 = vmatpush1.xpose.msra.mxu0 0.0
      %1806 = vmatprep.subr.mxu0 0.0
      %1807 = vmatpush1.xpose.msra.mxu0 0.0
      %1808 = vmatprep.subr.mxu0 0.0
      %1809 = vmatpush1.xpose.msra.mxu0 0.0
      %1810 = vmatprep.subr.mxu0 0.0
      %1811 = vmatpush1.xpose.msra.mxu0 0.0
      %1812 = vmatprep.subr.mxu0 0.0
      %1813 = vmatpush1.xpose.msra.mxu0 0.0
      %1814 = vmatprep.subr.mxu0 0.0
      %1815 = vmatpush1.xpose.msra.mxu0 0.0
      %1816 = vmatprep.subr.mxu0 0.0
      %1817 = vmatpush1.xpose.msra.mxu0 0.0
      %1818 = vmatprep.subr.mxu0 0.0
      %1819 = vmatpush1.xpose.msra.mxu0 0.0
      %1820 = vmatprep.mubr.f32.mxu0 0.0
      %1821 = vmatmul.mubr.f32.gmra.mrb[0].mxu0 %v1727
      %v1822 = vpop.f32.mrb[0].mxu0
      %v1823 = vadd.f32 0.0, %v1822
      %v1824 = vpop.f32.mrb[0].mxu0
      %1825 = vmatprep.mubr.f32.mxu0 0.0
      %1826 = vmatmul.mubr.f32.gmra.mrb[0].mxu0 %v1730
      %v1827 = vpop.f32.mrb[0].mxu0
      %v1828 = vadd.f32 0.0, %v1827
      %v1829 = vpop.f32.mrb[0].mxu0
      %1830 = vmatprep.mubr.f32.mxu0 0.0
      %1831 = vmatmul.mubr.f32.gmra.mrb[0].mxu0 %v1733
      %v1832 = vpop.f32.mrb[0].mxu0
      %v1833 = vadd.f32 0.0, %v1832
      %v1834 = vpop.f32.mrb[0].mxu0
      %1835 = vmatprep.mubr.f32.mxu0 0.0
      %1836 = vmatmul.mubr.f32.gmra.mrb[0].mxu0 %v1736
      %v1837 = vpop.f32.mrb[0].mxu0
      %v1838 = vadd.f32 0.0, %v1837
      %v1839 = vpop.f32.mrb[0].mxu0
      %1840 = vmatprep.mubr.f32.mxu0 0.0
      %1841 = vmatmul.mubr.f32.gmra.mrb[0].mxu0 %v1739
      %v1842 = vpop.f32.mrb[0].mxu0
      %v1843 = vadd.f32 0.0, %v1842
      %v1844 = vpop.f32.mrb[0].mxu0
      %1845 = vmatprep.mubr.f32.mxu0 0.0
      %1846 = vmatmul.mubr.f32.gmra.mrb[0].mxu0 %v1742
      %v1847 = vpop.f32.mrb[0].mxu0
      %v1848 = vadd.f32 0.0, %v1847
      %v1849 = vpop.f32.mrb[0].mxu0
      %1850 = vmatprep.mubr.f32.mxu0 0.0
      %1851 = vmatmul.mubr.f32.gmra.mrb[0].mxu0 %v1745
      %v1852 = vpop.f32.mrb[0].mxu0
      %v1853 = vadd.f32 0.0, %v1852
      %v1854 = vpop.f32.mrb[0].mxu0
      %1855 = vmatprep.mubr.f32.mxu0 0.0
      %1856 = vmatmul.mubr.f32.gmra.mrb[0].mxu0 %v1748
      %v1857 = vpop.f32.mrb[0].mxu0
      %v1858 = vadd.f32 0.0, %v1857
      %v1859 = vpop.f32.mrb[0].mxu0
      %1860 = vmatprep.mubr.f32.mxu0 0.0
      %1861 = vmatmul.mubr.f32.gmra.mrb[0].mxu0 %v1751
      %v1862 = vpop.f32.mrb[0].mxu0
      %v1863 = vadd.f32 0.0, %v1862
      %v1864 = vpop.f32.mrb[0].mxu0
      %1865 = vmatprep.mubr.f32.mxu0 0.0
      %1866 = vmatmul.mubr.f32.gmra.mrb[0].mxu0 %v1754
      %v1867 = vpop.f32.mrb[0].mxu0
      %v1868 = vadd.f32 0.0, %v1867
      %v1869 = vpop.f32.mrb[0].mxu0
      %1870 = vdwg.mxu0
      %v1871 = vmul.f32 %v1823, 0.17677669
      %v1872 = vmul.f32 %v1828, 0.17677669
      %v1873 = vmul.f32 %v1833, 0.17677669
      %v1874 = vmul.f32 %v1838, 0.17677669
      %v1875 = vmul.f32 %v1843, 0.17677669
      %v1876 = vmul.f32 %v1848, 0.17677669
      %v1877 = vmul.f32 %v1853, 0.17677669
      %v1878 = vmul.f32 %v1858, 0.17677669
      %v1879 = vmul.f32 %v1863, 0.17677669
      %v1880 = vmul.f32 %v1868, 0.17677669
      %v1881 = vsel %vm603, %v1871, -inf
      %v1882 = vsel %vm603, %v1872, -inf
      %v1883 = vsel %vm603, %v1873, -inf
      %v1884 = vsel %vm603, %v1874, -inf
      %v1885 = vsel %vm603, %v1875, -inf
      %v1886 = vmax.f32 %v1881, %v1885
      %v1887 = vsel %vm603, %v1876, -inf
      %v1888 = vmax.f32 %v1882, %v1887
      %v1889 = vsel %vm603, %v1877, -inf
      %v1890 = vmax.f32 %v1883, %v1889
      %v1891 = vsel %vm603, %v1878, -inf
      %v1892 = vmax.f32 %v1884, %v1891
      %v1893 = vsel %vm603, %v1879, -inf
      %v1894 = vmax.f32 %v1886, %v1893
      %v1895 = vsel %vm618, %v1880, -inf
      %v1896 = vmax.f32 %v1888, %v1895
      %v1897 = vmax.f32 %v1894, %v1896
      %v1898 = vmax.f32 %v1890, %v1892
      %v1899 = vmax.f32 %v1897, %v1898
      %v1900 = vrot.slane %v1899, 4
      %v1901 = vmax.f32 %v1899, %v1900
      %v1902 = vrot.slane %v1901, 2
      %v1903 = vmax.f32 %v1901, %v1902
      %v1904 = vrot.slane %v1903, 1
      %v1905 = vmax.f32 %v1903, %v1904
      %v1906 = vsub.f32 %v1871, %v1905
      %v1907 = vsub.f32 %v1872, %v1905
      %v1908 = vsub.f32 %v1873, %v1905
      %v1909 = vsub.f32 %v1874, %v1905
      %v1910 = vsub.f32 %v1875, %v1905
      %v1911 = vsub.f32 %v1876, %v1905
      %v1912 = vsub.f32 %v1877, %v1905
      %v1913 = vsub.f32 %v1878, %v1905
      %v1914 = vsub.f32 %v1879, %v1905
      %v1915 = vsub.f32 %v1880, %v1905
      %v1916 = vmul.f32 %v1906, 1.442695
      %v1917 = vpow.pop %v1916
      %v1918 = vmul.f32 %v1907, 1.442695
      %v1919 = vpow.pop %v1918
      %v1920 = vmul.f32 %v1908, 1.442695
      %v1921 = vpow.pop %v1920
      %v1922 = vmul.f32 %v1909, 1.442695
      %v1923 = vpow.pop %v1922
      %v1924 = vmul.f32 %v1910, 1.442695
      %v1925 = vpow.pop %v1924
      %v1926 = vmul.f32 %v1911, 1.442695
      %v1927 = vpow.pop %v1926
      %v1928 = vmul.f32 %v1912, 1.442695
      %v1929 = vpow.pop %v1928
      %v1930 = vmul.f32 %v1913, 1.442695
      %v1931 = vpow.pop %v1930
      %v1932 = vmul.f32 %v1914, 1.442695
      %v1933 = vpow.pop %v1932
      %v1934 = vmul.f32 %v1915, 1.442695
      %v1935 = vpow.pop %v1934
      %v1936 = vsel %vm603, %v1917, 0.0
      %v1937 = vsel %vm603, %v1919, 0.0
      %v1938 = vadd.f32 %v1936, %v1937
      %v1939 = vsel %vm603, %v1921, 0.0
      %v1940 = vadd.f32 %v1938, %v1939
      %v1941 = vsel %vm603, %v1923, 0.0
      %v1942 = vadd.f32 %v1940, %v1941
      %v1943 = vsel %vm603, %v1925, 0.0
      %v1944 = vadd.f32 %v1942, %v1943
      %v1945 = vsel %vm603, %v1927, 0.0
      %v1946 = vadd.f32 %v1944, %v1945
      %v1947 = vsel %vm603, %v1929, 0.0
      %v1948 = vadd.f32 %v1946, %v1947
      %v1949 = vsel %vm603, %v1931, 0.0
      %v1950 = vadd.f32 %v1948, %v1949
      %v1951 = vsel %vm603, %v1933, 0.0
      %v1952 = vadd.f32 %v1950, %v1951
      %v1953 = vsel %vm618, %v1935, 0.0
      %v1954 = vadd.f32 %v1952, %v1953
      %v1955 = vrot.slane %v1954, 4
      %v1956 = vadd.f32 %v1954, %v1955
      %v1957 = vrot.slane %v1956, 2
      %v1958 = vadd.f32 %v1956, %v1957
      %v1959 = vrot.slane %v1958, 1
      %v1960 = vadd.f32 %v1958, %v1959
      %v1961 = vrcp.pop %v1960
      %v1962 = vmul.f32 %v1917, %v1961
      %v1963 = vmul.f32 %v1919, %v1961
      %v1964 = vmul.f32 %v1921, %v1961
      %v1965 = vmul.f32 %v1923, %v1961
      %v1966 = vmul.f32 %v1925, %v1961
      %v1967 = vmul.f32 %v1927, %v1961
      %v1968 = vmul.f32 %v1929, %v1961
      %v1969 = vmul.f32 %v1931, %v1961
      %v1970 = vmul.f32 %v1933, %v1961
      %v1971 = vmul.f32 %v1935, %v1961
      %1972 = vrot.lane.b32.xlu0 %v1714, 32
      %v1973 = vpop.permute.xlu0 %1972
      %v1975 = vmul.f32 %v412, %v1973
      %v1976 = vmul.f32 %v413, %v1973
      %1979 = vrot.lane.b32.xlu0 %v1975, 96
      %v1980 = vpop.permute.xlu0 %1979
      %1981 = vrot.lane.b32.xlu0 %v1976, 96
      %v1982 = vpop.permute.xlu0 %1981
      %v1986 = vsel %vm603, %v1962, 0
      %v1989 = vsel %vm603, %v1963, 0
      %v1992 = vsel %vm603, %v1964, 0
      %v1995 = vsel %vm603, %v1965, 0
      %v1998 = vsel %vm603, %v1966, 0
      %v2001 = vsel %vm603, %v1967, 0
      %v2004 = vsel %vm603, %v1968, 0
      %v2007 = vsel %vm603, %v1969, 0
      %v2010 = vsel %vm603, %v1970, 0
      %v2013 = vsel %vm603, %v1971, 0
      %2015 = vmatprep.subr.mxu0 0.0
      %2016 = vmatpush1.msra.mxu0 %v1980
      %2017 = vmatprep.subr.mxu0 0.0
      %2018 = vmatpush1.msra.mxu0 %v1982
      %2019 = vmatprep.subr.mxu0 0.0
      %2020 = vmatpush1.msra.mxu0 0.0
      %2021 = vmatprep.subr.mxu0 0.0
      %2022 = vmatpush1.msra.mxu0 0.0
      %2023 = vmatprep.subr.mxu0 0.0
      %2024 = vmatpush1.msra.mxu0 0.0
      %2025 = vmatprep.subr.mxu0 0.0
      %2026 = vmatpush1.msra.mxu0 0.0
      %2027 = vmatprep.subr.mxu0 0.0
      %2028 = vmatpush1.msra.mxu0 0.0
      %2029 = vmatprep.subr.mxu0 0.0
      %2030 = vmatpush1.msra.mxu0 0.0
      %2031 = vmatprep.subr.mxu0 0.0
      %2032 = vmatpush1.msra.mxu0 0.0
      %2033 = vmatprep.subr.mxu0 0.0
      %2034 = vmatpush1.msra.mxu0 0.0
      %2035 = vmatprep.subr.mxu0 0.0
      %2036 = vmatpush1.msra.mxu0 0.0
      %2037 = vmatprep.subr.mxu0 0.0
      %2038 = vmatpush1.msra.mxu0 0.0
      %2039 = vmatprep.subr.mxu0 0.0
      %2040 = vmatpush1.msra.mxu0 0.0
      %2041 = vmatprep.subr.mxu0 0.0
      %2042 = vmatpush1.msra.mxu0 0.0
      %2043 = vmatprep.subr.mxu0 0.0
      %2044 = vmatpush1.msra.mxu0 0.0
      %2045 = vmatprep.subr.mxu0 0.0
      %2046 = vmatpush1.msra.mxu0 0.0
      %2047 = vmatprep.subr.mxu0 0.0
      %2048 = vmatpush1.msra.mxu0 0.0
      %2049 = vmatprep.subr.mxu0 0.0
      %2050 = vmatpush1.msra.mxu0 0.0
      %2051 = vmatprep.subr.mxu0 0.0
      %2052 = vmatpush1.msra.mxu0 0.0
      %2053 = vmatprep.subr.mxu0 0.0
      %2054 = vmatpush1.msra.mxu0 0.0
      %2055 = vmatprep.subr.mxu0 0.0
      %2056 = vmatpush1.msra.mxu0 0.0
      %2057 = vmatprep.subr.mxu0 0.0
      %2058 = vmatpush1.msra.mxu0 0.0
      %2059 = vmatprep.subr.mxu0 0.0
      %2060 = vmatpush1.msra.mxu0 0.0
      %2061 = vmatprep.subr.mxu0 0.0
      %2062 = vmatpush1.msra.mxu0 0.0
      %2063 = vmatprep.subr.mxu0 0.0
      %2064 = vmatpush1.msra.mxu0 0.0
      %2065 = vmatprep.subr.mxu0 0.0
      %2066 = vmatpush1.msra.mxu0 0.0
      %2067 = vmatprep.subr.mxu0 0.0
      %2068 = vmatpush1.msra.mxu0 0.0
      %2069 = vmatprep.subr.mxu0 0.0
      %2070 = vmatpush1.msra.mxu0 0.0
      %2071 = vmatprep.subr.mxu0 0.0
      %2072 = vmatpush1.msra.mxu0 0.0
      %2073 = vmatprep.subr.mxu0 0.0
      %2074 = vmatpush1.msra.mxu0 0.0
      %2075 = vmatprep.subr.mxu0 0.0
      %2076 = vmatpush1.msra.mxu0 0.0
      %2077 = vmatprep.subr.mxu0 0.0
      %2078 = vmatpush1.msra.mxu0 0.0
      %2079 = vmatprep.mubr.f32.mxu0 0.0
      %2080 = vmatmul.mubr.f32.gmra.mrb[0].mxu0 %v1986
      %v2081 = vpop.f32.mrb[0].mxu0
      %v2082 = vadd.f32 0.0, %v2081
      %v2083 = vpop.f32.mrb[0].mxu0
      %2084 = vmatprep.mubr.f32.mxu0 0.0
      %2085 = vmatmul.mubr.f32.gmra.mrb[0].mxu0 %v1989
      %v2086 = vpop.f32.mrb[0].mxu0
      %v2087 = vadd.f32 0.0, %v2086
      %v2088 = vpop.f32.mrb[0].mxu0
      %2089 = vmatprep.mubr.f32.mxu0 0.0
      %2090 = vmatmul.mubr.f32.gmra.mrb[0].mxu0 %v1992
      %v2091 = vpop.f32.mrb[0].mxu0
      %v2092 = vadd.f32 0.0, %v2091
      %v2093 = vpop.f32.mrb[0].mxu0
      %2094 = vmatprep.mubr.f32.mxu0 0.0
      %2095 = vmatmul.mubr.f32.gmra.mrb[0].mxu0 %v1995
      %v2096 = vpop.f32.mrb[0].mxu0
      %v2097 = vadd.f32 0.0, %v2096
      %v2098 = vpop.f32.mrb[0].mxu0
      %2099 = vmatprep.mubr.f32.mxu0 0.0
      %2100 = vmatmul.mubr.f32.gmra.mrb[0].mxu0 %v1998
      %v2101 = vpop.f32.mrb[0].mxu0
      %v2102 = vadd.f32 0.0, %v2101
      %v2103 = vpop.f32.mrb[0].mxu0
      %2104 = vmatprep.mubr.f32.mxu0 0.0
      %2105 = vmatmul.mubr.f32.gmra.mrb[0].mxu0 %v2001
      %v2106 = vpop.f32.mrb[0].mxu0
      %v2107 = vadd.f32 0.0, %v2106
      %v2108 = vpop.f32.mrb[0].mxu0
      %2109 = vmatprep.mubr.f32.mxu0 0.0
      %2110 = vmatmul.mubr.f32.gmra.mrb[0].mxu0 %v2004
      %v2111 = vpop.f32.mrb[0].mxu0
      %v2112 = vadd.f32 0.0, %v2111
      %v2113 = vpop.f32.mrb[0].mxu0
      %2114 = vmatprep.mubr.f32.mxu0 0.0
      %2115 = vmatmul.mubr.f32.gmra.mrb[0].mxu0 %v2007
      %v2116 = vpop.f32.mrb[0].mxu0
      %v2117 = vadd.f32 0.0, %v2116
      %v2118 = vpop.f32.mrb[0].mxu0
      %2119 = vmatprep.mubr.f32.mxu0 0.0
      %2120 = vmatmul.mubr.f32.gmra.mrb[0].mxu0 %v2010
      %v2121 = vpop.f32.mrb[0].mxu0
      %v2122 = vadd.f32 0.0, %v2121
      %v2123 = vpop.f32.mrb[0].mxu0
      %2124 = vmatprep.mubr.f32.mxu0 0.0
      %2125 = vmatmul.mubr.f32.gmra.mrb[0].mxu0 %v2013
      %v2126 = vpop.f32.mrb[0].mxu0
      %v2127 = vadd.f32 0.0, %v2126
      %v2128 = vpop.f32.mrb[0].mxu0
      %2129 = vdwg.mxu0
      %v2130 = vadd.f32 %v1698, %v2082
      %v2131 = vadd.f32 %v1699, %v2087
      %v2132 = vadd.f32 %v1700, %v2092
      %v2133 = vadd.f32 %v1701, %v2097
      %v2134 = vadd.f32 %v1702, %v2102
      %v2135 = vadd.f32 %v1703, %v2107
      %v2136 = vadd.f32 %v1704, %v2112
      %v2137 = vadd.f32 %v1705, %v2117
      %v2138 = vadd.f32 %v1706, %v2122
      %v2139 = vadd.f32 %v1707, %v2127
      %v2140 = vadd.f32 %v414, %v2130
      %v2141 = vadd.f32 %v415, %v2131
      %v2142 = vadd.f32 %v416, %v2132
      %v2143 = vadd.f32 %v417, %v2133
      %v2144 = vadd.f32 %v418, %v2134
      %v2145 = vadd.f32 %v419, %v2135
      %v2146 = vadd.f32 %v420, %v2136
      %v2147 = vadd.f32 %v421, %v2137
      %v2148 = vadd.f32 %v422, %v2138
      %v2149 = vadd.f32 %v423, %v2139
      %v2150 = vld [vmem:[%s4] sm:$0xff]
      %v2151 = vld [vmem:[%s4 + $0x8] sm:$0xff]
      %v2152 = vld [vmem:[%s4 + $0x10] sm:$0xff]
      %v2153 = vld [vmem:[%s4 + $0x18] sm:$0xff]
      %v2154 = vld [vmem:[%s5] sm:$0x1]
      %v2156 = vlaneseq
      %v2157 = vshrl.u32 %v2156, 7
      %v2158 = vsub.s32 0, %v2157
      %v2159 = vrot.slane %v2154, %v2158
      %v2162 = vsel %vm441, %v2140, 0
      %v2165 = vsel %vm441, %v2141, 0
      %v2168 = vsel %vm441, %v2142, 0
      %v2171 = vsel %vm441, %v2143, 0
      %v2174 = vsel %vm441, %v2144, 0
      %v2177 = vsel %vm441, %v2145, 0
      %v2180 = vsel %vm441, %v2146, 0
      %v2183 = vsel %vm441, %v2147, 0
      %v2186 = vsel %vm441, %v2148, 0
      %v2189 = vsel %vm441, %v2149, 0
      %2191 = vmatprep.subr.mxu0 0.0
      %2192 = vmatpush1.msra.mxu0 %v2150
      %2193 = vmatprep.subr.mxu0 0.0
      %2194 = vmatpush1.msra.mxu0 %v2151
      %2195 = vmatprep.subr.mxu0 0.0
      %2196 = vmatpush1.msra.mxu0 %v2152
      %2197 = vmatprep.subr.mxu0 0.0
      %2198 = vmatpush1.msra.mxu0 %v2153
      %2199 = vmatprep.subr.mxu0 0.0
      %2200 = vmatpush1.msra.mxu0 0.0
      %2201 = vmatprep.subr.mxu0 0.0
      %2202 = vmatpush1.msra.mxu0 0.0
      %2203 = vmatprep.subr.mxu0 0.0
      %2204 = vmatpush1.msra.mxu0 0.0
      %2205 = vmatprep.subr.mxu0 0.0
      %2206 = vmatpush1.msra.mxu0 0.0
      %2207 = vmatprep.subr.mxu0 0.0
      %2208 = vmatpush1.msra.mxu0 0.0
      %2209 = vmatprep.subr.mxu0 0.0
      %2210 = vmatpush1.msra.mxu0 0.0
      %2211 = vmatprep.subr.mxu0 0.0
      %2212 = vmatpush1.msra.mxu0 0.0
      %2213 = vmatprep.subr.mxu0 0.0
      %2214 = vmatpush1.msra.mxu0 0.0
      %2215 = vmatprep.subr.mxu0 0.0
      %2216 = vmatpush1.msra.mxu0 0.0
      %2217 = vmatprep.subr.mxu0 0.0
      %2218 = vmatpush1.msra.mxu0 0.0
      %2219 = vmatprep.subr.mxu0 0.0
      %2220 = vmatpush1.msra.mxu0 0.0
      %2221 = vmatprep.subr.mxu0 0.0
      %2222 = vmatpush1.msra.mxu0 0.0
      %2223 = vmatprep.subr.mxu0 0.0
      %2224 = vmatpush1.msra.mxu0 0.0
      %2225 = vmatprep.subr.mxu0 0.0
      %2226 = vmatpush1.msra.mxu0 0.0
      %2227 = vmatprep.subr.mxu0 0.0
      %2228 = vmatpush1.msra.mxu0 0.0
      %2229 = vmatprep.subr.mxu0 0.0
      %2230 = vmatpush1.msra.mxu0 0.0
      %2231 = vmatprep.subr.mxu0 0.0
      %2232 = vmatpush1.msra.mxu0 0.0
      %2233 = vmatprep.subr.mxu0 0.0
      %2234 = vmatpush1.msra.mxu0 0.0
      %2235 = vmatprep.subr.mxu0 0.0
      %2236 = vmatpush1.msra.mxu0 0.0
      %2237 = vmatprep.subr.mxu0 0.0
      %2238 = vmatpush1.msra.mxu0 0.0
      %2239 = vmatprep.subr.mxu0 0.0
      %2240 = vmatpush1.msra.mxu0 0.0
      %2241 = vmatprep.subr.mxu0 0.0
      %2242 = vmatpush1.msra.mxu0 0.0
      %2243 = vmatprep.subr.mxu0 0.0
      %2244 = vmatpush1.msra.mxu0 0.0
      %2245 = vmatprep.subr.mxu0 0.0
      %2246 = vmatpush1.msra.mxu0 0.0
      %2247 = vmatprep.subr.mxu0 0.0
      %2248 = vmatpush1.msra.mxu0 0.0
      %2249 = vmatprep.subr.mxu0 0.0
      %2250 = vmatpush1.msra.mxu0 0.0
      %2251 = vmatprep.subr.mxu0 0.0
      %2252 = vmatpush1.msra.mxu0 0.0
      %2253 = vmatprep.subr.mxu0 0.0
      %2254 = vmatpush1.msra.mxu0 0.0
      %2255 = vmatprep.mubr.f32.mxu0 0.0
      %2256 = vmatmul.mubr.f32.gmra.mrb[0].mxu0 %v2162
      %v2257 = vpop.f32.mrb[0].mxu0
      %v2258 = vadd.f32 %v2159, %v2257
      %v2259 = vpop.f32.mrb[0].mxu0
      %2260 = vmatprep.mubr.f32.mxu0 0.0
      %2261 = vmatmul.mubr.f32.gmra.mrb[0].mxu0 %v2165
      %v2262 = vpop.f32.mrb[0].mxu0
      %v2263 = vadd.f32 %v2159, %v2262
      %v2264 = vpop.f32.mrb[0].mxu0
      %2265 = vmatprep.mubr.f32.mxu0 0.0
      %2266 = vmatmul.mubr.f32.gmra.mrb[0].mxu0 %v2168
      %v2267 = vpop.f32.mrb[0].mxu0
      %v2268 = vadd.f32 %v2159, %v2267
      %v2269 = vpop.f32.mrb[0].mxu0
      %2270 = vmatprep.mubr.f32.mxu0 0.0
      %2271 = vmatmul.mubr.f32.gmra.mrb[0].mxu0 %v2171
      %v2272 = vpop.f32.mrb[0].mxu0
      %v2273 = vadd.f32 %v2159, %v2272
      %v2274 = vpop.f32.mrb[0].mxu0
      %2275 = vmatprep.mubr.f32.mxu0 0.0
      %2276 = vmatmul.mubr.f32.gmra.mrb[0].mxu0 %v2174
      %v2277 = vpop.f32.mrb[0].mxu0
      %v2278 = vadd.f32 %v2159, %v2277
      %v2279 = vpop.f32.mrb[0].mxu0
      %2280 = vmatprep.mubr.f32.mxu0 0.0
      %2281 = vmatmul.mubr.f32.gmra.mrb[0].mxu0 %v2177
      %v2282 = vpop.f32.mrb[0].mxu0
      %v2283 = vadd.f32 %v2159, %v2282
      %v2284 = vpop.f32.mrb[0].mxu0
      %2285 = vmatprep.mubr.f32.mxu0 0.0
      %2286 = vmatmul.mubr.f32.gmra.mrb[0].mxu0 %v2180
      %v2287 = vpop.f32.mrb[0].mxu0
      %v2288 = vadd.f32 %v2159, %v2287
      %v2289 = vpop.f32.mrb[0].mxu0
      %2290 = vmatprep.mubr.f32.mxu0 0.0
      %2291 = vmatmul.mubr.f32.gmra.mrb[0].mxu0 %v2183
      %v2292 = vpop.f32.mrb[0].mxu0
      %v2293 = vadd.f32 %v2159, %v2292
      %v2294 = vpop.f32.mrb[0].mxu0
      %2295 = vmatprep.mubr.f32.mxu0 0.0
      %2296 = vmatmul.mubr.f32.gmra.mrb[0].mxu0 %v2186
      %v2297 = vpop.f32.mrb[0].mxu0
      %v2298 = vadd.f32 %v2159, %v2297
      %v2299 = vpop.f32.mrb[0].mxu0
      %2300 = vmatprep.mubr.f32.mxu0 0.0
      %2301 = vmatmul.mubr.f32.gmra.mrb[0].mxu0 %v2189
      %v2302 = vpop.f32.mrb[0].mxu0
      %v2303 = vadd.f32 %v2159, %v2302
      %v2304 = vpop.f32.mrb[0].mxu0
      %2305 = vdwg.mxu0
      %v2306 = vmax.f32 %v2258, 0.0
      %v2307 = vmax.f32 %v2263, 0.0
      %v2308 = vmax.f32 %v2268, 0.0
      %v2309 = vmax.f32 %v2273, 0.0
      %v2310 = vmax.f32 %v2278, 0.0
      %v2311 = vmax.f32 %v2283, 0.0
      %v2312 = vmax.f32 %v2288, 0.0
      %v2313 = vmax.f32 %v2293, 0.0
      %v2314 = vmax.f32 %v2298, 0.0
      %v2315 = vmax.f32 %v2303, 0.0
      %v2316 = vadd.f32 %v2140, %v2306
      %v2317 = vadd.f32 %v2141, %v2307
      %v2318 = vadd.f32 %v2142, %v2308
      %v2319 = vadd.f32 %v2143, %v2309
      %v2320 = vadd.f32 %v2144, %v2310
      %v2321 = vadd.f32 %v2145, %v2311
      %v2322 = vadd.f32 %v2146, %v2312
      %v2323 = vadd.f32 %v2147, %v2313
      %v2324 = vadd.f32 %v2148, %v2314
      %v2325 = vadd.f32 %v2149, %v2315
      %v2326 = vld [vmem:[%s6] sm:$0xff]
      %v2327 = vld [vmem:[%s6 + $0x8] sm:$0xff]
      %v2328 = vld [vmem:[%s6 + $0x10] sm:$0xff]
      %v2329 = vld [vmem:[%s6 + $0x18] sm:$0xff]
      %v2330 = vld [vmem:[%s7] sm:$0x1]
      %v2332 = vlaneseq
      %v2333 = vshrl.u32 %v2332, 7
      %v2334 = vsub.s32 0, %v2333
      %v2335 = vrot.slane %v2330, %v2334
      %v2338 = vsel %vm441, %v2316, 0
      %v2341 = vsel %vm441, %v2317, 0
      %v2344 = vsel %vm441, %v2318, 0
      %v2347 = vsel %vm441, %v2319, 0
      %v2350 = vsel %vm441, %v2320, 0
      %v2353 = vsel %vm441, %v2321, 0
      %v2356 = vsel %vm441, %v2322, 0
      %v2359 = vsel %vm441, %v2323, 0
      %v2362 = vsel %vm441, %v2324, 0
      %v2365 = vsel %vm441, %v2325, 0
      %2367 = vmatprep.subr.mxu0 0.0
      %2368 = vmatpush1.msra.mxu0 %v2326
      %2369 = vmatprep.subr.mxu0 0.0
      %2370 = vmatpush1.msra.mxu0 %v2327
      %2371 = vmatprep.subr.mxu0 0.0
      %2372 = vmatpush1.msra.mxu0 %v2328
      %2373 = vmatprep.subr.mxu0 0.0
      %2374 = vmatpush1.msra.mxu0 %v2329
      %2375 = vmatprep.subr.mxu0 0.0
      %2376 = vmatpush1.msra.mxu0 0.0
      %2377 = vmatprep.subr.mxu0 0.0
      %2378 = vmatpush1.msra.mxu0 0.0
      %2379 = vmatprep.subr.mxu0 0.0
      %2380 = vmatpush1.msra.mxu0 0.0
      %2381 = vmatprep.subr.mxu0 0.0
      %2382 = vmatpush1.msra.mxu0 0.0
      %2383 = vmatprep.subr.mxu0 0.0
      %2384 = vmatpush1.msra.mxu0 0.0
      %2385 = vmatprep.subr.mxu0 0.0
      %2386 = vmatpush1.msra.mxu0 0.0
      %2387 = vmatprep.subr.mxu0 0.0
      %2388 = vmatpush1.msra.mxu0 0.0
      %2389 = vmatprep.subr.mxu0 0.0
      %2390 = vmatpush1.msra.mxu0 0.0
      %2391 = vmatprep.subr.mxu0 0.0
      %2392 = vmatpush1.msra.mxu0 0.0
      %2393 = vmatprep.subr.mxu0 0.0
      %2394 = vmatpush1.msra.mxu0 0.0
      %2395 = vmatprep.subr.mxu0 0.0
      %2396 = vmatpush1.msra.mxu0 0.0
      %2397 = vmatprep.subr.mxu0 0.0
      %2398 = vmatpush1.msra.mxu0 0.0
      %2399 = vmatprep.subr.mxu0 0.0
      %2400 = vmatpush1.msra.mxu0 0.0
      %2401 = vmatprep.subr.mxu0 0.0
      %2402 = vmatpush1.msra.mxu0 0.0
      %2403 = vmatprep.subr.mxu0 0.0
      %2404 = vmatpush1.msra.mxu0 0.0
      %2405 = vmatprep.subr.mxu0 0.0
      %2406 = vmatpush1.msra.mxu0 0.0
      %2407 = vmatprep.subr.mxu0 0.0
      %2408 = vmatpush1.msra.mxu0 0.0
      %2409 = vmatprep.subr.mxu0 0.0
      %2410 = vmatpush1.msra.mxu0 0.0
      %2411 = vmatprep.subr.mxu0 0.0
      %2412 = vmatpush1.msra.mxu0 0.0
      %2413 = vmatprep.subr.mxu0 0.0
      %2414 = vmatpush1.msra.mxu0 0.0
      %2415 = vmatprep.subr.mxu0 0.0
      %2416 = vmatpush1.msra.mxu0 0.0
      %2417 = vmatprep.subr.mxu0 0.0
      %2418 = vmatpush1.msra.mxu0 0.0
      %2419 = vmatprep.subr.mxu0 0.0
      %2420 = vmatpush1.msra.mxu0 0.0
      %2421 = vmatprep.subr.mxu0 0.0
      %2422 = vmatpush1.msra.mxu0 0.0
      %2423 = vmatprep.subr.mxu0 0.0
      %2424 = vmatpush1.msra.mxu0 0.0
      %2425 = vmatprep.subr.mxu0 0.0
      %2426 = vmatpush1.msra.mxu0 0.0
      %2427 = vmatprep.subr.mxu0 0.0
      %2428 = vmatpush1.msra.mxu0 0.0
      %2429 = vmatprep.subr.mxu0 0.0
      %2430 = vmatpush1.msra.mxu0 0.0
      %2431 = vmatprep.mubr.f32.mxu0 0.0
      %2432 = vmatmul.mubr.f32.gmra.mrb[0].mxu0 %v2338
      %v2433 = vpop.f32.mrb[0].mxu0
      %v2434 = vadd.f32 %v2335, %v2433
      %v2435 = vpop.f32.mrb[0].mxu0
      %2436 = vmatprep.mubr.f32.mxu0 0.0
      %2437 = vmatmul.mubr.f32.gmra.mrb[0].mxu0 %v2341
      %v2438 = vpop.f32.mrb[0].mxu0
      %v2439 = vadd.f32 %v2335, %v2438
      %v2440 = vpop.f32.mrb[0].mxu0
      %2441 = vmatprep.mubr.f32.mxu0 0.0
      %2442 = vmatmul.mubr.f32.gmra.mrb[0].mxu0 %v2344
      %v2443 = vpop.f32.mrb[0].mxu0
      %v2444 = vadd.f32 %v2335, %v2443
      %v2445 = vpop.f32.mrb[0].mxu0
      %2446 = vmatprep.mubr.f32.mxu0 0.0
      %2447 = vmatmul.mubr.f32.gmra.mrb[0].mxu0 %v2347
      %v2448 = vpop.f32.mrb[0].mxu0
      %v2449 = vadd.f32 %v2335, %v2448
      %v2450 = vpop.f32.mrb[0].mxu0
      %2451 = vmatprep.mubr.f32.mxu0 0.0
      %2452 = vmatmul.mubr.f32.gmra.mrb[0].mxu0 %v2350
      %v2453 = vpop.f32.mrb[0].mxu0
      %v2454 = vadd.f32 %v2335, %v2453
      %v2455 = vpop.f32.mrb[0].mxu0
      %2456 = vmatprep.mubr.f32.mxu0 0.0
      %2457 = vmatmul.mubr.f32.gmra.mrb[0].mxu0 %v2353
      %v2458 = vpop.f32.mrb[0].mxu0
      %v2459 = vadd.f32 %v2335, %v2458
      %v2460 = vpop.f32.mrb[0].mxu0
      %2461 = vmatprep.mubr.f32.mxu0 0.0
      %2462 = vmatmul.mubr.f32.gmra.mrb[0].mxu0 %v2356
      %v2463 = vpop.f32.mrb[0].mxu0
      %v2464 = vadd.f32 %v2335, %v2463
      %v2465 = vpop.f32.mrb[0].mxu0
      %2466 = vmatprep.mubr.f32.mxu0 0.0
      %2467 = vmatmul.mubr.f32.gmra.mrb[0].mxu0 %v2359
      %v2468 = vpop.f32.mrb[0].mxu0
      %v2469 = vadd.f32 %v2335, %v2468
      %v2470 = vpop.f32.mrb[0].mxu0
      %2471 = vmatprep.mubr.f32.mxu0 0.0
      %2472 = vmatmul.mubr.f32.gmra.mrb[0].mxu0 %v2362
      %v2473 = vpop.f32.mrb[0].mxu0
      %v2474 = vadd.f32 %v2335, %v2473
      %v2475 = vpop.f32.mrb[0].mxu0
      %2476 = vmatprep.mubr.f32.mxu0 0.0
      %2477 = vmatmul.mubr.f32.gmra.mrb[0].mxu0 %v2365
      %v2478 = vpop.f32.mrb[0].mxu0
      %v2479 = vadd.f32 %v2335, %v2478
      %v2480 = vpop.f32.mrb[0].mxu0
      %2481 = vdwg.mxu0
      %v2482 = vmul.f32 %v2434, %v429
      %v2483 = vmul.f32 %v2439, %v429
      %v2484 = vmul.f32 %v2444, %v429
      %v2485 = vmul.f32 %v2449, %v429
      %v2486 = vmul.f32 %v2454, %v429
      %v2487 = vmul.f32 %v2459, %v429
      %v2488 = vmul.f32 %v2464, %v429
      %v2489 = vmul.f32 %v2469, %v429
      %v2490 = vmul.f32 %v2474, %v429
      %v2491 = vmul.f32 %v2479, %v429
      %2502 = vrot.lane.b32.xlu0 %v2434, 96
      %v2503 = vpop.permute.xlu0 %2502
      %2504 = vrot.lane.b32.xlu0 %v2439, 96
      %v2505 = vpop.permute.xlu0 %2504
      %2506 = vrot.lane.b32.xlu0 %v2444, 96
      %v2507 = vpop.permute.xlu0 %2506
      %2508 = vrot.lane.b32.xlu0 %v2449, 96
      %v2509 = vpop.permute.xlu0 %2508
      %2510 = vrot.lane.b32.xlu0 %v2454, 96
      %v2511 = vpop.permute.xlu0 %2510
      %2512 = vrot.lane.b32.xlu0 %v2459, 96
      %v2513 = vpop.permute.xlu0 %2512
      %2514 = vrot.lane.b32.xlu0 %v2464, 96
      %v2515 = vpop.permute.xlu0 %2514
      %2516 = vrot.lane.b32.xlu0 %v2469, 96
      %v2517 = vpop.permute.xlu0 %2516
      %2518 = vrot.lane.b32.xlu0 %v2474, 96
      %v2519 = vpop.permute.xlu0 %2518
      %2520 = vrot.lane.b32.xlu0 %v2479, 96
      %v2521 = vpop.permute.xlu0 %2520
      %v2523 = vsel %vm441, %v2482, 0
      %v2526 = vsel %vm441, %v2483, 0
      %v2529 = vsel %vm441, %v2484, 0
      %v2532 = vsel %vm441, %v2485, 0
      %v2535 = vsel %vm441, %v2486, 0
      %v2538 = vsel %vm441, %v2487, 0
      %v2541 = vsel %vm441, %v2488, 0
      %v2544 = vsel %vm441, %v2489, 0
      %v2547 = vsel %vm441, %v2490, 0
      %v2550 = vsel %vm441, %v2491, 0
      %v2552 = vsel %vm441, %v2503, 0
      %v2554 = vsel %vm441, %v2505, 0
      %v2556 = vsel %vm441, %v2507, 0
      %v2558 = vsel %vm441, %v2509, 0
      %v2560 = vsel %vm441, %v2511, 0
      %v2562 = vsel %vm441, %v2513, 0
      %v2564 = vsel %vm441, %v2515, 0
      %v2566 = vsel %vm441, %v2517, 0
      %v2568 = vsel %vm441, %v2519, 0
      %v2570 = vsel %vm441, %v2521, 0
      %2572 = vmatprep.subr.mxu0 0.0
      %2573 = vmatpush1.xpose.msra.mxu0 %v2552
      %2574 = vmatprep.subr.mxu0 0.0
      %2575 = vmatpush1.xpose.msra.mxu0 %v2554
      %2576 = vmatprep.subr.mxu0 0.0
      %2577 = vmatpush1.xpose.msra.mxu0 %v2556
      %2578 = vmatprep.subr.mxu0 0.0
      %2579 = vmatpush1.xpose.msra.mxu0 %v2558
      %2580 = vmatprep.subr.mxu0 0.0
      %2581 = vmatpush1.xpose.msra.mxu0 %v2560
      %2582 = vmatprep.subr.mxu0 0.0
      %2583 = vmatpush1.xpose.msra.mxu0 %v2562
      %2584 = vmatprep.subr.mxu0 0.0
      %2585 = vmatpush1.xpose.msra.mxu0 %v2564
      %2586 = vmatprep.subr.mxu0 0.0
      %2587 = vmatpush1.xpose.msra.mxu0 %v2566
      %2588 = vmatprep.subr.mxu0 0.0
      %2589 = vmatpush1.xpose.msra.mxu0 %v2568
      %2590 = vmatprep.subr.mxu0 0.0
      %2591 = vmatpush1.xpose.msra.mxu0 %v2570
      %2592 = vmatprep.subr.mxu0 0.0
      %2593 = vmatpush1.xpose.msra.mxu0 0.0
      %2594 = vmatprep.subr.mxu0 0.0
      %2595 = vmatpush1.xpose.msra.mxu0 0.0
      %2596 = vmatprep.subr.mxu0 0.0
      %2597 = vmatpush1.xpose.msra.mxu0 0.0
      %2598 = vmatprep.subr.mxu0 0.0
      %2599 = vmatpush1.xpose.msra.mxu0 0.0
      %2600 = vmatprep.subr.mxu0 0.0
      %2601 = vmatpush1.xpose.msra.mxu0 0.0
      %2602 = vmatprep.subr.mxu0 0.0
      %2603 = vmatpush1.xpose.msra.mxu0 0.0
      %2604 = vmatprep.subr.mxu0 0.0
      %2605 = vmatpush1.xpose.msra.mxu0 0.0
      %2606 = vmatprep.subr.mxu0 0.0
      %2607 = vmatpush1.xpose.msra.mxu0 0.0
      %2608 = vmatprep.subr.mxu0 0.0
      %2609 = vmatpush1.xpose.msra.mxu0 0.0
      %2610 = vmatprep.subr.mxu0 0.0
      %2611 = vmatpush1.xpose.msra.mxu0 0.0
      %2612 = vmatprep.subr.mxu0 0.0
      %2613 = vmatpush1.xpose.msra.mxu0 0.0
      %2614 = vmatprep.subr.mxu0 0.0
      %2615 = vmatpush1.xpose.msra.mxu0 0.0
      %2616 = vmatprep.subr.mxu0 0.0
      %2617 = vmatpush1.xpose.msra.mxu0 0.0
      %2618 = vmatprep.subr.mxu0 0.0
      %2619 = vmatpush1.xpose.msra.mxu0 0.0
      %2620 = vmatprep.subr.mxu0 0.0
      %2621 = vmatpush1.xpose.msra.mxu0 0.0
      %2622 = vmatprep.subr.mxu0 0.0
      %2623 = vmatpush1.xpose.msra.mxu0 0.0
      %2624 = vmatprep.subr.mxu0 0.0
      %2625 = vmatpush1.xpose.msra.mxu0 0.0
      %2626 = vmatprep.subr.mxu0 0.0
      %2627 = vmatpush1.xpose.msra.mxu0 0.0
      %2628 = vmatprep.subr.mxu0 0.0
      %2629 = vmatpush1.xpose.msra.mxu0 0.0
      %2630 = vmatprep.subr.mxu0 0.0
      %2631 = vmatpush1.xpose.msra.mxu0 0.0
      %2632 = vmatprep.subr.mxu0 0.0
      %2633 = vmatpush1.xpose.msra.mxu0 0.0
      %2634 = vmatprep.subr.mxu0 0.0
      %2635 = vmatpush1.xpose.msra.mxu0 0.0
      %2636 = vmatprep.mubr.f32.mxu0 0.0
      %2637 = vmatmul.mubr.f32.gmra.mrb[0].mxu0 %v2523
      %v2638 = vpop.f32.mrb[0].mxu0
      %v2639 = vadd.f32 0.0, %v2638
      %v2640 = vpop.f32.mrb[0].mxu0
      %2641 = vmatprep.mubr.f32.mxu0 0.0
      %2642 = vmatmul.mubr.f32.gmra.mrb[0].mxu0 %v2526
      %v2643 = vpop.f32.mrb[0].mxu0
      %v2644 = vadd.f32 0.0, %v2643
      %v2645 = vpop.f32.mrb[0].mxu0
      %2646 = vmatprep.mubr.f32.mxu0 0.0
      %2647 = vmatmul.mubr.f32.gmra.mrb[0].mxu0 %v2529
      %v2648 = vpop.f32.mrb[0].mxu0
      %v2649 = vadd.f32 0.0, %v2648
      %v2650 = vpop.f32.mrb[0].mxu0
      %2651 = vmatprep.mubr.f32.mxu0 0.0
      %2652 = vmatmul.mubr.f32.gmra.mrb[0].mxu0 %v2532
      %v2653 = vpop.f32.mrb[0].mxu0
      %v2654 = vadd.f32 0.0, %v2653
      %v2655 = vpop.f32.mrb[0].mxu0
      %2656 = vmatprep.mubr.f32.mxu0 0.0
      %2657 = vmatmul.mubr.f32.gmra.mrb[0].mxu0 %v2535
      %v2658 = vpop.f32.mrb[0].mxu0
      %v2659 = vadd.f32 0.0, %v2658
      %v2660 = vpop.f32.mrb[0].mxu0
      %2661 = vmatprep.mubr.f32.mxu0 0.0
      %2662 = vmatmul.mubr.f32.gmra.mrb[0].mxu0 %v2538
      %v2663 = vpop.f32.mrb[0].mxu0
      %v2664 = vadd.f32 0.0, %v2663
      %v2665 = vpop.f32.mrb[0].mxu0
      %2666 = vmatprep.mubr.f32.mxu0 0.0
      %2667 = vmatmul.mubr.f32.gmra.mrb[0].mxu0 %v2541
      %v2668 = vpop.f32.mrb[0].mxu0
      %v2669 = vadd.f32 0.0, %v2668
      %v2670 = vpop.f32.mrb[0].mxu0
      %2671 = vmatprep.mubr.f32.mxu0 0.0
      %2672 = vmatmul.mubr.f32.gmra.mrb[0].mxu0 %v2544
      %v2673 = vpop.f32.mrb[0].mxu0
      %v2674 = vadd.f32 0.0, %v2673
      %v2675 = vpop.f32.mrb[0].mxu0
      %2676 = vmatprep.mubr.f32.mxu0 0.0
      %2677 = vmatmul.mubr.f32.gmra.mrb[0].mxu0 %v2547
      %v2678 = vpop.f32.mrb[0].mxu0
      %v2679 = vadd.f32 0.0, %v2678
      %v2680 = vpop.f32.mrb[0].mxu0
      %2681 = vmatprep.mubr.f32.mxu0 0.0
      %2682 = vmatmul.mubr.f32.gmra.mrb[0].mxu0 %v2550
      %v2683 = vpop.f32.mrb[0].mxu0
      %v2684 = vadd.f32 0.0, %v2683
      %v2685 = vpop.f32.mrb[0].mxu0
      %2686 = vdwg.mxu0
      %v2687 = vmul.f32 %v2639, 0.17677669
      %v2688 = vmul.f32 %v2644, 0.17677669
      %v2689 = vmul.f32 %v2649, 0.17677669
      %v2690 = vmul.f32 %v2654, 0.17677669
      %v2691 = vmul.f32 %v2659, 0.17677669
      %v2692 = vmul.f32 %v2664, 0.17677669
      %v2693 = vmul.f32 %v2669, 0.17677669
      %v2694 = vmul.f32 %v2674, 0.17677669
      %v2695 = vmul.f32 %v2679, 0.17677669
      %v2696 = vmul.f32 %v2684, 0.17677669
      %vm2697 = vcmask 613376
      %v2698 = vsel %vm2697, %v2687, -inf
      %v2699 = vsel %vm2697, %v2688, -inf
      %v2700 = vsel %vm2697, %v2689, -inf
      %v2701 = vsel %vm2697, %v2690, -inf
      %v2702 = vsel %vm2697, %v2691, -inf
      %v2703 = vmax.f32 %v2698, %v2702
      %v2704 = vsel %vm2697, %v2692, -inf
      %v2705 = vmax.f32 %v2699, %v2704
      %v2706 = vsel %vm2697, %v2693, -inf
      %v2707 = vmax.f32 %v2700, %v2706
      %v2708 = vsel %vm2697, %v2694, -inf
      %v2709 = vmax.f32 %v2701, %v2708
      %v2710 = vsel %vm2697, %v2695, -inf
      %v2711 = vmax.f32 %v2703, %v2710
      %vm2712 = vcmask 608256
      %v2713 = vsel %vm2712, %v2696, -inf
      %v2714 = vmax.f32 %v2705, %v2713
      %v2715 = vmax.f32 %v2711, %v2714
      %v2716 = vmax.f32 %v2707, %v2709
      %v2717 = vmax.f32 %v2715, %v2716
      %v2718 = vrot.slane %v2717, 4
      %v2719 = vmax.f32 %v2717, %v2718
      %v2720 = vrot.slane %v2719, 2
      %v2721 = vmax.f32 %v2719, %v2720
      %v2722 = vrot.slane %v2721, 1
      %v2723 = vmax.f32 %v2721, %v2722
      %v2724 = vsub.f32 %v2687, %v2723
      %v2725 = vsub.f32 %v2688, %v2723
      %v2726 = vsub.f32 %v2689, %v2723
      %v2727 = vsub.f32 %v2690, %v2723
      %v2728 = vsub.f32 %v2691, %v2723
      %v2729 = vsub.f32 %v2692, %v2723
      %v2730 = vsub.f32 %v2693, %v2723
      %v2731 = vsub.f32 %v2694, %v2723
      %v2732 = vsub.f32 %v2695, %v2723
      %v2733 = vsub.f32 %v2696, %v2723
      %v2734 = vmul.f32 %v2724, 1.442695
      %v2735 = vpow.pop %v2734
      %v2736 = vmul.f32 %v2725, 1.442695
      %v2737 = vpow.pop %v2736
      %v2738 = vmul.f32 %v2726, 1.442695
      %v2739 = vpow.pop %v2738
      %v2740 = vmul.f32 %v2727, 1.442695
      %v2741 = vpow.pop %v2740
      %v2742 = vmul.f32 %v2728, 1.442695
      %v2743 = vpow.pop %v2742
      %v2744 = vmul.f32 %v2729, 1.442695
      %v2745 = vpow.pop %v2744
      %v2746 = vmul.f32 %v2730, 1.442695
      %v2747 = vpow.pop %v2746
      %v2748 = vmul.f32 %v2731, 1.442695
      %v2749 = vpow.pop %v2748
      %v2750 = vmul.f32 %v2732, 1.442695
      %v2751 = vpow.pop %v2750
      %v2752 = vmul.f32 %v2733, 1.442695
      %v2753 = vpow.pop %v2752
      %v2754 = vsel %vm2697, %v2735, 0.0
      %v2755 = vsel %vm2697, %v2737, 0.0
      %v2756 = vadd.f32 %v2754, %v2755
      %v2757 = vsel %vm2697, %v2739, 0.0
      %v2758 = vadd.f32 %v2756, %v2757
      %v2759 = vsel %vm2697, %v2741, 0.0
      %v2760 = vadd.f32 %v2758, %v2759
      %v2761 = vsel %vm2697, %v2743, 0.0
      %v2762 = vadd.f32 %v2760, %v2761
      %v2763 = vsel %vm2697, %v2745, 0.0
      %v2764 = vadd.f32 %v2762, %v2763
      %v2765 = vsel %vm2697, %v2747, 0.0
      %v2766 = vadd.f32 %v2764, %v2765
      %v2767 = vsel %vm2697, %v2749, 0.0
      %v2768 = vadd.f32 %v2766, %v2767
      %v2769 = vsel %vm2697, %v2751, 0.0
      %v2770 = vadd.f32 %v2768, %v2769
      %v2771 = vsel %vm2712, %v2753, 0.0
      %v2772 = vadd.f32 %v2770, %v2771
      %v2773 = vrot.slane %v2772, 4
      %v2774 = vadd.f32 %v2772, %v2773
      %v2775 = vrot.slane %v2774, 2
      %v2776 = vadd.f32 %v2774, %v2775
      %v2777 = vrot.slane %v2776, 1
      %v2778 = vadd.f32 %v2776, %v2777
      %v2779 = vrcp.pop %v2778
      %v2780 = vmul.f32 %v2735, %v2779
      %v2781 = vmul.f32 %v2737, %v2779
      %v2782 = vmul.f32 %v2739, %v2779
      %v2783 = vmul.f32 %v2741, %v2779
      %v2784 = vmul.f32 %v2743, %v2779
      %v2785 = vmul.f32 %v2745, %v2779
      %v2786 = vmul.f32 %v2747, %v2779
      %v2787 = vmul.f32 %v2749, %v2779
      %v2788 = vmul.f32 %v2751, %v2779
      %v2789 = vmul.f32 %v2753, %v2779
      %2790 = vrot.lane.b32.xlu0 %v429, 64
      %v2791 = vpop.permute.xlu0 %2790
      %v2793 = vmul.f32 %v2434, %v2791
      %v2794 = vmul.f32 %v2439, %v2791
      %v2795 = vmul.f32 %v2444, %v2791
      %v2796 = vmul.f32 %v2449, %v2791
      %v2797 = vmul.f32 %v2454, %v2791
      %v2798 = vmul.f32 %v2459, %v2791
      %v2799 = vmul.f32 %v2464, %v2791
      %v2800 = vmul.f32 %v2469, %v2791
      %v2801 = vmul.f32 %v2474, %v2791
      %v2802 = vmul.f32 %v2479, %v2791
      %v2803 = vmul.f32 %v2434, %v707
      %v2804 = vmul.f32 %v2439, %v707
      %v2805 = vmul.f32 %v2444, %v707
      %v2806 = vmul.f32 %v2449, %v707
      %v2807 = vmul.f32 %v2454, %v707
      %v2808 = vmul.f32 %v2459, %v707
      %v2809 = vmul.f32 %v2464, %v707
      %v2810 = vmul.f32 %v2469, %v707
      %v2811 = vmul.f32 %v2474, %v707
      %v2812 = vmul.f32 %v2479, %v707
      %v2814 = vsel %vm441, %v2803, 0
      %v2817 = vsel %vm441, %v2804, 0
      %v2820 = vsel %vm441, %v2805, 0
      %v2823 = vsel %vm441, %v2806, 0
      %v2826 = vsel %vm441, %v2807, 0
      %v2829 = vsel %vm441, %v2808, 0
      %v2832 = vsel %vm441, %v2809, 0
      %v2835 = vsel %vm441, %v2810, 0
      %v2838 = vsel %vm441, %v2811, 0
      %v2841 = vsel %vm441, %v2812, 0
      %2843 = vmatprep.subr.mxu0 0.0
      %2844 = vmatpush1.xpose.msra.mxu0 %v2552
      %2845 = vmatprep.subr.mxu0 0.0
      %2846 = vmatpush1.xpose.msra.mxu0 %v2554
      %2847 = vmatprep.subr.mxu0 0.0
      %2848 = vmatpush1.xpose.msra.mxu0 %v2556
      %2849 = vmatprep.subr.mxu0 0.0
      %2850 = vmatpush1.xpose.msra.mxu0 %v2558
      %2851 = vmatprep.subr.mxu0 0.0
      %2852 = vmatpush1.xpose.msra.mxu0 %v2560
      %2853 = vmatprep.subr.mxu0 0.0
      %2854 = vmatpush1.xpose.msra.mxu0 %v2562
      %2855 = vmatprep.subr.mxu0 0.0
      %2856 = vmatpush1.xpose.msra.mxu0 %v2564
      %2857 = vmatprep.subr.mxu0 0.0
      %2858 = vmatpush1.xpose.msra.mxu0 %v2566
      %2859 = vmatprep.subr.mxu0 0.0
      %2860 = vmatpush1.xpose.msra.mxu0 %v2568
      %2861 = vmatprep.subr.mxu0 0.0
      %2862 = vmatpush1.xpose.msra.mxu0 %v2570
      %2863 = vmatprep.subr.mxu0 0.0
      %2864 = vmatpush1.xpose.msra.mxu0 0.0
      %2865 = vmatprep.subr.mxu0 0.0
      %2866 = vmatpush1.xpose.msra.mxu0 0.0
      %2867 = vmatprep.subr.mxu0 0.0
      %2868 = vmatpush1.xpose.msra.mxu0 0.0
      %2869 = vmatprep.subr.mxu0 0.0
      %2870 = vmatpush1.xpose.msra.mxu0 0.0
      %2871 = vmatprep.subr.mxu0 0.0
      %2872 = vmatpush1.xpose.msra.mxu0 0.0
      %2873 = vmatprep.subr.mxu0 0.0
      %2874 = vmatpush1.xpose.msra.mxu0 0.0
      %2875 = vmatprep.subr.mxu0 0.0
      %2876 = vmatpush1.xpose.msra.mxu0 0.0
      %2877 = vmatprep.subr.mxu0 0.0
      %2878 = vmatpush1.xpose.msra.mxu0 0.0
      %2879 = vmatprep.subr.mxu0 0.0
      %2880 = vmatpush1.xpose.msra.mxu0 0.0
      %2881 = vmatprep.subr.mxu0 0.0
      %2882 = vmatpush1.xpose.msra.mxu0 0.0
      %2883 = vmatprep.subr.mxu0 0.0
      %2884 = vmatpush1.xpose.msra.mxu0 0.0
      %2885 = vmatprep.subr.mxu0 0.0
      %2886 = vmatpush1.xpose.msra.mxu0 0.0
      %2887 = vmatprep.subr.mxu0 0.0
      %2888 = vmatpush1.xpose.msra.mxu0 0.0
      %2889 = vmatprep.subr.mxu0 0.0
      %2890 = vmatpush1.xpose.msra.mxu0 0.0
      %2891 = vmatprep.subr.mxu0 0.0
      %2892 = vmatpush1.xpose.msra.mxu0 0.0
      %2893 = vmatprep.subr.mxu0 0.0
      %2894 = vmatpush1.xpose.msra.mxu0 0.0
      %2895 = vmatprep.subr.mxu0 0.0
      %2896 = vmatpush1.xpose.msra.mxu0 0.0
      %2897 = vmatprep.subr.mxu0 0.0
      %2898 = vmatpush1.xpose.msra.mxu0 0.0
      %2899 = vmatprep.subr.mxu0 0.0
      %2900 = vmatpush1.xpose.msra.mxu0 0.0
      %2901 = vmatprep.subr.mxu0 0.0
      %2902 = vmatpush1.xpose.msra.mxu0 0.0
      %2903 = vmatprep.subr.mxu0 0.0
      %2904 = vmatpush1.xpose.msra.mxu0 0.0
      %2905 = vmatprep.subr.mxu0 0.0
      %2906 = vmatpush1.xpose.msra.mxu0 0.0
      %2907 = vmatprep.mubr.f32.mxu0 0.0
      %2908 = vmatmul.mubr.f32.gmra.mrb[0].mxu0 %v2814
      %v2909 = vpop.f32.mrb[0].mxu0
      %v2910 = vadd.f32 0.0, %v2909
      %v2911 = vpop.f32.mrb[0].mxu0
      %2912 = vmatprep.mubr.f32.mxu0 0.0
      %2913 = vmatmul.mubr.f32.gmra.mrb[0].mxu0 %v2817
      %v2914 = vpop.f32.mrb[0].mxu0
      %v2915 = vadd.f32 0.0, %v2914
      %v2916 = vpop.f32.mrb[0].mxu0
      %2917 = vmatprep.mubr.f32.mxu0 0.0
      %2918 = vmatmul.mubr.f32.gmra.mrb[0].mxu0 %v2820
      %v2919 = vpop.f32.mrb[0].mxu0
      %v2920 = vadd.f32 0.0, %v2919
      %v2921 = vpop.f32.mrb[0].mxu0
      %2922 = vmatprep.mubr.f32.mxu0 0.0
      %2923 = vmatmul.mubr.f32.gmra.mrb[0].mxu0 %v2823
      %v2924 = vpop.f32.mrb[0].mxu0
      %v2925 = vadd.f32 0.0, %v2924
      %v2926 = vpop.f32.mrb[0].mxu0
      %2927 = vmatprep.mubr.f32.mxu0 0.0
      %2928 = vmatmul.mubr.f32.gmra.mrb[0].mxu0 %v2826
      %v2929 = vpop.f32.mrb[0].mxu0
      %v2930 = vadd.f32 0.0, %v2929
      %v2931 = vpop.f32.mrb[0].mxu0
      %2932 = vmatprep.mubr.f32.mxu0 0.0
      %2933 = vmatmul.mubr.f32.gmra.mrb[0].mxu0 %v2829
      %v2934 = vpop.f32.mrb[0].mxu0
      %v2935 = vadd.f32 0.0, %v2934
      %v2936 = vpop.f32.mrb[0].mxu0
      %2937 = vmatprep.mubr.f32.mxu0 0.0
      %2938 = vmatmul.mubr.f32.gmra.mrb[0].mxu0 %v2832
      %v2939 = vpop.f32.mrb[0].mxu0
      %v2940 = vadd.f32 0.0, %v2939
      %v2941 = vpop.f32.mrb[0].mxu0
      %2942 = vmatprep.mubr.f32.mxu0 0.0
      %2943 = vmatmul.mubr.f32.gmra.mrb[0].mxu0 %v2835
      %v2944 = vpop.f32.mrb[0].mxu0
      %v2945 = vadd.f32 0.0, %v2944
      %v2946 = vpop.f32.mrb[0].mxu0
      %2947 = vmatprep.mubr.f32.mxu0 0.0
      %2948 = vmatmul.mubr.f32.gmra.mrb[0].mxu0 %v2838
      %v2949 = vpop.f32.mrb[0].mxu0
      %v2950 = vadd.f32 0.0, %v2949
      %v2951 = vpop.f32.mrb[0].mxu0
      %2952 = vmatprep.mubr.f32.mxu0 0.0
      %2953 = vmatmul.mubr.f32.gmra.mrb[0].mxu0 %v2841
      %v2954 = vpop.f32.mrb[0].mxu0
      %v2955 = vadd.f32 0.0, %v2954
      %v2956 = vpop.f32.mrb[0].mxu0
      %2957 = vdwg.mxu0
      %v2958 = vmul.f32 %v2910, 0.17677669
      %v2959 = vmul.f32 %v2915, 0.17677669
      %v2960 = vmul.f32 %v2920, 0.17677669
      %v2961 = vmul.f32 %v2925, 0.17677669
      %v2962 = vmul.f32 %v2930, 0.17677669
      %v2963 = vmul.f32 %v2935, 0.17677669
      %v2964 = vmul.f32 %v2940, 0.17677669
      %v2965 = vmul.f32 %v2945, 0.17677669
      %v2966 = vmul.f32 %v2950, 0.17677669
      %v2967 = vmul.f32 %v2955, 0.17677669
      %v2968 = vsel %vm2697, %v2958, -inf
      %v2969 = vsel %vm2697, %v2959, -inf
      %v2970 = vsel %vm2697, %v2960, -inf
      %v2971 = vsel %vm2697, %v2961, -inf
      %v2972 = vsel %vm2697, %v2962, -inf
      %v2973 = vmax.f32 %v2968, %v2972
      %v2974 = vsel %vm2697, %v2963, -inf
      %v2975 = vmax.f32 %v2969, %v2974
      %v2976 = vsel %vm2697, %v2964, -inf
      %v2977 = vmax.f32 %v2970, %v2976
      %v2978 = vsel %vm2697, %v2965, -inf
      %v2979 = vmax.f32 %v2971, %v2978
      %v2980 = vsel %vm2697, %v2966, -inf
      %v2981 = vmax.f32 %v2973, %v2980
      %v2982 = vsel %vm2712, %v2967, -inf
      %v2983 = vmax.f32 %v2975, %v2982
      %v2984 = vmax.f32 %v2981, %v2983
      %v2985 = vmax.f32 %v2977, %v2979
      %v2986 = vmax.f32 %v2984, %v2985
      %v2987 = vrot.slane %v2986, 4
      %v2988 = vmax.f32 %v2986, %v2987
      %v2989 = vrot.slane %v2988, 2
      %v2990 = vmax.f32 %v2988, %v2989
      %v2991 = vrot.slane %v2990, 1
      %v2992 = vmax.f32 %v2990, %v2991
      %v2993 = vsub.f32 %v2958, %v2992
      %v2994 = vsub.f32 %v2959, %v2992
      %v2995 = vsub.f32 %v2960, %v2992
      %v2996 = vsub.f32 %v2961, %v2992
      %v2997 = vsub.f32 %v2962, %v2992
      %v2998 = vsub.f32 %v2963, %v2992
      %v2999 = vsub.f32 %v2964, %v2992
      %v3000 = vsub.f32 %v2965, %v2992
      %v3001 = vsub.f32 %v2966, %v2992
      %v3002 = vsub.f32 %v2967, %v2992
      %v3003 = vmul.f32 %v2993, 1.442695
      %v3004 = vpow.pop %v3003
      %v3005 = vmul.f32 %v2994, 1.442695
      %v3006 = vpow.pop %v3005
      %v3007 = vmul.f32 %v2995, 1.442695
      %v3008 = vpow.pop %v3007
      %v3009 = vmul.f32 %v2996, 1.442695
      %v3010 = vpow.pop %v3009
      %v3011 = vmul.f32 %v2997, 1.442695
      %v3012 = vpow.pop %v3011
      %v3013 = vmul.f32 %v2998, 1.442695
      %v3014 = vpow.pop %v3013
      %v3015 = vmul.f32 %v2999, 1.442695
      %v3016 = vpow.pop %v3015
      %v3017 = vmul.f32 %v3000, 1.442695
      %v3018 = vpow.pop %v3017
      %v3019 = vmul.f32 %v3001, 1.442695
      %v3020 = vpow.pop %v3019
      %v3021 = vmul.f32 %v3002, 1.442695
      %v3022 = vpow.pop %v3021
      %v3023 = vsel %vm2697, %v3004, 0.0
      %v3024 = vsel %vm2697, %v3006, 0.0
      %v3025 = vadd.f32 %v3023, %v3024
      %v3026 = vsel %vm2697, %v3008, 0.0
      %v3027 = vadd.f32 %v3025, %v3026
      %v3028 = vsel %vm2697, %v3010, 0.0
      %v3029 = vadd.f32 %v3027, %v3028
      %v3030 = vsel %vm2697, %v3012, 0.0
      %v3031 = vadd.f32 %v3029, %v3030
      %v3032 = vsel %vm2697, %v3014, 0.0
      %v3033 = vadd.f32 %v3031, %v3032
      %v3034 = vsel %vm2697, %v3016, 0.0
      %v3035 = vadd.f32 %v3033, %v3034
      %v3036 = vsel %vm2697, %v3018, 0.0
      %v3037 = vadd.f32 %v3035, %v3036
      %v3038 = vsel %vm2697, %v3020, 0.0
      %v3039 = vadd.f32 %v3037, %v3038
      %v3040 = vsel %vm2712, %v3022, 0.0
      %v3041 = vadd.f32 %v3039, %v3040
      %v3042 = vrot.slane %v3041, 4
      %v3043 = vadd.f32 %v3041, %v3042
      %v3044 = vrot.slane %v3043, 2
      %v3045 = vadd.f32 %v3043, %v3044
      %v3046 = vrot.slane %v3045, 1
      %v3047 = vadd.f32 %v3045, %v3046
      %v3048 = vrcp.pop %v3047
      %v3049 = vmul.f32 %v3004, %v3048
      %v3050 = vmul.f32 %v3006, %v3048
      %v3051 = vmul.f32 %v3008, %v3048
      %v3052 = vmul.f32 %v3010, %v3048
      %v3053 = vmul.f32 %v3012, %v3048
      %v3054 = vmul.f32 %v3014, %v3048
      %v3055 = vmul.f32 %v3016, %v3048
      %v3056 = vmul.f32 %v3018, %v3048
      %v3057 = vmul.f32 %v3020, %v3048
      %v3058 = vmul.f32 %v3022, %v3048
      %3059 = vrot.lane.b32.xlu0 %v707, 64
      %v3060 = vpop.permute.xlu0 %3059
      %v3062 = vmul.f32 %v2434, %v3060
      %v3063 = vmul.f32 %v2439, %v3060
      %v3064 = vmul.f32 %v2444, %v3060
      %v3065 = vmul.f32 %v2449, %v3060
      %v3066 = vmul.f32 %v2454, %v3060
      %v3067 = vmul.f32 %v2459, %v3060
      %v3068 = vmul.f32 %v2464, %v3060
      %v3069 = vmul.f32 %v2469, %v3060
      %v3070 = vmul.f32 %v2474, %v3060
      %v3071 = vmul.f32 %v2479, %v3060
      %3082 = vrot.lane.b32.xlu0 %v3062, 64
      %v3083 = vpop.permute.xlu0 %3082
      %3084 = vrot.lane.b32.xlu0 %v3063, 64
      %v3085 = vpop.permute.xlu0 %3084
      %3086 = vrot.lane.b32.xlu0 %v3064, 64
      %v3087 = vpop.permute.xlu0 %3086
      %3088 = vrot.lane.b32.xlu0 %v3065, 64
      %v3089 = vpop.permute.xlu0 %3088
      %3090 = vrot.lane.b32.xlu0 %v3066, 64
      %v3091 = vpop.permute.xlu0 %3090
      %3092 = vrot.lane.b32.xlu0 %v3067, 64
      %v3093 = vpop.permute.xlu0 %3092
      %3094 = vrot.lane.b32.xlu0 %v3068, 64
      %v3095 = vpop.permute.xlu0 %3094
      %3096 = vrot.lane.b32.xlu0 %v3069, 64
      %v3097 = vpop.permute.xlu0 %3096
      %3098 = vrot.lane.b32.xlu0 %v3070, 64
      %v3099 = vpop.permute.xlu0 %3098
      %3100 = vrot.lane.b32.xlu0 %v3071, 64
      %v3101 = vpop.permute.xlu0 %3100
      %v3112 = vsel %vm2697, %v3049, 0
      %v3115 = vsel %vm2697, %v3050, 0
      %v3118 = vsel %vm2697, %v3051, 0
      %v3121 = vsel %vm2697, %v3052, 0
      %v3124 = vsel %vm2697, %v3053, 0
      %v3127 = vsel %vm2697, %v3054, 0
      %v3130 = vsel %vm2697, %v3055, 0
      %v3133 = vsel %vm2697, %v3056, 0
      %v3136 = vsel %vm2697, %v3057, 0
      %v3139 = vsel %vm2697, %v3058, 0
      %vm3141 = vcmask 1042432
      %v3142 = vsel %vm3141, %v3101, 0
      %3144 = vmatprep.subr.mxu0 0.0
      %3145 = vmatpush1.msra.mxu0 %v3083
      %3146 = vmatprep.subr.mxu0 0.0
      %3147 = vmatpush1.msra.mxu0 %v3085
      %3148 = vmatprep.subr.mxu0 0.0
      %3149 = vmatpush1.msra.mxu0 %v3087
      %3150 = vmatprep.subr.mxu0 0.0
      %3151 = vmatpush1.msra.mxu0 %v3089
      %3152 = vmatprep.subr.mxu0 0.0
      %3153 = vmatpush1.msra.mxu0 %v3091
      %3154 = vmatprep.subr.mxu0 0.0
      %3155 = vmatpush1.msra.mxu0 %v3093
      %3156 = vmatprep.subr.mxu0 0.0
      %3157 = vmatpush1.msra.mxu0 %v3095
      %3158 = vmatprep.subr.mxu0 0.0
      %3159 = vmatpush1.msra.mxu0 %v3097
      %3160 = vmatprep.subr.mxu0 0.0
      %3161 = vmatpush1.msra.mxu0 %v3099
      %3162 = vmatprep.subr.mxu0 0.0
      %3163 = vmatpush1.msra.mxu0 %v3142
      %3164 = vmatprep.subr.mxu0 0.0
      %3165 = vmatpush1.msra.mxu0 0.0
      %3166 = vmatprep.subr.mxu0 0.0
      %3167 = vmatpush1.msra.mxu0 0.0
      %3168 = vmatprep.subr.mxu0 0.0
      %3169 = vmatpush1.msra.mxu0 0.0
      %3170 = vmatprep.subr.mxu0 0.0
      %3171 = vmatpush1.msra.mxu0 0.0
      %3172 = vmatprep.subr.mxu0 0.0
      %3173 = vmatpush1.msra.mxu0 0.0
      %3174 = vmatprep.subr.mxu0 0.0
      %3175 = vmatpush1.msra.mxu0 0.0
      %3176 = vmatprep.subr.mxu0 0.0
      %3177 = vmatpush1.msra.mxu0 0.0
      %3178 = vmatprep.subr.mxu0 0.0
      %3179 = vmatpush1.msra.mxu0 0.0
      %3180 = vmatprep.subr.mxu0 0.0
      %3181 = vmatpush1.msra.mxu0 0.0
      %3182 = vmatprep.subr.mxu0 0.0
      %3183 = vmatpush1.msra.mxu0 0.0
      %3184 = vmatprep.subr.mxu0 0.0
      %3185 = vmatpush1.msra.mxu0 0.0
      %3186 = vmatprep.subr.mxu0 0.0
      %3187 = vmatpush1.msra.mxu0 0.0
      %3188 = vmatprep.subr.mxu0 0.0
      %3189 = vmatpush1.msra.mxu0 0.0
      %3190 = vmatprep.subr.mxu0 0.0
      %3191 = vmatpush1.msra.mxu0 0.0
      %3192 = vmatprep.subr.mxu0 0.0
      %3193 = vmatpush1.msra.mxu0 0.0
      %3194 = vmatprep.subr.mxu0 0.0
      %3195 = vmatpush1.msra.mxu0 0.0
      %3196 = vmatprep.subr.mxu0 0.0
      %3197 = vmatpush1.msra.mxu0 0.0
      %3198 = vmatprep.subr.mxu0 0.0
      %3199 = vmatpush1.msra.mxu0 0.0
      %3200 = vmatprep.subr.mxu0 0.0
      %3201 = vmatpush1.msra.mxu0 0.0
      %3202 = vmatprep.subr.mxu0 0.0
      %3203 = vmatpush1.msra.mxu0 0.0
      %3204 = vmatprep.subr.mxu0 0.0
      %3205 = vmatpush1.msra.mxu0 0.0
      %3206 = vmatprep.subr.mxu0 0.0
      %3207 = vmatpush1.msra.mxu0 0.0
      %3208 = vmatprep.mubr.f32.mxu0 0.0
      %3209 = vmatmul.mubr.f32.gmra.mrb[0].mxu0 %v3112
      %v3210 = vpop.f32.mrb[0].mxu0
      %v3211 = vadd.f32 0.0, %v3210
      %v3212 = vpop.f32.mrb[0].mxu0
      %3213 = vmatprep.mubr.f32.mxu0 0.0
      %3214 = vmatmul.mubr.f32.gmra.mrb[0].mxu0 %v3115
      %v3215 = vpop.f32.mrb[0].mxu0
      %v3216 = vadd.f32 0.0, %v3215
      %v3217 = vpop.f32.mrb[0].mxu0
      %3218 = vmatprep.mubr.f32.mxu0 0.0
      %3219 = vmatmul.mubr.f32.gmra.mrb[0].mxu0 %v3118
      %v3220 = vpop.f32.mrb[0].mxu0
      %v3221 = vadd.f32 0.0, %v3220
      %v3222 = vpop.f32.mrb[0].mxu0
      %3223 = vmatprep.mubr.f32.mxu0 0.0
      %3224 = vmatmul.mubr.f32.gmra.mrb[0].mxu0 %v3121
      %v3225 = vpop.f32.mrb[0].mxu0
      %v3226 = vadd.f32 0.0, %v3225
      %v3227 = vpop.f32.mrb[0].mxu0
      %3228 = vmatprep.mubr.f32.mxu0 0.0
      %3229 = vmatmul.mubr.f32.gmra.mrb[0].mxu0 %v3124
      %v3230 = vpop.f32.mrb[0].mxu0
      %v3231 = vadd.f32 0.0, %v3230
      %v3232 = vpop.f32.mrb[0].mxu0
      %3233 = vmatprep.mubr.f32.mxu0 0.0
      %3234 = vmatmul.mubr.f32.gmra.mrb[0].mxu0 %v3127
      %v3235 = vpop.f32.mrb[0].mxu0
      %v3236 = vadd.f32 0.0, %v3235
      %v3237 = vpop.f32.mrb[0].mxu0
      %3238 = vmatprep.mubr.f32.mxu0 0.0
      %3239 = vmatmul.mubr.f32.gmra.mrb[0].mxu0 %v3130
      %v3240 = vpop.f32.mrb[0].mxu0
      %v3241 = vadd.f32 0.0, %v3240
      %v3242 = vpop.f32.mrb[0].mxu0
      %3243 = vmatprep.mubr.f32.mxu0 0.0
      %3244 = vmatmul.mubr.f32.gmra.mrb[0].mxu0 %v3133
      %v3245 = vpop.f32.mrb[0].mxu0
      %v3246 = vadd.f32 0.0, %v3245
      %v3247 = vpop.f32.mrb[0].mxu0
      %3248 = vmatprep.mubr.f32.mxu0 0.0
      %3249 = vmatmul.mubr.f32.gmra.mrb[0].mxu0 %v3136
      %v3250 = vpop.f32.mrb[0].mxu0
      %v3251 = vadd.f32 0.0, %v3250
      %v3252 = vpop.f32.mrb[0].mxu0
      %3253 = vmatprep.mubr.f32.mxu0 0.0
      %3254 = vmatmul.mubr.f32.gmra.mrb[0].mxu0 %v3139
      %v3255 = vpop.f32.mrb[0].mxu0
      %v3256 = vadd.f32 0.0, %v3255
      %v3257 = vpop.f32.mrb[0].mxu0
      %3258 = vdwg.mxu0
      %3269 = vrot.lane.b32.xlu0 %v2793, 64
      %v3270 = vpop.permute.xlu0 %3269
      %3271 = vrot.lane.b32.xlu0 %v2794, 64
      %v3272 = vpop.permute.xlu0 %3271
      %3273 = vrot.lane.b32.xlu0 %v2795, 64
      %v3274 = vpop.permute.xlu0 %3273
      %3275 = vrot.lane.b32.xlu0 %v2796, 64
      %v3276 = vpop.permute.xlu0 %3275
      %3277 = vrot.lane.b32.xlu0 %v2797, 64
      %v3278 = vpop.permute.xlu0 %3277
      %3279 = vrot.lane.b32.xlu0 %v2798, 64
      %v3280 = vpop.permute.xlu0 %3279
      %3281 = vrot.lane.b32.xlu0 %v2799, 64
      %v3282 = vpop.permute.xlu0 %3281
      %3283 = vrot.lane.b32.xlu0 %v2800, 64
      %v3284 = vpop.permute.xlu0 %3283
      %3285 = vrot.lane.b32.xlu0 %v2801, 64
      %v3286 = vpop.permute.xlu0 %3285
      %3287 = vrot.lane.b32.xlu0 %v2802, 64
      %v3288 = vpop.permute.xlu0 %3287
      %v3299 = vsel %vm2697, %v2780, 0
      %v3302 = vsel %vm2697, %v2781, 0
      %v3305 = vsel %vm2697, %v2782, 0
      %v3308 = vsel %vm2697, %v2783, 0
      %v3311 = vsel %vm2697, %v2784, 0
      %v3314 = vsel %vm2697, %v2785, 0
      %v3317 = vsel %vm2697, %v2786, 0
      %v3320 = vsel %vm2697, %v2787, 0
      %v3323 = vsel %vm2697, %v2788, 0
      %v3326 = vsel %vm2697, %v2789, 0
      %v3328 = vsel %vm3141, %v3288, 0
      %3330 = vmatprep.subr.mxu0 0.0
      %3331 = vmatpush1.msra.mxu0 %v3270
      %3332 = vmatprep.subr.mxu0 0.0
      %3333 = vmatpush1.msra.mxu0 %v3272
      %3334 = vmatprep.subr.mxu0 0.0
      %3335 = vmatpush1.msra.mxu0 %v3274
      %3336 = vmatprep.subr.mxu0 0.0
      %3337 = vmatpush1.msra.mxu0 %v3276
      %3338 = vmatprep.subr.mxu0 0.0
      %3339 = vmatpush1.msra.mxu0 %v3278
      %3340 = vmatprep.subr.mxu0 0.0
      %3341 = vmatpush1.msra.mxu0 %v3280
      %3342 = vmatprep.subr.mxu0 0.0
      %3343 = vmatpush1.msra.mxu0 %v3282
      %3344 = vmatprep.subr.mxu0 0.0
      %3345 = vmatpush1.msra.mxu0 %v3284
      %3346 = vmatprep.subr.mxu0 0.0
      %3347 = vmatpush1.msra.mxu0 %v3286
      %3348 = vmatprep.subr.mxu0 0.0
      %3349 = vmatpush1.msra.mxu0 %v3328
      %3350 = vmatprep.subr.mxu0 0.0
      %3351 = vmatpush1.msra.mxu0 0.0
      %3352 = vmatprep.subr.mxu0 0.0
      %3353 = vmatpush1.msra.mxu0 0.0
      %3354 = vmatprep.subr.mxu0 0.0
      %3355 = vmatpush1.msra.mxu0 0.0
      %3356 = vmatprep.subr.mxu0 0.0
      %3357 = vmatpush1.msra.mxu0 0.0
      %3358 = vmatprep.subr.mxu0 0.0
      %3359 = vmatpush1.msra.mxu0 0.0
      %3360 = vmatprep.subr.mxu0 0.0
      %3361 = vmatpush1.msra.mxu0 0.0
      %3362 = vmatprep.subr.mxu0 0.0
      %3363 = vmatpush1.msra.mxu0 0.0
      %3364 = vmatprep.subr.mxu0 0.0
      %3365 = vmatpush1.msra.mxu0 0.0
      %3366 = vmatprep.subr.mxu0 0.0
      %3367 = vmatpush1.msra.mxu0 0.0
      %3368 = vmatprep.subr.mxu0 0.0
      %3369 = vmatpush1.msra.mxu0 0.0
      %3370 = vmatprep.subr.mxu0 0.0
      %3371 = vmatpush1.msra.mxu0 0.0
      %3372 = vmatprep.subr.mxu0 0.0
      %3373 = vmatpush1.msra.mxu0 0.0
      %3374 = vmatprep.subr.mxu0 0.0
      %3375 = vmatpush1.msra.mxu0 0.0
      %3376 = vmatprep.subr.mxu0 0.0
      %3377 = vmatpush1.msra.mxu0 0.0
      %3378 = vmatprep.subr.mxu0 0.0
      %3379 = vmatpush1.msra.mxu0 0.0
      %3380 = vmatprep.subr.mxu0 0.0
      %3381 = vmatpush1.msra.mxu0 0.0
      %3382 = vmatprep.subr.mxu0 0.0
      %3383 = vmatpush1.msra.mxu0 0.0
      %3384 = vmatprep.subr.mxu0 0.0
      %3385 = vmatpush1.msra.mxu0 0.0
      %3386 = vmatprep.subr.mxu0 0.0
      %3387 = vmatpush1.msra.mxu0 0.0
      %3388 = vmatprep.subr.mxu0 0.0
      %3389 = vmatpush1.msra.mxu0 0.0
      %3390 = vmatprep.subr.mxu0 0.0
      %3391 = vmatpush1.msra.mxu0 0.0
      %3392 = vmatprep.subr.mxu0 0.0
      %3393 = vmatpush1.msra.mxu0 0.0
      %3394 = vmatprep.mubr.f32.mxu0 0.0
      %3395 = vmatmul.mubr.f32.gmra.mrb[0].mxu0 %v3299
      %v3396 = vpop.f32.mrb[0].mxu0
      %v3397 = vadd.f32 %v3211, %v3396
      %v3398 = vpop.f32.mrb[0].mxu0
      %3399 = vmatprep.mubr.f32.mxu0 0.0
      %3400 = vmatmul.mubr.f32.gmra.mrb[0].mxu0 %v3302
      %v3401 = vpop.f32.mrb[0].mxu0
      %v3402 = vadd.f32 %v3216, %v3401
      %v3403 = vpop.f32.mrb[0].mxu0
      %3404 = vmatprep.mubr.f32.mxu0 0.0
      %3405 = vmatmul.mubr.f32.gmra.mrb[0].mxu0 %v3305
      %v3406 = vpop.f32.mrb[0].mxu0
      %v3407 = vadd.f32 %v3221, %v3406
      %v3408 = vpop.f32.mrb[0].mxu0
      %3409 = vmatprep.mubr.f32.mxu0 0.0
      %3410 = vmatmul.mubr.f32.gmra.mrb[0].mxu0 %v3308
      %v3411 = vpop.f32.mrb[0].mxu0
      %v3412 = vadd.f32 %v3226, %v3411
      %v3413 = vpop.f32.mrb[0].mxu0
      %3414 = vmatprep.mubr.f32.mxu0 0.0
      %3415 = vmatmul.mubr.f32.gmra.mrb[0].mxu0 %v3311
      %v3416 = vpop.f32.mrb[0].mxu0
      %v3417 = vadd.f32 %v3231, %v3416
      %v3418 = vpop.f32.mrb[0].mxu0
      %3419 = vmatprep.mubr.f32.mxu0 0.0
      %3420 = vmatmul.mubr.f32.gmra.mrb[0].mxu0 %v3314
      %v3421 = vpop.f32.mrb[0].mxu0
      %v3422 = vadd.f32 %v3236, %v3421
      %v3423 = vpop.f32.mrb[0].mxu0
      %3424 = vmatprep.mubr.f32.mxu0 0.0
      %3425 = vmatmul.mubr.f32.gmra.mrb[0].mxu0 %v3317
      %v3426 = vpop.f32.mrb[0].mxu0
      %v3427 = vadd.f32 %v3241, %v3426
      %v3428 = vpop.f32.mrb[0].mxu0
      %3429 = vmatprep.mubr.f32.mxu0 0.0
      %3430 = vmatmul.mubr.f32.gmra.mrb[0].mxu0 %v3320
      %v3431 = vpop.f32.mrb[0].mxu0
      %v3432 = vadd.f32 %v3246, %v3431
      %v3433 = vpop.f32.mrb[0].mxu0
      %3434 = vmatprep.mubr.f32.mxu0 0.0
      %3435 = vmatmul.mubr.f32.gmra.mrb[0].mxu0 %v3323
      %v3436 = vpop.f32.mrb[0].mxu0
      %v3437 = vadd.f32 %v3251, %v3436
      %v3438 = vpop.f32.mrb[0].mxu0
      %3439 = vmatprep.mubr.f32.mxu0 0.0
      %3440 = vmatmul.mubr.f32.gmra.mrb[0].mxu0 %v3326
      %v3441 = vpop.f32.mrb[0].mxu0
      %v3442 = vadd.f32 %v3256, %v3441
      %v3443 = vpop.f32.mrb[0].mxu0
      %3444 = vdwg.mxu0
      %v3445 = vmul.f32 %v2434, %v1282
      %v3446 = vmul.f32 %v2439, %v1282
      %v3447 = vmul.f32 %v2444, %v1282
      %v3448 = vmul.f32 %v2449, %v1282
      %v3449 = vmul.f32 %v2454, %v1282
      %v3450 = vmul.f32 %v2459, %v1282
      %v3451 = vmul.f32 %v2464, %v1282
      %v3452 = vmul.f32 %v2469, %v1282
      %v3453 = vmul.f32 %v2474, %v1282
      %v3454 = vmul.f32 %v2479, %v1282
      %v3456 = vsel %vm441, %v3445, 0
      %v3459 = vsel %vm441, %v3446, 0
      %v3462 = vsel %vm441, %v3447, 0
      %v3465 = vsel %vm441, %v3448, 0
      %v3468 = vsel %vm441, %v3449, 0
      %v3471 = vsel %vm441, %v3450, 0
      %v3474 = vsel %vm441, %v3451, 0
      %v3477 = vsel %vm441, %v3452, 0
      %v3480 = vsel %vm441, %v3453, 0
      %v3483 = vsel %vm441, %v3454, 0
      %3485 = vmatprep.subr.mxu0 0.0
      %3486 = vmatpush1.xpose.msra.mxu0 %v2552
      %3487 = vmatprep.subr.mxu0 0.0
      %3488 = vmatpush1.xpose.msra.mxu0 %v2554
      %3489 = vmatprep.subr.mxu0 0.0
      %3490 = vmatpush1.xpose.msra.mxu0 %v2556
      %3491 = vmatprep.subr.mxu0 0.0
      %3492 = vmatpush1.xpose.msra.mxu0 %v2558
      %3493 = vmatprep.subr.mxu0 0.0
      %3494 = vmatpush1.xpose.msra.mxu0 %v2560
      %3495 = vmatprep.subr.mxu0 0.0
      %3496 = vmatpush1.xpose.msra.mxu0 %v2562
      %3497 = vmatprep.subr.mxu0 0.0
      %3498 = vmatpush1.xpose.msra.mxu0 %v2564
      %3499 = vmatprep.subr.mxu0 0.0
      %3500 = vmatpush1.xpose.msra.mxu0 %v2566
      %3501 = vmatprep.subr.mxu0 0.0
      %3502 = vmatpush1.xpose.msra.mxu0 %v2568
      %3503 = vmatprep.subr.mxu0 0.0
      %3504 = vmatpush1.xpose.msra.mxu0 %v2570
      %3505 = vmatprep.subr.mxu0 0.0
      %3506 = vmatpush1.xpose.msra.mxu0 0.0
      %3507 = vmatprep.subr.mxu0 0.0
      %3508 = vmatpush1.xpose.msra.mxu0 0.0
      %3509 = vmatprep.subr.mxu0 0.0
      %3510 = vmatpush1.xpose.msra.mxu0 0.0
      %3511 = vmatprep.subr.mxu0 0.0
      %3512 = vmatpush1.xpose.msra.mxu0 0.0
      %3513 = vmatprep.subr.mxu0 0.0
      %3514 = vmatpush1.xpose.msra.mxu0 0.0
      %3515 = vmatprep.subr.mxu0 0.0
      %3516 = vmatpush1.xpose.msra.mxu0 0.0
      %3517 = vmatprep.subr.mxu0 0.0
      %3518 = vmatpush1.xpose.msra.mxu0 0.0
      %3519 = vmatprep.subr.mxu0 0.0
      %3520 = vmatpush1.xpose.msra.mxu0 0.0
      %3521 = vmatprep.subr.mxu0 0.0
      %3522 = vmatpush1.xpose.msra.mxu0 0.0
      %3523 = vmatprep.subr.mxu0 0.0
      %3524 = vmatpush1.xpose.msra.mxu0 0.0
      %3525 = vmatprep.subr.mxu0 0.0
      %3526 = vmatpush1.xpose.msra.mxu0 0.0
      %3527 = vmatprep.subr.mxu0 0.0
      %3528 = vmatpush1.xpose.msra.mxu0 0.0
      %3529 = vmatprep.subr.mxu0 0.0
      %3530 = vmatpush1.xpose.msra.mxu0 0.0
      %3531 = vmatprep.subr.mxu0 0.0
      %3532 = vmatpush1.xpose.msra.mxu0 0.0
      %3533 = vmatprep.subr.mxu0 0.0
      %3534 = vmatpush1.xpose.msra.mxu0 0.0
      %3535 = vmatprep.subr.mxu0 0.0
      %3536 = vmatpush1.xpose.msra.mxu0 0.0
      %3537 = vmatprep.subr.mxu0 0.0
      %3538 = vmatpush1.xpose.msra.mxu0 0.0
      %3539 = vmatprep.subr.mxu0 0.0
      %3540 = vmatpush1.xpose.msra.mxu0 0.0
      %3541 = vmatprep.subr.mxu0 0.0
      %3542 = vmatpush1.xpose.msra.mxu0 0.0
      %3543 = vmatprep.subr.mxu0 0.0
      %3544 = vmatpush1.xpose.msra.mxu0 0.0
      %3545 = vmatprep.subr.mxu0 0.0
      %3546 = vmatpush1.xpose.msra.mxu0 0.0
      %3547 = vmatprep.subr.mxu0 0.0
      %3548 = vmatpush1.xpose.msra.mxu0 0.0
      %3549 = vmatprep.mubr.f32.mxu0 0.0
      %3550 = vmatmul.mubr.f32.gmra.mrb[0].mxu0 %v3456
      %v3551 = vpop.f32.mrb[0].mxu0
      %v3552 = vadd.f32 0.0, %v3551
      %v3553 = vpop.f32.mrb[0].mxu0
      %3554 = vmatprep.mubr.f32.mxu0 0.0
      %3555 = vmatmul.mubr.f32.gmra.mrb[0].mxu0 %v3459
      %v3556 = vpop.f32.mrb[0].mxu0
      %v3557 = vadd.f32 0.0, %v3556
      %v3558 = vpop.f32.mrb[0].mxu0
      %3559 = vmatprep.mubr.f32.mxu0 0.0
      %3560 = vmatmul.mubr.f32.gmra.mrb[0].mxu0 %v3462
      %v3561 = vpop.f32.mrb[0].mxu0
      %v3562 = vadd.f32 0.0, %v3561
      %v3563 = vpop.f32.mrb[0].mxu0
      %3564 = vmatprep.mubr.f32.mxu0 0.0
      %3565 = vmatmul.mubr.f32.gmra.mrb[0].mxu0 %v3465
      %v3566 = vpop.f32.mrb[0].mxu0
      %v3567 = vadd.f32 0.0, %v3566
      %v3568 = vpop.f32.mrb[0].mxu0
      %3569 = vmatprep.mubr.f32.mxu0 0.0
      %3570 = vmatmul.mubr.f32.gmra.mrb[0].mxu0 %v3468
      %v3571 = vpop.f32.mrb[0].mxu0
      %v3572 = vadd.f32 0.0, %v3571
      %v3573 = vpop.f32.mrb[0].mxu0
      %3574 = vmatprep.mubr.f32.mxu0 0.0
      %3575 = vmatmul.mubr.f32.gmra.mrb[0].mxu0 %v3471
      %v3576 = vpop.f32.mrb[0].mxu0
      %v3577 = vadd.f32 0.0, %v3576
      %v3578 = vpop.f32.mrb[0].mxu0
      %3579 = vmatprep.mubr.f32.mxu0 0.0
      %3580 = vmatmul.mubr.f32.gmra.mrb[0].mxu0 %v3474
      %v3581 = vpop.f32.mrb[0].mxu0
      %v3582 = vadd.f32 0.0, %v3581
      %v3583 = vpop.f32.mrb[0].mxu0
      %3584 = vmatprep.mubr.f32.mxu0 0.0
      %3585 = vmatmul.mubr.f32.gmra.mrb[0].mxu0 %v3477
      %v3586 = vpop.f32.mrb[0].mxu0
      %v3587 = vadd.f32 0.0, %v3586
      %v3588 = vpop.f32.mrb[0].mxu0
      %3589 = vmatprep.mubr.f32.mxu0 0.0
      %3590 = vmatmul.mubr.f32.gmra.mrb[0].mxu0 %v3480
      %v3591 = vpop.f32.mrb[0].mxu0
      %v3592 = vadd.f32 0.0, %v3591
      %v3593 = vpop.f32.mrb[0].mxu0
      %3594 = vmatprep.mubr.f32.mxu0 0.0
      %3595 = vmatmul.mubr.f32.gmra.mrb[0].mxu0 %v3483
      %v3596 = vpop.f32.mrb[0].mxu0
      %v3597 = vadd.f32 0.0, %v3596
      %v3598 = vpop.f32.mrb[0].mxu0
      %3599 = vdwg.mxu0
      %v3600 = vmul.f32 %v3552, 0.17677669
      %v3601 = vmul.f32 %v3557, 0.17677669
      %v3602 = vmul.f32 %v3562, 0.17677669
      %v3603 = vmul.f32 %v3567, 0.17677669
      %v3604 = vmul.f32 %v3572, 0.17677669
      %v3605 = vmul.f32 %v3577, 0.17677669
      %v3606 = vmul.f32 %v3582, 0.17677669
      %v3607 = vmul.f32 %v3587, 0.17677669
      %v3608 = vmul.f32 %v3592, 0.17677669
      %v3609 = vmul.f32 %v3597, 0.17677669
      %v3610 = vsel %vm2697, %v3600, -inf
      %v3611 = vsel %vm2697, %v3601, -inf
      %v3612 = vsel %vm2697, %v3602, -inf
      %v3613 = vsel %vm2697, %v3603, -inf
      %v3614 = vsel %vm2697, %v3604, -inf
      %v3615 = vmax.f32 %v3610, %v3614
      %v3616 = vsel %vm2697, %v3605, -inf
      %v3617 = vmax.f32 %v3611, %v3616
      %v3618 = vsel %vm2697, %v3606, -inf
      %v3619 = vmax.f32 %v3612, %v3618
      %v3620 = vsel %vm2697, %v3607, -inf
      %v3621 = vmax.f32 %v3613, %v3620
      %v3622 = vsel %vm2697, %v3608, -inf
      %v3623 = vmax.f32 %v3615, %v3622
      %v3624 = vsel %vm2712, %v3609, -inf
      %v3625 = vmax.f32 %v3617, %v3624
      %v3626 = vmax.f32 %v3623, %v3625
      %v3627 = vmax.f32 %v3619, %v3621
      %v3628 = vmax.f32 %v3626, %v3627
      %v3629 = vrot.slane %v3628, 4
      %v3630 = vmax.f32 %v3628, %v3629
      %v3631 = vrot.slane %v3630, 2
      %v3632 = vmax.f32 %v3630, %v3631
      %v3633 = vrot.slane %v3632, 1
      %v3634 = vmax.f32 %v3632, %v3633
      %v3635 = vsub.f32 %v3600, %v3634
      %v3636 = vsub.f32 %v3601, %v3634
      %v3637 = vsub.f32 %v3602, %v3634
      %v3638 = vsub.f32 %v3603, %v3634
      %v3639 = vsub.f32 %v3604, %v3634
      %v3640 = vsub.f32 %v3605, %v3634
      %v3641 = vsub.f32 %v3606, %v3634
      %v3642 = vsub.f32 %v3607, %v3634
      %v3643 = vsub.f32 %v3608, %v3634
      %v3644 = vsub.f32 %v3609, %v3634
      %v3645 = vmul.f32 %v3635, 1.442695
      %v3646 = vpow.pop %v3645
      %v3647 = vmul.f32 %v3636, 1.442695
      %v3648 = vpow.pop %v3647
      %v3649 = vmul.f32 %v3637, 1.442695
      %v3650 = vpow.pop %v3649
      %v3651 = vmul.f32 %v3638, 1.442695
      %v3652 = vpow.pop %v3651
      %v3653 = vmul.f32 %v3639, 1.442695
      %v3654 = vpow.pop %v3653
      %v3655 = vmul.f32 %v3640, 1.442695
      %v3656 = vpow.pop %v3655
      %v3657 = vmul.f32 %v3641, 1.442695
      %v3658 = vpow.pop %v3657
      %v3659 = vmul.f32 %v3642, 1.442695
      %v3660 = vpow.pop %v3659
      %v3661 = vmul.f32 %v3643, 1.442695
      %v3662 = vpow.pop %v3661
      %v3663 = vmul.f32 %v3644, 1.442695
      %v3664 = vpow.pop %v3663
      %v3665 = vsel %vm2697, %v3646, 0.0
      %v3666 = vsel %vm2697, %v3648, 0.0
      %v3667 = vadd.f32 %v3665, %v3666
      %v3668 = vsel %vm2697, %v3650, 0.0
      %v3669 = vadd.f32 %v3667, %v3668
      %v3670 = vsel %vm2697, %v3652, 0.0
      %v3671 = vadd.f32 %v3669, %v3670
      %v3672 = vsel %vm2697, %v3654, 0.0
      %v3673 = vadd.f32 %v3671, %v3672
      %v3674 = vsel %vm2697, %v3656, 0.0
      %v3675 = vadd.f32 %v3673, %v3674
      %v3676 = vsel %vm2697, %v3658, 0.0
      %v3677 = vadd.f32 %v3675, %v3676
      %v3678 = vsel %vm2697, %v3660, 0.0
      %v3679 = vadd.f32 %v3677, %v3678
      %v3680 = vsel %vm2697, %v3662, 0.0
      %v3681 = vadd.f32 %v3679, %v3680
      %v3682 = vsel %vm2712, %v3664, 0.0
      %v3683 = vadd.f32 %v3681, %v3682
      %v3684 = vrot.slane %v3683, 4
      %v3685 = vadd.f32 %v3683, %v3684
      %v3686 = vrot.slane %v3685, 2
      %v3687 = vadd.f32 %v3685, %v3686
      %v3688 = vrot.slane %v3687, 1
      %v3689 = vadd.f32 %v3687, %v3688
      %v3690 = vrcp.pop %v3689
      %v3691 = vmul.f32 %v3646, %v3690
      %v3692 = vmul.f32 %v3648, %v3690
      %v3693 = vmul.f32 %v3650, %v3690
      %v3694 = vmul.f32 %v3652, %v3690
      %v3695 = vmul.f32 %v3654, %v3690
      %v3696 = vmul.f32 %v3656, %v3690
      %v3697 = vmul.f32 %v3658, %v3690
      %v3698 = vmul.f32 %v3660, %v3690
      %v3699 = vmul.f32 %v3662, %v3690
      %v3700 = vmul.f32 %v3664, %v3690
      %3701 = vrot.lane.b32.xlu0 %v1282, 64
      %v3702 = vpop.permute.xlu0 %3701
      %v3704 = vmul.f32 %v2434, %v3702
      %v3705 = vmul.f32 %v2439, %v3702
      %v3706 = vmul.f32 %v2444, %v3702
      %v3707 = vmul.f32 %v2449, %v3702
      %v3708 = vmul.f32 %v2454, %v3702
      %v3709 = vmul.f32 %v2459, %v3702
      %v3710 = vmul.f32 %v2464, %v3702
      %v3711 = vmul.f32 %v2469, %v3702
      %v3712 = vmul.f32 %v2474, %v3702
      %v3713 = vmul.f32 %v2479, %v3702
      %3724 = vrot.lane.b32.xlu0 %v3704, 64
      %v3725 = vpop.permute.xlu0 %3724
      %3726 = vrot.lane.b32.xlu0 %v3705, 64
      %v3727 = vpop.permute.xlu0 %3726
      %3728 = vrot.lane.b32.xlu0 %v3706, 64
      %v3729 = vpop.permute.xlu0 %3728
      %3730 = vrot.lane.b32.xlu0 %v3707, 64
      %v3731 = vpop.permute.xlu0 %3730
      %3732 = vrot.lane.b32.xlu0 %v3708, 64
      %v3733 = vpop.permute.xlu0 %3732
      %3734 = vrot.lane.b32.xlu0 %v3709, 64
      %v3735 = vpop.permute.xlu0 %3734
      %3736 = vrot.lane.b32.xlu0 %v3710, 64
      %v3737 = vpop.permute.xlu0 %3736
      %3738 = vrot.lane.b32.xlu0 %v3711, 64
      %v3739 = vpop.permute.xlu0 %3738
      %3740 = vrot.lane.b32.xlu0 %v3712, 64
      %v3741 = vpop.permute.xlu0 %3740
      %3742 = vrot.lane.b32.xlu0 %v3713, 64
      %v3743 = vpop.permute.xlu0 %3742
      %v3754 = vsel %vm2697, %v3691, 0
      %v3757 = vsel %vm2697, %v3692, 0
      %v3760 = vsel %vm2697, %v3693, 0
      %v3763 = vsel %vm2697, %v3694, 0
      %v3766 = vsel %vm2697, %v3695, 0
      %v3769 = vsel %vm2697, %v3696, 0
      %v3772 = vsel %vm2697, %v3697, 0
      %v3775 = vsel %vm2697, %v3698, 0
      %v3778 = vsel %vm2697, %v3699, 0
      %v3781 = vsel %vm2697, %v3700, 0
      %v3783 = vsel %vm3141, %v3743, 0
      %3785 = vmatprep.subr.mxu0 0.0
      %3786 = vmatpush1.msra.mxu0 %v3725
      %3787 = vmatprep.subr.mxu0 0.0
      %3788 = vmatpush1.msra.mxu0 %v3727
      %3789 = vmatprep.subr.mxu0 0.0
      %3790 = vmatpush1.msra.mxu0 %v3729
      %3791 = vmatprep.subr.mxu0 0.0
      %3792 = vmatpush1.msra.mxu0 %v3731
      %3793 = vmatprep.subr.mxu0 0.0
      %3794 = vmatpush1.msra.mxu0 %v3733
      %3795 = vmatprep.subr.mxu0 0.0
      %3796 = vmatpush1.msra.mxu0 %v3735
      %3797 = vmatprep.subr.mxu0 0.0
      %3798 = vmatpush1.msra.mxu0 %v3737
      %3799 = vmatprep.subr.mxu0 0.0
      %3800 = vmatpush1.msra.mxu0 %v3739
      %3801 = vmatprep.subr.mxu0 0.0
      %3802 = vmatpush1.msra.mxu0 %v3741
      %3803 = vmatprep.subr.mxu0 0.0
      %3804 = vmatpush1.msra.mxu0 %v3783
      %3805 = vmatprep.subr.mxu0 0.0
      %3806 = vmatpush1.msra.mxu0 0.0
      %3807 = vmatprep.subr.mxu0 0.0
      %3808 = vmatpush1.msra.mxu0 0.0
      %3809 = vmatprep.subr.mxu0 0.0
      %3810 = vmatpush1.msra.mxu0 0.0
      %3811 = vmatprep.subr.mxu0 0.0
      %3812 = vmatpush1.msra.mxu0 0.0
      %3813 = vmatprep.subr.mxu0 0.0
      %3814 = vmatpush1.msra.mxu0 0.0
      %3815 = vmatprep.subr.mxu0 0.0
      %3816 = vmatpush1.msra.mxu0 0.0
      %3817 = vmatprep.subr.mxu0 0.0
      %3818 = vmatpush1.msra.mxu0 0.0
      %3819 = vmatprep.subr.mxu0 0.0
      %3820 = vmatpush1.msra.mxu0 0.0
      %3821 = vmatprep.subr.mxu0 0.0
      %3822 = vmatpush1.msra.mxu0 0.0
      %3823 = vmatprep.subr.mxu0 0.0
      %3824 = vmatpush1.msra.mxu0 0.0
      %3825 = vmatprep.subr.mxu0 0.0
      %3826 = vmatpush1.msra.mxu0 0.0
      %3827 = vmatprep.subr.mxu0 0.0
      %3828 = vmatpush1.msra.mxu0 0.0
      %3829 = vmatprep.subr.mxu0 0.0
      %3830 = vmatpush1.msra.mxu0 0.0
      %3831 = vmatprep.subr.mxu0 0.0
      %3832 = vmatpush1.msra.mxu0 0.0
      %3833 = vmatprep.subr.mxu0 0.0
      %3834 = vmatpush1.msra.mxu0 0.0
      %3835 = vmatprep.subr.mxu0 0.0
      %3836 = vmatpush1.msra.mxu0 0.0
      %3837 = vmatprep.subr.mxu0 0.0
      %3838 = vmatpush1.msra.mxu0 0.0
      %3839 = vmatprep.subr.mxu0 0.0
      %3840 = vmatpush1.msra.mxu0 0.0
      %3841 = vmatprep.subr.mxu0 0.0
      %3842 = vmatpush1.msra.mxu0 0.0
      %3843 = vmatprep.subr.mxu0 0.0
      %3844 = vmatpush1.msra.mxu0 0.0
      %3845 = vmatprep.subr.mxu0 0.0
      %3846 = vmatpush1.msra.mxu0 0.0
      %3847 = vmatprep.subr.mxu0 0.0
      %3848 = vmatpush1.msra.mxu0 0.0
      %3849 = vmatprep.mubr.f32.mxu0 0.0
      %3850 = vmatmul.mubr.f32.gmra.mrb[0].mxu0 %v3754
      %v3851 = vpop.f32.mrb[0].mxu0
      %v3852 = vadd.f32 0.0, %v3851
      %v3853 = vpop.f32.mrb[0].mxu0
      %3854 = vmatprep.mubr.f32.mxu0 0.0
      %3855 = vmatmul.mubr.f32.gmra.mrb[0].mxu0 %v3757
      %v3856 = vpop.f32.mrb[0].mxu0
      %v3857 = vadd.f32 0.0, %v3856
      %v3858 = vpop.f32.mrb[0].mxu0
      %3859 = vmatprep.mubr.f32.mxu0 0.0
      %3860 = vmatmul.mubr.f32.gmra.mrb[0].mxu0 %v3760
      %v3861 = vpop.f32.mrb[0].mxu0
      %v3862 = vadd.f32 0.0, %v3861
      %v3863 = vpop.f32.mrb[0].mxu0
      %3864 = vmatprep.mubr.f32.mxu0 0.0
      %3865 = vmatmul.mubr.f32.gmra.mrb[0].mxu0 %v3763
      %v3866 = vpop.f32.mrb[0].mxu0
      %v3867 = vadd.f32 0.0, %v3866
      %v3868 = vpop.f32.mrb[0].mxu0
      %3869 = vmatprep.mubr.f32.mxu0 0.0
      %3870 = vmatmul.mubr.f32.gmra.mrb[0].mxu0 %v3766
      %v3871 = vpop.f32.mrb[0].mxu0
      %v3872 = vadd.f32 0.0, %v3871
      %v3873 = vpop.f32.mrb[0].mxu0
      %3874 = vmatprep.mubr.f32.mxu0 0.0
      %3875 = vmatmul.mubr.f32.gmra.mrb[0].mxu0 %v3769
      %v3876 = vpop.f32.mrb[0].mxu0
      %v3877 = vadd.f32 0.0, %v3876
      %v3878 = vpop.f32.mrb[0].mxu0
      %3879 = vmatprep.mubr.f32.mxu0 0.0
      %3880 = vmatmul.mubr.f32.gmra.mrb[0].mxu0 %v3772
      %v3881 = vpop.f32.mrb[0].mxu0
      %v3882 = vadd.f32 0.0, %v3881
      %v3883 = vpop.f32.mrb[0].mxu0
      %3884 = vmatprep.mubr.f32.mxu0 0.0
      %3885 = vmatmul.mubr.f32.gmra.mrb[0].mxu0 %v3775
      %v3886 = vpop.f32.mrb[0].mxu0
      %v3887 = vadd.f32 0.0, %v3886
      %v3888 = vpop.f32.mrb[0].mxu0
      %3889 = vmatprep.mubr.f32.mxu0 0.0
      %3890 = vmatmul.mubr.f32.gmra.mrb[0].mxu0 %v3778
      %v3891 = vpop.f32.mrb[0].mxu0
      %v3892 = vadd.f32 0.0, %v3891
      %v3893 = vpop.f32.mrb[0].mxu0
      %3894 = vmatprep.mubr.f32.mxu0 0.0
      %3895 = vmatmul.mubr.f32.gmra.mrb[0].mxu0 %v3781
      %v3896 = vpop.f32.mrb[0].mxu0
      %v3897 = vadd.f32 0.0, %v3896
      %v3898 = vpop.f32.mrb[0].mxu0
      %3899 = vdwg.mxu0
      %v3900 = vadd.f32 %v3397, %v3852
      %v3901 = vadd.f32 %v3402, %v3857
      %v3902 = vadd.f32 %v3407, %v3862
      %v3903 = vadd.f32 %v3412, %v3867
      %v3904 = vadd.f32 %v3417, %v3872
      %v3905 = vadd.f32 %v3422, %v3877
      %v3906 = vadd.f32 %v3427, %v3882
      %v3907 = vadd.f32 %v3432, %v3887
      %v3908 = vadd.f32 %v3437, %v3892
      %v3909 = vadd.f32 %v3442, %v3897
      %v3910 = vmul.f32 %v2434, %v1714
      %v3911 = vmul.f32 %v2439, %v1714
      %v3912 = vmul.f32 %v2444, %v1714
      %v3913 = vmul.f32 %v2449, %v1714
      %v3914 = vmul.f32 %v2454, %v1714
      %v3915 = vmul.f32 %v2459, %v1714
      %v3916 = vmul.f32 %v2464, %v1714
      %v3917 = vmul.f32 %v2469, %v1714
      %v3918 = vmul.f32 %v2474, %v1714
      %v3919 = vmul.f32 %v2479, %v1714
      %v3921 = vsel %vm441, %v3910, 0
      %v3924 = vsel %vm441, %v3911, 0
      %v3927 = vsel %vm441, %v3912, 0
      %v3930 = vsel %vm441, %v3913, 0
      %v3933 = vsel %vm441, %v3914, 0
      %v3936 = vsel %vm441, %v3915, 0
      %v3939 = vsel %vm441, %v3916, 0
      %v3942 = vsel %vm441, %v3917, 0
      %v3945 = vsel %vm441, %v3918, 0
      %v3948 = vsel %vm441, %v3919, 0
      %3950 = vmatprep.subr.mxu0 0.0
      %3951 = vmatpush1.xpose.msra.mxu0 %v2552
      %3952 = vmatprep.subr.mxu0 0.0
      %3953 = vmatpush1.xpose.msra.mxu0 %v2554
      %3954 = vmatprep.subr.mxu0 0.0
      %3955 = vmatpush1.xpose.msra.mxu0 %v2556
      %3956 = vmatprep.subr.mxu0 0.0
      %3957 = vmatpush1.xpose.msra.mxu0 %v2558
      %3958 = vmatprep.subr.mxu0 0.0
      %3959 = vmatpush1.xpose.msra.mxu0 %v2560
      %3960 = vmatprep.subr.mxu0 0.0
      %3961 = vmatpush1.xpose.msra.mxu0 %v2562
      %3962 = vmatprep.subr.mxu0 0.0
      %3963 = vmatpush1.xpose.msra.mxu0 %v2564
      %3964 = vmatprep.subr.mxu0 0.0
      %3965 = vmatpush1.xpose.msra.mxu0 %v2566
      %3966 = vmatprep.subr.mxu0 0.0
      %3967 = vmatpush1.xpose.msra.mxu0 %v2568
      %3968 = vmatprep.subr.mxu0 0.0
      %3969 = vmatpush1.xpose.msra.mxu0 %v2570
      %3970 = vmatprep.subr.mxu0 0.0
      %3971 = vmatpush1.xpose.msra.mxu0 0.0
      %3972 = vmatprep.subr.mxu0 0.0
      %3973 = vmatpush1.xpose.msra.mxu0 0.0
      %3974 = vmatprep.subr.mxu0 0.0
      %3975 = vmatpush1.xpose.msra.mxu0 0.0
      %3976 = vmatprep.subr.mxu0 0.0
      %3977 = vmatpush1.xpose.msra.mxu0 0.0
      %3978 = vmatprep.subr.mxu0 0.0
      %3979 = vmatpush1.xpose.msra.mxu0 0.0
      %3980 = vmatprep.subr.mxu0 0.0
      %3981 = vmatpush1.xpose.msra.mxu0 0.0
      %3982 = vmatprep.subr.mxu0 0.0
      %3983 = vmatpush1.xpose.msra.mxu0 0.0
      %3984 = vmatprep.subr.mxu0 0.0
      %3985 = vmatpush1.xpose.msra.mxu0 0.0
      %3986 = vmatprep.subr.mxu0 0.0
      %3987 = vmatpush1.xpose.msra.mxu0 0.0
      %3988 = vmatprep.subr.mxu0 0.0
      %3989 = vmatpush1.xpose.msra.mxu0 0.0
      %3990 = vmatprep.subr.mxu0 0.0
      %3991 = vmatpush1.xpose.msra.mxu0 0.0
      %3992 = vmatprep.subr.mxu0 0.0
      %3993 = vmatpush1.xpose.msra.mxu0 0.0
      %3994 = vmatprep.subr.mxu0 0.0
      %3995 = vmatpush1.xpose.msra.mxu0 0.0
      %3996 = vmatprep.subr.mxu0 0.0
      %3997 = vmatpush1.xpose.msra.mxu0 0.0
      %3998 = vmatprep.subr.mxu0 0.0
      %3999 = vmatpush1.xpose.msra.mxu0 0.0
      %4000 = vmatprep.subr.mxu0 0.0
      %4001 = vmatpush1.xpose.msra.mxu0 0.0
      %4002 = vmatprep.subr.mxu0 0.0
      %4003 = vmatpush1.xpose.msra.mxu0 0.0
      %4004 = vmatprep.subr.mxu0 0.0
      %4005 = vmatpush1.xpose.msra.mxu0 0.0
      %4006 = vmatprep.subr.mxu0 0.0
      %4007 = vmatpush1.xpose.msra.mxu0 0.0
      %4008 = vmatprep.subr.mxu0 0.0
      %4009 = vmatpush1.xpose.msra.mxu0 0.0
      %4010 = vmatprep.subr.mxu0 0.0
      %4011 = vmatpush1.xpose.msra.mxu0 0.0
      %4012 = vmatprep.subr.mxu0 0.0
      %4013 = vmatpush1.xpose.msra.mxu0 0.0
      %4014 = vmatprep.mubr.f32.mxu0 0.0
      %4015 = vmatmul.mubr.f32.gmra.mrb[0].mxu0 %v3921
      %v4016 = vpop.f32.mrb[0].mxu0
      %v4017 = vadd.f32 0.0, %v4016
      %v4018 = vpop.f32.mrb[0].mxu0
      %4019 = vmatprep.mubr.f32.mxu0 0.0
      %4020 = vmatmul.mubr.f32.gmra.mrb[0].mxu0 %v3924
      %v4021 = vpop.f32.mrb[0].mxu0
      %v4022 = vadd.f32 0.0, %v4021
      %v4023 = vpop.f32.mrb[0].mxu0
      %4024 = vmatprep.mubr.f32.mxu0 0.0
      %4025 = vmatmul.mubr.f32.gmra.mrb[0].mxu0 %v3927
      %v4026 = vpop.f32.mrb[0].mxu0
      %v4027 = vadd.f32 0.0, %v4026
      %v4028 = vpop.f32.mrb[0].mxu0
      %4029 = vmatprep.mubr.f32.mxu0 0.0
      %4030 = vmatmul.mubr.f32.gmra.mrb[0].mxu0 %v3930
      %v4031 = vpop.f32.mrb[0].mxu0
      %v4032 = vadd.f32 0.0, %v4031
      %v4033 = vpop.f32.mrb[0].mxu0
      %4034 = vmatprep.mubr.f32.mxu0 0.0
      %4035 = vmatmul.mubr.f32.gmra.mrb[0].mxu0 %v3933
      %v4036 = vpop.f32.mrb[0].mxu0
      %v4037 = vadd.f32 0.0, %v4036
      %v4038 = vpop.f32.mrb[0].mxu0
      %4039 = vmatprep.mubr.f32.mxu0 0.0
      %4040 = vmatmul.mubr.f32.gmra.mrb[0].mxu0 %v3936
      %v4041 = vpop.f32.mrb[0].mxu0
      %v4042 = vadd.f32 0.0, %v4041
      %v4043 = vpop.f32.mrb[0].mxu0
      %4044 = vmatprep.mubr.f32.mxu0 0.0
      %4045 = vmatmul.mubr.f32.gmra.mrb[0].mxu0 %v3939
      %v4046 = vpop.f32.mrb[0].mxu0
      %v4047 = vadd.f32 0.0, %v4046
      %v4048 = vpop.f32.mrb[0].mxu0
      %4049 = vmatprep.mubr.f32.mxu0 0.0
      %4050 = vmatmul.mubr.f32.gmra.mrb[0].mxu0 %v3942
      %v4051 = vpop.f32.mrb[0].mxu0
      %v4052 = vadd.f32 0.0, %v4051
      %v4053 = vpop.f32.mrb[0].mxu0
      %4054 = vmatprep.mubr.f32.mxu0 0.0
      %4055 = vmatmul.mubr.f32.gmra.mrb[0].mxu0 %v3945
      %v4056 = vpop.f32.mrb[0].mxu0
      %v4057 = vadd.f32 0.0, %v4056
      %v4058 = vpop.f32.mrb[0].mxu0
      %4059 = vmatprep.mubr.f32.mxu0 0.0
      %4060 = vmatmul.mubr.f32.gmra.mrb[0].mxu0 %v3948
      %v4061 = vpop.f32.mrb[0].mxu0
      %v4062 = vadd.f32 0.0, %v4061
      %v4063 = vpop.f32.mrb[0].mxu0
      %4064 = vdwg.mxu0
      %v4065 = vmul.f32 %v4017, 0.17677669
      %v4066 = vmul.f32 %v4022, 0.17677669
      %v4067 = vmul.f32 %v4027, 0.17677669
      %v4068 = vmul.f32 %v4032, 0.17677669
      %v4069 = vmul.f32 %v4037, 0.17677669
      %v4070 = vmul.f32 %v4042, 0.17677669
      %v4071 = vmul.f32 %v4047, 0.17677669
      %v4072 = vmul.f32 %v4052, 0.17677669
      %v4073 = vmul.f32 %v4057, 0.17677669
      %v4074 = vmul.f32 %v4062, 0.17677669
      %v4075 = vsel %vm2697, %v4065, -inf
      %v4076 = vsel %vm2697, %v4066, -inf
      %v4077 = vsel %vm2697, %v4067, -inf
      %v4078 = vsel %vm2697, %v4068, -inf
      %v4079 = vsel %vm2697, %v4069, -inf
      %v4080 = vmax.f32 %v4075, %v4079
      %v4081 = vsel %vm2697, %v4070, -inf
      %v4082 = vmax.f32 %v4076, %v4081
      %v4083 = vsel %vm2697, %v4071, -inf
      %v4084 = vmax.f32 %v4077, %v4083
      %v4085 = vsel %vm2697, %v4072, -inf
      %v4086 = vmax.f32 %v4078, %v4085
      %v4087 = vsel %vm2697, %v4073, -inf
      %v4088 = vmax.f32 %v4080, %v4087
      %v4089 = vsel %vm2712, %v4074, -inf
      %v4090 = vmax.f32 %v4082, %v4089
      %v4091 = vmax.f32 %v4088, %v4090
      %v4092 = vmax.f32 %v4084, %v4086
      %v4093 = vmax.f32 %v4091, %v4092
      %v4094 = vrot.slane %v4093, 4
      %v4095 = vmax.f32 %v4093, %v4094
      %v4096 = vrot.slane %v4095, 2
      %v4097 = vmax.f32 %v4095, %v4096
      %v4098 = vrot.slane %v4097, 1
      %v4099 = vmax.f32 %v4097, %v4098
      %v4100 = vsub.f32 %v4065, %v4099
      %v4101 = vsub.f32 %v4066, %v4099
      %v4102 = vsub.f32 %v4067, %v4099
      %v4103 = vsub.f32 %v4068, %v4099
      %v4104 = vsub.f32 %v4069, %v4099
      %v4105 = vsub.f32 %v4070, %v4099
      %v4106 = vsub.f32 %v4071, %v4099
      %v4107 = vsub.f32 %v4072, %v4099
      %v4108 = vsub.f32 %v4073, %v4099
      %v4109 = vsub.f32 %v4074, %v4099
      %v4110 = vmul.f32 %v4100, 1.442695
      %v4111 = vpow.pop %v4110
      %v4112 = vmul.f32 %v4101, 1.442695
      %v4113 = vpow.pop %v4112
      %v4114 = vmul.f32 %v4102, 1.442695
      %v4115 = vpow.pop %v4114
      %v4116 = vmul.f32 %v4103, 1.442695
      %v4117 = vpow.pop %v4116
      %v4118 = vmul.f32 %v4104, 1.442695
      %v4119 = vpow.pop %v4118
      %v4120 = vmul.f32 %v4105, 1.442695
      %v4121 = vpow.pop %v4120
      %v4122 = vmul.f32 %v4106, 1.442695
      %v4123 = vpow.pop %v4122
      %v4124 = vmul.f32 %v4107, 1.442695
      %v4125 = vpow.pop %v4124
      %v4126 = vmul.f32 %v4108, 1.442695
      %v4127 = vpow.pop %v4126
      %v4128 = vmul.f32 %v4109, 1.442695
      %v4129 = vpow.pop %v4128
      %v4130 = vsel %vm2697, %v4111, 0.0
      %v4131 = vsel %vm2697, %v4113, 0.0
      %v4132 = vadd.f32 %v4130, %v4131
      %v4133 = vsel %vm2697, %v4115, 0.0
      %v4134 = vadd.f32 %v4132, %v4133
      %v4135 = vsel %vm2697, %v4117, 0.0
      %v4136 = vadd.f32 %v4134, %v4135
      %v4137 = vsel %vm2697, %v4119, 0.0
      %v4138 = vadd.f32 %v4136, %v4137
      %v4139 = vsel %vm2697, %v4121, 0.0
      %v4140 = vadd.f32 %v4138, %v4139
      %v4141 = vsel %vm2697, %v4123, 0.0
      %v4142 = vadd.f32 %v4140, %v4141
      %v4143 = vsel %vm2697, %v4125, 0.0
      %v4144 = vadd.f32 %v4142, %v4143
      %v4145 = vsel %vm2697, %v4127, 0.0
      %v4146 = vadd.f32 %v4144, %v4145
      %v4147 = vsel %vm2712, %v4129, 0.0
      %v4148 = vadd.f32 %v4146, %v4147
      %v4149 = vrot.slane %v4148, 4
      %v4150 = vadd.f32 %v4148, %v4149
      %v4151 = vrot.slane %v4150, 2
      %v4152 = vadd.f32 %v4150, %v4151
      %v4153 = vrot.slane %v4152, 1
      %v4154 = vadd.f32 %v4152, %v4153
      %v4155 = vrcp.pop %v4154
      %v4156 = vmul.f32 %v4111, %v4155
      %v4157 = vmul.f32 %v4113, %v4155
      %v4158 = vmul.f32 %v4115, %v4155
      %v4159 = vmul.f32 %v4117, %v4155
      %v4160 = vmul.f32 %v4119, %v4155
      %v4161 = vmul.f32 %v4121, %v4155
      %v4162 = vmul.f32 %v4123, %v4155
      %v4163 = vmul.f32 %v4125, %v4155
      %v4164 = vmul.f32 %v4127, %v4155
      %v4165 = vmul.f32 %v4129, %v4155
      %4166 = vrot.lane.b32.xlu0 %v1714, 64
      %v4167 = vpop.permute.xlu0 %4166
      %v4169 = vmul.f32 %v2434, %v4167
      %v4170 = vmul.f32 %v2439, %v4167
      %v4171 = vmul.f32 %v2444, %v4167
      %v4172 = vmul.f32 %v2449, %v4167
      %v4173 = vmul.f32 %v2454, %v4167
      %v4174 = vmul.f32 %v2459, %v4167
      %v4175 = vmul.f32 %v2464, %v4167
      %v4176 = vmul.f32 %v2469, %v4167
      %v4177 = vmul.f32 %v2474, %v4167
      %v4178 = vmul.f32 %v2479, %v4167
      %4189 = vrot.lane.b32.xlu0 %v4169, 64
      %v4190 = vpop.permute.xlu0 %4189
      %4191 = vrot.lane.b32.xlu0 %v4170, 64
      %v4192 = vpop.permute.xlu0 %4191
      %4193 = vrot.lane.b32.xlu0 %v4171, 64
      %v4194 = vpop.permute.xlu0 %4193
      %4195 = vrot.lane.b32.xlu0 %v4172, 64
      %v4196 = vpop.permute.xlu0 %4195
      %4197 = vrot.lane.b32.xlu0 %v4173, 64
      %v4198 = vpop.permute.xlu0 %4197
      %4199 = vrot.lane.b32.xlu0 %v4174, 64
      %v4200 = vpop.permute.xlu0 %4199
      %4201 = vrot.lane.b32.xlu0 %v4175, 64
      %v4202 = vpop.permute.xlu0 %4201
      %4203 = vrot.lane.b32.xlu0 %v4176, 64
      %v4204 = vpop.permute.xlu0 %4203
      %4205 = vrot.lane.b32.xlu0 %v4177, 64
      %v4206 = vpop.permute.xlu0 %4205
      %4207 = vrot.lane.b32.xlu0 %v4178, 64
      %v4208 = vpop.permute.xlu0 %4207
      %v4219 = vsel %vm2697, %v4156, 0
      %v4222 = vsel %vm2697, %v4157, 0
      %v4225 = vsel %vm2697, %v4158, 0
      %v4228 = vsel %vm2697, %v4159, 0
      %v4231 = vsel %vm2697, %v4160, 0
      %v4234 = vsel %vm2697, %v4161, 0
      %v4237 = vsel %vm2697, %v4162, 0
      %v4240 = vsel %vm2697, %v4163, 0
      %v4243 = vsel %vm2697, %v4164, 0
      %v4246 = vsel %vm2697, %v4165, 0
      %v4248 = vsel %vm3141, %v4208, 0
      %4250 = vmatprep.subr.mxu0 0.0
      %4251 = vmatpush1.msra.mxu0 %v4190
      %4252 = vmatprep.subr.mxu0 0.0
      %4253 = vmatpush1.msra.mxu0 %v4192
      %4254 = vmatprep.subr.mxu0 0.0
      %4255 = vmatpush1.msra.mxu0 %v4194
      %4256 = vmatprep.subr.mxu0 0.0
      %4257 = vmatpush1.msra.mxu0 %v4196
      %4258 = vmatprep.subr.mxu0 0.0
      %4259 = vmatpush1.msra.mxu0 %v4198
      %4260 = vmatprep.subr.mxu0 0.0
      %4261 = vmatpush1.msra.mxu0 %v4200
      %4262 = vmatprep.subr.mxu0 0.0
      %4263 = vmatpush1.msra.mxu0 %v4202
      %4264 = vmatprep.subr.mxu0 0.0
      %4265 = vmatpush1.msra.mxu0 %v4204
      %4266 = vmatprep.subr.mxu0 0.0
      %4267 = vmatpush1.msra.mxu0 %v4206
      %4268 = vmatprep.subr.mxu0 0.0
      %4269 = vmatpush1.msra.mxu0 %v4248
      %4270 = vmatprep.subr.mxu0 0.0
      %4271 = vmatpush1.msra.mxu0 0.0
      %4272 = vmatprep.subr.mxu0 0.0
      %4273 = vmatpush1.msra.mxu0 0.0
      %4274 = vmatprep.subr.mxu0 0.0
      %4275 = vmatpush1.msra.mxu0 0.0
      %4276 = vmatprep.subr.mxu0 0.0
      %4277 = vmatpush1.msra.mxu0 0.0
      %4278 = vmatprep.subr.mxu0 0.0
      %4279 = vmatpush1.msra.mxu0 0.0
      %4280 = vmatprep.subr.mxu0 0.0
      %4281 = vmatpush1.msra.mxu0 0.0
      %4282 = vmatprep.subr.mxu0 0.0
      %4283 = vmatpush1.msra.mxu0 0.0
      %4284 = vmatprep.subr.mxu0 0.0
      %4285 = vmatpush1.msra.mxu0 0.0
      %4286 = vmatprep.subr.mxu0 0.0
      %4287 = vmatpush1.msra.mxu0 0.0
      %4288 = vmatprep.subr.mxu0 0.0
      %4289 = vmatpush1.msra.mxu0 0.0
      %4290 = vmatprep.subr.mxu0 0.0
      %4291 = vmatpush1.msra.mxu0 0.0
      %4292 = vmatprep.subr.mxu0 0.0
      %4293 = vmatpush1.msra.mxu0 0.0
      %4294 = vmatprep.subr.mxu0 0.0
      %4295 = vmatpush1.msra.mxu0 0.0
      %4296 = vmatprep.subr.mxu0 0.0
      %4297 = vmatpush1.msra.mxu0 0.0
      %4298 = vmatprep.subr.mxu0 0.0
      %4299 = vmatpush1.msra.mxu0 0.0
      %4300 = vmatprep.subr.mxu0 0.0
      %4301 = vmatpush1.msra.mxu0 0.0
      %4302 = vmatprep.subr.mxu0 0.0
      %4303 = vmatpush1.msra.mxu0 0.0
      %4304 = vmatprep.subr.mxu0 0.0
      %4305 = vmatpush1.msra.mxu0 0.0
      %4306 = vmatprep.subr.mxu0 0.0
      %4307 = vmatpush1.msra.mxu0 0.0
      %4308 = vmatprep.subr.mxu0 0.0
      %4309 = vmatpush1.msra.mxu0 0.0
      %4310 = vmatprep.subr.mxu0 0.0
      %4311 = vmatpush1.msra.mxu0 0.0
      %4312 = vmatprep.subr.mxu0 0.0
      %4313 = vmatpush1.msra.mxu0 0.0
      %4314 = vmatprep.mubr.f32.mxu0 0.0
      %4315 = vmatmul.mubr.f32.gmra.mrb[0].mxu0 %v4219
      %v4316 = vpop.f32.mrb[0].mxu0
      %v4317 = vadd.f32 0.0, %v4316
      %v4318 = vpop.f32.mrb[0].mxu0
      %4319 = vmatprep.mubr.f32.mxu0 0.0
      %4320 = vmatmul.mubr.f32.gmra.mrb[0].mxu0 %v4222
      %v4321 = vpop.f32.mrb[0].mxu0
      %v4322 = vadd.f32 0.0, %v4321
      %v4323 = vpop.f32.mrb[0].mxu0
      %4324 = vmatprep.mubr.f32.mxu0 0.0
      %4325 = vmatmul.mubr.f32.gmra.mrb[0].mxu0 %v4225
      %v4326 = vpop.f32.mrb[0].mxu0
      %v4327 = vadd.f32 0.0, %v4326
      %v4328 = vpop.f32.mrb[0].mxu0
      %4329 = vmatprep.mubr.f32.mxu0 0.0
      %4330 = vmatmul.mubr.f32.gmra.mrb[0].mxu0 %v4228
      %v4331 = vpop.f32.mrb[0].mxu0
      %v4332 = vadd.f32 0.0, %v4331
      %v4333 = vpop.f32.mrb[0].mxu0
      %4334 = vmatprep.mubr.f32.mxu0 0.0
      %4335 = vmatmul.mubr.f32.gmra.mrb[0].mxu0 %v4231
      %v4336 = vpop.f32.mrb[0].mxu0
      %v4337 = vadd.f32 0.0, %v4336
      %v4338 = vpop.f32.mrb[0].mxu0
      %4339 = vmatprep.mubr.f32.mxu0 0.0
      %4340 = vmatmul.mubr.f32.gmra.mrb[0].mxu0 %v4234
      %v4341 = vpop.f32.mrb[0].mxu0
      %v4342 = vadd.f32 0.0, %v4341
      %v4343 = vpop.f32.mrb[0].mxu0
      %4344 = vmatprep.mubr.f32.mxu0 0.0
      %4345 = vmatmul.mubr.f32.gmra.mrb[0].mxu0 %v4237
      %v4346 = vpop.f32.mrb[0].mxu0
      %v4347 = vadd.f32 0.0, %v4346
      %v4348 = vpop.f32.mrb[0].mxu0
      %4349 = vmatprep.mubr.f32.mxu0 0.0
      %4350 = vmatmul.mubr.f32.gmra.mrb[0].mxu0 %v4240
      %v4351 = vpop.f32.mrb[0].mxu0
      %v4352 = vadd.f32 0.0, %v4351
      %v4353 = vpop.f32.mrb[0].mxu0
      %4354 = vmatprep.mubr.f32.mxu0 0.0
      %4355 = vmatmul.mubr.f32.gmra.mrb[0].mxu0 %v4243
      %v4356 = vpop.f32.mrb[0].mxu0
      %v4357 = vadd.f32 0.0, %v4356
      %v4358 = vpop.f32.mrb[0].mxu0
      %4359 = vmatprep.mubr.f32.mxu0 0.0
      %4360 = vmatmul.mubr.f32.gmra.mrb[0].mxu0 %v4246
      %v4361 = vpop.f32.mrb[0].mxu0
      %v4362 = vadd.f32 0.0, %v4361
      %v4363 = vpop.f32.mrb[0].mxu0
      %4364 = vdwg.mxu0
      %v4365 = vadd.f32 %v3900, %v4317
      %v4366 = vadd.f32 %v3901, %v4322
      %v4367 = vadd.f32 %v3902, %v4327
      %v4368 = vadd.f32 %v3903, %v4332
      %v4369 = vadd.f32 %v3904, %v4337
      %v4370 = vadd.f32 %v3905, %v4342
      %v4371 = vadd.f32 %v3906, %v4347
      %v4372 = vadd.f32 %v3907, %v4352
      %v4373 = vadd.f32 %v3908, %v4357
      %v4374 = vadd.f32 %v3909, %v4362
      %v4375 = vadd.f32 %v2434, %v4365
      %v4376 = vadd.f32 %v2439, %v4366
      %v4377 = vadd.f32 %v2444, %v4367
      %v4378 = vadd.f32 %v2449, %v4368
      %v4379 = vadd.f32 %v2454, %v4369
      %v4380 = vadd.f32 %v2459, %v4370
      %v4381 = vadd.f32 %v2464, %v4371
      %v4382 = vadd.f32 %v2469, %v4372
      %v4383 = vadd.f32 %v2474, %v4373
      %v4384 = vadd.f32 %v2479, %v4374
      %s4385 = scalar_lea.vmem %s4, 32
      %v4386 = vld [vmem:[%s4385] sm:$0xff]
      %v4387 = vld [vmem:[%s4385 + $0x8] sm:$0xff]
      %v4388 = vld [vmem:[%s4385 + $0x10] sm:$0xff]
      %v4389 = vld [vmem:[%s4385 + $0x18] sm:$0xff]
      %s4390 = scalar_lea.vmem %s5, 1
      %v4391 = vld [vmem:[%s4390] sm:$0x1]
      %v4393 = vlaneseq
      %v4394 = vshrl.u32 %v4393, 7
      %v4395 = vsub.s32 0, %v4394
      %v4396 = vrot.slane %v4391, %v4395
      %v4399 = vsel %vm441, %v4375, 0
      %v4402 = vsel %vm441, %v4376, 0
      %v4405 = vsel %vm441, %v4377, 0
      %v4408 = vsel %vm441, %v4378, 0
      %v4411 = vsel %vm441, %v4379, 0
      %v4414 = vsel %vm441, %v4380, 0
      %v4417 = vsel %vm441, %v4381, 0
      %v4420 = vsel %vm441, %v4382, 0
      %v4423 = vsel %vm441, %v4383, 0
      %v4426 = vsel %vm441, %v4384, 0
      %4428 = vmatprep.subr.mxu0 0.0
      %4429 = vmatpush1.msra.mxu0 %v4386
      %4430 = vmatprep.subr.mxu0 0.0
      %4431 = vmatpush1.msra.mxu0 %v4387
      %4432 = vmatprep.subr.mxu0 0.0
      %4433 = vmatpush1.msra.mxu0 %v4388
      %4434 = vmatprep.subr.mxu0 0.0
      %4435 = vmatpush1.msra.mxu0 %v4389
      %4436 = vmatprep.subr.mxu0 0.0
      %4437 = vmatpush1.msra.mxu0 0.0
      %4438 = vmatprep.subr.mxu0 0.0
      %4439 = vmatpush1.msra.mxu0 0.0
      %4440 = vmatprep.subr.mxu0 0.0
      %4441 = vmatpush1.msra.mxu0 0.0
      %4442 = vmatprep.subr.mxu0 0.0
      %4443 = vmatpush1.msra.mxu0 0.0
      %4444 = vmatprep.subr.mxu0 0.0
      %4445 = vmatpush1.msra.mxu0 0.0
      %4446 = vmatprep.subr.mxu0 0.0
      %4447 = vmatpush1.msra.mxu0 0.0
      %4448 = vmatprep.subr.mxu0 0.0
      %4449 = vmatpush1.msra.mxu0 0.0
      %4450 = vmatprep.subr.mxu0 0.0
      %4451 = vmatpush1.msra.mxu0 0.0
      %4452 = vmatprep.subr.mxu0 0.0
      %4453 = vmatpush1.msra.mxu0 0.0
      %4454 = vmatprep.subr.mxu0 0.0
      %4455 = vmatpush1.msra.mxu0 0.0
      %4456 = vmatprep.subr.mxu0 0.0
      %4457 = vmatpush1.msra.mxu0 0.0
      %4458 = vmatprep.subr.mxu0 0.0
      %4459 = vmatpush1.msra.mxu0 0.0
      %4460 = vmatprep.subr.mxu0 0.0
      %4461 = vmatpush1.msra.mxu0 0.0
      %4462 = vmatprep.subr.mxu0 0.0
      %4463 = vmatpush1.msra.mxu0 0.0
      %4464 = vmatprep.subr.mxu0 0.0
      %4465 = vmatpush1.msra.mxu0 0.0
      %4466 = vmatprep.subr.mxu0 0.0
      %4467 = vmatpush1.msra.mxu0 0.0
      %4468 = vmatprep.subr.mxu0 0.0
      %4469 = vmatpush1.msra.mxu0 0.0
      %4470 = vmatprep.subr.mxu0 0.0
      %4471 = vmatpush1.msra.mxu0 0.0
      %4472 = vmatprep.subr.mxu0 0.0
      %4473 = vmatpush1.msra.mxu0 0.0
      %4474 = vmatprep.subr.mxu0 0.0
      %4475 = vmatpush1.msra.mxu0 0.0
      %4476 = vmatprep.subr.mxu0 0.0
      %4477 = vmatpush1.msra.mxu0 0.0
      %4478 = vmatprep.subr.mxu0 0.0
      %4479 = vmatpush1.msra.mxu0 0.0
      %4480 = vmatprep.subr.mxu0 0.0
      %4481 = vmatpush1.msra.mxu0 0.0
      %4482 = vmatprep.subr.mxu0 0.0
      %4483 = vmatpush1.msra.mxu0 0.0
      %4484 = vmatprep.subr.mxu0 0.0
      %4485 = vmatpush1.msra.mxu0 0.0
      %4486 = vmatprep.subr.mxu0 0.0
      %4487 = vmatpush1.msra.mxu0 0.0
      %4488 = vmatprep.subr.mxu0 0.0
      %4489 = vmatpush1.msra.mxu0 0.0
      %4490 = vmatprep.subr.mxu0 0.0
      %4491 = vmatpush1.msra.mxu0 0.0
      %4492 = vmatprep.mubr.f32.mxu0 0.0
      %4493 = vmatmul.mubr.f32.gmra.mrb[0].mxu0 %v4399
      %v4494 = vpop.f32.mrb[0].mxu0
      %v4495 = vadd.f32 %v4396, %v4494
      %v4496 = vpop.f32.mrb[0].mxu0
      %4497 = vmatprep.mubr.f32.mxu0 0.0
      %4498 = vmatmul.mubr.f32.gmra.mrb[0].mxu0 %v4402
      %v4499 = vpop.f32.mrb[0].mxu0
      %v4500 = vadd.f32 %v4396, %v4499
      %v4501 = vpop.f32.mrb[0].mxu0
      %4502 = vmatprep.mubr.f32.mxu0 0.0
      %4503 = vmatmul.mubr.f32.gmra.mrb[0].mxu0 %v4405
      %v4504 = vpop.f32.mrb[0].mxu0
      %v4505 = vadd.f32 %v4396, %v4504
      %v4506 = vpop.f32.mrb[0].mxu0
      %4507 = vmatprep.mubr.f32.mxu0 0.0
      %4508 = vmatmul.mubr.f32.gmra.mrb[0].mxu0 %v4408
      %v4509 = vpop.f32.mrb[0].mxu0
      %v4510 = vadd.f32 %v4396, %v4509
      %v4511 = vpop.f32.mrb[0].mxu0
      %4512 = vmatprep.mubr.f32.mxu0 0.0
      %4513 = vmatmul.mubr.f32.gmra.mrb[0].mxu0 %v4411
      %v4514 = vpop.f32.mrb[0].mxu0
      %v4515 = vadd.f32 %v4396, %v4514
      %v4516 = vpop.f32.mrb[0].mxu0
      %4517 = vmatprep.mubr.f32.mxu0 0.0
      %4518 = vmatmul.mubr.f32.gmra.mrb[0].mxu0 %v4414
      %v4519 = vpop.f32.mrb[0].mxu0
      %v4520 = vadd.f32 %v4396, %v4519
      %v4521 = vpop.f32.mrb[0].mxu0
      %4522 = vmatprep.mubr.f32.mxu0 0.0
      %4523 = vmatmul.mubr.f32.gmra.mrb[0].mxu0 %v4417
      %v4524 = vpop.f32.mrb[0].mxu0
      %v4525 = vadd.f32 %v4396, %v4524
      %v4526 = vpop.f32.mrb[0].mxu0
      %4527 = vmatprep.mubr.f32.mxu0 0.0
      %4528 = vmatmul.mubr.f32.gmra.mrb[0].mxu0 %v4420
      %v4529 = vpop.f32.mrb[0].mxu0
      %v4530 = vadd.f32 %v4396, %v4529
      %v4531 = vpop.f32.mrb[0].mxu0
      %4532 = vmatprep.mubr.f32.mxu0 0.0
      %4533 = vmatmul.mubr.f32.gmra.mrb[0].mxu0 %v4423
      %v4534 = vpop.f32.mrb[0].mxu0
      %v4535 = vadd.f32 %v4396, %v4534
      %v4536 = vpop.f32.mrb[0].mxu0
      %4537 = vmatprep.mubr.f32.mxu0 0.0
      %4538 = vmatmul.mubr.f32.gmra.mrb[0].mxu0 %v4426
      %v4539 = vpop.f32.mrb[0].mxu0
      %v4540 = vadd.f32 %v4396, %v4539
      %v4541 = vpop.f32.mrb[0].mxu0
      %4542 = vdwg.mxu0
      %v4543 = vmax.f32 %v4495, 0.0
      %v4544 = vmax.f32 %v4500, 0.0
      %v4545 = vmax.f32 %v4505, 0.0
      %v4546 = vmax.f32 %v4510, 0.0
      %v4547 = vmax.f32 %v4515, 0.0
      %v4548 = vmax.f32 %v4520, 0.0
      %v4549 = vmax.f32 %v4525, 0.0
      %v4550 = vmax.f32 %v4530, 0.0
      %v4551 = vmax.f32 %v4535, 0.0
      %v4552 = vmax.f32 %v4540, 0.0
      %v4553 = vadd.f32 %v4375, %v4543
      %v4554 = vadd.f32 %v4376, %v4544
      %v4555 = vadd.f32 %v4377, %v4545
      %v4556 = vadd.f32 %v4378, %v4546
      %v4557 = vadd.f32 %v4379, %v4547
      %v4558 = vadd.f32 %v4380, %v4548
      %v4559 = vadd.f32 %v4381, %v4549
      %v4560 = vadd.f32 %v4382, %v4550
      %v4561 = vadd.f32 %v4383, %v4551
      %v4562 = vadd.f32 %v4384, %v4552
      %v4563 = vld [vmem:[%s8] sm:$0xff]
      %v4564 = vld [vmem:[%s8 + $0x8] sm:$0xff]
      %v4565 = vld [vmem:[%s8 + $0x10] sm:$0xff]
      %v4566 = vld [vmem:[%s8 + $0x18] sm:$0xff]
      %v4567 = vld [vmem:[%s9] sm:$0x1]
      %v4569 = vlaneseq
      %v4570 = vshrl.u32 %v4569, 7
      %v4571 = vsub.s32 0, %v4570
      %v4572 = vrot.slane %v4567, %v4571
      %v4575 = vsel %vm441, %v4553, 0
      %v4578 = vsel %vm441, %v4554, 0
      %v4581 = vsel %vm441, %v4555, 0
      %v4584 = vsel %vm441, %v4556, 0
      %v4587 = vsel %vm441, %v4557, 0
      %v4590 = vsel %vm441, %v4558, 0
      %v4593 = vsel %vm441, %v4559, 0
      %v4596 = vsel %vm441, %v4560, 0
      %v4599 = vsel %vm441, %v4561, 0
      %v4602 = vsel %vm441, %v4562, 0
      %4604 = vmatprep.subr.mxu0 0.0
      %4605 = vmatpush1.msra.mxu0 %v4563
      %4606 = vmatprep.subr.mxu0 0.0
      %4607 = vmatpush1.msra.mxu0 %v4564
      %4608 = vmatprep.subr.mxu0 0.0
      %4609 = vmatpush1.msra.mxu0 %v4565
      %4610 = vmatprep.subr.mxu0 0.0
      %4611 = vmatpush1.msra.mxu0 %v4566
      %4612 = vmatprep.subr.mxu0 0.0
      %4613 = vmatpush1.msra.mxu0 0.0
      %4614 = vmatprep.subr.mxu0 0.0
      %4615 = vmatpush1.msra.mxu0 0.0
      %4616 = vmatprep.subr.mxu0 0.0
      %4617 = vmatpush1.msra.mxu0 0.0
      %4618 = vmatprep.subr.mxu0 0.0
      %4619 = vmatpush1.msra.mxu0 0.0
      %4620 = vmatprep.subr.mxu0 0.0
      %4621 = vmatpush1.msra.mxu0 0.0
      %4622 = vmatprep.subr.mxu0 0.0
      %4623 = vmatpush1.msra.mxu0 0.0
      %4624 = vmatprep.subr.mxu0 0.0
      %4625 = vmatpush1.msra.mxu0 0.0
      %4626 = vmatprep.subr.mxu0 0.0
      %4627 = vmatpush1.msra.mxu0 0.0
      %4628 = vmatprep.subr.mxu0 0.0
      %4629 = vmatpush1.msra.mxu0 0.0
      %4630 = vmatprep.subr.mxu0 0.0
      %4631 = vmatpush1.msra.mxu0 0.0
      %4632 = vmatprep.subr.mxu0 0.0
      %4633 = vmatpush1.msra.mxu0 0.0
      %4634 = vmatprep.subr.mxu0 0.0
      %4635 = vmatpush1.msra.mxu0 0.0
      %4636 = vmatprep.subr.mxu0 0.0
      %4637 = vmatpush1.msra.mxu0 0.0
      %4638 = vmatprep.subr.mxu0 0.0
      %4639 = vmatpush1.msra.mxu0 0.0
      %4640 = vmatprep.subr.mxu0 0.0
      %4641 = vmatpush1.msra.mxu0 0.0
      %4642 = vmatprep.subr.mxu0 0.0
      %4643 = vmatpush1.msra.mxu0 0.0
      %4644 = vmatprep.subr.mxu0 0.0
      %4645 = vmatpush1.msra.mxu0 0.0
      %4646 = vmatprep.subr.mxu0 0.0
      %4647 = vmatpush1.msra.mxu0 0.0
      %4648 = vmatprep.subr.mxu0 0.0
      %4649 = vmatpush1.msra.mxu0 0.0
      %4650 = vmatprep.subr.mxu0 0.0
      %4651 = vmatpush1.msra.mxu0 0.0
      %4652 = vmatprep.subr.mxu0 0.0
      %4653 = vmatpush1.msra.mxu0 0.0
      %4654 = vmatprep.subr.mxu0 0.0
      %4655 = vmatpush1.msra.mxu0 0.0
      %4656 = vmatprep.subr.mxu0 0.0
      %4657 = vmatpush1.msra.mxu0 0.0
      %4658 = vmatprep.subr.mxu0 0.0
      %4659 = vmatpush1.msra.mxu0 0.0
      %4660 = vmatprep.subr.mxu0 0.0
      %4661 = vmatpush1.msra.mxu0 0.0
      %4662 = vmatprep.subr.mxu0 0.0
      %4663 = vmatpush1.msra.mxu0 0.0
      %4664 = vmatprep.subr.mxu0 0.0
      %4665 = vmatpush1.msra.mxu0 0.0
      %4666 = vmatprep.subr.mxu0 0.0
      %4667 = vmatpush1.msra.mxu0 0.0
      %4668 = vmatprep.mubr.f32.mxu0 0.0
      %4669 = vmatmul.mubr.f32.gmra.mrb[0].mxu0 %v4575
      %v4670 = vpop.f32.mrb[0].mxu0
      %v4671 = vadd.f32 %v4572, %v4670
      %v4672 = vpop.f32.mrb[0].mxu0
      %4673 = vmatprep.mubr.f32.mxu0 0.0
      %4674 = vmatmul.mubr.f32.gmra.mrb[0].mxu0 %v4578
      %v4675 = vpop.f32.mrb[0].mxu0
      %v4676 = vadd.f32 %v4572, %v4675
      %v4677 = vpop.f32.mrb[0].mxu0
      %4678 = vmatprep.mubr.f32.mxu0 0.0
      %4679 = vmatmul.mubr.f32.gmra.mrb[0].mxu0 %v4581
      %v4680 = vpop.f32.mrb[0].mxu0
      %v4681 = vadd.f32 %v4572, %v4680
      %v4682 = vpop.f32.mrb[0].mxu0
      %4683 = vmatprep.mubr.f32.mxu0 0.0
      %4684 = vmatmul.mubr.f32.gmra.mrb[0].mxu0 %v4584
      %v4685 = vpop.f32.mrb[0].mxu0
      %v4686 = vadd.f32 %v4572, %v4685
      %v4687 = vpop.f32.mrb[0].mxu0
      %4688 = vmatprep.mubr.f32.mxu0 0.0
      %4689 = vmatmul.mubr.f32.gmra.mrb[0].mxu0 %v4587
      %v4690 = vpop.f32.mrb[0].mxu0
      %v4691 = vadd.f32 %v4572, %v4690
      %v4692 = vpop.f32.mrb[0].mxu0
      %4693 = vmatprep.mubr.f32.mxu0 0.0
      %4694 = vmatmul.mubr.f32.gmra.mrb[0].mxu0 %v4590
      %v4695 = vpop.f32.mrb[0].mxu0
      %v4696 = vadd.f32 %v4572, %v4695
      %v4697 = vpop.f32.mrb[0].mxu0
      %4698 = vmatprep.mubr.f32.mxu0 0.0
      %4699 = vmatmul.mubr.f32.gmra.mrb[0].mxu0 %v4593
      %v4700 = vpop.f32.mrb[0].mxu0
      %v4701 = vadd.f32 %v4572, %v4700
      %v4702 = vpop.f32.mrb[0].mxu0
      %4703 = vmatprep.mubr.f32.mxu0 0.0
      %4704 = vmatmul.mubr.f32.gmra.mrb[0].mxu0 %v4596
      %v4705 = vpop.f32.mrb[0].mxu0
      %v4706 = vadd.f32 %v4572, %v4705
      %v4707 = vpop.f32.mrb[0].mxu0
      %4708 = vmatprep.mubr.f32.mxu0 0.0
      %4709 = vmatmul.mubr.f32.gmra.mrb[0].mxu0 %v4599
      %v4710 = vpop.f32.mrb[0].mxu0
      %v4711 = vadd.f32 %v4572, %v4710
      %v4712 = vpop.f32.mrb[0].mxu0
      %4713 = vmatprep.mubr.f32.mxu0 0.0
      %4714 = vmatmul.mubr.f32.gmra.mrb[0].mxu0 %v4602
      %v4715 = vpop.f32.mrb[0].mxu0
      %v4716 = vadd.f32 %v4572, %v4715
      %v4717 = vpop.f32.mrb[0].mxu0
      %4718 = vdwg.mxu0
      %v4719 = vld [vmem:[%s2] sm:$0x1]
      %v4720 = vmul.f32 %v4719, %v424
      %v4722 = vsel %vm441, %v4720, 0
      %v4725 = vsel %vm441, %v4671, 0
      %v4728 = vsel %vm441, %v4676, 0
      %v4731 = vsel %vm441, %v4681, 0
      %v4734 = vsel %vm441, %v4686, 0
      %v4737 = vsel %vm441, %v4691, 0
      %v4740 = vsel %vm441, %v4696, 0
      %v4743 = vsel %vm441, %v4701, 0
      %v4746 = vsel %vm441, %v4706, 0
      %v4749 = vsel %vm441, %v4711, 0
      %v4752 = vsel %vm441, %v4716, 0
      %4754 = vmatprep.subr.mxu0 0.0
      %4755 = vmatpush1.xpose.msra.mxu0 %v4725
      %4756 = vmatprep.subr.mxu0 0.0
      %4757 = vmatpush1.xpose.msra.mxu0 %v4728
      %4758 = vmatprep.subr.mxu0 0.0
      %4759 = vmatpush1.xpose.msra.mxu0 %v4731
      %4760 = vmatprep.subr.mxu0 0.0
      %4761 = vmatpush1.xpose.msra.mxu0 %v4734
      %4762 = vmatprep.subr.mxu0 0.0
      %4763 = vmatpush1.xpose.msra.mxu0 %v4737
      %4764 = vmatprep.subr.mxu0 0.0
      %4765 = vmatpush1.xpose.msra.mxu0 %v4740
      %4766 = vmatprep.subr.mxu0 0.0
      %4767 = vmatpush1.xpose.msra.mxu0 %v4743
      %4768 = vmatprep.subr.mxu0 0.0
      %4769 = vmatpush1.xpose.msra.mxu0 %v4746
      %4770 = vmatprep.subr.mxu0 0.0
      %4771 = vmatpush1.xpose.msra.mxu0 %v4749
      %4772 = vmatprep.subr.mxu0 0.0
      %4773 = vmatpush1.xpose.msra.mxu0 %v4752
      %4774 = vmatprep.subr.mxu0 0.0
      %4775 = vmatpush1.xpose.msra.mxu0 0.0
      %4776 = vmatprep.subr.mxu0 0.0
      %4777 = vmatpush1.xpose.msra.mxu0 0.0
      %4778 = vmatprep.subr.mxu0 0.0
      %4779 = vmatpush1.xpose.msra.mxu0 0.0
      %4780 = vmatprep.subr.mxu0 0.0
      %4781 = vmatpush1.xpose.msra.mxu0 0.0
      %4782 = vmatprep.subr.mxu0 0.0
      %4783 = vmatpush1.xpose.msra.mxu0 0.0
      %4784 = vmatprep.subr.mxu0 0.0
      %4785 = vmatpush1.xpose.msra.mxu0 0.0
      %4786 = vmatprep.subr.mxu0 0.0
      %4787 = vmatpush1.xpose.msra.mxu0 0.0
      %4788 = vmatprep.subr.mxu0 0.0
      %4789 = vmatpush1.xpose.msra.mxu0 0.0
      %4790 = vmatprep.subr.mxu0 0.0
      %4791 = vmatpush1.xpose.msra.mxu0 0.0
      %4792 = vmatprep.subr.mxu0 0.0
      %4793 = vmatpush1.xpose.msra.mxu0 0.0
      %4794 = vmatprep.subr.mxu0 0.0
      %4795 = vmatpush1.xpose.msra.mxu0 0.0
      %4796 = vmatprep.subr.mxu0 0.0
      %4797 = vmatpush1.xpose.msra.mxu0 0.0
      %4798 = vmatprep.subr.mxu0 0.0
      %4799 = vmatpush1.xpose.msra.mxu0 0.0
      %4800 = vmatprep.subr.mxu0 0.0
      %4801 = vmatpush1.xpose.msra.mxu0 0.0
      %4802 = vmatprep.subr.mxu0 0.0
      %4803 = vmatpush1.xpose.msra.mxu0 0.0
      %4804 = vmatprep.subr.mxu0 0.0
      %4805 = vmatpush1.xpose.msra.mxu0 0.0
      %4806 = vmatprep.subr.mxu0 0.0
      %4807 = vmatpush1.xpose.msra.mxu0 0.0
      %4808 = vmatprep.subr.mxu0 0.0
      %4809 = vmatpush1.xpose.msra.mxu0 0.0
      %4810 = vmatprep.subr.mxu0 0.0
      %4811 = vmatpush1.xpose.msra.mxu0 0.0
      %4812 = vmatprep.subr.mxu0 0.0
      %4813 = vmatpush1.xpose.msra.mxu0 0.0
      %4814 = vmatprep.subr.mxu0 0.0
      %4815 = vmatpush1.xpose.msra.mxu0 0.0
      %4816 = vmatprep.subr.mxu0 0.0
      %4817 = vmatpush1.xpose.msra.mxu0 0.0
      %4818 = vmatprep.mubr.f32.mxu0 0.0
      %4819 = vmatmul.mubr.f32.gmra.mrb[0].mxu0 %v4722
      %v4820 = vpop.f32.mrb[0].mxu0
      %v4821 = vadd.f32 0.0, %v4820
      %v4822 = vpop.f32.mrb[0].mxu0
      %4823 = vdwg.mxu0
      %v4824 = vmul.f32 %v4821, 0.17677669
      %v4825 = vsub.f32 %v4824, %v4824
      %v4826 = vmul.f32 %v4825, 1.442695
      %v4827 = vpow.pop %v4826
      %v4828 = vadd.f32 %v4827, 0.0
      %v4829 = vrcp.pop %v4828
      %v4830 = vmul.f32 %v4827, %v4829
      %v4831 = vmul.f32 %v4671, %v697
      %v4832 = vmul.f32 %v4676, %v697
      %v4833 = vmul.f32 %v4681, %v697
      %v4834 = vmul.f32 %v4686, %v697
      %v4835 = vmul.f32 %v4691, %v697
      %v4836 = vmul.f32 %v4696, %v697
      %v4837 = vmul.f32 %v4701, %v697
      %v4838 = vmul.f32 %v4706, %v697
      %v4839 = vmul.f32 %v4711, %v697
      %v4840 = vmul.f32 %v4716, %v697
      %v4841 = vmul.f32 %v4719, %v702
      %v4843 = vsel %vm441, %v4841, 0
      %4845 = vmatprep.subr.mxu0 0.0
      %4846 = vmatpush1.xpose.msra.mxu0 %v4725
      %4847 = vmatprep.subr.mxu0 0.0
      %4848 = vmatpush1.xpose.msra.mxu0 %v4728
      %4849 = vmatprep.subr.mxu0 0.0
      %4850 = vmatpush1.xpose.msra.mxu0 %v4731
      %4851 = vmatprep.subr.mxu0 0.0
      %4852 = vmatpush1.xpose.msra.mxu0 %v4734
      %4853 = vmatprep.subr.mxu0 0.0
      %4854 = vmatpush1.xpose.msra.mxu0 %v4737
      %4855 = vmatprep.subr.mxu0 0.0
      %4856 = vmatpush1.xpose.msra.mxu0 %v4740
      %4857 = vmatprep.subr.mxu0 0.0
      %4858 = vmatpush1.xpose.msra.mxu0 %v4743
      %4859 = vmatprep.subr.mxu0 0.0
      %4860 = vmatpush1.xpose.msra.mxu0 %v4746
      %4861 = vmatprep.subr.mxu0 0.0
      %4862 = vmatpush1.xpose.msra.mxu0 %v4749
      %4863 = vmatprep.subr.mxu0 0.0
      %4864 = vmatpush1.xpose.msra.mxu0 %v4752
      %4865 = vmatprep.subr.mxu0 0.0
      %4866 = vmatpush1.xpose.msra.mxu0 0.0
      %4867 = vmatprep.subr.mxu0 0.0
      %4868 = vmatpush1.xpose.msra.mxu0 0.0
      %4869 = vmatprep.subr.mxu0 0.0
      %4870 = vmatpush1.xpose.msra.mxu0 0.0
      %4871 = vmatprep.subr.mxu0 0.0
      %4872 = vmatpush1.xpose.msra.mxu0 0.0
      %4873 = vmatprep.subr.mxu0 0.0
      %4874 = vmatpush1.xpose.msra.mxu0 0.0
      %4875 = vmatprep.subr.mxu0 0.0
      %4876 = vmatpush1.xpose.msra.mxu0 0.0
      %4877 = vmatprep.subr.mxu0 0.0
      %4878 = vmatpush1.xpose.msra.mxu0 0.0
      %4879 = vmatprep.subr.mxu0 0.0
      %4880 = vmatpush1.xpose.msra.mxu0 0.0
      %4881 = vmatprep.subr.mxu0 0.0
      %4882 = vmatpush1.xpose.msra.mxu0 0.0
      %4883 = vmatprep.subr.mxu0 0.0
      %4884 = vmatpush1.xpose.msra.mxu0 0.0
      %4885 = vmatprep.subr.mxu0 0.0
      %4886 = vmatpush1.xpose.msra.mxu0 0.0
      %4887 = vmatprep.subr.mxu0 0.0
      %4888 = vmatpush1.xpose.msra.mxu0 0.0
      %4889 = vmatprep.subr.mxu0 0.0
      %4890 = vmatpush1.xpose.msra.mxu0 0.0
      %4891 = vmatprep.subr.mxu0 0.0
      %4892 = vmatpush1.xpose.msra.mxu0 0.0
      %4893 = vmatprep.subr.mxu0 0.0
      %4894 = vmatpush1.xpose.msra.mxu0 0.0
      %4895 = vmatprep.subr.mxu0 0.0
      %4896 = vmatpush1.xpose.msra.mxu0 0.0
      %4897 = vmatprep.subr.mxu0 0.0
      %4898 = vmatpush1.xpose.msra.mxu0 0.0
      %4899 = vmatprep.subr.mxu0 0.0
      %4900 = vmatpush1.xpose.msra.mxu0 0.0
      %4901 = vmatprep.subr.mxu0 0.0
      %4902 = vmatpush1.xpose.msra.mxu0 0.0
      %4903 = vmatprep.subr.mxu0 0.0
      %4904 = vmatpush1.xpose.msra.mxu0 0.0
      %4905 = vmatprep.subr.mxu0 0.0
      %4906 = vmatpush1.xpose.msra.mxu0 0.0
      %4907 = vmatprep.subr.mxu0 0.0
      %4908 = vmatpush1.xpose.msra.mxu0 0.0
      %4909 = vmatprep.mubr.f32.mxu0 0.0
      %4910 = vmatmul.mubr.f32.gmra.mrb[0].mxu0 %v4843
      %v4911 = vpop.f32.mrb[0].mxu0
      %v4912 = vadd.f32 0.0, %v4911
      %v4913 = vpop.f32.mrb[0].mxu0
      %4914 = vdwg.mxu0
      %v4915 = vmul.f32 %v4912, 0.17677669
      %v4916 = vsub.f32 %v4915, %v4915
      %v4917 = vmul.f32 %v4916, 1.442695
      %v4918 = vpow.pop %v4917
      %v4919 = vadd.f32 %v4918, 0.0
      %v4920 = vrcp.pop %v4919
      %v4921 = vmul.f32 %v4918, %v4920
      %v4922 = vmul.f32 %v4671, %v966
      %v4923 = vmul.f32 %v4676, %v966
      %v4924 = vmul.f32 %v4681, %v966
      %v4925 = vmul.f32 %v4686, %v966
      %v4926 = vmul.f32 %v4691, %v966
      %v4927 = vmul.f32 %v4696, %v966
      %v4928 = vmul.f32 %v4701, %v966
      %v4929 = vmul.f32 %v4706, %v966
      %v4930 = vmul.f32 %v4711, %v966
      %v4931 = vmul.f32 %v4716, %v966
      %4942 = vrot.lane.b32.xlu0 %v4922, 96
      %v4943 = vpop.permute.xlu0 %4942
      %4944 = vrot.lane.b32.xlu0 %v4923, 96
      %v4945 = vpop.permute.xlu0 %4944
      %4946 = vrot.lane.b32.xlu0 %v4924, 96
      %v4947 = vpop.permute.xlu0 %4946
      %4948 = vrot.lane.b32.xlu0 %v4925, 96
      %v4949 = vpop.permute.xlu0 %4948
      %4950 = vrot.lane.b32.xlu0 %v4926, 96
      %v4951 = vpop.permute.xlu0 %4950
      %4952 = vrot.lane.b32.xlu0 %v4927, 96
      %v4953 = vpop.permute.xlu0 %4952
      %4954 = vrot.lane.b32.xlu0 %v4928, 96
      %v4955 = vpop.permute.xlu0 %4954
      %4956 = vrot.lane.b32.xlu0 %v4929, 96
      %v4957 = vpop.permute.xlu0 %4956
      %4958 = vrot.lane.b32.xlu0 %v4930, 96
      %v4959 = vpop.permute.xlu0 %4958
      %4960 = vrot.lane.b32.xlu0 %v4931, 96
      %v4961 = vpop.permute.xlu0 %4960
      %v4972 = vsel %vm2697, %v4921, 0
      %v4974 = vsel %vm3141, %v4961, 0
      %4976 = vmatprep.subr.mxu0 0.0
      %4977 = vmatpush1.msra.mxu0 %v4943
      %4978 = vmatprep.subr.mxu0 0.0
      %4979 = vmatpush1.msra.mxu0 %v4945
      %4980 = vmatprep.subr.mxu0 0.0
      %4981 = vmatpush1.msra.mxu0 %v4947
      %4982 = vmatprep.subr.mxu0 0.0
      %4983 = vmatpush1.msra.mxu0 %v4949
      %4984 = vmatprep.subr.mxu0 0.0
      %4985 = vmatpush1.msra.mxu0 %v4951
      %4986 = vmatprep.subr.mxu0 0.0
      %4987 = vmatpush1.msra.mxu0 %v4953
      %4988 = vmatprep.subr.mxu0 0.0
      %4989 = vmatpush1.msra.mxu0 %v4955
      %4990 = vmatprep.subr.mxu0 0.0
      %4991 = vmatpush1.msra.mxu0 %v4957
      %4992 = vmatprep.subr.mxu0 0.0
      %4993 = vmatpush1.msra.mxu0 %v4959
      %4994 = vmatprep.subr.mxu0 0.0
      %4995 = vmatpush1.msra.mxu0 %v4974
      %4996 = vmatprep.subr.mxu0 0.0
      %4997 = vmatpush1.msra.mxu0 0.0
      %4998 = vmatprep.subr.mxu0 0.0
      %4999 = vmatpush1.msra.mxu0 0.0
      %5000 = vmatprep.subr.mxu0 0.0
      %5001 = vmatpush1.msra.mxu0 0.0
      %5002 = vmatprep.subr.mxu0 0.0
      %5003 = vmatpush1.msra.mxu0 0.0
      %5004 = vmatprep.subr.mxu0 0.0
      %5005 = vmatpush1.msra.mxu0 0.0
      %5006 = vmatprep.subr.mxu0 0.0
      %5007 = vmatpush1.msra.mxu0 0.0
      %5008 = vmatprep.subr.mxu0 0.0
      %5009 = vmatpush1.msra.mxu0 0.0
      %5010 = vmatprep.subr.mxu0 0.0
      %5011 = vmatpush1.msra.mxu0 0.0
      %5012 = vmatprep.subr.mxu0 0.0
      %5013 = vmatpush1.msra.mxu0 0.0
      %5014 = vmatprep.subr.mxu0 0.0
      %5015 = vmatpush1.msra.mxu0 0.0
      %5016 = vmatprep.subr.mxu0 0.0
      %5017 = vmatpush1.msra.mxu0 0.0
      %5018 = vmatprep.subr.mxu0 0.0
      %5019 = vmatpush1.msra.mxu0 0.0
      %5020 = vmatprep.subr.mxu0 0.0
      %5021 = vmatpush1.msra.mxu0 0.0
      %5022 = vmatprep.subr.mxu0 0.0
      %5023 = vmatpush1.msra.mxu0 0.0
      %5024 = vmatprep.subr.mxu0 0.0
      %5025 = vmatpush1.msra.mxu0 0.0
      %5026 = vmatprep.subr.mxu0 0.0
      %5027 = vmatpush1.msra.mxu0 0.0
      %5028 = vmatprep.subr.mxu0 0.0
      %5029 = vmatpush1.msra.mxu0 0.0
      %5030 = vmatprep.subr.mxu0 0.0
      %5031 = vmatpush1.msra.mxu0 0.0
      %5032 = vmatprep.subr.mxu0 0.0
      %5033 = vmatpush1.msra.mxu0 0.0
      %5034 = vmatprep.subr.mxu0 0.0
      %5035 = vmatpush1.msra.mxu0 0.0
      %5036 = vmatprep.subr.mxu0 0.0
      %5037 = vmatpush1.msra.mxu0 0.0
      %5038 = vmatprep.subr.mxu0 0.0
      %5039 = vmatpush1.msra.mxu0 0.0
      %5040 = vmatprep.mubr.f32.mxu0 0.0
      %5041 = vmatmul.mubr.f32.gmra.mrb[0].mxu0 %v4972
      %v5042 = vpop.f32.mrb[0].mxu0
      %v5043 = vadd.f32 0.0, %v5042
      %v5044 = vpop.f32.mrb[0].mxu0
      %5045 = vdwg.mxu0
      %5056 = vrot.lane.b32.xlu0 %v4831, 96
      %v5057 = vpop.permute.xlu0 %5056
      %5058 = vrot.lane.b32.xlu0 %v4832, 96
      %v5059 = vpop.permute.xlu0 %5058
      %5060 = vrot.lane.b32.xlu0 %v4833, 96
      %v5061 = vpop.permute.xlu0 %5060
      %5062 = vrot.lane.b32.xlu0 %v4834, 96
      %v5063 = vpop.permute.xlu0 %5062
      %5064 = vrot.lane.b32.xlu0 %v4835, 96
      %v5065 = vpop.permute.xlu0 %5064
      %5066 = vrot.lane.b32.xlu0 %v4836, 96
      %v5067 = vpop.permute.xlu0 %5066
      %5068 = vrot.lane.b32.xlu0 %v4837, 96
      %v5069 = vpop.permute.xlu0 %5068
      %5070 = vrot.lane.b32.xlu0 %v4838, 96
      %v5071 = vpop.permute.xlu0 %5070
      %5072 = vrot.lane.b32.xlu0 %v4839, 96
      %v5073 = vpop.permute.xlu0 %5072
      %5074 = vrot.lane.b32.xlu0 %v4840, 96
      %v5075 = vpop.permute.xlu0 %5074
      %v5086 = vsel %vm2697, %v4830, 0
      %v5088 = vsel %vm3141, %v5075, 0
      %5090 = vmatprep.subr.mxu0 0.0
      %5091 = vmatpush1.msra.mxu0 %v5057
      %5092 = vmatprep.subr.mxu0 0.0
      %5093 = vmatpush1.msra.mxu0 %v5059
      %5094 = vmatprep.subr.mxu0 0.0
      %5095 = vmatpush1.msra.mxu0 %v5061
      %5096 = vmatprep.subr.mxu0 0.0
      %5097 = vmatpush1.msra.mxu0 %v5063
      %5098 = vmatprep.subr.mxu0 0.0
      %5099 = vmatpush1.msra.mxu0 %v5065
      %5100 = vmatprep.subr.mxu0 0.0
      %5101 = vmatpush1.msra.mxu0 %v5067
      %5102 = vmatprep.subr.mxu0 0.0
      %5103 = vmatpush1.msra.mxu0 %v5069
      %5104 = vmatprep.subr.mxu0 0.0
      %5105 = vmatpush1.msra.mxu0 %v5071
      %5106 = vmatprep.subr.mxu0 0.0
      %5107 = vmatpush1.msra.mxu0 %v5073
      %5108 = vmatprep.subr.mxu0 0.0
      %5109 = vmatpush1.msra.mxu0 %v5088
      %5110 = vmatprep.subr.mxu0 0.0
      %5111 = vmatpush1.msra.mxu0 0.0
      %5112 = vmatprep.subr.mxu0 0.0
      %5113 = vmatpush1.msra.mxu0 0.0
      %5114 = vmatprep.subr.mxu0 0.0
      %5115 = vmatpush1.msra.mxu0 0.0
      %5116 = vmatprep.subr.mxu0 0.0
      %5117 = vmatpush1.msra.mxu0 0.0
      %5118 = vmatprep.subr.mxu0 0.0
      %5119 = vmatpush1.msra.mxu0 0.0
      %5120 = vmatprep.subr.mxu0 0.0
      %5121 = vmatpush1.msra.mxu0 0.0
      %5122 = vmatprep.subr.mxu0 0.0
      %5123 = vmatpush1.msra.mxu0 0.0
      %5124 = vmatprep.subr.mxu0 0.0
      %5125 = vmatpush1.msra.mxu0 0.0
      %5126 = vmatprep.subr.mxu0 0.0
      %5127 = vmatpush1.msra.mxu0 0.0
      %5128 = vmatprep.subr.mxu0 0.0
      %5129 = vmatpush1.msra.mxu0 0.0
      %5130 = vmatprep.subr.mxu0 0.0
      %5131 = vmatpush1.msra.mxu0 0.0
      %5132 = vmatprep.subr.mxu0 0.0
      %5133 = vmatpush1.msra.mxu0 0.0
      %5134 = vmatprep.subr.mxu0 0.0
      %5135 = vmatpush1.msra.mxu0 0.0
      %5136 = vmatprep.subr.mxu0 0.0
      %5137 = vmatpush1.msra.mxu0 0.0
      %5138 = vmatprep.subr.mxu0 0.0
      %5139 = vmatpush1.msra.mxu0 0.0
      %5140 = vmatprep.subr.mxu0 0.0
      %5141 = vmatpush1.msra.mxu0 0.0
      %5142 = vmatprep.subr.mxu0 0.0
      %5143 = vmatpush1.msra.mxu0 0.0
      %5144 = vmatprep.subr.mxu0 0.0
      %5145 = vmatpush1.msra.mxu0 0.0
      %5146 = vmatprep.subr.mxu0 0.0
      %5147 = vmatpush1.msra.mxu0 0.0
      %5148 = vmatprep.subr.mxu0 0.0
      %5149 = vmatpush1.msra.mxu0 0.0
      %5150 = vmatprep.subr.mxu0 0.0
      %5151 = vmatpush1.msra.mxu0 0.0
      %5152 = vmatprep.subr.mxu0 0.0
      %5153 = vmatpush1.msra.mxu0 0.0
      %5154 = vmatprep.mubr.f32.mxu0 0.0
      %5155 = vmatmul.mubr.f32.gmra.mrb[0].mxu0 %v5086
      %v5156 = vpop.f32.mrb[0].mxu0
      %v5157 = vadd.f32 %v5043, %v5156
      %v5158 = vpop.f32.mrb[0].mxu0
      %5159 = vdwg.mxu0
      %v5160 = vmul.f32 %v4719, %v1277
      %v5162 = vsel %vm441, %v5160, 0
      %5164 = vmatprep.subr.mxu0 0.0
      %5165 = vmatpush1.xpose.msra.mxu0 %v4725
      %5166 = vmatprep.subr.mxu0 0.0
      %5167 = vmatpush1.xpose.msra.mxu0 %v4728
      %5168 = vmatprep.subr.mxu0 0.0
      %5169 = vmatpush1.xpose.msra.mxu0 %v4731
      %5170 = vmatprep.subr.mxu0 0.0
      %5171 = vmatpush1.xpose.msra.mxu0 %v4734
      %5172 = vmatprep.subr.mxu0 0.0
      %5173 = vmatpush1.xpose.msra.mxu0 %v4737
      %5174 = vmatprep.subr.mxu0 0.0
      %5175 = vmatpush1.xpose.msra.mxu0 %v4740
      %5176 = vmatprep.subr.mxu0 0.0
      %5177 = vmatpush1.xpose.msra.mxu0 %v4743
      %5178 = vmatprep.subr.mxu0 0.0
      %5179 = vmatpush1.xpose.msra.mxu0 %v4746
      %5180 = vmatprep.subr.mxu0 0.0
      %5181 = vmatpush1.xpose.msra.mxu0 %v4749
      %5182 = vmatprep.subr.mxu0 0.0
      %5183 = vmatpush1.xpose.msra.mxu0 %v4752
      %5184 = vmatprep.subr.mxu0 0.0
      %5185 = vmatpush1.xpose.msra.mxu0 0.0
      %5186 = vmatprep.subr.mxu0 0.0
      %5187 = vmatpush1.xpose.msra.mxu0 0.0
      %5188 = vmatprep.subr.mxu0 0.0
      %5189 = vmatpush1.xpose.msra.mxu0 0.0
      %5190 = vmatprep.subr.mxu0 0.0
      %5191 = vmatpush1.xpose.msra.mxu0 0.0
      %5192 = vmatprep.subr.mxu0 0.0
      %5193 = vmatpush1.xpose.msra.mxu0 0.0
      %5194 = vmatprep.subr.mxu0 0.0
      %5195 = vmatpush1.xpose.msra.mxu0 0.0
      %5196 = vmatprep.subr.mxu0 0.0
      %5197 = vmatpush1.xpose.msra.mxu0 0.0
      %5198 = vmatprep.subr.mxu0 0.0
      %5199 = vmatpush1.xpose.msra.mxu0 0.0
      %5200 = vmatprep.subr.mxu0 0.0
      %5201 = vmatpush1.xpose.msra.mxu0 0.0
      %5202 = vmatprep.subr.mxu0 0.0
      %5203 = vmatpush1.xpose.msra.mxu0 0.0
      %5204 = vmatprep.subr.mxu0 0.0
      %5205 = vmatpush1.xpose.msra.mxu0 0.0
      %5206 = vmatprep.subr.mxu0 0.0
      %5207 = vmatpush1.xpose.msra.mxu0 0.0
      %5208 = vmatprep.subr.mxu0 0.0
      %5209 = vmatpush1.xpose.msra.mxu0 0.0
      %5210 = vmatprep.subr.mxu0 0.0
      %5211 = vmatpush1.xpose.msra.mxu0 0.0
      %5212 = vmatprep.subr.mxu0 0.0
      %5213 = vmatpush1.xpose.msra.mxu0 0.0
      %5214 = vmatprep.subr.mxu0 0.0
      %5215 = vmatpush1.xpose.msra.mxu0 0.0
      %5216 = vmatprep.subr.mxu0 0.0
      %5217 = vmatpush1.xpose.msra.mxu0 0.0
      %5218 = vmatprep.subr.mxu0 0.0
      %5219 = vmatpush1.xpose.msra.mxu0 0.0
      %5220 = vmatprep.subr.mxu0 0.0
      %5221 = vmatpush1.xpose.msra.mxu0 0.0
      %5222 = vmatprep.subr.mxu0 0.0
      %5223 = vmatpush1.xpose.msra.mxu0 0.0
      %5224 = vmatprep.subr.mxu0 0.0
      %5225 = vmatpush1.xpose.msra.mxu0 0.0
      %5226 = vmatprep.subr.mxu0 0.0
      %5227 = vmatpush1.xpose.msra.mxu0 0.0
      %5228 = vmatprep.mubr.f32.mxu0 0.0
      %5229 = vmatmul.mubr.f32.gmra.mrb[0].mxu0 %v5162
      %v5230 = vpop.f32.mrb[0].mxu0
      %v5231 = vadd.f32 0.0, %v5230
      %v5232 = vpop.f32.mrb[0].mxu0
      %5233 = vdwg.mxu0
      %v5234 = vmul.f32 %v5231, 0.17677669
      %v5235 = vsub.f32 %v5234, %v5234
      %v5236 = vmul.f32 %v5235, 1.442695
      %v5237 = vpow.pop %v5236
      %v5238 = vadd.f32 %v5237, 0.0
      %v5239 = vrcp.pop %v5238
      %v5240 = vmul.f32 %v5237, %v5239
      %v5241 = vmul.f32 %v4671, %v1541
      %v5242 = vmul.f32 %v4676, %v1541
      %v5243 = vmul.f32 %v4681, %v1541
      %v5244 = vmul.f32 %v4686, %v1541
      %v5245 = vmul.f32 %v4691, %v1541
      %v5246 = vmul.f32 %v4696, %v1541
      %v5247 = vmul.f32 %v4701, %v1541
      %v5248 = vmul.f32 %v4706, %v1541
      %v5249 = vmul.f32 %v4711, %v1541
      %v5250 = vmul.f32 %v4716, %v1541
      %5261 = vrot.lane.b32.xlu0 %v5241, 96
      %v5262 = vpop.permute.xlu0 %5261
      %5263 = vrot.lane.b32.xlu0 %v5242, 96
      %v5264 = vpop.permute.xlu0 %5263
      %5265 = vrot.lane.b32.xlu0 %v5243, 96
      %v5266 = vpop.permute.xlu0 %5265
      %5267 = vrot.lane.b32.xlu0 %v5244, 96
      %v5268 = vpop.permute.xlu0 %5267
      %5269 = vrot.lane.b32.xlu0 %v5245, 96
      %v5270 = vpop.permute.xlu0 %5269
      %5271 = vrot.lane.b32.xlu0 %v5246, 96
      %v5272 = vpop.permute.xlu0 %5271
      %5273 = vrot.lane.b32.xlu0 %v5247, 96
      %v5274 = vpop.permute.xlu0 %5273
      %5275 = vrot.lane.b32.xlu0 %v5248, 96
      %v5276 = vpop.permute.xlu0 %5275
      %5277 = vrot.lane.b32.xlu0 %v5249, 96
      %v5278 = vpop.permute.xlu0 %5277
      %5279 = vrot.lane.b32.xlu0 %v5250, 96
      %v5280 = vpop.permute.xlu0 %5279
      %v5291 = vsel %vm2697, %v5240, 0
      %v5293 = vsel %vm3141, %v5280, 0
      %5295 = vmatprep.subr.mxu0 0.0
      %5296 = vmatpush1.msra.mxu0 %v5262
      %5297 = vmatprep.subr.mxu0 0.0
      %5298 = vmatpush1.msra.mxu0 %v5264
      %5299 = vmatprep.subr.mxu0 0.0
      %5300 = vmatpush1.msra.mxu0 %v5266
      %5301 = vmatprep.subr.mxu0 0.0
      %5302 = vmatpush1.msra.mxu0 %v5268
      %5303 = vmatprep.subr.mxu0 0.0
      %5304 = vmatpush1.msra.mxu0 %v5270
      %5305 = vmatprep.subr.mxu0 0.0
      %5306 = vmatpush1.msra.mxu0 %v5272
      %5307 = vmatprep.subr.mxu0 0.0
      %5308 = vmatpush1.msra.mxu0 %v5274
      %5309 = vmatprep.subr.mxu0 0.0
      %5310 = vmatpush1.msra.mxu0 %v5276
      %5311 = vmatprep.subr.mxu0 0.0
      %5312 = vmatpush1.msra.mxu0 %v5278
      %5313 = vmatprep.subr.mxu0 0.0
      %5314 = vmatpush1.msra.mxu0 %v5293
      %5315 = vmatprep.subr.mxu0 0.0
      %5316 = vmatpush1.msra.mxu0 0.0
      %5317 = vmatprep.subr.mxu0 0.0
      %5318 = vmatpush1.msra.mxu0 0.0
      %5319 = vmatprep.subr.mxu0 0.0
      %5320 = vmatpush1.msra.mxu0 0.0
      %5321 = vmatprep.subr.mxu0 0.0
      %5322 = vmatpush1.msra.mxu0 0.0
      %5323 = vmatprep.subr.mxu0 0.0
      %5324 = vmatpush1.msra.mxu0 0.0
      %5325 = vmatprep.subr.mxu0 0.0
      %5326 = vmatpush1.msra.mxu0 0.0
      %5327 = vmatprep.subr.mxu0 0.0
      %5328 = vmatpush1.msra.mxu0 0.0
      %5329 = vmatprep.subr.mxu0 0.0
      %5330 = vmatpush1.msra.mxu0 0.0
      %5331 = vmatprep.subr.mxu0 0.0
      %5332 = vmatpush1.msra.mxu0 0.0
      %5333 = vmatprep.subr.mxu0 0.0
      %5334 = vmatpush1.msra.mxu0 0.0
      %5335 = vmatprep.subr.mxu0 0.0
      %5336 = vmatpush1.msra.mxu0 0.0
      %5337 = vmatprep.subr.mxu0 0.0
      %5338 = vmatpush1.msra.mxu0 0.0
      %5339 = vmatprep.subr.mxu0 0.0
      %5340 = vmatpush1.msra.mxu0 0.0
      %5341 = vmatprep.subr.mxu0 0.0
      %5342 = vmatpush1.msra.mxu0 0.0
      %5343 = vmatprep.subr.mxu0 0.0
      %5344 = vmatpush1.msra.mxu0 0.0
      %5345 = vmatprep.subr.mxu0 0.0
      %5346 = vmatpush1.msra.mxu0 0.0
      %5347 = vmatprep.subr.mxu0 0.0
      %5348 = vmatpush1.msra.mxu0 0.0
      %5349 = vmatprep.subr.mxu0 0.0
      %5350 = vmatpush1.msra.mxu0 0.0
      %5351 = vmatprep.subr.mxu0 0.0
      %5352 = vmatpush1.msra.mxu0 0.0
      %5353 = vmatprep.subr.mxu0 0.0
      %5354 = vmatpush1.msra.mxu0 0.0
      %5355 = vmatprep.subr.mxu0 0.0
      %5356 = vmatpush1.msra.mxu0 0.0
      %5357 = vmatprep.subr.mxu0 0.0
      %5358 = vmatpush1.msra.mxu0 0.0
      %5359 = vmatprep.mubr.f32.mxu0 0.0
      %5360 = vmatmul.mubr.f32.gmra.mrb[0].mxu0 %v5291
      %v5361 = vpop.f32.mrb[0].mxu0
      %v5362 = vadd.f32 0.0, %v5361
      %v5363 = vpop.f32.mrb[0].mxu0
      %5364 = vdwg.mxu0
      %v5365 = vadd.f32 %v5157, %v5362
      %v5366 = vmul.f32 %v4719, %v1709
      %v5368 = vsel %vm441, %v5366, 0
      %5370 = vmatprep.subr.mxu0 0.0
      %5371 = vmatpush1.xpose.msra.mxu0 %v4725
      %5372 = vmatprep.subr.mxu0 0.0
      %5373 = vmatpush1.xpose.msra.mxu0 %v4728
      %5374 = vmatprep.subr.mxu0 0.0
      %5375 = vmatpush1.xpose.msra.mxu0 %v4731
      %5376 = vmatprep.subr.mxu0 0.0
      %5377 = vmatpush1.xpose.msra.mxu0 %v4734
      %5378 = vmatprep.subr.mxu0 0.0
      %5379 = vmatpush1.xpose.msra.mxu0 %v4737
      %5380 = vmatprep.subr.mxu0 0.0
      %5381 = vmatpush1.xpose.msra.mxu0 %v4740
      %5382 = vmatprep.subr.mxu0 0.0
      %5383 = vmatpush1.xpose.msra.mxu0 %v4743
      %5384 = vmatprep.subr.mxu0 0.0
      %5385 = vmatpush1.xpose.msra.mxu0 %v4746
      %5386 = vmatprep.subr.mxu0 0.0
      %5387 = vmatpush1.xpose.msra.mxu0 %v4749
      %5388 = vmatprep.subr.mxu0 0.0
      %5389 = vmatpush1.xpose.msra.mxu0 %v4752
      %5390 = vmatprep.subr.mxu0 0.0
      %5391 = vmatpush1.xpose.msra.mxu0 0.0
      %5392 = vmatprep.subr.mxu0 0.0
      %5393 = vmatpush1.xpose.msra.mxu0 0.0
      %5394 = vmatprep.subr.mxu0 0.0
      %5395 = vmatpush1.xpose.msra.mxu0 0.0
      %5396 = vmatprep.subr.mxu0 0.0
      %5397 = vmatpush1.xpose.msra.mxu0 0.0
      %5398 = vmatprep.subr.mxu0 0.0
      %5399 = vmatpush1.xpose.msra.mxu0 0.0
      %5400 = vmatprep.subr.mxu0 0.0
      %5401 = vmatpush1.xpose.msra.mxu0 0.0
      %5402 = vmatprep.subr.mxu0 0.0
      %5403 = vmatpush1.xpose.msra.mxu0 0.0
      %5404 = vmatprep.subr.mxu0 0.0
      %5405 = vmatpush1.xpose.msra.mxu0 0.0
      %5406 = vmatprep.subr.mxu0 0.0
      %5407 = vmatpush1.xpose.msra.mxu0 0.0
      %5408 = vmatprep.subr.mxu0 0.0
      %5409 = vmatpush1.xpose.msra.mxu0 0.0
      %5410 = vmatprep.subr.mxu0 0.0
      %5411 = vmatpush1.xpose.msra.mxu0 0.0
      %5412 = vmatprep.subr.mxu0 0.0
      %5413 = vmatpush1.xpose.msra.mxu0 0.0
      %5414 = vmatprep.subr.mxu0 0.0
      %5415 = vmatpush1.xpose.msra.mxu0 0.0
      %5416 = vmatprep.subr.mxu0 0.0
      %5417 = vmatpush1.xpose.msra.mxu0 0.0
      %5418 = vmatprep.subr.mxu0 0.0
      %5419 = vmatpush1.xpose.msra.mxu0 0.0
      %5420 = vmatprep.subr.mxu0 0.0
      %5421 = vmatpush1.xpose.msra.mxu0 0.0
      %5422 = vmatprep.subr.mxu0 0.0
      %5423 = vmatpush1.xpose.msra.mxu0 0.0
      %5424 = vmatprep.subr.mxu0 0.0
      %5425 = vmatpush1.xpose.msra.mxu0 0.0
      %5426 = vmatprep.subr.mxu0 0.0
      %5427 = vmatpush1.xpose.msra.mxu0 0.0
      %5428 = vmatprep.subr.mxu0 0.0
      %5429 = vmatpush1.xpose.msra.mxu0 0.0
      %5430 = vmatprep.subr.mxu0 0.0
      %5431 = vmatpush1.xpose.msra.mxu0 0.0
      %5432 = vmatprep.subr.mxu0 0.0
      %5433 = vmatpush1.xpose.msra.mxu0 0.0
      %5434 = vmatprep.mubr.f32.mxu0 0.0
      %5435 = vmatmul.mubr.f32.gmra.mrb[0].mxu0 %v5368
      %v5436 = vpop.f32.mrb[0].mxu0
      %v5437 = vadd.f32 0.0, %v5436
      %v5438 = vpop.f32.mrb[0].mxu0
      %5439 = vdwg.mxu0
      %v5440 = vmul.f32 %v5437, 0.17677669
      %v5441 = vsub.f32 %v5440, %v5440
      %v5442 = vmul.f32 %v5441, 1.442695
      %v5443 = vpow.pop %v5442
      %v5444 = vadd.f32 %v5443, 0.0
      %v5445 = vrcp.pop %v5444
      %v5446 = vmul.f32 %v5443, %v5445
      %v5447 = vmul.f32 %v4671, %v1973
      %v5448 = vmul.f32 %v4676, %v1973
      %v5449 = vmul.f32 %v4681, %v1973
      %v5450 = vmul.f32 %v4686, %v1973
      %v5451 = vmul.f32 %v4691, %v1973
      %v5452 = vmul.f32 %v4696, %v1973
      %v5453 = vmul.f32 %v4701, %v1973
      %v5454 = vmul.f32 %v4706, %v1973
      %v5455 = vmul.f32 %v4711, %v1973
      %v5456 = vmul.f32 %v4716, %v1973
      %5467 = vrot.lane.b32.xlu0 %v5447, 96
      %v5468 = vpop.permute.xlu0 %5467
      %5469 = vrot.lane.b32.xlu0 %v5448, 96
      %v5470 = vpop.permute.xlu0 %5469
      %5471 = vrot.lane.b32.xlu0 %v5449, 96
      %v5472 = vpop.permute.xlu0 %5471
      %5473 = vrot.lane.b32.xlu0 %v5450, 96
      %v5474 = vpop.permute.xlu0 %5473
      %5475 = vrot.lane.b32.xlu0 %v5451, 96
      %v5476 = vpop.permute.xlu0 %5475
      %5477 = vrot.lane.b32.xlu0 %v5452, 96
      %v5478 = vpop.permute.xlu0 %5477
      %5479 = vrot.lane.b32.xlu0 %v5453, 96
      %v5480 = vpop.permute.xlu0 %5479
      %5481 = vrot.lane.b32.xlu0 %v5454, 96
      %v5482 = vpop.permute.xlu0 %5481
      %5483 = vrot.lane.b32.xlu0 %v5455, 96
      %v5484 = vpop.permute.xlu0 %5483
      %5485 = vrot.lane.b32.xlu0 %v5456, 96
      %v5486 = vpop.permute.xlu0 %5485
      %v5497 = vsel %vm2697, %v5446, 0
      %v5499 = vsel %vm3141, %v5486, 0
      %5501 = vmatprep.subr.mxu0 0.0
      %5502 = vmatpush1.msra.mxu0 %v5468
      %5503 = vmatprep.subr.mxu0 0.0
      %5504 = vmatpush1.msra.mxu0 %v5470
      %5505 = vmatprep.subr.mxu0 0.0
      %5506 = vmatpush1.msra.mxu0 %v5472
      %5507 = vmatprep.subr.mxu0 0.0
      %5508 = vmatpush1.msra.mxu0 %v5474
      %5509 = vmatprep.subr.mxu0 0.0
      %5510 = vmatpush1.msra.mxu0 %v5476
      %5511 = vmatprep.subr.mxu0 0.0
      %5512 = vmatpush1.msra.mxu0 %v5478
      %5513 = vmatprep.subr.mxu0 0.0
      %5514 = vmatpush1.msra.mxu0 %v5480
      %5515 = vmatprep.subr.mxu0 0.0
      %5516 = vmatpush1.msra.mxu0 %v5482
      %5517 = vmatprep.subr.mxu0 0.0
      %5518 = vmatpush1.msra.mxu0 %v5484
      %5519 = vmatprep.subr.mxu0 0.0
      %5520 = vmatpush1.msra.mxu0 %v5499
      %5521 = vmatprep.subr.mxu0 0.0
      %5522 = vmatpush1.msra.mxu0 0.0
      %5523 = vmatprep.subr.mxu0 0.0
      %5524 = vmatpush1.msra.mxu0 0.0
      %5525 = vmatprep.subr.mxu0 0.0
      %5526 = vmatpush1.msra.mxu0 0.0
      %5527 = vmatprep.subr.mxu0 0.0
      %5528 = vmatpush1.msra.mxu0 0.0
      %5529 = vmatprep.subr.mxu0 0.0
      %5530 = vmatpush1.msra.mxu0 0.0
      %5531 = vmatprep.subr.mxu0 0.0
      %5532 = vmatpush1.msra.mxu0 0.0
      %5533 = vmatprep.subr.mxu0 0.0
      %5534 = vmatpush1.msra.mxu0 0.0
      %5535 = vmatprep.subr.mxu0 0.0
      %5536 = vmatpush1.msra.mxu0 0.0
      %5537 = vmatprep.subr.mxu0 0.0
      %5538 = vmatpush1.msra.mxu0 0.0
      %5539 = vmatprep.subr.mxu0 0.0
      %5540 = vmatpush1.msra.mxu0 0.0
      %5541 = vmatprep.subr.mxu0 0.0
      %5542 = vmatpush1.msra.mxu0 0.0
      %5543 = vmatprep.subr.mxu0 0.0
      %5544 = vmatpush1.msra.mxu0 0.0
      %5545 = vmatprep.subr.mxu0 0.0
      %5546 = vmatpush1.msra.mxu0 0.0
      %5547 = vmatprep.subr.mxu0 0.0
      %5548 = vmatpush1.msra.mxu0 0.0
      %5549 = vmatprep.subr.mxu0 0.0
      %5550 = vmatpush1.msra.mxu0 0.0
      %5551 = vmatprep.subr.mxu0 0.0
      %5552 = vmatpush1.msra.mxu0 0.0
      %5553 = vmatprep.subr.mxu0 0.0
      %5554 = vmatpush1.msra.mxu0 0.0
      %5555 = vmatprep.subr.mxu0 0.0
      %5556 = vmatpush1.msra.mxu0 0.0
      %5557 = vmatprep.subr.mxu0 0.0
      %5558 = vmatpush1.msra.mxu0 0.0
      %5559 = vmatprep.subr.mxu0 0.0
      %5560 = vmatpush1.msra.mxu0 0.0
      %5561 = vmatprep.subr.mxu0 0.0
      %5562 = vmatpush1.msra.mxu0 0.0
      %5563 = vmatprep.subr.mxu0 0.0
      %5564 = vmatpush1.msra.mxu0 0.0
      %5565 = vmatprep.mubr.f32.mxu0 0.0
      %5566 = vmatmul.mubr.f32.gmra.mrb[0].mxu0 %v5497
      %v5567 = vpop.f32.mrb[0].mxu0
      %v5568 = vadd.f32 0.0, %v5567
      %v5569 = vpop.f32.mrb[0].mxu0
      %5570 = vdwg.mxu0
      %v5571 = vadd.f32 %v5365, %v5568
      %v5572 = vadd.f32 %v4719, %v5571
      %s5573 = scalar_lea.vmem %s4, 64
      %v5574 = vld [vmem:[%s5573] sm:$0xff]
      %v5575 = vld [vmem:[%s5573 + $0x8] sm:$0xff]
      %v5576 = vld [vmem:[%s5573 + $0x10] sm:$0xff]
      %v5577 = vld [vmem:[%s5573 + $0x18] sm:$0xff]
      %s5578 = scalar_lea.vmem %s5, 2
      %v5579 = vld [vmem:[%s5578] sm:$0x1]
      %v5581 = vsel %vm441, %v5572, 0
      %5583 = vmatprep.subr.mxu0 0.0
      %5584 = vmatpush1.msra.mxu0 %v5574
      %5585 = vmatprep.subr.mxu0 0.0
      %5586 = vmatpush1.msra.mxu0 %v5575
      %5587 = vmatprep.subr.mxu0 0.0
      %5588 = vmatpush1.msra.mxu0 %v5576
      %5589 = vmatprep.subr.mxu0 0.0
      %5590 = vmatpush1.msra.mxu0 %v5577
      %5591 = vmatprep.subr.mxu0 0.0
      %5592 = vmatpush1.msra.mxu0 0.0
      %5593 = vmatprep.subr.mxu0 0.0
      %5594 = vmatpush1.msra.mxu0 0.0
      %5595 = vmatprep.subr.mxu0 0.0
      %5596 = vmatpush1.msra.mxu0 0.0
      %5597 = vmatprep.subr.mxu0 0.0
      %5598 = vmatpush1.msra.mxu0 0.0
      %5599 = vmatprep.subr.mxu0 0.0
      %5600 = vmatpush1.msra.mxu0 0.0
      %5601 = vmatprep.subr.mxu0 0.0
      %5602 = vmatpush1.msra.mxu0 0.0
      %5603 = vmatprep.subr.mxu0 0.0
      %5604 = vmatpush1.msra.mxu0 0.0
      %5605 = vmatprep.subr.mxu0 0.0
      %5606 = vmatpush1.msra.mxu0 0.0
      %5607 = vmatprep.subr.mxu0 0.0
      %5608 = vmatpush1.msra.mxu0 0.0
      %5609 = vmatprep.subr.mxu0 0.0
      %5610 = vmatpush1.msra.mxu0 0.0
      %5611 = vmatprep.subr.mxu0 0.0
      %5612 = vmatpush1.msra.mxu0 0.0
      %5613 = vmatprep.subr.mxu0 0.0
      %5614 = vmatpush1.msra.mxu0 0.0
      %5615 = vmatprep.subr.mxu0 0.0
      %5616 = vmatpush1.msra.mxu0 0.0
      %5617 = vmatprep.subr.mxu0 0.0
      %5618 = vmatpush1.msra.mxu0 0.0
      %5619 = vmatprep.subr.mxu0 0.0
      %5620 = vmatpush1.msra.mxu0 0.0
      %5621 = vmatprep.subr.mxu0 0.0
      %5622 = vmatpush1.msra.mxu0 0.0
      %5623 = vmatprep.subr.mxu0 0.0
      %5624 = vmatpush1.msra.mxu0 0.0
      %5625 = vmatprep.subr.mxu0 0.0
      %5626 = vmatpush1.msra.mxu0 0.0
      %5627 = vmatprep.subr.mxu0 0.0
      %5628 = vmatpush1.msra.mxu0 0.0
      %5629 = vmatprep.subr.mxu0 0.0
      %5630 = vmatpush1.msra.mxu0 0.0
      %5631 = vmatprep.subr.mxu0 0.0
      %5632 = vmatpush1.msra.mxu0 0.0
      %5633 = vmatprep.subr.mxu0 0.0
      %5634 = vmatpush1.msra.mxu0 0.0
      %5635 = vmatprep.subr.mxu0 0.0
      %5636 = vmatpush1.msra.mxu0 0.0
      %5637 = vmatprep.subr.mxu0 0.0
      %5638 = vmatpush1.msra.mxu0 0.0
      %5639 = vmatprep.subr.mxu0 0.0
      %5640 = vmatpush1.msra.mxu0 0.0
      %5641 = vmatprep.subr.mxu0 0.0
      %5642 = vmatpush1.msra.mxu0 0.0
      %5643 = vmatprep.subr.mxu0 0.0
      %5644 = vmatpush1.msra.mxu0 0.0
      %5645 = vmatprep.subr.mxu0 0.0
      %5646 = vmatpush1.msra.mxu0 0.0
      %5647 = vmatprep.mubr.f32.mxu0 0.0
      %5648 = vmatmul.mubr.f32.gmra.mrb[0].mxu0 %v5581
      %v5649 = vpop.f32.mrb[0].mxu0
      %v5650 = vadd.f32 %v5579, %v5649
      %v5651 = vpop.f32.mrb[0].mxu0
      %5652 = vdwg.mxu0
      %v5653 = vmax.f32 %v5650, 0.0
      %v5654 = vadd.f32 %v5572, %v5653
      %v5655 = vld [vmem:[%s10] sm:$0xff]
      %v5656 = vld [vmem:[%s10 + $0x8] sm:$0xff]
      %v5657 = vld [vmem:[%s10 + $0x10] sm:$0xff]
      %v5658 = vld [vmem:[%s10 + $0x18] sm:$0xff]
      %v5659 = vld [vmem:[#allocation2] sm:$0x1]
      %v5661 = vsel %vm441, %v5654, 0
      %5663 = vmatprep.subr.mxu0 0.0
      %5664 = vmatpush1.msra.mxu0 %v5655
      %5665 = vmatprep.subr.mxu0 0.0
      %5666 = vmatpush1.msra.mxu0 %v5656
      %5667 = vmatprep.subr.mxu0 0.0
      %5668 = vmatpush1.msra.mxu0 %v5657
      %5669 = vmatprep.subr.mxu0 0.0
      %5670 = vmatpush1.msra.mxu0 %v5658
      %5671 = vmatprep.subr.mxu0 0.0
      %5672 = vmatpush1.msra.mxu0 0.0
      %5673 = vmatprep.subr.mxu0 0.0
      %5674 = vmatpush1.msra.mxu0 0.0
      %5675 = vmatprep.subr.mxu0 0.0
      %5676 = vmatpush1.msra.mxu0 0.0
      %5677 = vmatprep.subr.mxu0 0.0
      %5678 = vmatpush1.msra.mxu0 0.0
      %5679 = vmatprep.subr.mxu0 0.0
      %5680 = vmatpush1.msra.mxu0 0.0
      %5681 = vmatprep.subr.mxu0 0.0
      %5682 = vmatpush1.msra.mxu0 0.0
      %5683 = vmatprep.subr.mxu0 0.0
      %5684 = vmatpush1.msra.mxu0 0.0
      %5685 = vmatprep.subr.mxu0 0.0
      %5686 = vmatpush1.msra.mxu0 0.0
      %5687 = vmatprep.subr.mxu0 0.0
      %5688 = vmatpush1.msra.mxu0 0.0
      %5689 = vmatprep.subr.mxu0 0.0
      %5690 = vmatpush1.msra.mxu0 0.0
      %5691 = vmatprep.subr.mxu0 0.0
      %5692 = vmatpush1.msra.mxu0 0.0
      %5693 = vmatprep.subr.mxu0 0.0
      %5694 = vmatpush1.msra.mxu0 0.0
      %5695 = vmatprep.subr.mxu0 0.0
      %5696 = vmatpush1.msra.mxu0 0.0
      %5697 = vmatprep.subr.mxu0 0.0
      %5698 = vmatpush1.msra.mxu0 0.0
      %5699 = vmatprep.subr.mxu0 0.0
      %5700 = vmatpush1.msra.mxu0 0.0
      %5701 = vmatprep.subr.mxu0 0.0
      %5702 = vmatpush1.msra.mxu0 0.0
      %5703 = vmatprep.subr.mxu0 0.0
      %5704 = vmatpush1.msra.mxu0 0.0
      %5705 = vmatprep.subr.mxu0 0.0
      %5706 = vmatpush1.msra.mxu0 0.0
      %5707 = vmatprep.subr.mxu0 0.0
      %5708 = vmatpush1.msra.mxu0 0.0
      %5709 = vmatprep.subr.mxu0 0.0
      %5710 = vmatpush1.msra.mxu0 0.0
      %5711 = vmatprep.subr.mxu0 0.0
      %5712 = vmatpush1.msra.mxu0 0.0
      %5713 = vmatprep.subr.mxu0 0.0
      %5714 = vmatpush1.msra.mxu0 0.0
      %5715 = vmatprep.subr.mxu0 0.0
      %5716 = vmatpush1.msra.mxu0 0.0
      %5717 = vmatprep.subr.mxu0 0.0
      %5718 = vmatpush1.msra.mxu0 0.0
      %5719 = vmatprep.subr.mxu0 0.0
      %5720 = vmatpush1.msra.mxu0 0.0
      %5721 = vmatprep.subr.mxu0 0.0
      %5722 = vmatpush1.msra.mxu0 0.0
      %5723 = vmatprep.subr.mxu0 0.0
      %5724 = vmatpush1.msra.mxu0 0.0
      %5725 = vmatprep.subr.mxu0 0.0
      %5726 = vmatpush1.msra.mxu0 0.0
      %5727 = vmatprep.mubr.f32.mxu0 0.0
      %5728 = vmatmul.mubr.f32.gmra.mrb[0].mxu0 %v5661
      %v5729 = vpop.f32.mrb[0].mxu0
      %v5730 = vadd.f32 %v5659, %v5729
      %v5731 = vpop.f32.mrb[0].mxu0
      %5732 = vdwg.mxu0
      %vm5733 = vcmask 0
      %5734 = vst.msk [vmem:[%s411] sm:$0x1] %vm5733, %v5730
      %p5735 = scmp.lt.s32.totalorder %s25, 1
      %s5736 = scalar_select %p5735, %s25, 1
      %s5737 = scalar_lea.vmem %s12, %s5736
      // Predicated region
      $region69: #{flexible_net_forward.3} parent=67 // pred_check
        %p5738 = pneg %p300
      $region70: #{flexible_net_forward.3} parent=67 // pred_check_branch
        %5740 = sbr.rel (%p5738) target = $region72
      $region71: #{flexible_net_forward.3} parent=67 // pred_region
        _
      $region72: #{flexible_net_forward.3} parent=67 // pred_fallthru
        _
    $region68: #{flexible_net_forward.3} parent=5 // pred_fallthru
      _
    %p5741 = scmp.le.s32.totalorder 2, %s20
    // Predicated region
    $region73: #{flexible_net_forward.3} parent=5 // pred_check
      %p5742 = pneg %p5741
    $region74: #{flexible_net_forward.3} parent=5 // pred_check_branch
      %5744 = sbr.rel (%p5742) target = $region76
    $region75: #{flexible_net_forward.3} parent=5 // pred_region
      %s5745 = ssub.s32 %s20, 2
      // Predicated region
      $region77: #{flexible_net_forward.3} parent=75 // pred_check
        %p5746 = pneg %p306
      $region78: #{flexible_net_forward.3} parent=75 // pred_check_branch
        %5748 = sbr.rel (%p5746) target = $region80
      $region79: #{flexible_net_forward.3} parent=75 // pred_region
        %p5749 = scmp.lt.s32.totalorder %s26, 1
        %s5750 = scalar_select %p5749, %s26, 1
        %s5751 = scalar_lea.vmem %s12, %s5750
      $region80: #{flexible_net_forward.3} parent=75 // pred_fallthru
        _
    $region76: #{flexible_net_forward.3} parent=5 // pred_fallthru
      _
  $region6: #{flexible_net_forward.3} parent=0 // loop_footer
    %s24 = sadd.s32 1, %s20
  $region7: #{flexible_net_forward.3} parent=0 // loop_footer_branch
    %19 = sbr.rel target = $region3
  $region8: #{flexible_net_forward.3} parent=0 // loop_exit
    _

</llo_original>
